<compile_context>
chip_gen: v7x
topology: tpu7x:2x2x1
jax: 0.10.0
libtpu: 0.0.40
codegen_flags: <defaults>
</compile_context>

<pallas_src>
import jax
import jax.numpy as jnp
from jax.experimental import pallas as pl
from jax.experimental.pallas import tpu as pltpu  # noqa: F401  (TPU backend)


# ---------------------------------------------------------------------------
# Model dimensions
# ---------------------------------------------------------------------------
N = 2            # batch
C_IN = 4         # input channels of the synthetic feature stand-in
H = W = 16       # spatial
HW = H * W
C_FEAT = 1920    # DenseNet-201 feature channels (fixed by Linear(1920, n_classes))
N_CLASSES = 10
NC_PAD = 128     # pad classifier output dim to one full lane register

# Channel chunk for the fused features->ReLU->pool->classifier loop.
CHUNK = 384
N_CHUNKS = C_FEAT // CHUNK
assert N_CHUNKS * CHUNK == C_FEAT


# ---------------------------------------------------------------------------
# Fused Pallas kernel: features stand-in + ReLU + global-avg-pool + classifier
# ---------------------------------------------------------------------------
def densenet_head_kernel(x_ref, wf_ref, bf_ref, wc_ref, bc_ref, out_ref):
    # x_ref:  (N, HW, C_IN)     whole batch, channels on the lane axis
    # wf_ref: (C_IN, C_FEAT)    synthetic 1x1-conv ("features" stand-in)
    # bf_ref: (1, C_FEAT)
    # wc_ref: (C_FEAT, NC_PAD)  classifier weight (lane-padded)
    # bc_ref: (1, NC_PAD)       classifier bias   (lane-padded)
    # out_ref:(N, NC_PAD)
    x = x_ref[...]                                   # (N, HW, C_IN), ~8 KB
    inv_hw = 1.0 / float(HW)

    logits = jnp.zeros(out_ref.shape, jnp.float32)   # (N, NC_PAD) accumulator

    # Chunk over C_FEAT so the (N, HW, chunk) intermediate stays small and the
    # ReLU + pool reduction fuses with its production (no full ~2 MB feat tile
    # spilled to VMEM and re-read).
    for j in range(N_CHUNKS):
        sl = slice(j * CHUNK, (j + 1) * CHUNK)
        w_rows = wf_ref[:, sl]                       # (C_IN, CHUNK)
        b_row = bf_ref[:, sl]                        # (1, CHUNK)

        # "model.features(x)" stand-in as C_IN broadcast FMAs on the VPU
        # (a K=4 MXU contraction would run at 4/256 utilization + relayout).
        feat = x[:, :, 0:1] * w_rows[0:1, :][None, :, :]
        for c in range(1, C_IN):
            feat = feat + x[:, :, c:c + 1] * w_rows[c:c + 1, :][None, :, :]
        feat = feat + b_row[None, :, :]              # (N, HW, CHUNK)

        # F.relu + F.adaptive_avg_pool2d((1,1)): mean over spatial positions.
        feat = jnp.maximum(feat, 0.0)
        pooled_c = jnp.sum(feat, axis=1) * inv_hw    # (N, CHUNK)

        # Partial classifier contribution for this channel chunk (MXU, M=N).
        logits = logits + jnp.dot(pooled_c, wc_ref[sl, :],
                                  preferred_element_type=jnp.float32)

    # torch.flatten + classifier bias; single lane-dense (N, NC_PAD) store.
    out_ref[...] = logits + bc_ref[...]


# ---------------------------------------------------------------------------
# One-time parameter prep (hoisted out of the per-call forward)
# ---------------------------------------------------------------------------
def prepare_params(wf, bf, wc, bc):
    wc_pad = jnp.zeros((C_FEAT, NC_PAD), jnp.float32).at[:, :N_CLASSES].set(wc)
    bc_pad = jnp.zeros((1, NC_PAD), jnp.float32).at[0, :N_CLASSES].set(bc)
    bf_2d = bf.reshape(1, C_FEAT)
    return wf, bf_2d, wc_pad, bc_pad


@jax.jit
def densenet_gradcam_forward(x_nchw, wf, bf_2d, wc_pad, bc_pad):
    """x_nchw: (N, C_IN, H, W) float32. Returns (N, N_CLASSES) logits."""
    n, cin, h, w = x_nchw.shape

    # NCHW -> (N, HW, C): channels on the lane axis (matches feat layout).
    x_seq = jnp.transpose(x_nchw, (0, 2, 3, 1)).reshape(n, h * w, cin)

    out = pl.pallas_call(
        densenet_head_kernel,
        out_shape=jax.ShapeDtypeStruct((n, NC_PAD), jnp.float32),
        # No grid: single invocation, whole arrays resident in VMEM (~1.6 MB),
        # so the invariant weights are never re-fetched or double-buffered.
    )(x_seq, wf, bf_2d, wc_pad, bc_pad)

    return out[:, :N_CLASSES]


# ---------------------------------------------------------------------------
# Pure-JAX reference (mirrors the PyTorch forward)
# ---------------------------------------------------------------------------
def reference_forward(x_nchw, wf, bf, wc, bc):
    n, cin, h, w = x_nchw.shape
    x_nhwc = jnp.transpose(x_nchw, (0, 2, 3, 1)).reshape(n, h * w, cin)
    feat = jnp.einsum("npc,cf->npf", x_nhwc, wf) + bf   # features stand-in
    feat = jnp.maximum(feat, 0.0)                        # relu
    pooled = jnp.mean(feat, axis=1)                      # avg_pool((1,1)) + flatten
    return pooled @ wc + bc                              # classifier


if __name__ == "__main__":
    key = jax.random.PRNGKey(0)
    k_x, k_wf, k_bf, k_wc, k_bc = jax.random.split(key, 5)

    x = jax.random.normal(k_x, (N, C_IN, H, W), dtype=jnp.float32)

    # Synthetic "features" stand-in params (1x1 conv: C_IN -> 1920).
    bound_f = 1.0 / jnp.sqrt(float(C_IN))
    wf = jax.random.uniform(k_wf, (C_IN, C_FEAT), jnp.float32, -bound_f, bound_f)
    bf = jax.random.uniform(k_bf, (C_FEAT,), jnp.float32, -bound_f, bound_f)

    # Classifier params, PyTorch nn.Linear(1920, n_classes) default-init style.
    bound_c = 1.0 / jnp.sqrt(float(C_FEAT))
    wc = jax.random.uniform(k_wc, (C_FEAT, N_CLASSES), jnp.float32, -bound_c, bound_c)
    bc = jax.random.uniform(k_bc, (N_CLASSES,), jnp.float32, -bound_c, bound_c)

    # One-time parameter prep (padding / reshape) outside the forward path.
    params = prepare_params(wf, bf, wc, bc)
    params = jax.block_until_ready(params)

    logits = densenet_gradcam_forward(x, *params)
    logits = jax.block_until_ready(logits)

    ref = reference_forward(x, wf, bf, wc, bc)
    assert logits.shape == (N, N_CLASSES)
    assert jnp.allclose(logits, ref, atol=1e-4, rtol=1e-4), "mismatch vs reference"

    print("KERNEL_OK")
</pallas_src>

<mosaic_0001>
module attributes {stable_mosaic.version = 11 : i64} {
  func.func @densenet_head_kernel(%arg0: memref<2x256x4xf32, #tpu.memory_space<vmem>>, %arg1: memref<4x1920xf32, #tpu.memory_space<vmem>>, %arg2: memref<1x1920xf32, #tpu.memory_space<vmem>>, %arg3: memref<1920x128xf32, #tpu.memory_space<vmem>>, %arg4: memref<1x128xf32, #tpu.memory_space<vmem>>, %arg5: memref<2x128xf32, #tpu.memory_space<vmem>>) attributes {dimension_semantics = [], scalar_prefetch = 0 : i64, scratch_operands = 0 : i64, tpu.core_type = #tpu.core_type<tc>} {
    %c0 = arith.constant 0 : index
    %c0_0 = arith.constant 0 : index
    %c0_1 = arith.constant 0 : index
    %0 = vector.load %arg0[%c0, %c0_0, %c0_1] : memref<2x256x4xf32, #tpu.memory_space<vmem>>, vector<2x256x4xf32>
    %cst = arith.constant 0.000000e+00 : f32
    %1 = vector.broadcast %cst : f32 to vector<2x128xf32>
    %c0_2 = arith.constant 0 : index
    %c0_3 = arith.constant 0 : index
    %2 = vector.load %arg1[%c0_2, %c0_3] : memref<4x1920xf32, #tpu.memory_space<vmem>>, vector<4x384xf32>
    %c0_4 = arith.constant 0 : index
    %c0_5 = arith.constant 0 : index
    %3 = vector.load %arg2[%c0_4, %c0_5] : memref<1x1920xf32, #tpu.memory_space<vmem>>, vector<1x384xf32>
    %4 = vector.extract_strided_slice %0 {offsets = [0, 0, 0], sizes = [2, 256, 1], strides = [1, 1, 1]} : vector<2x256x4xf32> to vector<2x256x1xf32>
    %5 = vector.extract_strided_slice %2 {offsets = [0, 0], sizes = [1, 384], strides = [1, 1]} : vector<4x384xf32> to vector<1x384xf32>
    %6 = vector.shape_cast %5 : vector<1x384xf32> to vector<1x1x384xf32>
    %7 = vector.broadcast %4 : vector<2x256x1xf32> to vector<2x256x384xf32>
    %8 = vector.broadcast %6 : vector<1x1x384xf32> to vector<2x256x384xf32>
    %9 = arith.mulf %7, %8 : vector<2x256x384xf32>
    %10 = vector.extract_strided_slice %0 {offsets = [0, 0, 1], sizes = [2, 256, 1], strides = [1, 1, 1]} : vector<2x256x4xf32> to vector<2x256x1xf32>
    %11 = vector.extract_strided_slice %2 {offsets = [1, 0], sizes = [1, 384], strides = [1, 1]} : vector<4x384xf32> to vector<1x384xf32>
    %12 = vector.shape_cast %11 : vector<1x384xf32> to vector<1x1x384xf32>
    %13 = vector.broadcast %10 : vector<2x256x1xf32> to vector<2x256x384xf32>
    %14 = vector.broadcast %12 : vector<1x1x384xf32> to vector<2x256x384xf32>
    %15 = arith.mulf %13, %14 : vector<2x256x384xf32>
    %16 = arith.addf %9, %15 : vector<2x256x384xf32>
    %17 = vector.extract_strided_slice %0 {offsets = [0, 0, 2], sizes = [2, 256, 1], strides = [1, 1, 1]} : vector<2x256x4xf32> to vector<2x256x1xf32>
    %18 = vector.extract_strided_slice %2 {offsets = [2, 0], sizes = [1, 384], strides = [1, 1]} : vector<4x384xf32> to vector<1x384xf32>
    %19 = vector.shape_cast %18 : vector<1x384xf32> to vector<1x1x384xf32>
    %20 = vector.broadcast %17 : vector<2x256x1xf32> to vector<2x256x384xf32>
    %21 = vector.broadcast %19 : vector<1x1x384xf32> to vector<2x256x384xf32>
    %22 = arith.mulf %20, %21 : vector<2x256x384xf32>
    %23 = arith.addf %16, %22 : vector<2x256x384xf32>
    %24 = vector.extract_strided_slice %0 {offsets = [0, 0, 3], sizes = [2, 256, 1], strides = [1, 1, 1]} : vector<2x256x4xf32> to vector<2x256x1xf32>
    %25 = vector.extract_strided_slice %2 {offsets = [3, 0], sizes = [1, 384], strides = [1, 1]} : vector<4x384xf32> to vector<1x384xf32>
    %26 = vector.shape_cast %25 : vector<1x384xf32> to vector<1x1x384xf32>
    %27 = vector.broadcast %24 : vector<2x256x1xf32> to vector<2x256x384xf32>
    %28 = vector.broadcast %26 : vector<1x1x384xf32> to vector<2x256x384xf32>
    %29 = arith.mulf %27, %28 : vector<2x256x384xf32>
    %30 = arith.addf %23, %29 : vector<2x256x384xf32>
    %31 = vector.shape_cast %3 : vector<1x384xf32> to vector<1x1x384xf32>
    %32 = vector.broadcast %31 : vector<1x1x384xf32> to vector<2x256x384xf32>
    %33 = arith.addf %30, %32 : vector<2x256x384xf32>
    %cst_6 = arith.constant 0.000000e+00 : f32
    %34 = vector.broadcast %cst_6 : f32 to vector<2x256x384xf32>
    %35 = arith.maximumf %33, %34 : vector<2x256x384xf32>
    %cst_7 = arith.constant dense<0.000000e+00> : vector<2x384xf32>
    %36 = vector.multi_reduction <add>, %35, %cst_7 [1] : vector<2x256x384xf32> to vector<2x384xf32>
    %cst_8 = arith.constant 3.906250e-03 : f32
    %37 = vector.broadcast %cst_8 : f32 to vector<2x384xf32>
    %38 = arith.mulf %36, %37 : vector<2x384xf32>
    %c0_9 = arith.constant 0 : index
    %c0_10 = arith.constant 0 : index
    %39 = vector.load %arg3[%c0_9, %c0_10] : memref<1920x128xf32, #tpu.memory_space<vmem>>, vector<384x128xf32>
    %cst_11 = arith.constant dense<0.000000e+00> : vector<2x128xf32>
    %40 = tpu.matmul %38, %39, %cst_11 {dimension_numbers = #tpu.dot_dimension_numbers<[1], [0], [0], [1], [0, 0, 1, 1], [], []>} : vector<2x384xf32>, vector<384x128xf32>, vector<2x128xf32> -> vector<2x128xf32>
    %41 = arith.addf %1, %40 : vector<2x128xf32>
    %c0_12 = arith.constant 0 : index
    %c384 = arith.constant 384 : index
    %42 = vector.load %arg1[%c0_12, %c384] : memref<4x1920xf32, #tpu.memory_space<vmem>>, vector<4x384xf32>
    %c0_13 = arith.constant 0 : index
    %c384_14 = arith.constant 384 : index
    %43 = vector.load %arg2[%c0_13, %c384_14] : memref<1x1920xf32, #tpu.memory_space<vmem>>, vector<1x384xf32>
    %44 = vector.extract_strided_slice %0 {offsets = [0, 0, 0], sizes = [2, 256, 1], strides = [1, 1, 1]} : vector<2x256x4xf32> to vector<2x256x1xf32>
    %45 = vector.extract_strided_slice %42 {offsets = [0, 0], sizes = [1, 384], strides = [1, 1]} : vector<4x384xf32> to vector<1x384xf32>
    %46 = vector.shape_cast %45 : vector<1x384xf32> to vector<1x1x384xf32>
    %47 = vector.broadcast %44 : vector<2x256x1xf32> to vector<2x256x384xf32>
    %48 = vector.broadcast %46 : vector<1x1x384xf32> to vector<2x256x384xf32>
    %49 = arith.mulf %47, %48 : vector<2x256x384xf32>
    %50 = vector.extract_strided_slice %0 {offsets = [0, 0, 1], sizes = [2, 256, 1], strides = [1, 1, 1]} : vector<2x256x4xf32> to vector<2x256x1xf32>
    %51 = vector.extract_strided_slice %42 {offsets = [1, 0], sizes = [1, 384], strides = [1, 1]} : vector<4x384xf32> to vector<1x384xf32>
    %52 = vector.shape_cast %51 : vector<1x384xf32> to vector<1x1x384xf32>
    %53 = vector.broadcast %50 : vector<2x256x1xf32> to vector<2x256x384xf32>
    %54 = vector.broadcast %52 : vector<1x1x384xf32> to vector<2x256x384xf32>
    %55 = arith.mulf %53, %54 : vector<2x256x384xf32>
    %56 = arith.addf %49, %55 : vector<2x256x384xf32>
    %57 = vector.extract_strided_slice %0 {offsets = [0, 0, 2], sizes = [2, 256, 1], strides = [1, 1, 1]} : vector<2x256x4xf32> to vector<2x256x1xf32>
    %58 = vector.extract_strided_slice %42 {offsets = [2, 0], sizes = [1, 384], strides = [1, 1]} : vector<4x384xf32> to vector<1x384xf32>
    %59 = vector.shape_cast %58 : vector<1x384xf32> to vector<1x1x384xf32>
    %60 = vector.broadcast %57 : vector<2x256x1xf32> to vector<2x256x384xf32>
    %61 = vector.broadcast %59 : vector<1x1x384xf32> to vector<2x256x384xf32>
    %62 = arith.mulf %60, %61 : vector<2x256x384xf32>
    %63 = arith.addf %56, %62 : vector<2x256x384xf32>
    %64 = vector.extract_strided_slice %0 {offsets = [0, 0, 3], sizes = [2, 256, 1], strides = [1, 1, 1]} : vector<2x256x4xf32> to vector<2x256x1xf32>
    %65 = vector.extract_strided_slice %42 {offsets = [3, 0], sizes = [1, 384], strides = [1, 1]} : vector<4x384xf32> to vector<1x384xf32>
    %66 = vector.shape_cast %65 : vector<1x384xf32> to vector<1x1x384xf32>
    %67 = vector.broadcast %64 : vector<2x256x1xf32> to vector<2x256x384xf32>
    %68 = vector.broadcast %66 : vector<1x1x384xf32> to vector<2x256x384xf32>
    %69 = arith.mulf %67, %68 : vector<2x256x384xf32>
    %70 = arith.addf %63, %69 : vector<2x256x384xf32>
    %71 = vector.shape_cast %43 : vector<1x384xf32> to vector<1x1x384xf32>
    %72 = vector.broadcast %71 : vector<1x1x384xf32> to vector<2x256x384xf32>
    %73 = arith.addf %70, %72 : vector<2x256x384xf32>
    %cst_15 = arith.constant 0.000000e+00 : f32
    %74 = vector.broadcast %cst_15 : f32 to vector<2x256x384xf32>
    %75 = arith.maximumf %73, %74 : vector<2x256x384xf32>
    %cst_16 = arith.constant dense<0.000000e+00> : vector<2x384xf32>
    %76 = vector.multi_reduction <add>, %75, %cst_16 [1] : vector<2x256x384xf32> to vector<2x384xf32>
    %cst_17 = arith.constant 3.906250e-03 : f32
    %77 = vector.broadcast %cst_17 : f32 to vector<2x384xf32>
    %78 = arith.mulf %76, %77 : vector<2x384xf32>
    %c384_18 = arith.constant 384 : index
    %c0_19 = arith.constant 0 : index
    %79 = vector.load %arg3[%c384_18, %c0_19] : memref<1920x128xf32, #tpu.memory_space<vmem>>, vector<384x128xf32>
    %cst_20 = arith.constant dense<0.000000e+00> : vector<2x128xf32>
    %80 = tpu.matmul %78, %79, %cst_20 {dimension_numbers = #tpu.dot_dimension_numbers<[1], [0], [0], [1], [0, 0, 1, 1], [], []>} : vector<2x384xf32>, vector<384x128xf32>, vector<2x128xf32> -> vector<2x128xf32>
    %81 = arith.addf %41, %80 : vector<2x128xf32>
    %c0_21 = arith.constant 0 : index
    %c768 = arith.constant 768 : index
    %82 = vector.load %arg1[%c0_21, %c768] : memref<4x1920xf32, #tpu.memory_space<vmem>>, vector<4x384xf32>
    %c0_22 = arith.constant 0 : index
    %c768_23 = arith.constant 768 : index
    %83 = vector.load %arg2[%c0_22, %c768_23] : memref<1x1920xf32, #tpu.memory_space<vmem>>, vector<1x384xf32>
    %84 = vector.extract_strided_slice %0 {offsets = [0, 0, 0], sizes = [2, 256, 1], strides = [1, 1, 1]} : vector<2x256x4xf32> to vector<2x256x1xf32>
    %85 = vector.extract_strided_slice %82 {offsets = [0, 0], sizes = [1, 384], strides = [1, 1]} : vector<4x384xf32> to vector<1x384xf32>
    %86 = vector.shape_cast %85 : vector<1x384xf32> to vector<1x1x384xf32>
    %87 = vector.broadcast %84 : vector<2x256x1xf32> to vector<2x256x384xf32>
    %88 = vector.broadcast %86 : vector<1x1x384xf32> to vector<2x256x384xf32>
    %89 = arith.mulf %87, %88 : vector<2x256x384xf32>
    %90 = vector.extract_strided_slice %0 {offsets = [0, 0, 1], sizes = [2, 256, 1], strides = [1, 1, 1]} : vector<2x256x4xf32> to vector<2x256x1xf32>
    %91 = vector.extract_strided_slice %82 {offsets = [1, 0], sizes = [1, 384], strides = [1, 1]} : vector<4x384xf32> to vector<1x384xf32>
    %92 = vector.shape_cast %91 : vector<1x384xf32> to vector<1x1x384xf32>
    %93 = vector.broadcast %90 : vector<2x256x1xf32> to vector<2x256x384xf32>
    %94 = vector.broadcast %92 : vector<1x1x384xf32> to vector<2x256x384xf32>
    %95 = arith.mulf %93, %94 : vector<2x256x384xf32>
    %96 = arith.addf %89, %95 : vector<2x256x384xf32>
    %97 = vector.extract_strided_slice %0 {offsets = [0, 0, 2], sizes = [2, 256, 1], strides = [1, 1, 1]} : vector<2x256x4xf32> to vector<2x256x1xf32>
    %98 = vector.extract_strided_slice %82 {offsets = [2, 0], sizes = [1, 384], strides = [1, 1]} : vector<4x384xf32> to vector<1x384xf32>
    %99 = vector.shape_cast %98 : vector<1x384xf32> to vector<1x1x384xf32>
    %100 = vector.broadcast %97 : vector<2x256x1xf32> to vector<2x256x384xf32>
    %101 = vector.broadcast %99 : vector<1x1x384xf32> to vector<2x256x384xf32>
    %102 = arith.mulf %100, %101 : vector<2x256x384xf32>
    %103 = arith.addf %96, %102 : vector<2x256x384xf32>
    %104 = vector.extract_strided_slice %0 {offsets = [0, 0, 3], sizes = [2, 256, 1], strides = [1, 1, 1]} : vector<2x256x4xf32> to vector<2x256x1xf32>
    %105 = vector.extract_strided_slice %82 {offsets = [3, 0], sizes = [1, 384], strides = [1, 1]} : vector<4x384xf32> to vector<1x384xf32>
    %106 = vector.shape_cast %105 : vector<1x384xf32> to vector<1x1x384xf32>
    %107 = vector.broadcast %104 : vector<2x256x1xf32> to vector<2x256x384xf32>
    %108 = vector.broadcast %106 : vector<1x1x384xf32> to vector<2x256x384xf32>
    %109 = arith.mulf %107, %108 : vector<2x256x384xf32>
    %110 = arith.addf %103, %109 : vector<2x256x384xf32>
    %111 = vector.shape_cast %83 : vector<1x384xf32> to vector<1x1x384xf32>
    %112 = vector.broadcast %111 : vector<1x1x384xf32> to vector<2x256x384xf32>
    %113 = arith.addf %110, %112 : vector<2x256x384xf32>
    %cst_24 = arith.constant 0.000000e+00 : f32
    %114 = vector.broadcast %cst_24 : f32 to vector<2x256x384xf32>
    %115 = arith.maximumf %113, %114 : vector<2x256x384xf32>
    %cst_25 = arith.constant dense<0.000000e+00> : vector<2x384xf32>
    %116 = vector.multi_reduction <add>, %115, %cst_25 [1] : vector<2x256x384xf32> to vector<2x384xf32>
    %cst_26 = arith.constant 3.906250e-03 : f32
    %117 = vector.broadcast %cst_26 : f32 to vector<2x384xf32>
    %118 = arith.mulf %116, %117 : vector<2x384xf32>
    %c768_27 = arith.constant 768 : index
    %c0_28 = arith.constant 0 : index
    %119 = vector.load %arg3[%c768_27, %c0_28] : memref<1920x128xf32, #tpu.memory_space<vmem>>, vector<384x128xf32>
    %cst_29 = arith.constant dense<0.000000e+00> : vector<2x128xf32>
    %120 = tpu.matmul %118, %119, %cst_29 {dimension_numbers = #tpu.dot_dimension_numbers<[1], [0], [0], [1], [0, 0, 1, 1], [], []>} : vector<2x384xf32>, vector<384x128xf32>, vector<2x128xf32> -> vector<2x128xf32>
    %121 = arith.addf %81, %120 : vector<2x128xf32>
    %c0_30 = arith.constant 0 : index
    %c1152 = arith.constant 1152 : index
    %122 = vector.load %arg1[%c0_30, %c1152] : memref<4x1920xf32, #tpu.memory_space<vmem>>, vector<4x384xf32>
    %c0_31 = arith.constant 0 : index
    %c1152_32 = arith.constant 1152 : index
    %123 = vector.load %arg2[%c0_31, %c1152_32] : memref<1x1920xf32, #tpu.memory_space<vmem>>, vector<1x384xf32>
    %124 = vector.extract_strided_slice %0 {offsets = [0, 0, 0], sizes = [2, 256, 1], strides = [1, 1, 1]} : vector<2x256x4xf32> to vector<2x256x1xf32>
    %125 = vector.extract_strided_slice %122 {offsets = [0, 0], sizes = [1, 384], strides = [1, 1]} : vector<4x384xf32> to vector<1x384xf32>
    %126 = vector.shape_cast %125 : vector<1x384xf32> to vector<1x1x384xf32>
    %127 = vector.broadcast %124 : vector<2x256x1xf32> to vector<2x256x384xf32>
    %128 = vector.broadcast %126 : vector<1x1x384xf32> to vector<2x256x384xf32>
    %129 = arith.mulf %127, %128 : vector<2x256x384xf32>
    %130 = vector.extract_strided_slice %0 {offsets = [0, 0, 1], sizes = [2, 256, 1], strides = [1, 1, 1]} : vector<2x256x4xf32> to vector<2x256x1xf32>
    %131 = vector.extract_strided_slice %122 {offsets = [1, 0], sizes = [1, 384], strides = [1, 1]} : vector<4x384xf32> to vector<1x384xf32>
    %132 = vector.shape_cast %131 : vector<1x384xf32> to vector<1x1x384xf32>
    %133 = vector.broadcast %130 : vector<2x256x1xf32> to vector<2x256x384xf32>
    %134 = vector.broadcast %132 : vector<1x1x384xf32> to vector<2x256x384xf32>
    %135 = arith.mulf %133, %134 : vector<2x256x384xf32>
    %136 = arith.addf %129, %135 : vector<2x256x384xf32>
    %137 = vector.extract_strided_slice %0 {offsets = [0, 0, 2], sizes = [2, 256, 1], strides = [1, 1, 1]} : vector<2x256x4xf32> to vector<2x256x1xf32>
    %138 = vector.extract_strided_slice %122 {offsets = [2, 0], sizes = [1, 384], strides = [1, 1]} : vector<4x384xf32> to vector<1x384xf32>
    %139 = vector.shape_cast %138 : vector<1x384xf32> to vector<1x1x384xf32>
    %140 = vector.broadcast %137 : vector<2x256x1xf32> to vector<2x256x384xf32>
    %141 = vector.broadcast %139 : vector<1x1x384xf32> to vector<2x256x384xf32>
    %142 = arith.mulf %140, %141 : vector<2x256x384xf32>
    %143 = arith.addf %136, %142 : vector<2x256x384xf32>
    %144 = vector.extract_strided_slice %0 {offsets = [0, 0, 3], sizes = [2, 256, 1], strides = [1, 1, 1]} : vector<2x256x4xf32> to vector<2x256x1xf32>
    %145 = vector.extract_strided_slice %122 {offsets = [3, 0], sizes = [1, 384], strides = [1, 1]} : vector<4x384xf32> to vector<1x384xf32>
    %146 = vector.shape_cast %145 : vector<1x384xf32> to vector<1x1x384xf32>
    %147 = vector.broadcast %144 : vector<2x256x1xf32> to vector<2x256x384xf32>
    %148 = vector.broadcast %146 : vector<1x1x384xf32> to vector<2x256x384xf32>
    %149 = arith.mulf %147, %148 : vector<2x256x384xf32>
    %150 = arith.addf %143, %149 : vector<2x256x384xf32>
    %151 = vector.shape_cast %123 : vector<1x384xf32> to vector<1x1x384xf32>
    %152 = vector.broadcast %151 : vector<1x1x384xf32> to vector<2x256x384xf32>
    %153 = arith.addf %150, %152 : vector<2x256x384xf32>
    %cst_33 = arith.constant 0.000000e+00 : f32
    %154 = vector.broadcast %cst_33 : f32 to vector<2x256x384xf32>
    %155 = arith.maximumf %153, %154 : vector<2x256x384xf32>
    %cst_34 = arith.constant dense<0.000000e+00> : vector<2x384xf32>
    %156 = vector.multi_reduction <add>, %155, %cst_34 [1] : vector<2x256x384xf32> to vector<2x384xf32>
    %cst_35 = arith.constant 3.906250e-03 : f32
    %157 = vector.broadcast %cst_35 : f32 to vector<2x384xf32>
    %158 = arith.mulf %156, %157 : vector<2x384xf32>
    %c1152_36 = arith.constant 1152 : index
    %c0_37 = arith.constant 0 : index
    %159 = vector.load %arg3[%c1152_36, %c0_37] : memref<1920x128xf32, #tpu.memory_space<vmem>>, vector<384x128xf32>
    %cst_38 = arith.constant dense<0.000000e+00> : vector<2x128xf32>
    %160 = tpu.matmul %158, %159, %cst_38 {dimension_numbers = #tpu.dot_dimension_numbers<[1], [0], [0], [1], [0, 0, 1, 1], [], []>} : vector<2x384xf32>, vector<384x128xf32>, vector<2x128xf32> -> vector<2x128xf32>
    %161 = arith.addf %121, %160 : vector<2x128xf32>
    %c0_39 = arith.constant 0 : index
    %c1536 = arith.constant 1536 : index
    %162 = vector.load %arg1[%c0_39, %c1536] : memref<4x1920xf32, #tpu.memory_space<vmem>>, vector<4x384xf32>
    %c0_40 = arith.constant 0 : index
    %c1536_41 = arith.constant 1536 : index
    %163 = vector.load %arg2[%c0_40, %c1536_41] : memref<1x1920xf32, #tpu.memory_space<vmem>>, vector<1x384xf32>
    %164 = vector.extract_strided_slice %0 {offsets = [0, 0, 0], sizes = [2, 256, 1], strides = [1, 1, 1]} : vector<2x256x4xf32> to vector<2x256x1xf32>
    %165 = vector.extract_strided_slice %162 {offsets = [0, 0], sizes = [1, 384], strides = [1, 1]} : vector<4x384xf32> to vector<1x384xf32>
    %166 = vector.shape_cast %165 : vector<1x384xf32> to vector<1x1x384xf32>
    %167 = vector.broadcast %164 : vector<2x256x1xf32> to vector<2x256x384xf32>
    %168 = vector.broadcast %166 : vector<1x1x384xf32> to vector<2x256x384xf32>
    %169 = arith.mulf %167, %168 : vector<2x256x384xf32>
    %170 = vector.extract_strided_slice %0 {offsets = [0, 0, 1], sizes = [2, 256, 1], strides = [1, 1, 1]} : vector<2x256x4xf32> to vector<2x256x1xf32>
    %171 = vector.extract_strided_slice %162 {offsets = [1, 0], sizes = [1, 384], strides = [1, 1]} : vector<4x384xf32> to vector<1x384xf32>
    %172 = vector.shape_cast %171 : vector<1x384xf32> to vector<1x1x384xf32>
    %173 = vector.broadcast %170 : vector<2x256x1xf32> to vector<2x256x384xf32>
    %174 = vector.broadcast %172 : vector<1x1x384xf32> to vector<2x256x384xf32>
    %175 = arith.mulf %173, %174 : vector<2x256x384xf32>
    %176 = arith.addf %169, %175 : vector<2x256x384xf32>
    %177 = vector.extract_strided_slice %0 {offsets = [0, 0, 2], sizes = [2, 256, 1], strides = [1, 1, 1]} : vector<2x256x4xf32> to vector<2x256x1xf32>
    %178 = vector.extract_strided_slice %162 {offsets = [2, 0], sizes = [1, 384], strides = [1, 1]} : vector<4x384xf32> to vector<1x384xf32>
    %179 = vector.shape_cast %178 : vector<1x384xf32> to vector<1x1x384xf32>
    %180 = vector.broadcast %177 : vector<2x256x1xf32> to vector<2x256x384xf32>
    %181 = vector.broadcast %179 : vector<1x1x384xf32> to vector<2x256x384xf32>
    %182 = arith.mulf %180, %181 : vector<2x256x384xf32>
    %183 = arith.addf %176, %182 : vector<2x256x384xf32>
    %184 = vector.extract_strided_slice %0 {offsets = [0, 0, 3], sizes = [2, 256, 1], strides = [1, 1, 1]} : vector<2x256x4xf32> to vector<2x256x1xf32>
    %185 = vector.extract_strided_slice %162 {offsets = [3, 0], sizes = [1, 384], strides = [1, 1]} : vector<4x384xf32> to vector<1x384xf32>
    %186 = vector.shape_cast %185 : vector<1x384xf32> to vector<1x1x384xf32>
    %187 = vector.broadcast %184 : vector<2x256x1xf32> to vector<2x256x384xf32>
    %188 = vector.broadcast %186 : vector<1x1x384xf32> to vector<2x256x384xf32>
    %189 = arith.mulf %187, %188 : vector<2x256x384xf32>
    %190 = arith.addf %183, %189 : vector<2x256x384xf32>
    %191 = vector.shape_cast %163 : vector<1x384xf32> to vector<1x1x384xf32>
    %192 = vector.broadcast %191 : vector<1x1x384xf32> to vector<2x256x384xf32>
    %193 = arith.addf %190, %192 : vector<2x256x384xf32>
    %cst_42 = arith.constant 0.000000e+00 : f32
    %194 = vector.broadcast %cst_42 : f32 to vector<2x256x384xf32>
    %195 = arith.maximumf %193, %194 : vector<2x256x384xf32>
    %cst_43 = arith.constant dense<0.000000e+00> : vector<2x384xf32>
    %196 = vector.multi_reduction <add>, %195, %cst_43 [1] : vector<2x256x384xf32> to vector<2x384xf32>
    %cst_44 = arith.constant 3.906250e-03 : f32
    %197 = vector.broadcast %cst_44 : f32 to vector<2x384xf32>
    %198 = arith.mulf %196, %197 : vector<2x384xf32>
    %c1536_45 = arith.constant 1536 : index
    %c0_46 = arith.constant 0 : index
    %199 = vector.load %arg3[%c1536_45, %c0_46] : memref<1920x128xf32, #tpu.memory_space<vmem>>, vector<384x128xf32>
    %cst_47 = arith.constant dense<0.000000e+00> : vector<2x128xf32>
    %200 = tpu.matmul %198, %199, %cst_47 {dimension_numbers = #tpu.dot_dimension_numbers<[1], [0], [0], [1], [0, 0, 1, 1], [], []>} : vector<2x384xf32>, vector<384x128xf32>, vector<2x128xf32> -> vector<2x128xf32>
    %201 = arith.addf %161, %200 : vector<2x128xf32>
    %c0_48 = arith.constant 0 : index
    %c0_49 = arith.constant 0 : index
    %202 = vector.load %arg4[%c0_48, %c0_49] : memref<1x128xf32, #tpu.memory_space<vmem>>, vector<1x128xf32>
    %203 = vector.broadcast %202 : vector<1x128xf32> to vector<2x128xf32>
    %204 = arith.addf %201, %203 : vector<2x128xf32>
    %c0_50 = arith.constant 0 : index
    %c0_51 = arith.constant 0 : index
    %205 = vector.load %arg5[%c0_50, %c0_51] : memref<2x128xf32, #tpu.memory_space<vmem>>, vector<2x128xf32>
    tpu.vector_store %arg5[%c0_50, %c0_51], %204 {strides = array<i32>} : memref<2x128xf32, #tpu.memory_space<vmem>>, vector<2x128xf32>,
    return
  }
}

</mosaic_0001>

<llo_original>
// kernel: densenet_gradcam_forward.1
$region0: #{densenet_gradcam_forward.1}
  #allocation0 [shape = 'u32[]', space=smem, size = 0x4, offset = 0x4, fixed_abs, tag = 'smem constant byte address 0x4 - core index']
  #allocation1 [shape = 'u32[144,128]{1,0:T(1,128)}', space=vmem, size = 0x12000, scoped, tag = 'internal scratch']
  %s0 = inlined_call_operand.vmem [shape: f32[2,256,4], index: 0, kind: input, shape index: {}]
  %s1 = inlined_call_operand.vmem [shape: f32[4,1920], index: 1, kind: input, shape index: {}]
  %s2 = inlined_call_operand.vmem [shape: f32[1,1920], index: 2, kind: input, shape index: {}]
  %s3 = inlined_call_operand.hbm [shape: f32[1920,128], index: 3, kind: input, shape index: {}]
  %s4 = inlined_call_operand.vmem [shape: f32[1,128], index: 4, kind: input, shape index: {}]
  %s5 = inlined_call_operand.hbm [shape: f32[2,128], index: 5, kind: output, shape index: {}]
  %s6 = sld [smem:[#allocation0]]
  $region34: #{densenet_gradcam_forward.1} parent=0
    _
  %s8 = ssub.s32 1, %s6
  %s9 = scalar_select 0, %s8, %s6
  $region1: #{densenet_gradcam_forward.1} parent=0
    #allocation2 [shape = 'u8[983040]{0}', space=vmem, size = 0xf0000, scoped, tag = 'input window, operand 3, single buffered']
    #allocation3 [shape = 's32[1]{0}', space=sflag, size = 0x4, scoped, tag = 'scoped memory for densenet_gradcam_forward.1']
    #allocation4 [shape = 's32[1]{0}', space=sflag, size = 0x4, scoped, tag = 'scoped memory for densenet_gradcam_forward.1']
    #allocation5 [shape = 'u8[1024]{0}', space=vmem, size = 0x400, scoped, tag = 'output window, operand 0, single buffered']
    %10 = vsyncpa [#allocation3], 0
    %11 = vsyncpa [#allocation4], 0
    // Predicated region
    $region2: #{densenet_gradcam_forward.1} parent=1 // pred_check
      _
    $region3: #{densenet_gradcam_forward.1} parent=1 // pred_check_branch
      %13 = sbr.rel (0) target = $region5
    $region4: #{densenet_gradcam_forward.1} parent=1 // pred_region
      _
    $region5: #{densenet_gradcam_forward.1} parent=1 // pred_fallthru
      _
    // Predicated region
    $region6: #{densenet_gradcam_forward.1} parent=1 // pred_check
      _
    $region7: #{densenet_gradcam_forward.1} parent=1 // pred_check_branch
      %15 = sbr.rel (0) target = $region9
    $region8: #{densenet_gradcam_forward.1} parent=1 // pred_region
      _
    $region9: #{densenet_gradcam_forward.1} parent=1 // pred_fallthru
      _
    // Predicated region
    $region10: #{densenet_gradcam_forward.1} parent=1 // pred_check
      _
    $region11: #{densenet_gradcam_forward.1} parent=1 // pred_check_branch
      %17 = sbr.rel (0) target = $region13
    $region12: #{densenet_gradcam_forward.1} parent=1 // pred_region
      _
    $region13: #{densenet_gradcam_forward.1} parent=1 // pred_fallthru
      _
    // Predicated region
    $region14: #{densenet_gradcam_forward.1} parent=1 // pred_check
      _
    $region15: #{densenet_gradcam_forward.1} parent=1 // pred_check_branch
      %19 = sbr.rel (0) target = $region17
    $region16: #{densenet_gradcam_forward.1} parent=1 // pred_region
      %s21 = ssub.s32 30720, 30720
      %22 = vsyncadd [#allocation3], %s21
      %s23 = sshll.u32 [#allocation2], 4
      %s24 = int_to_ptr.vmem [resolvable:$true] %s23
      %29 = dma.hbm_to_vmem [thread:$0]  %s3, 30720, %s24, [#allocation3], 128, 128, 8
    $region17: #{densenet_gradcam_forward.1} parent=1 // pred_fallthru
      _
    // Predicated region
    $region18: #{densenet_gradcam_forward.1} parent=1 // pred_check
      _
    $region19: #{densenet_gradcam_forward.1} parent=1 // pred_check_branch
      %31 = sbr.rel (0) target = $region21
    $region20: #{densenet_gradcam_forward.1} parent=1 // pred_region
      _
    $region21: #{densenet_gradcam_forward.1} parent=1 // pred_fallthru
      _
    // Predicated region
    $region22: #{densenet_gradcam_forward.1} parent=1 // pred_check
      _
    $region23: #{densenet_gradcam_forward.1} parent=1 // pred_check_branch
      %33 = sbr.rel (0) target = $region25
    $region24: #{densenet_gradcam_forward.1} parent=1 // pred_region
      %34 = dma.done [#allocation3], 30720
    $region25: #{densenet_gradcam_forward.1} parent=1 // pred_fallthru
      _
    %v35 = vld [vmem:[%s0] sm:$0xff]
    %v36 = vld [vmem:[%s0 + $0x8] sm:$0xff]
    %v37 = vld [vmem:[%s0 + $0x10] sm:$0xff]
    %v38 = vld [vmem:[%s0 + $0x18] sm:$0xff]
    %v39 = vld [vmem:[%s0 + $0x20] sm:$0xff]
    %v40 = vld [vmem:[%s0 + $0x28] sm:$0xff]
    %v41 = vld [vmem:[%s0 + $0x30] sm:$0xff]
    %v42 = vld [vmem:[%s0 + $0x38] sm:$0xff]
    %v43 = vld [vmem:[%s0 + $0x40] sm:$0xff]
    %v44 = vld [vmem:[%s0 + $0x48] sm:$0xff]
    %v45 = vld [vmem:[%s0 + $0x50] sm:$0xff]
    %v46 = vld [vmem:[%s0 + $0x58] sm:$0xff]
    %v47 = vld [vmem:[%s0 + $0x60] sm:$0xff]
    %v48 = vld [vmem:[%s0 + $0x68] sm:$0xff]
    %v49 = vld [vmem:[%s0 + $0x70] sm:$0xff]
    %v50 = vld [vmem:[%s0 + $0x78] sm:$0xff]
    %v51 = vld [vmem:[%s0 + $0x80] sm:$0xff]
    %v52 = vld [vmem:[%s0 + $0x88] sm:$0xff]
    %v53 = vld [vmem:[%s0 + $0x90] sm:$0xff]
    %v54 = vld [vmem:[%s0 + $0x98] sm:$0xff]
    %v55 = vld [vmem:[%s0 + $0xa0] sm:$0xff]
    %v56 = vld [vmem:[%s0 + $0xa8] sm:$0xff]
    %v57 = vld [vmem:[%s0 + $0xb0] sm:$0xff]
    %v58 = vld [vmem:[%s0 + $0xb8] sm:$0xff]
    %v59 = vld [vmem:[%s0 + $0xc0] sm:$0xff]
    %v60 = vld [vmem:[%s0 + $0xc8] sm:$0xff]
    %v61 = vld [vmem:[%s0 + $0xd0] sm:$0xff]
    %v62 = vld [vmem:[%s0 + $0xd8] sm:$0xff]
    %v63 = vld [vmem:[%s0 + $0xe0] sm:$0xff]
    %v64 = vld [vmem:[%s0 + $0xe8] sm:$0xff]
    %v65 = vld [vmem:[%s0 + $0xf0] sm:$0xff]
    %v66 = vld [vmem:[%s0 + $0xf8] sm:$0xff]
    %v67 = vld [vmem:[%s0 + $0x100] sm:$0xff]
    %v68 = vld [vmem:[%s0 + $0x108] sm:$0xff]
    %v69 = vld [vmem:[%s0 + $0x110] sm:$0xff]
    %v70 = vld [vmem:[%s0 + $0x118] sm:$0xff]
    %v71 = vld [vmem:[%s0 + $0x120] sm:$0xff]
    %v72 = vld [vmem:[%s0 + $0x128] sm:$0xff]
    %v73 = vld [vmem:[%s0 + $0x130] sm:$0xff]
    %v74 = vld [vmem:[%s0 + $0x138] sm:$0xff]
    %v75 = vld [vmem:[%s0 + $0x140] sm:$0xff]
    %v76 = vld [vmem:[%s0 + $0x148] sm:$0xff]
    %v77 = vld [vmem:[%s0 + $0x150] sm:$0xff]
    %v78 = vld [vmem:[%s0 + $0x158] sm:$0xff]
    %v79 = vld [vmem:[%s0 + $0x160] sm:$0xff]
    %v80 = vld [vmem:[%s0 + $0x168] sm:$0xff]
    %v81 = vld [vmem:[%s0 + $0x170] sm:$0xff]
    %v82 = vld [vmem:[%s0 + $0x178] sm:$0xff]
    %v83 = vld [vmem:[%s0 + $0x180] sm:$0xff]
    %v84 = vld [vmem:[%s0 + $0x188] sm:$0xff]
    %v85 = vld [vmem:[%s0 + $0x190] sm:$0xff]
    %v86 = vld [vmem:[%s0 + $0x198] sm:$0xff]
    %v87 = vld [vmem:[%s0 + $0x1a0] sm:$0xff]
    %v88 = vld [vmem:[%s0 + $0x1a8] sm:$0xff]
    %v89 = vld [vmem:[%s0 + $0x1b0] sm:$0xff]
    %v90 = vld [vmem:[%s0 + $0x1b8] sm:$0xff]
    %v91 = vld [vmem:[%s0 + $0x1c0] sm:$0xff]
    %v92 = vld [vmem:[%s0 + $0x1c8] sm:$0xff]
    %v93 = vld [vmem:[%s0 + $0x1d0] sm:$0xff]
    %v94 = vld [vmem:[%s0 + $0x1d8] sm:$0xff]
    %v95 = vld [vmem:[%s0 + $0x1e0] sm:$0xff]
    %v96 = vld [vmem:[%s0 + $0x1e8] sm:$0xff]
    %v97 = vld [vmem:[%s0 + $0x1f0] sm:$0xff]
    %v98 = vld [vmem:[%s0 + $0x1f8] sm:$0xff]
    %v99 = vld [vmem:[%s1] sm:$0xff]
    %v100 = vld [vmem:[%s1 + $0x8] sm:$0xf]
    %v101 = vld [vmem:[%s2] sm:$0x7]
    %103 = vset.pattern.permute.xlu0 0
    %104 = vperm.xlu0 %103, %v35
    %v105 = vpop.permute.xlu0 %104
    %108 = vset.pattern.permute.xlu0 0
    %109 = vperm.xlu0 %108, %v36
    %v110 = vpop.permute.xlu0 %109
    %113 = vset.pattern.permute.xlu0 0
    %114 = vperm.xlu0 %113, %v37
    %v115 = vpop.permute.xlu0 %114
    %118 = vset.pattern.permute.xlu0 0
    %119 = vperm.xlu0 %118, %v38
    %v120 = vpop.permute.xlu0 %119
    %123 = vset.pattern.permute.xlu0 0
    %124 = vperm.xlu0 %123, %v39
    %v125 = vpop.permute.xlu0 %124
    %128 = vset.pattern.permute.xlu0 0
    %129 = vperm.xlu0 %128, %v40
    %v130 = vpop.permute.xlu0 %129
    %133 = vset.pattern.permute.xlu0 0
    %134 = vperm.xlu0 %133, %v41
    %v135 = vpop.permute.xlu0 %134
    %138 = vset.pattern.permute.xlu0 0
    %139 = vperm.xlu0 %138, %v42
    %v140 = vpop.permute.xlu0 %139
    %143 = vset.pattern.permute.xlu0 0
    %144 = vperm.xlu0 %143, %v43
    %v145 = vpop.permute.xlu0 %144
    %148 = vset.pattern.permute.xlu0 0
    %149 = vperm.xlu0 %148, %v44
    %v150 = vpop.permute.xlu0 %149
    %153 = vset.pattern.permute.xlu0 0
    %154 = vperm.xlu0 %153, %v45
    %v155 = vpop.permute.xlu0 %154
    %158 = vset.pattern.permute.xlu0 0
    %159 = vperm.xlu0 %158, %v46
    %v160 = vpop.permute.xlu0 %159
    %163 = vset.pattern.permute.xlu0 0
    %164 = vperm.xlu0 %163, %v47
    %v165 = vpop.permute.xlu0 %164
    %168 = vset.pattern.permute.xlu0 0
    %169 = vperm.xlu0 %168, %v48
    %v170 = vpop.permute.xlu0 %169
    %173 = vset.pattern.permute.xlu0 0
    %174 = vperm.xlu0 %173, %v49
    %v175 = vpop.permute.xlu0 %174
    %178 = vset.pattern.permute.xlu0 0
    %179 = vperm.xlu0 %178, %v50
    %v180 = vpop.permute.xlu0 %179
    %183 = vset.pattern.permute.xlu0 0
    %184 = vperm.xlu0 %183, %v51
    %v185 = vpop.permute.xlu0 %184
    %188 = vset.pattern.permute.xlu0 0
    %189 = vperm.xlu0 %188, %v52
    %v190 = vpop.permute.xlu0 %189
    %193 = vset.pattern.permute.xlu0 0
    %194 = vperm.xlu0 %193, %v53
    %v195 = vpop.permute.xlu0 %194
    %198 = vset.pattern.permute.xlu0 0
    %199 = vperm.xlu0 %198, %v54
    %v200 = vpop.permute.xlu0 %199
    %203 = vset.pattern.permute.xlu0 0
    %204 = vperm.xlu0 %203, %v55
    %v205 = vpop.permute.xlu0 %204
    %208 = vset.pattern.permute.xlu0 0
    %209 = vperm.xlu0 %208, %v56
    %v210 = vpop.permute.xlu0 %209
    %213 = vset.pattern.permute.xlu0 0
    %214 = vperm.xlu0 %213, %v57
    %v215 = vpop.permute.xlu0 %214
    %218 = vset.pattern.permute.xlu0 0
    %219 = vperm.xlu0 %218, %v58
    %v220 = vpop.permute.xlu0 %219
    %223 = vset.pattern.permute.xlu0 0
    %224 = vperm.xlu0 %223, %v59
    %v225 = vpop.permute.xlu0 %224
    %228 = vset.pattern.permute.xlu0 0
    %229 = vperm.xlu0 %228, %v60
    %v230 = vpop.permute.xlu0 %229
    %233 = vset.pattern.permute.xlu0 0
    %234 = vperm.xlu0 %233, %v61
    %v235 = vpop.permute.xlu0 %234
    %238 = vset.pattern.permute.xlu0 0
    %239 = vperm.xlu0 %238, %v62
    %v240 = vpop.permute.xlu0 %239
    %243 = vset.pattern.permute.xlu0 0
    %244 = vperm.xlu0 %243, %v63
    %v245 = vpop.permute.xlu0 %244
    %248 = vset.pattern.permute.xlu0 0
    %249 = vperm.xlu0 %248, %v64
    %v250 = vpop.permute.xlu0 %249
    %253 = vset.pattern.permute.xlu0 0
    %254 = vperm.xlu0 %253, %v65
    %v255 = vpop.permute.xlu0 %254
    %258 = vset.pattern.permute.xlu0 0
    %259 = vperm.xlu0 %258, %v66
    %v260 = vpop.permute.xlu0 %259
    %263 = vset.pattern.permute.xlu0 0
    %264 = vperm.xlu0 %263, %v67
    %v265 = vpop.permute.xlu0 %264
    %268 = vset.pattern.permute.xlu0 0
    %269 = vperm.xlu0 %268, %v68
    %v270 = vpop.permute.xlu0 %269
    %273 = vset.pattern.permute.xlu0 0
    %274 = vperm.xlu0 %273, %v69
    %v275 = vpop.permute.xlu0 %274
    %278 = vset.pattern.permute.xlu0 0
    %279 = vperm.xlu0 %278, %v70
    %v280 = vpop.permute.xlu0 %279
    %283 = vset.pattern.permute.xlu0 0
    %284 = vperm.xlu0 %283, %v71
    %v285 = vpop.permute.xlu0 %284
    %288 = vset.pattern.permute.xlu0 0
    %289 = vperm.xlu0 %288, %v72
    %v290 = vpop.permute.xlu0 %289
    %293 = vset.pattern.permute.xlu0 0
    %294 = vperm.xlu0 %293, %v73
    %v295 = vpop.permute.xlu0 %294
    %298 = vset.pattern.permute.xlu0 0
    %299 = vperm.xlu0 %298, %v74
    %v300 = vpop.permute.xlu0 %299
    %303 = vset.pattern.permute.xlu0 0
    %304 = vperm.xlu0 %303, %v75
    %v305 = vpop.permute.xlu0 %304
    %308 = vset.pattern.permute.xlu0 0
    %309 = vperm.xlu0 %308, %v76
    %v310 = vpop.permute.xlu0 %309
    %313 = vset.pattern.permute.xlu0 0
    %314 = vperm.xlu0 %313, %v77
    %v315 = vpop.permute.xlu0 %314
    %318 = vset.pattern.permute.xlu0 0
    %319 = vperm.xlu0 %318, %v78
    %v320 = vpop.permute.xlu0 %319
    %323 = vset.pattern.permute.xlu0 0
    %324 = vperm.xlu0 %323, %v79
    %v325 = vpop.permute.xlu0 %324
    %328 = vset.pattern.permute.xlu0 0
    %329 = vperm.xlu0 %328, %v80
    %v330 = vpop.permute.xlu0 %329
    %333 = vset.pattern.permute.xlu0 0
    %334 = vperm.xlu0 %333, %v81
    %v335 = vpop.permute.xlu0 %334
    %338 = vset.pattern.permute.xlu0 0
    %339 = vperm.xlu0 %338, %v82
    %v340 = vpop.permute.xlu0 %339
    %343 = vset.pattern.permute.xlu0 0
    %344 = vperm.xlu0 %343, %v83
    %v345 = vpop.permute.xlu0 %344
    %348 = vset.pattern.permute.xlu0 0
    %349 = vperm.xlu0 %348, %v84
    %v350 = vpop.permute.xlu0 %349
    %353 = vset.pattern.permute.xlu0 0
    %354 = vperm.xlu0 %353, %v85
    %v355 = vpop.permute.xlu0 %354
    %358 = vset.pattern.permute.xlu0 0
    %359 = vperm.xlu0 %358, %v86
    %v360 = vpop.permute.xlu0 %359
    %363 = vset.pattern.permute.xlu0 0
    %364 = vperm.xlu0 %363, %v87
    %v365 = vpop.permute.xlu0 %364
    %368 = vset.pattern.permute.xlu0 0
    %369 = vperm.xlu0 %368, %v88
    %v370 = vpop.permute.xlu0 %369
    %373 = vset.pattern.permute.xlu0 0
    %374 = vperm.xlu0 %373, %v89
    %v375 = vpop.permute.xlu0 %374
    %378 = vset.pattern.permute.xlu0 0
    %379 = vperm.xlu0 %378, %v90
    %v380 = vpop.permute.xlu0 %379
    %383 = vset.pattern.permute.xlu0 0
    %384 = vperm.xlu0 %383, %v91
    %v385 = vpop.permute.xlu0 %384
    %388 = vset.pattern.permute.xlu0 0
    %389 = vperm.xlu0 %388, %v92
    %v390 = vpop.permute.xlu0 %389
    %393 = vset.pattern.permute.xlu0 0
    %394 = vperm.xlu0 %393, %v93
    %v395 = vpop.permute.xlu0 %394
    %398 = vset.pattern.permute.xlu0 0
    %399 = vperm.xlu0 %398, %v94
    %v400 = vpop.permute.xlu0 %399
    %403 = vset.pattern.permute.xlu0 0
    %404 = vperm.xlu0 %403, %v95
    %v405 = vpop.permute.xlu0 %404
    %408 = vset.pattern.permute.xlu0 0
    %409 = vperm.xlu0 %408, %v96
    %v410 = vpop.permute.xlu0 %409
    %413 = vset.pattern.permute.xlu0 0
    %414 = vperm.xlu0 %413, %v97
    %v415 = vpop.permute.xlu0 %414
    %418 = vset.pattern.permute.xlu0 0
    %419 = vperm.xlu0 %418, %v98
    %v420 = vpop.permute.xlu0 %419
    %v424 = vlaneseq
    %v425 = vshrl.u32 %v424, 7
    %v426 = vsub.s32 0, %v425
    %v427 = vrot.slane %v99, %v426
    %v428 = vlaneseq
    %v429 = vshrl.u32 %v428, 7
    %v430 = vsub.s32 4, %v429
    %v431 = vrot.slane %v99, %v430
    %v432 = vlaneseq
    %v433 = vshrl.u32 %v432, 7
    %v434 = vsub.s32 0, %v433
    %v435 = vrot.slane %v100, %v434
    %v439 = vlaneseq
    %v440 = vshrl.u32 %v439, 7
    %v441 = vsub.s32 0, %v440
    %v442 = vrot.slane %v427, %v441
    %v443 = vlaneseq
    %v444 = vshrl.u32 %v443, 7
    %v445 = vsub.s32 0, %v444
    %v446 = vrot.slane %v431, %v445
    %v447 = vlaneseq
    %v448 = vshrl.u32 %v447, 7
    %v449 = vsub.s32 0, %v448
    %v450 = vrot.slane %v435, %v449
    %v451 = vmul.f32 %v105, %v442
    %v452 = vmul.f32 %v105, %v446
    %v453 = vmul.f32 %v105, %v450
    %v454 = vmul.f32 %v110, %v442
    %v455 = vmul.f32 %v110, %v446
    %v456 = vmul.f32 %v110, %v450
    %v457 = vmul.f32 %v115, %v442
    %v458 = vmul.f32 %v115, %v446
    %v459 = vmul.f32 %v115, %v450
    %v460 = vmul.f32 %v120, %v442
    %v461 = vmul.f32 %v120, %v446
    %v462 = vmul.f32 %v120, %v450
    %v463 = vmul.f32 %v125, %v442
    %v464 = vmul.f32 %v125, %v446
    %v465 = vmul.f32 %v125, %v450
    %v466 = vmul.f32 %v130, %v442
    %v467 = vmul.f32 %v130, %v446
    %v468 = vmul.f32 %v130, %v450
    %v469 = vmul.f32 %v135, %v442
    %v470 = vmul.f32 %v135, %v446
    %v471 = vmul.f32 %v135, %v450
    %v472 = vmul.f32 %v140, %v442
    %v473 = vmul.f32 %v140, %v446
    %v474 = vmul.f32 %v140, %v450
    %v475 = vmul.f32 %v145, %v442
    %v476 = vmul.f32 %v145, %v446
    %v477 = vmul.f32 %v145, %v450
    %v478 = vmul.f32 %v150, %v442
    %v479 = vmul.f32 %v150, %v446
    %v480 = vmul.f32 %v150, %v450
    %v481 = vmul.f32 %v155, %v442
    %v482 = vmul.f32 %v155, %v446
    %v483 = vmul.f32 %v155, %v450
    %v484 = vmul.f32 %v160, %v442
    %v485 = vmul.f32 %v160, %v446
    %v486 = vmul.f32 %v160, %v450
    %v487 = vmul.f32 %v165, %v442
    %v488 = vmul.f32 %v165, %v446
    %v489 = vmul.f32 %v165, %v450
    %v490 = vmul.f32 %v170, %v442
    %v491 = vmul.f32 %v170, %v446
    %v492 = vmul.f32 %v170, %v450
    %v493 = vmul.f32 %v175, %v442
    %v494 = vmul.f32 %v175, %v446
    %v495 = vmul.f32 %v175, %v450
    %v496 = vmul.f32 %v180, %v442
    %v497 = vmul.f32 %v180, %v446
    %v498 = vmul.f32 %v180, %v450
    %v499 = vmul.f32 %v185, %v442
    %v500 = vmul.f32 %v185, %v446
    %v501 = vmul.f32 %v185, %v450
    %v502 = vmul.f32 %v190, %v442
    %v503 = vmul.f32 %v190, %v446
    %v504 = vmul.f32 %v190, %v450
    %v505 = vmul.f32 %v195, %v442
    %v506 = vmul.f32 %v195, %v446
    %v507 = vmul.f32 %v195, %v450
    %v508 = vmul.f32 %v200, %v442
    %v509 = vmul.f32 %v200, %v446
    %v510 = vmul.f32 %v200, %v450
    %v511 = vmul.f32 %v205, %v442
    %v512 = vmul.f32 %v205, %v446
    %v513 = vmul.f32 %v205, %v450
    %v514 = vmul.f32 %v210, %v442
    %v515 = vmul.f32 %v210, %v446
    %v516 = vmul.f32 %v210, %v450
    %v517 = vmul.f32 %v215, %v442
    %v518 = vmul.f32 %v215, %v446
    %v519 = vmul.f32 %v215, %v450
    %v520 = vmul.f32 %v220, %v442
    %v521 = vmul.f32 %v220, %v446
    %v522 = vmul.f32 %v220, %v450
    %v523 = vmul.f32 %v225, %v442
    %v524 = vmul.f32 %v225, %v446
    %v525 = vmul.f32 %v225, %v450
    %v526 = vmul.f32 %v230, %v442
    %v527 = vmul.f32 %v230, %v446
    %v528 = vmul.f32 %v230, %v450
    %v529 = vmul.f32 %v235, %v442
    %v530 = vmul.f32 %v235, %v446
    %v531 = vmul.f32 %v235, %v450
    %v532 = vmul.f32 %v240, %v442
    %v533 = vmul.f32 %v240, %v446
    %v534 = vmul.f32 %v240, %v450
    %v535 = vmul.f32 %v245, %v442
    %v536 = vmul.f32 %v245, %v446
    %v537 = vmul.f32 %v245, %v450
    %v538 = vmul.f32 %v250, %v442
    %v539 = vmul.f32 %v250, %v446
    %v540 = vmul.f32 %v250, %v450
    %v541 = vmul.f32 %v255, %v442
    %v542 = vmul.f32 %v255, %v446
    %v543 = vmul.f32 %v255, %v450
    %v544 = vmul.f32 %v260, %v442
    %v545 = vmul.f32 %v260, %v446
    %v546 = vmul.f32 %v260, %v450
    %v547 = vmul.f32 %v265, %v442
    %v548 = vmul.f32 %v265, %v446
    %v549 = vmul.f32 %v265, %v450
    %v550 = vmul.f32 %v270, %v442
    %v551 = vmul.f32 %v270, %v446
    %v552 = vmul.f32 %v270, %v450
    %v553 = vmul.f32 %v275, %v442
    %v554 = vmul.f32 %v275, %v446
    %v555 = vmul.f32 %v275, %v450
    %v556 = vmul.f32 %v280, %v442
    %v557 = vmul.f32 %v280, %v446
    %v558 = vmul.f32 %v280, %v450
    %v559 = vmul.f32 %v285, %v442
    %v560 = vmul.f32 %v285, %v446
    %v561 = vmul.f32 %v285, %v450
    %v562 = vmul.f32 %v290, %v442
    %v563 = vmul.f32 %v290, %v446
    %v564 = vmul.f32 %v290, %v450
    %v565 = vmul.f32 %v295, %v442
    %v566 = vmul.f32 %v295, %v446
    %v567 = vmul.f32 %v295, %v450
    %v568 = vmul.f32 %v300, %v442
    %v569 = vmul.f32 %v300, %v446
    %v570 = vmul.f32 %v300, %v450
    %v571 = vmul.f32 %v305, %v442
    %v572 = vmul.f32 %v305, %v446
    %v573 = vmul.f32 %v305, %v450
    %v574 = vmul.f32 %v310, %v442
    %v575 = vmul.f32 %v310, %v446
    %v576 = vmul.f32 %v310, %v450
    %v577 = vmul.f32 %v315, %v442
    %v578 = vmul.f32 %v315, %v446
    %v579 = vmul.f32 %v315, %v450
    %v580 = vmul.f32 %v320, %v442
    %v581 = vmul.f32 %v320, %v446
    %v582 = vmul.f32 %v320, %v450
    %v583 = vmul.f32 %v325, %v442
    %v584 = vmul.f32 %v325, %v446
    %v585 = vmul.f32 %v325, %v450
    %v586 = vmul.f32 %v330, %v442
    %v587 = vmul.f32 %v330, %v446
    %v588 = vmul.f32 %v330, %v450
    %v589 = vmul.f32 %v335, %v442
    %v590 = vmul.f32 %v335, %v446
    %v591 = vmul.f32 %v335, %v450
    %v592 = vmul.f32 %v340, %v442
    %v593 = vmul.f32 %v340, %v446
    %v594 = vmul.f32 %v340, %v450
    %v595 = vmul.f32 %v345, %v442
    %v596 = vmul.f32 %v345, %v446
    %v597 = vmul.f32 %v345, %v450
    %v598 = vmul.f32 %v350, %v442
    %v599 = vmul.f32 %v350, %v446
    %v600 = vmul.f32 %v350, %v450
    %v601 = vmul.f32 %v355, %v442
    %v602 = vmul.f32 %v355, %v446
    %v603 = vmul.f32 %v355, %v450
    %v604 = vmul.f32 %v360, %v442
    %v605 = vmul.f32 %v360, %v446
    %v606 = vmul.f32 %v360, %v450
    %v607 = vmul.f32 %v365, %v442
    %v608 = vmul.f32 %v365, %v446
    %v609 = vmul.f32 %v365, %v450
    %v610 = vmul.f32 %v370, %v442
    %v611 = vmul.f32 %v370, %v446
    %v612 = vmul.f32 %v370, %v450
    %v613 = vmul.f32 %v375, %v442
    %v614 = vmul.f32 %v375, %v446
    %v615 = vmul.f32 %v375, %v450
    %v616 = vmul.f32 %v380, %v442
    %v617 = vmul.f32 %v380, %v446
    %v618 = vmul.f32 %v380, %v450
    %v619 = vmul.f32 %v385, %v442
    %v620 = vmul.f32 %v385, %v446
    %v621 = vmul.f32 %v385, %v450
    %v622 = vmul.f32 %v390, %v442
    %v623 = vmul.f32 %v390, %v446
    %v624 = vmul.f32 %v390, %v450
    %v625 = vmul.f32 %v395, %v442
    %v626 = vmul.f32 %v395, %v446
    %v627 = vmul.f32 %v395, %v450
    %v628 = vmul.f32 %v400, %v442
    %v629 = vmul.f32 %v400, %v446
    %v630 = vmul.f32 %v400, %v450
    %v631 = vmul.f32 %v405, %v442
    %v632 = vmul.f32 %v405, %v446
    %v633 = vmul.f32 %v405, %v450
    %v634 = vmul.f32 %v410, %v442
    %v635 = vmul.f32 %v410, %v446
    %v636 = vmul.f32 %v410, %v450
    %v637 = vmul.f32 %v415, %v442
    %v638 = vmul.f32 %v415, %v446
    %v639 = vmul.f32 %v415, %v450
    %v640 = vmul.f32 %v420, %v442
    %v641 = vmul.f32 %v420, %v446
    %v642 = vmul.f32 %v420, %v450
    %643 = vset.pattern.permute.xlu0 1
    %644 = vperm.xlu0 %643, %v35
    %v645 = vpop.permute.xlu0 %644
    %647 = vset.pattern.permute.xlu0 1
    %648 = vperm.xlu0 %647, %v36
    %v649 = vpop.permute.xlu0 %648
    %651 = vset.pattern.permute.xlu0 1
    %652 = vperm.xlu0 %651, %v37
    %v653 = vpop.permute.xlu0 %652
    %655 = vset.pattern.permute.xlu0 1
    %656 = vperm.xlu0 %655, %v38
    %v657 = vpop.permute.xlu0 %656
    %659 = vset.pattern.permute.xlu0 1
    %660 = vperm.xlu0 %659, %v39
    %v661 = vpop.permute.xlu0 %660
    %663 = vset.pattern.permute.xlu0 1
    %664 = vperm.xlu0 %663, %v40
    %v665 = vpop.permute.xlu0 %664
    %667 = vset.pattern.permute.xlu0 1
    %668 = vperm.xlu0 %667, %v41
    %v669 = vpop.permute.xlu0 %668
    %671 = vset.pattern.permute.xlu0 1
    %672 = vperm.xlu0 %671, %v42
    %v673 = vpop.permute.xlu0 %672
    %675 = vset.pattern.permute.xlu0 1
    %676 = vperm.xlu0 %675, %v43
    %v677 = vpop.permute.xlu0 %676
    %679 = vset.pattern.permute.xlu0 1
    %680 = vperm.xlu0 %679, %v44
    %v681 = vpop.permute.xlu0 %680
    %683 = vset.pattern.permute.xlu0 1
    %684 = vperm.xlu0 %683, %v45
    %v685 = vpop.permute.xlu0 %684
    %687 = vset.pattern.permute.xlu0 1
    %688 = vperm.xlu0 %687, %v46
    %v689 = vpop.permute.xlu0 %688
    %691 = vset.pattern.permute.xlu0 1
    %692 = vperm.xlu0 %691, %v47
    %v693 = vpop.permute.xlu0 %692
    %695 = vset.pattern.permute.xlu0 1
    %696 = vperm.xlu0 %695, %v48
    %v697 = vpop.permute.xlu0 %696
    %699 = vset.pattern.permute.xlu0 1
    %700 = vperm.xlu0 %699, %v49
    %v701 = vpop.permute.xlu0 %700
    %703 = vset.pattern.permute.xlu0 1
    %704 = vperm.xlu0 %703, %v50
    %v705 = vpop.permute.xlu0 %704
    %707 = vset.pattern.permute.xlu0 1
    %708 = vperm.xlu0 %707, %v51
    %v709 = vpop.permute.xlu0 %708
    %711 = vset.pattern.permute.xlu0 1
    %712 = vperm.xlu0 %711, %v52
    %v713 = vpop.permute.xlu0 %712
    %715 = vset.pattern.permute.xlu0 1
    %716 = vperm.xlu0 %715, %v53
    %v717 = vpop.permute.xlu0 %716
    %719 = vset.pattern.permute.xlu0 1
    %720 = vperm.xlu0 %719, %v54
    %v721 = vpop.permute.xlu0 %720
    %723 = vset.pattern.permute.xlu0 1
    %724 = vperm.xlu0 %723, %v55
    %v725 = vpop.permute.xlu0 %724
    %727 = vset.pattern.permute.xlu0 1
    %728 = vperm.xlu0 %727, %v56
    %v729 = vpop.permute.xlu0 %728
    %731 = vset.pattern.permute.xlu0 1
    %732 = vperm.xlu0 %731, %v57
    %v733 = vpop.permute.xlu0 %732
    %735 = vset.pattern.permute.xlu0 1
    %736 = vperm.xlu0 %735, %v58
    %v737 = vpop.permute.xlu0 %736
    %739 = vset.pattern.permute.xlu0 1
    %740 = vperm.xlu0 %739, %v59
    %v741 = vpop.permute.xlu0 %740
    %743 = vset.pattern.permute.xlu0 1
    %744 = vperm.xlu0 %743, %v60
    %v745 = vpop.permute.xlu0 %744
    %747 = vset.pattern.permute.xlu0 1
    %748 = vperm.xlu0 %747, %v61
    %v749 = vpop.permute.xlu0 %748
    %751 = vset.pattern.permute.xlu0 1
    %752 = vperm.xlu0 %751, %v62
    %v753 = vpop.permute.xlu0 %752
    %755 = vset.pattern.permute.xlu0 1
    %756 = vperm.xlu0 %755, %v63
    %v757 = vpop.permute.xlu0 %756
    %759 = vset.pattern.permute.xlu0 1
    %760 = vperm.xlu0 %759, %v64
    %v761 = vpop.permute.xlu0 %760
    %763 = vset.pattern.permute.xlu0 1
    %764 = vperm.xlu0 %763, %v65
    %v765 = vpop.permute.xlu0 %764
    %767 = vset.pattern.permute.xlu0 1
    %768 = vperm.xlu0 %767, %v66
    %v769 = vpop.permute.xlu0 %768
    %771 = vset.pattern.permute.xlu0 1
    %772 = vperm.xlu0 %771, %v67
    %v773 = vpop.permute.xlu0 %772
    %775 = vset.pattern.permute.xlu0 1
    %776 = vperm.xlu0 %775, %v68
    %v777 = vpop.permute.xlu0 %776
    %779 = vset.pattern.permute.xlu0 1
    %780 = vperm.xlu0 %779, %v69
    %v781 = vpop.permute.xlu0 %780
    %783 = vset.pattern.permute.xlu0 1
    %784 = vperm.xlu0 %783, %v70
    %v785 = vpop.permute.xlu0 %784
    %787 = vset.pattern.permute.xlu0 1
    %788 = vperm.xlu0 %787, %v71
    %v789 = vpop.permute.xlu0 %788
    %791 = vset.pattern.permute.xlu0 1
    %792 = vperm.xlu0 %791, %v72
    %v793 = vpop.permute.xlu0 %792
    %795 = vset.pattern.permute.xlu0 1
    %796 = vperm.xlu0 %795, %v73
    %v797 = vpop.permute.xlu0 %796
    %799 = vset.pattern.permute.xlu0 1
    %800 = vperm.xlu0 %799, %v74
    %v801 = vpop.permute.xlu0 %800
    %803 = vset.pattern.permute.xlu0 1
    %804 = vperm.xlu0 %803, %v75
    %v805 = vpop.permute.xlu0 %804
    %807 = vset.pattern.permute.xlu0 1
    %808 = vperm.xlu0 %807, %v76
    %v809 = vpop.permute.xlu0 %808
    %811 = vset.pattern.permute.xlu0 1
    %812 = vperm.xlu0 %811, %v77
    %v813 = vpop.permute.xlu0 %812
    %815 = vset.pattern.permute.xlu0 1
    %816 = vperm.xlu0 %815, %v78
    %v817 = vpop.permute.xlu0 %816
    %819 = vset.pattern.permute.xlu0 1
    %820 = vperm.xlu0 %819, %v79
    %v821 = vpop.permute.xlu0 %820
    %823 = vset.pattern.permute.xlu0 1
    %824 = vperm.xlu0 %823, %v80
    %v825 = vpop.permute.xlu0 %824
    %827 = vset.pattern.permute.xlu0 1
    %828 = vperm.xlu0 %827, %v81
    %v829 = vpop.permute.xlu0 %828
    %831 = vset.pattern.permute.xlu0 1
    %832 = vperm.xlu0 %831, %v82
    %v833 = vpop.permute.xlu0 %832
    %835 = vset.pattern.permute.xlu0 1
    %836 = vperm.xlu0 %835, %v83
    %v837 = vpop.permute.xlu0 %836
    %839 = vset.pattern.permute.xlu0 1
    %840 = vperm.xlu0 %839, %v84
    %v841 = vpop.permute.xlu0 %840
    %843 = vset.pattern.permute.xlu0 1
    %844 = vperm.xlu0 %843, %v85
    %v845 = vpop.permute.xlu0 %844
    %847 = vset.pattern.permute.xlu0 1
    %848 = vperm.xlu0 %847, %v86
    %v849 = vpop.permute.xlu0 %848
    %851 = vset.pattern.permute.xlu0 1
    %852 = vperm.xlu0 %851, %v87
    %v853 = vpop.permute.xlu0 %852
    %855 = vset.pattern.permute.xlu0 1
    %856 = vperm.xlu0 %855, %v88
    %v857 = vpop.permute.xlu0 %856
    %859 = vset.pattern.permute.xlu0 1
    %860 = vperm.xlu0 %859, %v89
    %v861 = vpop.permute.xlu0 %860
    %863 = vset.pattern.permute.xlu0 1
    %864 = vperm.xlu0 %863, %v90
    %v865 = vpop.permute.xlu0 %864
    %867 = vset.pattern.permute.xlu0 1
    %868 = vperm.xlu0 %867, %v91
    %v869 = vpop.permute.xlu0 %868
    %871 = vset.pattern.permute.xlu0 1
    %872 = vperm.xlu0 %871, %v92
    %v873 = vpop.permute.xlu0 %872
    %875 = vset.pattern.permute.xlu0 1
    %876 = vperm.xlu0 %875, %v93
    %v877 = vpop.permute.xlu0 %876
    %879 = vset.pattern.permute.xlu0 1
    %880 = vperm.xlu0 %879, %v94
    %v881 = vpop.permute.xlu0 %880
    %883 = vset.pattern.permute.xlu0 1
    %884 = vperm.xlu0 %883, %v95
    %v885 = vpop.permute.xlu0 %884
    %887 = vset.pattern.permute.xlu0 1
    %888 = vperm.xlu0 %887, %v96
    %v889 = vpop.permute.xlu0 %888
    %891 = vset.pattern.permute.xlu0 1
    %892 = vperm.xlu0 %891, %v97
    %v893 = vpop.permute.xlu0 %892
    %895 = vset.pattern.permute.xlu0 1
    %896 = vperm.xlu0 %895, %v98
    %v897 = vpop.permute.xlu0 %896
    %v899 = vlaneseq
    %v900 = vshrl.u32 %v899, 7
    %v901 = vsub.s32 1, %v900
    %v902 = vrot.slane %v99, %v901
    %v903 = vlaneseq
    %v904 = vshrl.u32 %v903, 7
    %v905 = vsub.s32 5, %v904
    %v906 = vrot.slane %v99, %v905
    %v907 = vlaneseq
    %v908 = vshrl.u32 %v907, 7
    %v909 = vsub.s32 1, %v908
    %v910 = vrot.slane %v100, %v909
    %v914 = vlaneseq
    %v915 = vshrl.u32 %v914, 7
    %v916 = vsub.s32 1, %v915
    %v917 = vrot.slane %v902, %v916
    %v918 = vlaneseq
    %v919 = vshrl.u32 %v918, 7
    %v920 = vsub.s32 1, %v919
    %v921 = vrot.slane %v906, %v920
    %v922 = vlaneseq
    %v923 = vshrl.u32 %v922, 7
    %v924 = vsub.s32 1, %v923
    %v925 = vrot.slane %v910, %v924
    %v926 = vmul.f32 %v645, %v917
    %v927 = vmul.f32 %v645, %v921
    %v928 = vmul.f32 %v645, %v925
    %v929 = vmul.f32 %v649, %v917
    %v930 = vmul.f32 %v649, %v921
    %v931 = vmul.f32 %v649, %v925
    %v932 = vmul.f32 %v653, %v917
    %v933 = vmul.f32 %v653, %v921
    %v934 = vmul.f32 %v653, %v925
    %v935 = vmul.f32 %v657, %v917
    %v936 = vmul.f32 %v657, %v921
    %v937 = vmul.f32 %v657, %v925
    %v938 = vmul.f32 %v661, %v917
    %v939 = vmul.f32 %v661, %v921
    %v940 = vmul.f32 %v661, %v925
    %v941 = vmul.f32 %v665, %v917
    %v942 = vmul.f32 %v665, %v921
    %v943 = vmul.f32 %v665, %v925
    %v944 = vmul.f32 %v669, %v917
    %v945 = vmul.f32 %v669, %v921
    %v946 = vmul.f32 %v669, %v925
    %v947 = vmul.f32 %v673, %v917
    %v948 = vmul.f32 %v673, %v921
    %v949 = vmul.f32 %v673, %v925
    %v950 = vmul.f32 %v677, %v917
    %v951 = vmul.f32 %v677, %v921
    %v952 = vmul.f32 %v677, %v925
    %v953 = vmul.f32 %v681, %v917
    %v954 = vmul.f32 %v681, %v921
    %v955 = vmul.f32 %v681, %v925
    %v956 = vmul.f32 %v685, %v917
    %v957 = vmul.f32 %v685, %v921
    %v958 = vmul.f32 %v685, %v925
    %v959 = vmul.f32 %v689, %v917
    %v960 = vmul.f32 %v689, %v921
    %v961 = vmul.f32 %v689, %v925
    %v962 = vmul.f32 %v693, %v917
    %v963 = vmul.f32 %v693, %v921
    %v964 = vmul.f32 %v693, %v925
    %v965 = vmul.f32 %v697, %v917
    %v966 = vmul.f32 %v697, %v921
    %v967 = vmul.f32 %v697, %v925
    %v968 = vmul.f32 %v701, %v917
    %v969 = vmul.f32 %v701, %v921
    %v970 = vmul.f32 %v701, %v925
    %v971 = vmul.f32 %v705, %v917
    %v972 = vmul.f32 %v705, %v921
    %v973 = vmul.f32 %v705, %v925
    %v974 = vmul.f32 %v709, %v917
    %v975 = vmul.f32 %v709, %v921
    %v976 = vmul.f32 %v709, %v925
    %v977 = vmul.f32 %v713, %v917
    %v978 = vmul.f32 %v713, %v921
    %v979 = vmul.f32 %v713, %v925
    %v980 = vmul.f32 %v717, %v917
    %v981 = vmul.f32 %v717, %v921
    %v982 = vmul.f32 %v717, %v925
    %v983 = vmul.f32 %v721, %v917
    %v984 = vmul.f32 %v721, %v921
    %v985 = vmul.f32 %v721, %v925
    %v986 = vmul.f32 %v725, %v917
    %v987 = vmul.f32 %v725, %v921
    %v988 = vmul.f32 %v725, %v925
    %v989 = vmul.f32 %v729, %v917
    %v990 = vmul.f32 %v729, %v921
    %v991 = vmul.f32 %v729, %v925
    %v992 = vmul.f32 %v733, %v917
    %v993 = vmul.f32 %v733, %v921
    %v994 = vmul.f32 %v733, %v925
    %v995 = vmul.f32 %v737, %v917
    %v996 = vmul.f32 %v737, %v921
    %v997 = vmul.f32 %v737, %v925
    %v998 = vmul.f32 %v741, %v917
    %v999 = vmul.f32 %v741, %v921
    %v1000 = vmul.f32 %v741, %v925
    %v1001 = vmul.f32 %v745, %v917
    %v1002 = vmul.f32 %v745, %v921
    %v1003 = vmul.f32 %v745, %v925
    %v1004 = vmul.f32 %v749, %v917
    %v1005 = vmul.f32 %v749, %v921
    %v1006 = vmul.f32 %v749, %v925
    %v1007 = vmul.f32 %v753, %v917
    %v1008 = vmul.f32 %v753, %v921
    %v1009 = vmul.f32 %v753, %v925
    %v1010 = vmul.f32 %v757, %v917
    %v1011 = vmul.f32 %v757, %v921
    %v1012 = vmul.f32 %v757, %v925
    %v1013 = vmul.f32 %v761, %v917
    %v1014 = vmul.f32 %v761, %v921
    %v1015 = vmul.f32 %v761, %v925
    %v1016 = vmul.f32 %v765, %v917
    %v1017 = vmul.f32 %v765, %v921
    %v1018 = vmul.f32 %v765, %v925
    %v1019 = vmul.f32 %v769, %v917
    %v1020 = vmul.f32 %v769, %v921
    %v1021 = vmul.f32 %v769, %v925
    %v1022 = vmul.f32 %v773, %v917
    %v1023 = vmul.f32 %v773, %v921
    %v1024 = vmul.f32 %v773, %v925
    %v1025 = vmul.f32 %v777, %v917
    %v1026 = vmul.f32 %v777, %v921
    %v1027 = vmul.f32 %v777, %v925
    %v1028 = vmul.f32 %v781, %v917
    %v1029 = vmul.f32 %v781, %v921
    %v1030 = vmul.f32 %v781, %v925
    %v1031 = vmul.f32 %v785, %v917
    %v1032 = vmul.f32 %v785, %v921
    %v1033 = vmul.f32 %v785, %v925
    %v1034 = vmul.f32 %v789, %v917
    %v1035 = vmul.f32 %v789, %v921
    %v1036 = vmul.f32 %v789, %v925
    %v1037 = vmul.f32 %v793, %v917
    %v1038 = vmul.f32 %v793, %v921
    %v1039 = vmul.f32 %v793, %v925
    %v1040 = vmul.f32 %v797, %v917
    %v1041 = vmul.f32 %v797, %v921
    %v1042 = vmul.f32 %v797, %v925
    %v1043 = vmul.f32 %v801, %v917
    %v1044 = vmul.f32 %v801, %v921
    %v1045 = vmul.f32 %v801, %v925
    %v1046 = vmul.f32 %v805, %v917
    %v1047 = vmul.f32 %v805, %v921
    %v1048 = vmul.f32 %v805, %v925
    %v1049 = vmul.f32 %v809, %v917
    %v1050 = vmul.f32 %v809, %v921
    %v1051 = vmul.f32 %v809, %v925
    %v1052 = vmul.f32 %v813, %v917
    %v1053 = vmul.f32 %v813, %v921
    %v1054 = vmul.f32 %v813, %v925
    %v1055 = vmul.f32 %v817, %v917
    %v1056 = vmul.f32 %v817, %v921
    %v1057 = vmul.f32 %v817, %v925
    %v1058 = vmul.f32 %v821, %v917
    %v1059 = vmul.f32 %v821, %v921
    %v1060 = vmul.f32 %v821, %v925
    %v1061 = vmul.f32 %v825, %v917
    %v1062 = vmul.f32 %v825, %v921
    %v1063 = vmul.f32 %v825, %v925
    %v1064 = vmul.f32 %v829, %v917
    %v1065 = vmul.f32 %v829, %v921
    %v1066 = vmul.f32 %v829, %v925
    %v1067 = vmul.f32 %v833, %v917
    %v1068 = vmul.f32 %v833, %v921
    %v1069 = vmul.f32 %v833, %v925
    %v1070 = vmul.f32 %v837, %v917
    %v1071 = vmul.f32 %v837, %v921
    %v1072 = vmul.f32 %v837, %v925
    %v1073 = vmul.f32 %v841, %v917
    %v1074 = vmul.f32 %v841, %v921
    %v1075 = vmul.f32 %v841, %v925
    %v1076 = vmul.f32 %v845, %v917
    %v1077 = vmul.f32 %v845, %v921
    %v1078 = vmul.f32 %v845, %v925
    %v1079 = vmul.f32 %v849, %v917
    %v1080 = vmul.f32 %v849, %v921
    %v1081 = vmul.f32 %v849, %v925
    %v1082 = vmul.f32 %v853, %v917
    %v1083 = vmul.f32 %v853, %v921
    %v1084 = vmul.f32 %v853, %v925
    %v1085 = vmul.f32 %v857, %v917
    %v1086 = vmul.f32 %v857, %v921
    %v1087 = vmul.f32 %v857, %v925
    %v1088 = vmul.f32 %v861, %v917
    %v1089 = vmul.f32 %v861, %v921
    %v1090 = vmul.f32 %v861, %v925
    %v1091 = vmul.f32 %v865, %v917
    %v1092 = vmul.f32 %v865, %v921
    %v1093 = vmul.f32 %v865, %v925
    %v1094 = vmul.f32 %v869, %v917
    %v1095 = vmul.f32 %v869, %v921
    %v1096 = vmul.f32 %v869, %v925
    %v1097 = vmul.f32 %v873, %v917
    %v1098 = vmul.f32 %v873, %v921
    %v1099 = vmul.f32 %v873, %v925
    %v1100 = vmul.f32 %v877, %v917
    %v1101 = vmul.f32 %v877, %v921
    %v1102 = vmul.f32 %v877, %v925
    %v1103 = vmul.f32 %v881, %v917
    %v1104 = vmul.f32 %v881, %v921
    %v1105 = vmul.f32 %v881, %v925
    %v1106 = vmul.f32 %v885, %v917
    %v1107 = vmul.f32 %v885, %v921
    %v1108 = vmul.f32 %v885, %v925
    %v1109 = vmul.f32 %v889, %v917
    %v1110 = vmul.f32 %v889, %v921
    %v1111 = vmul.f32 %v889, %v925
    %v1112 = vmul.f32 %v893, %v917
    %v1113 = vmul.f32 %v893, %v921
    %v1114 = vmul.f32 %v893, %v925
    %v1115 = vmul.f32 %v897, %v917
    %v1116 = vmul.f32 %v897, %v921
    %v1117 = vmul.f32 %v897, %v925
    %v1118 = vadd.f32 %v451, %v926
    %v1119 = vadd.f32 %v452, %v927
    %v1120 = vadd.f32 %v453, %v928
    %v1121 = vadd.f32 %v454, %v929
    %v1122 = vadd.f32 %v455, %v930
    %v1123 = vadd.f32 %v456, %v931
    %v1124 = vadd.f32 %v457, %v932
    %v1125 = vadd.f32 %v458, %v933
    %v1126 = vadd.f32 %v459, %v934
    %v1127 = vadd.f32 %v460, %v935
    %v1128 = vadd.f32 %v461, %v936
    %v1129 = vadd.f32 %v462, %v937
    %v1130 = vadd.f32 %v463, %v938
    %v1131 = vadd.f32 %v464, %v939
    %v1132 = vadd.f32 %v465, %v940
    %v1133 = vadd.f32 %v466, %v941
    %v1134 = vadd.f32 %v467, %v942
    %v1135 = vadd.f32 %v468, %v943
    %v1136 = vadd.f32 %v469, %v944
    %v1137 = vadd.f32 %v470, %v945
    %v1138 = vadd.f32 %v471, %v946
    %v1139 = vadd.f32 %v472, %v947
    %v1140 = vadd.f32 %v473, %v948
    %v1141 = vadd.f32 %v474, %v949
    %v1142 = vadd.f32 %v475, %v950
    %v1143 = vadd.f32 %v476, %v951
    %v1144 = vadd.f32 %v477, %v952
    %v1145 = vadd.f32 %v478, %v953
    %v1146 = vadd.f32 %v479, %v954
    %v1147 = vadd.f32 %v480, %v955
    %v1148 = vadd.f32 %v481, %v956
    %v1149 = vadd.f32 %v482, %v957
    %v1150 = vadd.f32 %v483, %v958
    %v1151 = vadd.f32 %v484, %v959
    %v1152 = vadd.f32 %v485, %v960
    %v1153 = vadd.f32 %v486, %v961
    %v1154 = vadd.f32 %v487, %v962
    %v1155 = vadd.f32 %v488, %v963
    %v1156 = vadd.f32 %v489, %v964
    %v1157 = vadd.f32 %v490, %v965
    %v1158 = vadd.f32 %v491, %v966
    %v1159 = vadd.f32 %v492, %v967
    %v1160 = vadd.f32 %v493, %v968
    %v1161 = vadd.f32 %v494, %v969
    %v1162 = vadd.f32 %v495, %v970
    %v1163 = vadd.f32 %v496, %v971
    %v1164 = vadd.f32 %v497, %v972
    %v1165 = vadd.f32 %v498, %v973
    %v1166 = vadd.f32 %v499, %v974
    %v1167 = vadd.f32 %v500, %v975
    %v1168 = vadd.f32 %v501, %v976
    %v1169 = vadd.f32 %v502, %v977
    %v1170 = vadd.f32 %v503, %v978
    %v1171 = vadd.f32 %v504, %v979
    %v1172 = vadd.f32 %v505, %v980
    %v1173 = vadd.f32 %v506, %v981
    %v1174 = vadd.f32 %v507, %v982
    %v1175 = vadd.f32 %v508, %v983
    %v1176 = vadd.f32 %v509, %v984
    %v1177 = vadd.f32 %v510, %v985
    %v1178 = vadd.f32 %v511, %v986
    %v1179 = vadd.f32 %v512, %v987
    %v1180 = vadd.f32 %v513, %v988
    %v1181 = vadd.f32 %v514, %v989
    %v1182 = vadd.f32 %v515, %v990
    %v1183 = vadd.f32 %v516, %v991
    %v1184 = vadd.f32 %v517, %v992
    %v1185 = vadd.f32 %v518, %v993
    %v1186 = vadd.f32 %v519, %v994
    %v1187 = vadd.f32 %v520, %v995
    %v1188 = vadd.f32 %v521, %v996
    %v1189 = vadd.f32 %v522, %v997
    %v1190 = vadd.f32 %v523, %v998
    %v1191 = vadd.f32 %v524, %v999
    %v1192 = vadd.f32 %v525, %v1000
    %v1193 = vadd.f32 %v526, %v1001
    %v1194 = vadd.f32 %v527, %v1002
    %v1195 = vadd.f32 %v528, %v1003
    %v1196 = vadd.f32 %v529, %v1004
    %v1197 = vadd.f32 %v530, %v1005
    %v1198 = vadd.f32 %v531, %v1006
    %v1199 = vadd.f32 %v532, %v1007
    %v1200 = vadd.f32 %v533, %v1008
    %v1201 = vadd.f32 %v534, %v1009
    %v1202 = vadd.f32 %v535, %v1010
    %v1203 = vadd.f32 %v536, %v1011
    %v1204 = vadd.f32 %v537, %v1012
    %v1205 = vadd.f32 %v538, %v1013
    %v1206 = vadd.f32 %v539, %v1014
    %v1207 = vadd.f32 %v540, %v1015
    %v1208 = vadd.f32 %v541, %v1016
    %v1209 = vadd.f32 %v542, %v1017
    %v1210 = vadd.f32 %v543, %v1018
    %v1211 = vadd.f32 %v544, %v1019
    %v1212 = vadd.f32 %v545, %v1020
    %v1213 = vadd.f32 %v546, %v1021
    %v1214 = vadd.f32 %v547, %v1022
    %v1215 = vadd.f32 %v548, %v1023
    %v1216 = vadd.f32 %v549, %v1024
    %v1217 = vadd.f32 %v550, %v1025
    %v1218 = vadd.f32 %v551, %v1026
    %v1219 = vadd.f32 %v552, %v1027
    %v1220 = vadd.f32 %v553, %v1028
    %v1221 = vadd.f32 %v554, %v1029
    %v1222 = vadd.f32 %v555, %v1030
    %v1223 = vadd.f32 %v556, %v1031
    %v1224 = vadd.f32 %v557, %v1032
    %v1225 = vadd.f32 %v558, %v1033
    %v1226 = vadd.f32 %v559, %v1034
    %v1227 = vadd.f32 %v560, %v1035
    %v1228 = vadd.f32 %v561, %v1036
    %v1229 = vadd.f32 %v562, %v1037
    %v1230 = vadd.f32 %v563, %v1038
    %v1231 = vadd.f32 %v564, %v1039
    %v1232 = vadd.f32 %v565, %v1040
    %v1233 = vadd.f32 %v566, %v1041
    %v1234 = vadd.f32 %v567, %v1042
    %v1235 = vadd.f32 %v568, %v1043
    %v1236 = vadd.f32 %v569, %v1044
    %v1237 = vadd.f32 %v570, %v1045
    %v1238 = vadd.f32 %v571, %v1046
    %v1239 = vadd.f32 %v572, %v1047
    %v1240 = vadd.f32 %v573, %v1048
    %v1241 = vadd.f32 %v574, %v1049
    %v1242 = vadd.f32 %v575, %v1050
    %v1243 = vadd.f32 %v576, %v1051
    %v1244 = vadd.f32 %v577, %v1052
    %v1245 = vadd.f32 %v578, %v1053
    %v1246 = vadd.f32 %v579, %v1054
    %v1247 = vadd.f32 %v580, %v1055
    %v1248 = vadd.f32 %v581, %v1056
    %v1249 = vadd.f32 %v582, %v1057
    %v1250 = vadd.f32 %v583, %v1058
    %v1251 = vadd.f32 %v584, %v1059
    %v1252 = vadd.f32 %v585, %v1060
    %v1253 = vadd.f32 %v586, %v1061
    %v1254 = vadd.f32 %v587, %v1062
    %v1255 = vadd.f32 %v588, %v1063
    %v1256 = vadd.f32 %v589, %v1064
    %v1257 = vadd.f32 %v590, %v1065
    %v1258 = vadd.f32 %v591, %v1066
    %v1259 = vadd.f32 %v592, %v1067
    %v1260 = vadd.f32 %v593, %v1068
    %v1261 = vadd.f32 %v594, %v1069
    %v1262 = vadd.f32 %v595, %v1070
    %v1263 = vadd.f32 %v596, %v1071
    %v1264 = vadd.f32 %v597, %v1072
    %v1265 = vadd.f32 %v598, %v1073
    %v1266 = vadd.f32 %v599, %v1074
    %v1267 = vadd.f32 %v600, %v1075
    %v1268 = vadd.f32 %v601, %v1076
    %v1269 = vadd.f32 %v602, %v1077
    %v1270 = vadd.f32 %v603, %v1078
    %v1271 = vadd.f32 %v604, %v1079
    %v1272 = vadd.f32 %v605, %v1080
    %v1273 = vadd.f32 %v606, %v1081
    %v1274 = vadd.f32 %v607, %v1082
    %v1275 = vadd.f32 %v608, %v1083
    %v1276 = vadd.f32 %v609, %v1084
    %v1277 = vadd.f32 %v610, %v1085
    %v1278 = vadd.f32 %v611, %v1086
    %v1279 = vadd.f32 %v612, %v1087
    %v1280 = vadd.f32 %v613, %v1088
    %v1281 = vadd.f32 %v614, %v1089
    %v1282 = vadd.f32 %v615, %v1090
    %v1283 = vadd.f32 %v616, %v1091
    %v1284 = vadd.f32 %v617, %v1092
    %v1285 = vadd.f32 %v618, %v1093
    %v1286 = vadd.f32 %v619, %v1094
    %v1287 = vadd.f32 %v620, %v1095
    %v1288 = vadd.f32 %v621, %v1096
    %v1289 = vadd.f32 %v622, %v1097
    %v1290 = vadd.f32 %v623, %v1098
    %v1291 = vadd.f32 %v624, %v1099
    %v1292 = vadd.f32 %v625, %v1100
    %v1293 = vadd.f32 %v626, %v1101
    %v1294 = vadd.f32 %v627, %v1102
    %v1295 = vadd.f32 %v628, %v1103
    %v1296 = vadd.f32 %v629, %v1104
    %v1297 = vadd.f32 %v630, %v1105
    %v1298 = vadd.f32 %v631, %v1106
    %v1299 = vadd.f32 %v632, %v1107
    %v1300 = vadd.f32 %v633, %v1108
    %v1301 = vadd.f32 %v634, %v1109
    %v1302 = vadd.f32 %v635, %v1110
    %v1303 = vadd.f32 %v636, %v1111
    %v1304 = vadd.f32 %v637, %v1112
    %v1305 = vadd.f32 %v638, %v1113
    %v1306 = vadd.f32 %v639, %v1114
    %v1307 = vadd.f32 %v640, %v1115
    %v1308 = vadd.f32 %v641, %v1116
    %v1309 = vadd.f32 %v642, %v1117
    %1310 = vset.pattern.permute.xlu0 2
    %1311 = vperm.xlu0 %1310, %v35
    %v1312 = vpop.permute.xlu0 %1311
    %1314 = vset.pattern.permute.xlu0 2
    %1315 = vperm.xlu0 %1314, %v36
    %v1316 = vpop.permute.xlu0 %1315
    %1318 = vset.pattern.permute.xlu0 2
    %1319 = vperm.xlu0 %1318, %v37
    %v1320 = vpop.permute.xlu0 %1319
    %1322 = vset.pattern.permute.xlu0 2
    %1323 = vperm.xlu0 %1322, %v38
    %v1324 = vpop.permute.xlu0 %1323
    %1326 = vset.pattern.permute.xlu0 2
    %1327 = vperm.xlu0 %1326, %v39
    %v1328 = vpop.permute.xlu0 %1327
    %1330 = vset.pattern.permute.xlu0 2
    %1331 = vperm.xlu0 %1330, %v40
    %v1332 = vpop.permute.xlu0 %1331
    %1334 = vset.pattern.permute.xlu0 2
    %1335 = vperm.xlu0 %1334, %v41
    %v1336 = vpop.permute.xlu0 %1335
    %1338 = vset.pattern.permute.xlu0 2
    %1339 = vperm.xlu0 %1338, %v42
    %v1340 = vpop.permute.xlu0 %1339
    %1342 = vset.pattern.permute.xlu0 2
    %1343 = vperm.xlu0 %1342, %v43
    %v1344 = vpop.permute.xlu0 %1343
    %1346 = vset.pattern.permute.xlu0 2
    %1347 = vperm.xlu0 %1346, %v44
    %v1348 = vpop.permute.xlu0 %1347
    %1350 = vset.pattern.permute.xlu0 2
    %1351 = vperm.xlu0 %1350, %v45
    %v1352 = vpop.permute.xlu0 %1351
    %1354 = vset.pattern.permute.xlu0 2
    %1355 = vperm.xlu0 %1354, %v46
    %v1356 = vpop.permute.xlu0 %1355
    %1358 = vset.pattern.permute.xlu0 2
    %1359 = vperm.xlu0 %1358, %v47
    %v1360 = vpop.permute.xlu0 %1359
    %1362 = vset.pattern.permute.xlu0 2
    %1363 = vperm.xlu0 %1362, %v48
    %v1364 = vpop.permute.xlu0 %1363
    %1366 = vset.pattern.permute.xlu0 2
    %1367 = vperm.xlu0 %1366, %v49
    %v1368 = vpop.permute.xlu0 %1367
    %1370 = vset.pattern.permute.xlu0 2
    %1371 = vperm.xlu0 %1370, %v50
    %v1372 = vpop.permute.xlu0 %1371
    %1374 = vset.pattern.permute.xlu0 2
    %1375 = vperm.xlu0 %1374, %v51
    %v1376 = vpop.permute.xlu0 %1375
    %1378 = vset.pattern.permute.xlu0 2
    %1379 = vperm.xlu0 %1378, %v52
    %v1380 = vpop.permute.xlu0 %1379
    %1382 = vset.pattern.permute.xlu0 2
    %1383 = vperm.xlu0 %1382, %v53
    %v1384 = vpop.permute.xlu0 %1383
    %1386 = vset.pattern.permute.xlu0 2
    %1387 = vperm.xlu0 %1386, %v54
    %v1388 = vpop.permute.xlu0 %1387
    %1390 = vset.pattern.permute.xlu0 2
    %1391 = vperm.xlu0 %1390, %v55
    %v1392 = vpop.permute.xlu0 %1391
    %1394 = vset.pattern.permute.xlu0 2
    %1395 = vperm.xlu0 %1394, %v56
    %v1396 = vpop.permute.xlu0 %1395
    %1398 = vset.pattern.permute.xlu0 2
    %1399 = vperm.xlu0 %1398, %v57
    %v1400 = vpop.permute.xlu0 %1399
    %1402 = vset.pattern.permute.xlu0 2
    %1403 = vperm.xlu0 %1402, %v58
    %v1404 = vpop.permute.xlu0 %1403
    %1406 = vset.pattern.permute.xlu0 2
    %1407 = vperm.xlu0 %1406, %v59
    %v1408 = vpop.permute.xlu0 %1407
    %1410 = vset.pattern.permute.xlu0 2
    %1411 = vperm.xlu0 %1410, %v60
    %v1412 = vpop.permute.xlu0 %1411
    %1414 = vset.pattern.permute.xlu0 2
    %1415 = vperm.xlu0 %1414, %v61
    %v1416 = vpop.permute.xlu0 %1415
    %1418 = vset.pattern.permute.xlu0 2
    %1419 = vperm.xlu0 %1418, %v62
    %v1420 = vpop.permute.xlu0 %1419
    %1422 = vset.pattern.permute.xlu0 2
    %1423 = vperm.xlu0 %1422, %v63
    %v1424 = vpop.permute.xlu0 %1423
    %1426 = vset.pattern.permute.xlu0 2
    %1427 = vperm.xlu0 %1426, %v64
    %v1428 = vpop.permute.xlu0 %1427
    %1430 = vset.pattern.permute.xlu0 2
    %1431 = vperm.xlu0 %1430, %v65
    %v1432 = vpop.permute.xlu0 %1431
    %1434 = vset.pattern.permute.xlu0 2
    %1435 = vperm.xlu0 %1434, %v66
    %v1436 = vpop.permute.xlu0 %1435
    %1438 = vset.pattern.permute.xlu0 2
    %1439 = vperm.xlu0 %1438, %v67
    %v1440 = vpop.permute.xlu0 %1439
    %1442 = vset.pattern.permute.xlu0 2
    %1443 = vperm.xlu0 %1442, %v68
    %v1444 = vpop.permute.xlu0 %1443
    %1446 = vset.pattern.permute.xlu0 2
    %1447 = vperm.xlu0 %1446, %v69
    %v1448 = vpop.permute.xlu0 %1447
    %1450 = vset.pattern.permute.xlu0 2
    %1451 = vperm.xlu0 %1450, %v70
    %v1452 = vpop.permute.xlu0 %1451
    %1454 = vset.pattern.permute.xlu0 2
    %1455 = vperm.xlu0 %1454, %v71
    %v1456 = vpop.permute.xlu0 %1455
    %1458 = vset.pattern.permute.xlu0 2
    %1459 = vperm.xlu0 %1458, %v72
    %v1460 = vpop.permute.xlu0 %1459
    %1462 = vset.pattern.permute.xlu0 2
    %1463 = vperm.xlu0 %1462, %v73
    %v1464 = vpop.permute.xlu0 %1463
    %1466 = vset.pattern.permute.xlu0 2
    %1467 = vperm.xlu0 %1466, %v74
    %v1468 = vpop.permute.xlu0 %1467
    %1470 = vset.pattern.permute.xlu0 2
    %1471 = vperm.xlu0 %1470, %v75
    %v1472 = vpop.permute.xlu0 %1471
    %1474 = vset.pattern.permute.xlu0 2
    %1475 = vperm.xlu0 %1474, %v76
    %v1476 = vpop.permute.xlu0 %1475
    %1478 = vset.pattern.permute.xlu0 2
    %1479 = vperm.xlu0 %1478, %v77
    %v1480 = vpop.permute.xlu0 %1479
    %1482 = vset.pattern.permute.xlu0 2
    %1483 = vperm.xlu0 %1482, %v78
    %v1484 = vpop.permute.xlu0 %1483
    %1486 = vset.pattern.permute.xlu0 2
    %1487 = vperm.xlu0 %1486, %v79
    %v1488 = vpop.permute.xlu0 %1487
    %1490 = vset.pattern.permute.xlu0 2
    %1491 = vperm.xlu0 %1490, %v80
    %v1492 = vpop.permute.xlu0 %1491
    %1494 = vset.pattern.permute.xlu0 2
    %1495 = vperm.xlu0 %1494, %v81
    %v1496 = vpop.permute.xlu0 %1495
    %1498 = vset.pattern.permute.xlu0 2
    %1499 = vperm.xlu0 %1498, %v82
    %v1500 = vpop.permute.xlu0 %1499
    %1502 = vset.pattern.permute.xlu0 2
    %1503 = vperm.xlu0 %1502, %v83
    %v1504 = vpop.permute.xlu0 %1503
    %1506 = vset.pattern.permute.xlu0 2
    %1507 = vperm.xlu0 %1506, %v84
    %v1508 = vpop.permute.xlu0 %1507
    %1510 = vset.pattern.permute.xlu0 2
    %1511 = vperm.xlu0 %1510, %v85
    %v1512 = vpop.permute.xlu0 %1511
    %1514 = vset.pattern.permute.xlu0 2
    %1515 = vperm.xlu0 %1514, %v86
    %v1516 = vpop.permute.xlu0 %1515
    %1518 = vset.pattern.permute.xlu0 2
    %1519 = vperm.xlu0 %1518, %v87
    %v1520 = vpop.permute.xlu0 %1519
    %1522 = vset.pattern.permute.xlu0 2
    %1523 = vperm.xlu0 %1522, %v88
    %v1524 = vpop.permute.xlu0 %1523
    %1526 = vset.pattern.permute.xlu0 2
    %1527 = vperm.xlu0 %1526, %v89
    %v1528 = vpop.permute.xlu0 %1527
    %1530 = vset.pattern.permute.xlu0 2
    %1531 = vperm.xlu0 %1530, %v90
    %v1532 = vpop.permute.xlu0 %1531
    %1534 = vset.pattern.permute.xlu0 2
    %1535 = vperm.xlu0 %1534, %v91
    %v1536 = vpop.permute.xlu0 %1535
    %1538 = vset.pattern.permute.xlu0 2
    %1539 = vperm.xlu0 %1538, %v92
    %v1540 = vpop.permute.xlu0 %1539
    %1542 = vset.pattern.permute.xlu0 2
    %1543 = vperm.xlu0 %1542, %v93
    %v1544 = vpop.permute.xlu0 %1543
    %1546 = vset.pattern.permute.xlu0 2
    %1547 = vperm.xlu0 %1546, %v94
    %v1548 = vpop.permute.xlu0 %1547
    %1550 = vset.pattern.permute.xlu0 2
    %1551 = vperm.xlu0 %1550, %v95
    %v1552 = vpop.permute.xlu0 %1551
    %1554 = vset.pattern.permute.xlu0 2
    %1555 = vperm.xlu0 %1554, %v96
    %v1556 = vpop.permute.xlu0 %1555
    %1558 = vset.pattern.permute.xlu0 2
    %1559 = vperm.xlu0 %1558, %v97
    %v1560 = vpop.permute.xlu0 %1559
    %1562 = vset.pattern.permute.xlu0 2
    %1563 = vperm.xlu0 %1562, %v98
    %v1564 = vpop.permute.xlu0 %1563
    %v1566 = vlaneseq
    %v1567 = vshrl.u32 %v1566, 7
    %v1568 = vsub.s32 2, %v1567
    %v1569 = vrot.slane %v99, %v1568
    %v1570 = vlaneseq
    %v1571 = vshrl.u32 %v1570, 7
    %v1572 = vsub.s32 6, %v1571
    %v1573 = vrot.slane %v99, %v1572
    %v1574 = vlaneseq
    %v1575 = vshrl.u32 %v1574, 7
    %v1576 = vsub.s32 2, %v1575
    %v1577 = vrot.slane %v100, %v1576
    %v1581 = vlaneseq
    %v1582 = vshrl.u32 %v1581, 7
    %v1583 = vsub.s32 2, %v1582
    %v1584 = vrot.slane %v1569, %v1583
    %v1585 = vlaneseq
    %v1586 = vshrl.u32 %v1585, 7
    %v1587 = vsub.s32 2, %v1586
    %v1588 = vrot.slane %v1573, %v1587
    %v1589 = vlaneseq
    %v1590 = vshrl.u32 %v1589, 7
    %v1591 = vsub.s32 2, %v1590
    %v1592 = vrot.slane %v1577, %v1591
    %v1593 = vmul.f32 %v1312, %v1584
    %v1594 = vmul.f32 %v1312, %v1588
    %v1595 = vmul.f32 %v1312, %v1592
    %v1596 = vmul.f32 %v1316, %v1584
    %v1597 = vmul.f32 %v1316, %v1588
    %v1598 = vmul.f32 %v1316, %v1592
    %v1599 = vmul.f32 %v1320, %v1584
    %v1600 = vmul.f32 %v1320, %v1588
    %v1601 = vmul.f32 %v1320, %v1592
    %v1602 = vmul.f32 %v1324, %v1584
    %v1603 = vmul.f32 %v1324, %v1588
    %v1604 = vmul.f32 %v1324, %v1592
    %v1605 = vmul.f32 %v1328, %v1584
    %v1606 = vmul.f32 %v1328, %v1588
    %v1607 = vmul.f32 %v1328, %v1592
    %v1608 = vmul.f32 %v1332, %v1584
    %v1609 = vmul.f32 %v1332, %v1588
    %v1610 = vmul.f32 %v1332, %v1592
    %v1611 = vmul.f32 %v1336, %v1584
    %v1612 = vmul.f32 %v1336, %v1588
    %v1613 = vmul.f32 %v1336, %v1592
    %v1614 = vmul.f32 %v1340, %v1584
    %v1615 = vmul.f32 %v1340, %v1588
    %v1616 = vmul.f32 %v1340, %v1592
    %v1617 = vmul.f32 %v1344, %v1584
    %v1618 = vmul.f32 %v1344, %v1588
    %v1619 = vmul.f32 %v1344, %v1592
    %v1620 = vmul.f32 %v1348, %v1584
    %v1621 = vmul.f32 %v1348, %v1588
    %v1622 = vmul.f32 %v1348, %v1592
    %v1623 = vmul.f32 %v1352, %v1584
    %v1624 = vmul.f32 %v1352, %v1588
    %v1625 = vmul.f32 %v1352, %v1592
    %v1626 = vmul.f32 %v1356, %v1584
    %v1627 = vmul.f32 %v1356, %v1588
    %v1628 = vmul.f32 %v1356, %v1592
    %v1629 = vmul.f32 %v1360, %v1584
    %v1630 = vmul.f32 %v1360, %v1588
    %v1631 = vmul.f32 %v1360, %v1592
    %v1632 = vmul.f32 %v1364, %v1584
    %v1633 = vmul.f32 %v1364, %v1588
    %v1634 = vmul.f32 %v1364, %v1592
    %v1635 = vmul.f32 %v1368, %v1584
    %v1636 = vmul.f32 %v1368, %v1588
    %v1637 = vmul.f32 %v1368, %v1592
    %v1638 = vmul.f32 %v1372, %v1584
    %v1639 = vmul.f32 %v1372, %v1588
    %v1640 = vmul.f32 %v1372, %v1592
    %v1641 = vmul.f32 %v1376, %v1584
    %v1642 = vmul.f32 %v1376, %v1588
    %v1643 = vmul.f32 %v1376, %v1592
    %v1644 = vmul.f32 %v1380, %v1584
    %v1645 = vmul.f32 %v1380, %v1588
    %v1646 = vmul.f32 %v1380, %v1592
    %v1647 = vmul.f32 %v1384, %v1584
    %v1648 = vmul.f32 %v1384, %v1588
    %v1649 = vmul.f32 %v1384, %v1592
    %v1650 = vmul.f32 %v1388, %v1584
    %v1651 = vmul.f32 %v1388, %v1588
    %v1652 = vmul.f32 %v1388, %v1592
    %v1653 = vmul.f32 %v1392, %v1584
    %v1654 = vmul.f32 %v1392, %v1588
    %v1655 = vmul.f32 %v1392, %v1592
    %v1656 = vmul.f32 %v1396, %v1584
    %v1657 = vmul.f32 %v1396, %v1588
    %v1658 = vmul.f32 %v1396, %v1592
    %v1659 = vmul.f32 %v1400, %v1584
    %v1660 = vmul.f32 %v1400, %v1588
    %v1661 = vmul.f32 %v1400, %v1592
    %v1662 = vmul.f32 %v1404, %v1584
    %v1663 = vmul.f32 %v1404, %v1588
    %v1664 = vmul.f32 %v1404, %v1592
    %v1665 = vmul.f32 %v1408, %v1584
    %v1666 = vmul.f32 %v1408, %v1588
    %v1667 = vmul.f32 %v1408, %v1592
    %v1668 = vmul.f32 %v1412, %v1584
    %v1669 = vmul.f32 %v1412, %v1588
    %v1670 = vmul.f32 %v1412, %v1592
    %v1671 = vmul.f32 %v1416, %v1584
    %v1672 = vmul.f32 %v1416, %v1588
    %v1673 = vmul.f32 %v1416, %v1592
    %v1674 = vmul.f32 %v1420, %v1584
    %v1675 = vmul.f32 %v1420, %v1588
    %v1676 = vmul.f32 %v1420, %v1592
    %v1677 = vmul.f32 %v1424, %v1584
    %v1678 = vmul.f32 %v1424, %v1588
    %v1679 = vmul.f32 %v1424, %v1592
    %v1680 = vmul.f32 %v1428, %v1584
    %v1681 = vmul.f32 %v1428, %v1588
    %v1682 = vmul.f32 %v1428, %v1592
    %v1683 = vmul.f32 %v1432, %v1584
    %v1684 = vmul.f32 %v1432, %v1588
    %v1685 = vmul.f32 %v1432, %v1592
    %v1686 = vmul.f32 %v1436, %v1584
    %v1687 = vmul.f32 %v1436, %v1588
    %v1688 = vmul.f32 %v1436, %v1592
    %v1689 = vmul.f32 %v1440, %v1584
    %v1690 = vmul.f32 %v1440, %v1588
    %v1691 = vmul.f32 %v1440, %v1592
    %v1692 = vmul.f32 %v1444, %v1584
    %v1693 = vmul.f32 %v1444, %v1588
    %v1694 = vmul.f32 %v1444, %v1592
    %v1695 = vmul.f32 %v1448, %v1584
    %v1696 = vmul.f32 %v1448, %v1588
    %v1697 = vmul.f32 %v1448, %v1592
    %v1698 = vmul.f32 %v1452, %v1584
    %v1699 = vmul.f32 %v1452, %v1588
    %v1700 = vmul.f32 %v1452, %v1592
    %v1701 = vmul.f32 %v1456, %v1584
    %v1702 = vmul.f32 %v1456, %v1588
    %v1703 = vmul.f32 %v1456, %v1592
    %v1704 = vmul.f32 %v1460, %v1584
    %v1705 = vmul.f32 %v1460, %v1588
    %v1706 = vmul.f32 %v1460, %v1592
    %v1707 = vmul.f32 %v1464, %v1584
    %v1708 = vmul.f32 %v1464, %v1588
    %v1709 = vmul.f32 %v1464, %v1592
    %v1710 = vmul.f32 %v1468, %v1584
    %v1711 = vmul.f32 %v1468, %v1588
    %v1712 = vmul.f32 %v1468, %v1592
    %v1713 = vmul.f32 %v1472, %v1584
    %v1714 = vmul.f32 %v1472, %v1588
    %v1715 = vmul.f32 %v1472, %v1592
    %v1716 = vmul.f32 %v1476, %v1584
    %v1717 = vmul.f32 %v1476, %v1588
    %v1718 = vmul.f32 %v1476, %v1592
    %v1719 = vmul.f32 %v1480, %v1584
    %v1720 = vmul.f32 %v1480, %v1588
    %v1721 = vmul.f32 %v1480, %v1592
    %v1722 = vmul.f32 %v1484, %v1584
    %v1723 = vmul.f32 %v1484, %v1588
    %v1724 = vmul.f32 %v1484, %v1592
    %v1725 = vmul.f32 %v1488, %v1584
    %v1726 = vmul.f32 %v1488, %v1588
    %v1727 = vmul.f32 %v1488, %v1592
    %v1728 = vmul.f32 %v1492, %v1584
    %v1729 = vmul.f32 %v1492, %v1588
    %v1730 = vmul.f32 %v1492, %v1592
    %v1731 = vmul.f32 %v1496, %v1584
    %v1732 = vmul.f32 %v1496, %v1588
    %v1733 = vmul.f32 %v1496, %v1592
    %v1734 = vmul.f32 %v1500, %v1584
    %v1735 = vmul.f32 %v1500, %v1588
    %v1736 = vmul.f32 %v1500, %v1592
    %v1737 = vmul.f32 %v1504, %v1584
    %v1738 = vmul.f32 %v1504, %v1588
    %v1739 = vmul.f32 %v1504, %v1592
    %v1740 = vmul.f32 %v1508, %v1584
    %v1741 = vmul.f32 %v1508, %v1588
    %v1742 = vmul.f32 %v1508, %v1592
    %v1743 = vmul.f32 %v1512, %v1584
    %v1744 = vmul.f32 %v1512, %v1588
    %v1745 = vmul.f32 %v1512, %v1592
    %v1746 = vmul.f32 %v1516, %v1584
    %v1747 = vmul.f32 %v1516, %v1588
    %v1748 = vmul.f32 %v1516, %v1592
    %v1749 = vmul.f32 %v1520, %v1584
    %v1750 = vmul.f32 %v1520, %v1588
    %v1751 = vmul.f32 %v1520, %v1592
    %v1752 = vmul.f32 %v1524, %v1584
    %v1753 = vmul.f32 %v1524, %v1588
    %v1754 = vmul.f32 %v1524, %v1592
    %v1755 = vmul.f32 %v1528, %v1584
    %v1756 = vmul.f32 %v1528, %v1588
    %v1757 = vmul.f32 %v1528, %v1592
    %v1758 = vmul.f32 %v1532, %v1584
    %v1759 = vmul.f32 %v1532, %v1588
    %v1760 = vmul.f32 %v1532, %v1592
    %v1761 = vmul.f32 %v1536, %v1584
    %v1762 = vmul.f32 %v1536, %v1588
    %v1763 = vmul.f32 %v1536, %v1592
    %v1764 = vmul.f32 %v1540, %v1584
    %v1765 = vmul.f32 %v1540, %v1588
    %v1766 = vmul.f32 %v1540, %v1592
    %v1767 = vmul.f32 %v1544, %v1584
    %v1768 = vmul.f32 %v1544, %v1588
    %v1769 = vmul.f32 %v1544, %v1592
    %v1770 = vmul.f32 %v1548, %v1584
    %v1771 = vmul.f32 %v1548, %v1588
    %v1772 = vmul.f32 %v1548, %v1592
    %v1773 = vmul.f32 %v1552, %v1584
    %v1774 = vmul.f32 %v1552, %v1588
    %v1775 = vmul.f32 %v1552, %v1592
    %v1776 = vmul.f32 %v1556, %v1584
    %v1777 = vmul.f32 %v1556, %v1588
    %v1778 = vmul.f32 %v1556, %v1592
    %v1779 = vmul.f32 %v1560, %v1584
    %v1780 = vmul.f32 %v1560, %v1588
    %v1781 = vmul.f32 %v1560, %v1592
    %v1782 = vmul.f32 %v1564, %v1584
    %v1783 = vmul.f32 %v1564, %v1588
    %v1784 = vmul.f32 %v1564, %v1592
    %v1785 = vadd.f32 %v1118, %v1593
    %v1786 = vadd.f32 %v1119, %v1594
    %v1787 = vadd.f32 %v1120, %v1595
    %v1788 = vadd.f32 %v1121, %v1596
    %v1789 = vadd.f32 %v1122, %v1597
    %v1790 = vadd.f32 %v1123, %v1598
    %v1791 = vadd.f32 %v1124, %v1599
    %v1792 = vadd.f32 %v1125, %v1600
    %v1793 = vadd.f32 %v1126, %v1601
    %v1794 = vadd.f32 %v1127, %v1602
    %v1795 = vadd.f32 %v1128, %v1603
    %v1796 = vadd.f32 %v1129, %v1604
    %v1797 = vadd.f32 %v1130, %v1605
    %v1798 = vadd.f32 %v1131, %v1606
    %v1799 = vadd.f32 %v1132, %v1607
    %v1800 = vadd.f32 %v1133, %v1608
    %v1801 = vadd.f32 %v1134, %v1609
    %v1802 = vadd.f32 %v1135, %v1610
    %v1803 = vadd.f32 %v1136, %v1611
    %v1804 = vadd.f32 %v1137, %v1612
    %v1805 = vadd.f32 %v1138, %v1613
    %v1806 = vadd.f32 %v1139, %v1614
    %v1807 = vadd.f32 %v1140, %v1615
    %v1808 = vadd.f32 %v1141, %v1616
    %v1809 = vadd.f32 %v1142, %v1617
    %v1810 = vadd.f32 %v1143, %v1618
    %v1811 = vadd.f32 %v1144, %v1619
    %v1812 = vadd.f32 %v1145, %v1620
    %v1813 = vadd.f32 %v1146, %v1621
    %v1814 = vadd.f32 %v1147, %v1622
    %v1815 = vadd.f32 %v1148, %v1623
    %v1816 = vadd.f32 %v1149, %v1624
    %v1817 = vadd.f32 %v1150, %v1625
    %v1818 = vadd.f32 %v1151, %v1626
    %v1819 = vadd.f32 %v1152, %v1627
    %v1820 = vadd.f32 %v1153, %v1628
    %v1821 = vadd.f32 %v1154, %v1629
    %v1822 = vadd.f32 %v1155, %v1630
    %v1823 = vadd.f32 %v1156, %v1631
    %v1824 = vadd.f32 %v1157, %v1632
    %v1825 = vadd.f32 %v1158, %v1633
    %v1826 = vadd.f32 %v1159, %v1634
    %v1827 = vadd.f32 %v1160, %v1635
    %v1828 = vadd.f32 %v1161, %v1636
    %v1829 = vadd.f32 %v1162, %v1637
    %v1830 = vadd.f32 %v1163, %v1638
    %v1831 = vadd.f32 %v1164, %v1639
    %v1832 = vadd.f32 %v1165, %v1640
    %v1833 = vadd.f32 %v1166, %v1641
    %v1834 = vadd.f32 %v1167, %v1642
    %v1835 = vadd.f32 %v1168, %v1643
    %v1836 = vadd.f32 %v1169, %v1644
    %v1837 = vadd.f32 %v1170, %v1645
    %v1838 = vadd.f32 %v1171, %v1646
    %v1839 = vadd.f32 %v1172, %v1647
    %v1840 = vadd.f32 %v1173, %v1648
    %v1841 = vadd.f32 %v1174, %v1649
    %v1842 = vadd.f32 %v1175, %v1650
    %v1843 = vadd.f32 %v1176, %v1651
    %v1844 = vadd.f32 %v1177, %v1652
    %v1845 = vadd.f32 %v1178, %v1653
    %v1846 = vadd.f32 %v1179, %v1654
    %v1847 = vadd.f32 %v1180, %v1655
    %v1848 = vadd.f32 %v1181, %v1656
    %v1849 = vadd.f32 %v1182, %v1657
    %v1850 = vadd.f32 %v1183, %v1658
    %v1851 = vadd.f32 %v1184, %v1659
    %v1852 = vadd.f32 %v1185, %v1660
    %v1853 = vadd.f32 %v1186, %v1661
    %v1854 = vadd.f32 %v1187, %v1662
    %v1855 = vadd.f32 %v1188, %v1663
    %v1856 = vadd.f32 %v1189, %v1664
    %v1857 = vadd.f32 %v1190, %v1665
    %v1858 = vadd.f32 %v1191, %v1666
    %v1859 = vadd.f32 %v1192, %v1667
    %v1860 = vadd.f32 %v1193, %v1668
    %v1861 = vadd.f32 %v1194, %v1669
    %v1862 = vadd.f32 %v1195, %v1670
    %v1863 = vadd.f32 %v1196, %v1671
    %v1864 = vadd.f32 %v1197, %v1672
    %v1865 = vadd.f32 %v1198, %v1673
    %v1866 = vadd.f32 %v1199, %v1674
    %v1867 = vadd.f32 %v1200, %v1675
    %v1868 = vadd.f32 %v1201, %v1676
    %v1869 = vadd.f32 %v1202, %v1677
    %v1870 = vadd.f32 %v1203, %v1678
    %v1871 = vadd.f32 %v1204, %v1679
    %v1872 = vadd.f32 %v1205, %v1680
    %v1873 = vadd.f32 %v1206, %v1681
    %v1874 = vadd.f32 %v1207, %v1682
    %v1875 = vadd.f32 %v1208, %v1683
    %v1876 = vadd.f32 %v1209, %v1684
    %v1877 = vadd.f32 %v1210, %v1685
    %v1878 = vadd.f32 %v1211, %v1686
    %v1879 = vadd.f32 %v1212, %v1687
    %v1880 = vadd.f32 %v1213, %v1688
    %v1881 = vadd.f32 %v1214, %v1689
    %v1882 = vadd.f32 %v1215, %v1690
    %v1883 = vadd.f32 %v1216, %v1691
    %v1884 = vadd.f32 %v1217, %v1692
    %v1885 = vadd.f32 %v1218, %v1693
    %v1886 = vadd.f32 %v1219, %v1694
    %v1887 = vadd.f32 %v1220, %v1695
    %v1888 = vadd.f32 %v1221, %v1696
    %v1889 = vadd.f32 %v1222, %v1697
    %v1890 = vadd.f32 %v1223, %v1698
    %v1891 = vadd.f32 %v1224, %v1699
    %v1892 = vadd.f32 %v1225, %v1700
    %v1893 = vadd.f32 %v1226, %v1701
    %v1894 = vadd.f32 %v1227, %v1702
    %v1895 = vadd.f32 %v1228, %v1703
    %v1896 = vadd.f32 %v1229, %v1704
    %v1897 = vadd.f32 %v1230, %v1705
    %v1898 = vadd.f32 %v1231, %v1706
    %v1899 = vadd.f32 %v1232, %v1707
    %v1900 = vadd.f32 %v1233, %v1708
    %v1901 = vadd.f32 %v1234, %v1709
    %v1902 = vadd.f32 %v1235, %v1710
    %v1903 = vadd.f32 %v1236, %v1711
    %v1904 = vadd.f32 %v1237, %v1712
    %v1905 = vadd.f32 %v1238, %v1713
    %v1906 = vadd.f32 %v1239, %v1714
    %v1907 = vadd.f32 %v1240, %v1715
    %v1908 = vadd.f32 %v1241, %v1716
    %v1909 = vadd.f32 %v1242, %v1717
    %v1910 = vadd.f32 %v1243, %v1718
    %v1911 = vadd.f32 %v1244, %v1719
    %v1912 = vadd.f32 %v1245, %v1720
    %v1913 = vadd.f32 %v1246, %v1721
    %v1914 = vadd.f32 %v1247, %v1722
    %v1915 = vadd.f32 %v1248, %v1723
    %v1916 = vadd.f32 %v1249, %v1724
    %v1917 = vadd.f32 %v1250, %v1725
    %v1918 = vadd.f32 %v1251, %v1726
    %v1919 = vadd.f32 %v1252, %v1727
    %v1920 = vadd.f32 %v1253, %v1728
    %v1921 = vadd.f32 %v1254, %v1729
    %v1922 = vadd.f32 %v1255, %v1730
    %v1923 = vadd.f32 %v1256, %v1731
    %v1924 = vadd.f32 %v1257, %v1732
    %v1925 = vadd.f32 %v1258, %v1733
    %v1926 = vadd.f32 %v1259, %v1734
    %v1927 = vadd.f32 %v1260, %v1735
    %v1928 = vadd.f32 %v1261, %v1736
    %v1929 = vadd.f32 %v1262, %v1737
    %v1930 = vadd.f32 %v1263, %v1738
    %v1931 = vadd.f32 %v1264, %v1739
    %v1932 = vadd.f32 %v1265, %v1740
    %v1933 = vadd.f32 %v1266, %v1741
    %v1934 = vadd.f32 %v1267, %v1742
    %v1935 = vadd.f32 %v1268, %v1743
    %v1936 = vadd.f32 %v1269, %v1744
    %v1937 = vadd.f32 %v1270, %v1745
    %v1938 = vadd.f32 %v1271, %v1746
    %v1939 = vadd.f32 %v1272, %v1747
    %v1940 = vadd.f32 %v1273, %v1748
    %v1941 = vadd.f32 %v1274, %v1749
    %v1942 = vadd.f32 %v1275, %v1750
    %v1943 = vadd.f32 %v1276, %v1751
    %v1944 = vadd.f32 %v1277, %v1752
    %v1945 = vadd.f32 %v1278, %v1753
    %v1946 = vadd.f32 %v1279, %v1754
    %v1947 = vadd.f32 %v1280, %v1755
    %v1948 = vadd.f32 %v1281, %v1756
    %v1949 = vadd.f32 %v1282, %v1757
    %v1950 = vadd.f32 %v1283, %v1758
    %v1951 = vadd.f32 %v1284, %v1759
    %v1952 = vadd.f32 %v1285, %v1760
    %v1953 = vadd.f32 %v1286, %v1761
    %v1954 = vadd.f32 %v1287, %v1762
    %v1955 = vadd.f32 %v1288, %v1763
    %v1956 = vadd.f32 %v1289, %v1764
    %v1957 = vadd.f32 %v1290, %v1765
    %v1958 = vadd.f32 %v1291, %v1766
    %v1959 = vadd.f32 %v1292, %v1767
    %v1960 = vadd.f32 %v1293, %v1768
    %v1961 = vadd.f32 %v1294, %v1769
    %v1962 = vadd.f32 %v1295, %v1770
    %v1963 = vadd.f32 %v1296, %v1771
    %v1964 = vadd.f32 %v1297, %v1772
    %v1965 = vadd.f32 %v1298, %v1773
    %v1966 = vadd.f32 %v1299, %v1774
    %v1967 = vadd.f32 %v1300, %v1775
    %v1968 = vadd.f32 %v1301, %v1776
    %v1969 = vadd.f32 %v1302, %v1777
    %v1970 = vadd.f32 %v1303, %v1778
    %v1971 = vadd.f32 %v1304, %v1779
    %v1972 = vadd.f32 %v1305, %v1780
    %v1973 = vadd.f32 %v1306, %v1781
    %v1974 = vadd.f32 %v1307, %v1782
    %v1975 = vadd.f32 %v1308, %v1783
    %v1976 = vadd.f32 %v1309, %v1784
    %1977 = vset.pattern.permute.xlu0 3
    %1978 = vperm.xlu0 %1977, %v35
    %v1979 = vpop.permute.xlu0 %1978
    %1981 = vset.pattern.permute.xlu0 3
    %1982 = vperm.xlu0 %1981, %v36
    %v1983 = vpop.permute.xlu0 %1982
    %1985 = vset.pattern.permute.xlu0 3
    %1986 = vperm.xlu0 %1985, %v37
    %v1987 = vpop.permute.xlu0 %1986
    %1989 = vset.pattern.permute.xlu0 3
    %1990 = vperm.xlu0 %1989, %v38
    %v1991 = vpop.permute.xlu0 %1990
    %1993 = vset.pattern.permute.xlu0 3
    %1994 = vperm.xlu0 %1993, %v39
    %v1995 = vpop.permute.xlu0 %1994
    %1997 = vset.pattern.permute.xlu0 3
    %1998 = vperm.xlu0 %1997, %v40
    %v1999 = vpop.permute.xlu0 %1998
    %2001 = vset.pattern.permute.xlu0 3
    %2002 = vperm.xlu0 %2001, %v41
    %v2003 = vpop.permute.xlu0 %2002
    %2005 = vset.pattern.permute.xlu0 3
    %2006 = vperm.xlu0 %2005, %v42
    %v2007 = vpop.permute.xlu0 %2006
    %2009 = vset.pattern.permute.xlu0 3
    %2010 = vperm.xlu0 %2009, %v43
    %v2011 = vpop.permute.xlu0 %2010
    %2013 = vset.pattern.permute.xlu0 3
    %2014 = vperm.xlu0 %2013, %v44
    %v2015 = vpop.permute.xlu0 %2014
    %2017 = vset.pattern.permute.xlu0 3
    %2018 = vperm.xlu0 %2017, %v45
    %v2019 = vpop.permute.xlu0 %2018
    %2021 = vset.pattern.permute.xlu0 3
    %2022 = vperm.xlu0 %2021, %v46
    %v2023 = vpop.permute.xlu0 %2022
    %2025 = vset.pattern.permute.xlu0 3
    %2026 = vperm.xlu0 %2025, %v47
    %v2027 = vpop.permute.xlu0 %2026
    %2029 = vset.pattern.permute.xlu0 3
    %2030 = vperm.xlu0 %2029, %v48
    %v2031 = vpop.permute.xlu0 %2030
    %2033 = vset.pattern.permute.xlu0 3
    %2034 = vperm.xlu0 %2033, %v49
    %v2035 = vpop.permute.xlu0 %2034
    %2037 = vset.pattern.permute.xlu0 3
    %2038 = vperm.xlu0 %2037, %v50
    %v2039 = vpop.permute.xlu0 %2038
    %2041 = vset.pattern.permute.xlu0 3
    %2042 = vperm.xlu0 %2041, %v51
    %v2043 = vpop.permute.xlu0 %2042
    %2045 = vset.pattern.permute.xlu0 3
    %2046 = vperm.xlu0 %2045, %v52
    %v2047 = vpop.permute.xlu0 %2046
    %2049 = vset.pattern.permute.xlu0 3
    %2050 = vperm.xlu0 %2049, %v53
    %v2051 = vpop.permute.xlu0 %2050
    %2053 = vset.pattern.permute.xlu0 3
    %2054 = vperm.xlu0 %2053, %v54
    %v2055 = vpop.permute.xlu0 %2054
    %2057 = vset.pattern.permute.xlu0 3
    %2058 = vperm.xlu0 %2057, %v55
    %v2059 = vpop.permute.xlu0 %2058
    %2061 = vset.pattern.permute.xlu0 3
    %2062 = vperm.xlu0 %2061, %v56
    %v2063 = vpop.permute.xlu0 %2062
    %2065 = vset.pattern.permute.xlu0 3
    %2066 = vperm.xlu0 %2065, %v57
    %v2067 = vpop.permute.xlu0 %2066
    %2069 = vset.pattern.permute.xlu0 3
    %2070 = vperm.xlu0 %2069, %v58
    %v2071 = vpop.permute.xlu0 %2070
    %2073 = vset.pattern.permute.xlu0 3
    %2074 = vperm.xlu0 %2073, %v59
    %v2075 = vpop.permute.xlu0 %2074
    %2077 = vset.pattern.permute.xlu0 3
    %2078 = vperm.xlu0 %2077, %v60
    %v2079 = vpop.permute.xlu0 %2078
    %2081 = vset.pattern.permute.xlu0 3
    %2082 = vperm.xlu0 %2081, %v61
    %v2083 = vpop.permute.xlu0 %2082
    %2085 = vset.pattern.permute.xlu0 3
    %2086 = vperm.xlu0 %2085, %v62
    %v2087 = vpop.permute.xlu0 %2086
    %2089 = vset.pattern.permute.xlu0 3
    %2090 = vperm.xlu0 %2089, %v63
    %v2091 = vpop.permute.xlu0 %2090
    %2093 = vset.pattern.permute.xlu0 3
    %2094 = vperm.xlu0 %2093, %v64
    %v2095 = vpop.permute.xlu0 %2094
    %2097 = vset.pattern.permute.xlu0 3
    %2098 = vperm.xlu0 %2097, %v65
    %v2099 = vpop.permute.xlu0 %2098
    %2101 = vset.pattern.permute.xlu0 3
    %2102 = vperm.xlu0 %2101, %v66
    %v2103 = vpop.permute.xlu0 %2102
    %2105 = vset.pattern.permute.xlu0 3
    %2106 = vperm.xlu0 %2105, %v67
    %v2107 = vpop.permute.xlu0 %2106
    %2109 = vset.pattern.permute.xlu0 3
    %2110 = vperm.xlu0 %2109, %v68
    %v2111 = vpop.permute.xlu0 %2110
    %2113 = vset.pattern.permute.xlu0 3
    %2114 = vperm.xlu0 %2113, %v69
    %v2115 = vpop.permute.xlu0 %2114
    %2117 = vset.pattern.permute.xlu0 3
    %2118 = vperm.xlu0 %2117, %v70
    %v2119 = vpop.permute.xlu0 %2118
    %2121 = vset.pattern.permute.xlu0 3
    %2122 = vperm.xlu0 %2121, %v71
    %v2123 = vpop.permute.xlu0 %2122
    %2125 = vset.pattern.permute.xlu0 3
    %2126 = vperm.xlu0 %2125, %v72
    %v2127 = vpop.permute.xlu0 %2126
    %2129 = vset.pattern.permute.xlu0 3
    %2130 = vperm.xlu0 %2129, %v73
    %v2131 = vpop.permute.xlu0 %2130
    %2133 = vset.pattern.permute.xlu0 3
    %2134 = vperm.xlu0 %2133, %v74
    %v2135 = vpop.permute.xlu0 %2134
    %2137 = vset.pattern.permute.xlu0 3
    %2138 = vperm.xlu0 %2137, %v75
    %v2139 = vpop.permute.xlu0 %2138
    %2141 = vset.pattern.permute.xlu0 3
    %2142 = vperm.xlu0 %2141, %v76
    %v2143 = vpop.permute.xlu0 %2142
    %2145 = vset.pattern.permute.xlu0 3
    %2146 = vperm.xlu0 %2145, %v77
    %v2147 = vpop.permute.xlu0 %2146
    %2149 = vset.pattern.permute.xlu0 3
    %2150 = vperm.xlu0 %2149, %v78
    %v2151 = vpop.permute.xlu0 %2150
    %2153 = vset.pattern.permute.xlu0 3
    %2154 = vperm.xlu0 %2153, %v79
    %v2155 = vpop.permute.xlu0 %2154
    %2157 = vset.pattern.permute.xlu0 3
    %2158 = vperm.xlu0 %2157, %v80
    %v2159 = vpop.permute.xlu0 %2158
    %2161 = vset.pattern.permute.xlu0 3
    %2162 = vperm.xlu0 %2161, %v81
    %v2163 = vpop.permute.xlu0 %2162
    %2165 = vset.pattern.permute.xlu0 3
    %2166 = vperm.xlu0 %2165, %v82
    %v2167 = vpop.permute.xlu0 %2166
    %2169 = vset.pattern.permute.xlu0 3
    %2170 = vperm.xlu0 %2169, %v83
    %v2171 = vpop.permute.xlu0 %2170
    %2173 = vset.pattern.permute.xlu0 3
    %2174 = vperm.xlu0 %2173, %v84
    %v2175 = vpop.permute.xlu0 %2174
    %2177 = vset.pattern.permute.xlu0 3
    %2178 = vperm.xlu0 %2177, %v85
    %v2179 = vpop.permute.xlu0 %2178
    %2181 = vset.pattern.permute.xlu0 3
    %2182 = vperm.xlu0 %2181, %v86
    %v2183 = vpop.permute.xlu0 %2182
    %2185 = vset.pattern.permute.xlu0 3
    %2186 = vperm.xlu0 %2185, %v87
    %v2187 = vpop.permute.xlu0 %2186
    %2189 = vset.pattern.permute.xlu0 3
    %2190 = vperm.xlu0 %2189, %v88
    %v2191 = vpop.permute.xlu0 %2190
    %2193 = vset.pattern.permute.xlu0 3
    %2194 = vperm.xlu0 %2193, %v89
    %v2195 = vpop.permute.xlu0 %2194
    %2197 = vset.pattern.permute.xlu0 3
    %2198 = vperm.xlu0 %2197, %v90
    %v2199 = vpop.permute.xlu0 %2198
    %2201 = vset.pattern.permute.xlu0 3
    %2202 = vperm.xlu0 %2201, %v91
    %v2203 = vpop.permute.xlu0 %2202
    %2205 = vset.pattern.permute.xlu0 3
    %2206 = vperm.xlu0 %2205, %v92
    %v2207 = vpop.permute.xlu0 %2206
    %2209 = vset.pattern.permute.xlu0 3
    %2210 = vperm.xlu0 %2209, %v93
    %v2211 = vpop.permute.xlu0 %2210
    %2213 = vset.pattern.permute.xlu0 3
    %2214 = vperm.xlu0 %2213, %v94
    %v2215 = vpop.permute.xlu0 %2214
    %2217 = vset.pattern.permute.xlu0 3
    %2218 = vperm.xlu0 %2217, %v95
    %v2219 = vpop.permute.xlu0 %2218
    %2221 = vset.pattern.permute.xlu0 3
    %2222 = vperm.xlu0 %2221, %v96
    %v2223 = vpop.permute.xlu0 %2222
    %2225 = vset.pattern.permute.xlu0 3
    %2226 = vperm.xlu0 %2225, %v97
    %v2227 = vpop.permute.xlu0 %2226
    %2229 = vset.pattern.permute.xlu0 3
    %2230 = vperm.xlu0 %2229, %v98
    %v2231 = vpop.permute.xlu0 %2230
    %v2233 = vlaneseq
    %v2234 = vshrl.u32 %v2233, 7
    %v2235 = vsub.s32 3, %v2234
    %v2236 = vrot.slane %v99, %v2235
    %v2237 = vlaneseq
    %v2238 = vshrl.u32 %v2237, 7
    %v2239 = vsub.s32 7, %v2238
    %v2240 = vrot.slane %v99, %v2239
    %v2241 = vlaneseq
    %v2242 = vshrl.u32 %v2241, 7
    %v2243 = vsub.s32 3, %v2242
    %v2244 = vrot.slane %v100, %v2243
    %v2248 = vlaneseq
    %v2249 = vshrl.u32 %v2248, 7
    %v2250 = vsub.s32 3, %v2249
    %v2251 = vrot.slane %v2236, %v2250
    %v2252 = vlaneseq
    %v2253 = vshrl.u32 %v2252, 7
    %v2254 = vsub.s32 3, %v2253
    %v2255 = vrot.slane %v2240, %v2254
    %v2256 = vlaneseq
    %v2257 = vshrl.u32 %v2256, 7
    %v2258 = vsub.s32 3, %v2257
    %v2259 = vrot.slane %v2244, %v2258
    %v2260 = vmul.f32 %v1979, %v2251
    %v2261 = vmul.f32 %v1979, %v2255
    %v2262 = vmul.f32 %v1979, %v2259
    %v2263 = vmul.f32 %v1983, %v2251
    %v2264 = vmul.f32 %v1983, %v2255
    %v2265 = vmul.f32 %v1983, %v2259
    %v2266 = vmul.f32 %v1987, %v2251
    %v2267 = vmul.f32 %v1987, %v2255
    %v2268 = vmul.f32 %v1987, %v2259
    %v2269 = vmul.f32 %v1991, %v2251
    %v2270 = vmul.f32 %v1991, %v2255
    %v2271 = vmul.f32 %v1991, %v2259
    %v2272 = vmul.f32 %v1995, %v2251
    %v2273 = vmul.f32 %v1995, %v2255
    %v2274 = vmul.f32 %v1995, %v2259
    %v2275 = vmul.f32 %v1999, %v2251
    %v2276 = vmul.f32 %v1999, %v2255
    %v2277 = vmul.f32 %v1999, %v2259
    %v2278 = vmul.f32 %v2003, %v2251
    %v2279 = vmul.f32 %v2003, %v2255
    %v2280 = vmul.f32 %v2003, %v2259
    %v2281 = vmul.f32 %v2007, %v2251
    %v2282 = vmul.f32 %v2007, %v2255
    %v2283 = vmul.f32 %v2007, %v2259
    %v2284 = vmul.f32 %v2011, %v2251
    %v2285 = vmul.f32 %v2011, %v2255
    %v2286 = vmul.f32 %v2011, %v2259
    %v2287 = vmul.f32 %v2015, %v2251
    %v2288 = vmul.f32 %v2015, %v2255
    %v2289 = vmul.f32 %v2015, %v2259
    %v2290 = vmul.f32 %v2019, %v2251
    %v2291 = vmul.f32 %v2019, %v2255
    %v2292 = vmul.f32 %v2019, %v2259
    %v2293 = vmul.f32 %v2023, %v2251
    %v2294 = vmul.f32 %v2023, %v2255
    %v2295 = vmul.f32 %v2023, %v2259
    %v2296 = vmul.f32 %v2027, %v2251
    %v2297 = vmul.f32 %v2027, %v2255
    %v2298 = vmul.f32 %v2027, %v2259
    %v2299 = vmul.f32 %v2031, %v2251
    %v2300 = vmul.f32 %v2031, %v2255
    %v2301 = vmul.f32 %v2031, %v2259
    %v2302 = vmul.f32 %v2035, %v2251
    %v2303 = vmul.f32 %v2035, %v2255
    %v2304 = vmul.f32 %v2035, %v2259
    %v2305 = vmul.f32 %v2039, %v2251
    %v2306 = vmul.f32 %v2039, %v2255
    %v2307 = vmul.f32 %v2039, %v2259
    %v2308 = vmul.f32 %v2043, %v2251
    %v2309 = vmul.f32 %v2043, %v2255
    %v2310 = vmul.f32 %v2043, %v2259
    %v2311 = vmul.f32 %v2047, %v2251
    %v2312 = vmul.f32 %v2047, %v2255
    %v2313 = vmul.f32 %v2047, %v2259
    %v2314 = vmul.f32 %v2051, %v2251
    %v2315 = vmul.f32 %v2051, %v2255
    %v2316 = vmul.f32 %v2051, %v2259
    %v2317 = vmul.f32 %v2055, %v2251
    %v2318 = vmul.f32 %v2055, %v2255
    %v2319 = vmul.f32 %v2055, %v2259
    %v2320 = vmul.f32 %v2059, %v2251
    %v2321 = vmul.f32 %v2059, %v2255
    %v2322 = vmul.f32 %v2059, %v2259
    %v2323 = vmul.f32 %v2063, %v2251
    %v2324 = vmul.f32 %v2063, %v2255
    %v2325 = vmul.f32 %v2063, %v2259
    %v2326 = vmul.f32 %v2067, %v2251
    %v2327 = vmul.f32 %v2067, %v2255
    %v2328 = vmul.f32 %v2067, %v2259
    %v2329 = vmul.f32 %v2071, %v2251
    %v2330 = vmul.f32 %v2071, %v2255
    %v2331 = vmul.f32 %v2071, %v2259
    %v2332 = vmul.f32 %v2075, %v2251
    %v2333 = vmul.f32 %v2075, %v2255
    %v2334 = vmul.f32 %v2075, %v2259
    %v2335 = vmul.f32 %v2079, %v2251
    %v2336 = vmul.f32 %v2079, %v2255
    %v2337 = vmul.f32 %v2079, %v2259
    %v2338 = vmul.f32 %v2083, %v2251
    %v2339 = vmul.f32 %v2083, %v2255
    %v2340 = vmul.f32 %v2083, %v2259
    %v2341 = vmul.f32 %v2087, %v2251
    %v2342 = vmul.f32 %v2087, %v2255
    %v2343 = vmul.f32 %v2087, %v2259
    %v2344 = vmul.f32 %v2091, %v2251
    %v2345 = vmul.f32 %v2091, %v2255
    %v2346 = vmul.f32 %v2091, %v2259
    %v2347 = vmul.f32 %v2095, %v2251
    %v2348 = vmul.f32 %v2095, %v2255
    %v2349 = vmul.f32 %v2095, %v2259
    %v2350 = vmul.f32 %v2099, %v2251
    %v2351 = vmul.f32 %v2099, %v2255
    %v2352 = vmul.f32 %v2099, %v2259
    %v2353 = vmul.f32 %v2103, %v2251
    %v2354 = vmul.f32 %v2103, %v2255
    %v2355 = vmul.f32 %v2103, %v2259
    %v2356 = vmul.f32 %v2107, %v2251
    %v2357 = vmul.f32 %v2107, %v2255
    %v2358 = vmul.f32 %v2107, %v2259
    %v2359 = vmul.f32 %v2111, %v2251
    %v2360 = vmul.f32 %v2111, %v2255
    %v2361 = vmul.f32 %v2111, %v2259
    %v2362 = vmul.f32 %v2115, %v2251
    %v2363 = vmul.f32 %v2115, %v2255
    %v2364 = vmul.f32 %v2115, %v2259
    %v2365 = vmul.f32 %v2119, %v2251
    %v2366 = vmul.f32 %v2119, %v2255
    %v2367 = vmul.f32 %v2119, %v2259
    %v2368 = vmul.f32 %v2123, %v2251
    %v2369 = vmul.f32 %v2123, %v2255
    %v2370 = vmul.f32 %v2123, %v2259
    %v2371 = vmul.f32 %v2127, %v2251
    %v2372 = vmul.f32 %v2127, %v2255
    %v2373 = vmul.f32 %v2127, %v2259
    %v2374 = vmul.f32 %v2131, %v2251
    %v2375 = vmul.f32 %v2131, %v2255
    %v2376 = vmul.f32 %v2131, %v2259
    %v2377 = vmul.f32 %v2135, %v2251
    %v2378 = vmul.f32 %v2135, %v2255
    %v2379 = vmul.f32 %v2135, %v2259
    %v2380 = vmul.f32 %v2139, %v2251
    %v2381 = vmul.f32 %v2139, %v2255
    %v2382 = vmul.f32 %v2139, %v2259
    %v2383 = vmul.f32 %v2143, %v2251
    %v2384 = vmul.f32 %v2143, %v2255
    %v2385 = vmul.f32 %v2143, %v2259
    %v2386 = vmul.f32 %v2147, %v2251
    %v2387 = vmul.f32 %v2147, %v2255
    %v2388 = vmul.f32 %v2147, %v2259
    %v2389 = vmul.f32 %v2151, %v2251
    %v2390 = vmul.f32 %v2151, %v2255
    %v2391 = vmul.f32 %v2151, %v2259
    %v2392 = vmul.f32 %v2155, %v2251
    %v2393 = vmul.f32 %v2155, %v2255
    %v2394 = vmul.f32 %v2155, %v2259
    %v2395 = vmul.f32 %v2159, %v2251
    %v2396 = vmul.f32 %v2159, %v2255
    %v2397 = vmul.f32 %v2159, %v2259
    %v2398 = vmul.f32 %v2163, %v2251
    %v2399 = vmul.f32 %v2163, %v2255
    %v2400 = vmul.f32 %v2163, %v2259
    %v2401 = vmul.f32 %v2167, %v2251
    %v2402 = vmul.f32 %v2167, %v2255
    %v2403 = vmul.f32 %v2167, %v2259
    %v2404 = vmul.f32 %v2171, %v2251
    %v2405 = vmul.f32 %v2171, %v2255
    %v2406 = vmul.f32 %v2171, %v2259
    %v2407 = vmul.f32 %v2175, %v2251
    %v2408 = vmul.f32 %v2175, %v2255
    %v2409 = vmul.f32 %v2175, %v2259
    %v2410 = vmul.f32 %v2179, %v2251
    %v2411 = vmul.f32 %v2179, %v2255
    %v2412 = vmul.f32 %v2179, %v2259
    %v2413 = vmul.f32 %v2183, %v2251
    %v2414 = vmul.f32 %v2183, %v2255
    %v2415 = vmul.f32 %v2183, %v2259
    %v2416 = vmul.f32 %v2187, %v2251
    %v2417 = vmul.f32 %v2187, %v2255
    %v2418 = vmul.f32 %v2187, %v2259
    %v2419 = vmul.f32 %v2191, %v2251
    %v2420 = vmul.f32 %v2191, %v2255
    %v2421 = vmul.f32 %v2191, %v2259
    %v2422 = vmul.f32 %v2195, %v2251
    %v2423 = vmul.f32 %v2195, %v2255
    %v2424 = vmul.f32 %v2195, %v2259
    %v2425 = vmul.f32 %v2199, %v2251
    %v2426 = vmul.f32 %v2199, %v2255
    %v2427 = vmul.f32 %v2199, %v2259
    %v2428 = vmul.f32 %v2203, %v2251
    %v2429 = vmul.f32 %v2203, %v2255
    %v2430 = vmul.f32 %v2203, %v2259
    %v2431 = vmul.f32 %v2207, %v2251
    %v2432 = vmul.f32 %v2207, %v2255
    %v2433 = vmul.f32 %v2207, %v2259
    %v2434 = vmul.f32 %v2211, %v2251
    %v2435 = vmul.f32 %v2211, %v2255
    %v2436 = vmul.f32 %v2211, %v2259
    %v2437 = vmul.f32 %v2215, %v2251
    %v2438 = vmul.f32 %v2215, %v2255
    %v2439 = vmul.f32 %v2215, %v2259
    %v2440 = vmul.f32 %v2219, %v2251
    %v2441 = vmul.f32 %v2219, %v2255
    %v2442 = vmul.f32 %v2219, %v2259
    %v2443 = vmul.f32 %v2223, %v2251
    %v2444 = vmul.f32 %v2223, %v2255
    %v2445 = vmul.f32 %v2223, %v2259
    %v2446 = vmul.f32 %v2227, %v2251
    %v2447 = vmul.f32 %v2227, %v2255
    %v2448 = vmul.f32 %v2227, %v2259
    %v2449 = vmul.f32 %v2231, %v2251
    %v2450 = vmul.f32 %v2231, %v2255
    %v2451 = vmul.f32 %v2231, %v2259
    %v2452 = vadd.f32 %v1785, %v2260
    %v2453 = vadd.f32 %v1786, %v2261
    %v2454 = vadd.f32 %v1787, %v2262
    %v2455 = vadd.f32 %v1788, %v2263
    %v2456 = vadd.f32 %v1789, %v2264
    %v2457 = vadd.f32 %v1790, %v2265
    %v2458 = vadd.f32 %v1791, %v2266
    %v2459 = vadd.f32 %v1792, %v2267
    %v2460 = vadd.f32 %v1793, %v2268
    %v2461 = vadd.f32 %v1794, %v2269
    %v2462 = vadd.f32 %v1795, %v2270
    %v2463 = vadd.f32 %v1796, %v2271
    %v2464 = vadd.f32 %v1797, %v2272
    %v2465 = vadd.f32 %v1798, %v2273
    %v2466 = vadd.f32 %v1799, %v2274
    %v2467 = vadd.f32 %v1800, %v2275
    %v2468 = vadd.f32 %v1801, %v2276
    %v2469 = vadd.f32 %v1802, %v2277
    %v2470 = vadd.f32 %v1803, %v2278
    %v2471 = vadd.f32 %v1804, %v2279
    %v2472 = vadd.f32 %v1805, %v2280
    %v2473 = vadd.f32 %v1806, %v2281
    %v2474 = vadd.f32 %v1807, %v2282
    %v2475 = vadd.f32 %v1808, %v2283
    %v2476 = vadd.f32 %v1809, %v2284
    %v2477 = vadd.f32 %v1810, %v2285
    %v2478 = vadd.f32 %v1811, %v2286
    %v2479 = vadd.f32 %v1812, %v2287
    %v2480 = vadd.f32 %v1813, %v2288
    %v2481 = vadd.f32 %v1814, %v2289
    %v2482 = vadd.f32 %v1815, %v2290
    %v2483 = vadd.f32 %v1816, %v2291
    %v2484 = vadd.f32 %v1817, %v2292
    %v2485 = vadd.f32 %v1818, %v2293
    %v2486 = vadd.f32 %v1819, %v2294
    %v2487 = vadd.f32 %v1820, %v2295
    %v2488 = vadd.f32 %v1821, %v2296
    %v2489 = vadd.f32 %v1822, %v2297
    %v2490 = vadd.f32 %v1823, %v2298
    %v2491 = vadd.f32 %v1824, %v2299
    %v2492 = vadd.f32 %v1825, %v2300
    %v2493 = vadd.f32 %v1826, %v2301
    %v2494 = vadd.f32 %v1827, %v2302
    %v2495 = vadd.f32 %v1828, %v2303
    %v2496 = vadd.f32 %v1829, %v2304
    %v2497 = vadd.f32 %v1830, %v2305
    %v2498 = vadd.f32 %v1831, %v2306
    %v2499 = vadd.f32 %v1832, %v2307
    %v2500 = vadd.f32 %v1833, %v2308
    %v2501 = vadd.f32 %v1834, %v2309
    %v2502 = vadd.f32 %v1835, %v2310
    %v2503 = vadd.f32 %v1836, %v2311
    %v2504 = vadd.f32 %v1837, %v2312
    %v2505 = vadd.f32 %v1838, %v2313
    %v2506 = vadd.f32 %v1839, %v2314
    %v2507 = vadd.f32 %v1840, %v2315
    %v2508 = vadd.f32 %v1841, %v2316
    %v2509 = vadd.f32 %v1842, %v2317
    %v2510 = vadd.f32 %v1843, %v2318
    %v2511 = vadd.f32 %v1844, %v2319
    %v2512 = vadd.f32 %v1845, %v2320
    %v2513 = vadd.f32 %v1846, %v2321
    %v2514 = vadd.f32 %v1847, %v2322
    %v2515 = vadd.f32 %v1848, %v2323
    %v2516 = vadd.f32 %v1849, %v2324
    %v2517 = vadd.f32 %v1850, %v2325
    %v2518 = vadd.f32 %v1851, %v2326
    %v2519 = vadd.f32 %v1852, %v2327
    %v2520 = vadd.f32 %v1853, %v2328
    %v2521 = vadd.f32 %v1854, %v2329
    %v2522 = vadd.f32 %v1855, %v2330
    %v2523 = vadd.f32 %v1856, %v2331
    %v2524 = vadd.f32 %v1857, %v2332
    %v2525 = vadd.f32 %v1858, %v2333
    %v2526 = vadd.f32 %v1859, %v2334
    %v2527 = vadd.f32 %v1860, %v2335
    %v2528 = vadd.f32 %v1861, %v2336
    %v2529 = vadd.f32 %v1862, %v2337
    %v2530 = vadd.f32 %v1863, %v2338
    %v2531 = vadd.f32 %v1864, %v2339
    %v2532 = vadd.f32 %v1865, %v2340
    %v2533 = vadd.f32 %v1866, %v2341
    %v2534 = vadd.f32 %v1867, %v2342
    %v2535 = vadd.f32 %v1868, %v2343
    %v2536 = vadd.f32 %v1869, %v2344
    %v2537 = vadd.f32 %v1870, %v2345
    %v2538 = vadd.f32 %v1871, %v2346
    %v2539 = vadd.f32 %v1872, %v2347
    %v2540 = vadd.f32 %v1873, %v2348
    %v2541 = vadd.f32 %v1874, %v2349
    %v2542 = vadd.f32 %v1875, %v2350
    %v2543 = vadd.f32 %v1876, %v2351
    %v2544 = vadd.f32 %v1877, %v2352
    %v2545 = vadd.f32 %v1878, %v2353
    %v2546 = vadd.f32 %v1879, %v2354
    %v2547 = vadd.f32 %v1880, %v2355
    %v2548 = vadd.f32 %v1881, %v2356
    %v2549 = vadd.f32 %v1882, %v2357
    %v2550 = vadd.f32 %v1883, %v2358
    %v2551 = vadd.f32 %v1884, %v2359
    %v2552 = vadd.f32 %v1885, %v2360
    %v2553 = vadd.f32 %v1886, %v2361
    %v2554 = vadd.f32 %v1887, %v2362
    %v2555 = vadd.f32 %v1888, %v2363
    %v2556 = vadd.f32 %v1889, %v2364
    %v2557 = vadd.f32 %v1890, %v2365
    %v2558 = vadd.f32 %v1891, %v2366
    %v2559 = vadd.f32 %v1892, %v2367
    %v2560 = vadd.f32 %v1893, %v2368
    %v2561 = vadd.f32 %v1894, %v2369
    %v2562 = vadd.f32 %v1895, %v2370
    %v2563 = vadd.f32 %v1896, %v2371
    %v2564 = vadd.f32 %v1897, %v2372
    %v2565 = vadd.f32 %v1898, %v2373
    %v2566 = vadd.f32 %v1899, %v2374
    %v2567 = vadd.f32 %v1900, %v2375
    %v2568 = vadd.f32 %v1901, %v2376
    %v2569 = vadd.f32 %v1902, %v2377
    %v2570 = vadd.f32 %v1903, %v2378
    %v2571 = vadd.f32 %v1904, %v2379
    %v2572 = vadd.f32 %v1905, %v2380
    %v2573 = vadd.f32 %v1906, %v2381
    %v2574 = vadd.f32 %v1907, %v2382
    %v2575 = vadd.f32 %v1908, %v2383
    %v2576 = vadd.f32 %v1909, %v2384
    %v2577 = vadd.f32 %v1910, %v2385
    %v2578 = vadd.f32 %v1911, %v2386
    %v2579 = vadd.f32 %v1912, %v2387
    %v2580 = vadd.f32 %v1913, %v2388
    %v2581 = vadd.f32 %v1914, %v2389
    %v2582 = vadd.f32 %v1915, %v2390
    %v2583 = vadd.f32 %v1916, %v2391
    %v2584 = vadd.f32 %v1917, %v2392
    %v2585 = vadd.f32 %v1918, %v2393
    %v2586 = vadd.f32 %v1919, %v2394
    %v2587 = vadd.f32 %v1920, %v2395
    %v2588 = vadd.f32 %v1921, %v2396
    %v2589 = vadd.f32 %v1922, %v2397
    %v2590 = vadd.f32 %v1923, %v2398
    %v2591 = vadd.f32 %v1924, %v2399
    %v2592 = vadd.f32 %v1925, %v2400
    %v2593 = vadd.f32 %v1926, %v2401
    %v2594 = vadd.f32 %v1927, %v2402
    %v2595 = vadd.f32 %v1928, %v2403
    %v2596 = vadd.f32 %v1929, %v2404
    %v2597 = vadd.f32 %v1930, %v2405
    %v2598 = vadd.f32 %v1931, %v2406
    %v2599 = vadd.f32 %v1932, %v2407
    %v2600 = vadd.f32 %v1933, %v2408
    %v2601 = vadd.f32 %v1934, %v2409
    %v2602 = vadd.f32 %v1935, %v2410
    %v2603 = vadd.f32 %v1936, %v2411
    %v2604 = vadd.f32 %v1937, %v2412
    %v2605 = vadd.f32 %v1938, %v2413
    %v2606 = vadd.f32 %v1939, %v2414
    %v2607 = vadd.f32 %v1940, %v2415
    %v2608 = vadd.f32 %v1941, %v2416
    %v2609 = vadd.f32 %v1942, %v2417
    %v2610 = vadd.f32 %v1943, %v2418
    %v2611 = vadd.f32 %v1944, %v2419
    %v2612 = vadd.f32 %v1945, %v2420
    %v2613 = vadd.f32 %v1946, %v2421
    %v2614 = vadd.f32 %v1947, %v2422
    %v2615 = vadd.f32 %v1948, %v2423
    %v2616 = vadd.f32 %v1949, %v2424
    %v2617 = vadd.f32 %v1950, %v2425
    %v2618 = vadd.f32 %v1951, %v2426
    %v2619 = vadd.f32 %v1952, %v2427
    %v2620 = vadd.f32 %v1953, %v2428
    %v2621 = vadd.f32 %v1954, %v2429
    %v2622 = vadd.f32 %v1955, %v2430
    %v2623 = vadd.f32 %v1956, %v2431
    %v2624 = vadd.f32 %v1957, %v2432
    %v2625 = vadd.f32 %v1958, %v2433
    %v2626 = vadd.f32 %v1959, %v2434
    %v2627 = vadd.f32 %v1960, %v2435
    %v2628 = vadd.f32 %v1961, %v2436
    %v2629 = vadd.f32 %v1962, %v2437
    %v2630 = vadd.f32 %v1963, %v2438
    %v2631 = vadd.f32 %v1964, %v2439
    %v2632 = vadd.f32 %v1965, %v2440
    %v2633 = vadd.f32 %v1966, %v2441
    %v2634 = vadd.f32 %v1967, %v2442
    %v2635 = vadd.f32 %v1968, %v2443
    %v2636 = vadd.f32 %v1969, %v2444
    %v2637 = vadd.f32 %v1970, %v2445
    %v2638 = vadd.f32 %v1971, %v2446
    %v2639 = vadd.f32 %v1972, %v2447
    %v2640 = vadd.f32 %v1973, %v2448
    %v2641 = vadd.f32 %v1974, %v2449
    %v2642 = vadd.f32 %v1975, %v2450
    %v2643 = vadd.f32 %v1976, %v2451
    %v2645 = vlaneseq
    %v2646 = vshrl.u32 %v2645, 7
    %v2647 = vsub.s32 0, %v2646
    %v2648 = vrot.slane %v101, %v2647
    %v2649 = vlaneseq
    %v2650 = vshrl.u32 %v2649, 7
    %v2651 = vsub.s32 1, %v2650
    %v2652 = vrot.slane %v101, %v2651
    %v2653 = vlaneseq
    %v2654 = vshrl.u32 %v2653, 7
    %v2655 = vsub.s32 2, %v2654
    %v2656 = vrot.slane %v101, %v2655
    %v2660 = vadd.f32 %v2452, %v2648
    %v2661 = vadd.f32 %v2453, %v2652
    %v2662 = vadd.f32 %v2454, %v2656
    %v2663 = vadd.f32 %v2455, %v2648
    %v2664 = vadd.f32 %v2456, %v2652
    %v2665 = vadd.f32 %v2457, %v2656
    %v2666 = vadd.f32 %v2458, %v2648
    %v2667 = vadd.f32 %v2459, %v2652
    %v2668 = vadd.f32 %v2460, %v2656
    %v2669 = vadd.f32 %v2461, %v2648
    %v2670 = vadd.f32 %v2462, %v2652
    %v2671 = vadd.f32 %v2463, %v2656
    %v2672 = vadd.f32 %v2464, %v2648
    %v2673 = vadd.f32 %v2465, %v2652
    %v2674 = vadd.f32 %v2466, %v2656
    %v2675 = vadd.f32 %v2467, %v2648
    %v2676 = vadd.f32 %v2468, %v2652
    %v2677 = vadd.f32 %v2469, %v2656
    %v2678 = vadd.f32 %v2470, %v2648
    %v2679 = vadd.f32 %v2471, %v2652
    %v2680 = vadd.f32 %v2472, %v2656
    %v2681 = vadd.f32 %v2473, %v2648
    %v2682 = vadd.f32 %v2474, %v2652
    %v2683 = vadd.f32 %v2475, %v2656
    %v2684 = vadd.f32 %v2476, %v2648
    %v2685 = vadd.f32 %v2477, %v2652
    %v2686 = vadd.f32 %v2478, %v2656
    %v2687 = vadd.f32 %v2479, %v2648
    %v2688 = vadd.f32 %v2480, %v2652
    %v2689 = vadd.f32 %v2481, %v2656
    %v2690 = vadd.f32 %v2482, %v2648
    %v2691 = vadd.f32 %v2483, %v2652
    %v2692 = vadd.f32 %v2484, %v2656
    %v2693 = vadd.f32 %v2485, %v2648
    %v2694 = vadd.f32 %v2486, %v2652
    %v2695 = vadd.f32 %v2487, %v2656
    %v2696 = vadd.f32 %v2488, %v2648
    %v2697 = vadd.f32 %v2489, %v2652
    %v2698 = vadd.f32 %v2490, %v2656
    %v2699 = vadd.f32 %v2491, %v2648
    %v2700 = vadd.f32 %v2492, %v2652
    %v2701 = vadd.f32 %v2493, %v2656
    %v2702 = vadd.f32 %v2494, %v2648
    %v2703 = vadd.f32 %v2495, %v2652
    %v2704 = vadd.f32 %v2496, %v2656
    %v2705 = vadd.f32 %v2497, %v2648
    %v2706 = vadd.f32 %v2498, %v2652
    %v2707 = vadd.f32 %v2499, %v2656
    %v2708 = vadd.f32 %v2500, %v2648
    %v2709 = vadd.f32 %v2501, %v2652
    %v2710 = vadd.f32 %v2502, %v2656
    %v2711 = vadd.f32 %v2503, %v2648
    %v2712 = vadd.f32 %v2504, %v2652
    %v2713 = vadd.f32 %v2505, %v2656
    %v2714 = vadd.f32 %v2506, %v2648
    %v2715 = vadd.f32 %v2507, %v2652
    %v2716 = vadd.f32 %v2508, %v2656
    %v2717 = vadd.f32 %v2509, %v2648
    %v2718 = vadd.f32 %v2510, %v2652
    %v2719 = vadd.f32 %v2511, %v2656
    %v2720 = vadd.f32 %v2512, %v2648
    %v2721 = vadd.f32 %v2513, %v2652
    %v2722 = vadd.f32 %v2514, %v2656
    %v2723 = vadd.f32 %v2515, %v2648
    %v2724 = vadd.f32 %v2516, %v2652
    %v2725 = vadd.f32 %v2517, %v2656
    %v2726 = vadd.f32 %v2518, %v2648
    %v2727 = vadd.f32 %v2519, %v2652
    %v2728 = vadd.f32 %v2520, %v2656
    %v2729 = vadd.f32 %v2521, %v2648
    %v2730 = vadd.f32 %v2522, %v2652
    %v2731 = vadd.f32 %v2523, %v2656
    %v2732 = vadd.f32 %v2524, %v2648
    %v2733 = vadd.f32 %v2525, %v2652
    %v2734 = vadd.f32 %v2526, %v2656
    %v2735 = vadd.f32 %v2527, %v2648
    %v2736 = vadd.f32 %v2528, %v2652
    %v2737 = vadd.f32 %v2529, %v2656
    %v2738 = vadd.f32 %v2530, %v2648
    %v2739 = vadd.f32 %v2531, %v2652
    %v2740 = vadd.f32 %v2532, %v2656
    %v2741 = vadd.f32 %v2533, %v2648
    %v2742 = vadd.f32 %v2534, %v2652
    %v2743 = vadd.f32 %v2535, %v2656
    %v2744 = vadd.f32 %v2536, %v2648
    %v2745 = vadd.f32 %v2537, %v2652
    %v2746 = vadd.f32 %v2538, %v2656
    %v2747 = vadd.f32 %v2539, %v2648
    %v2748 = vadd.f32 %v2540, %v2652
    %v2749 = vadd.f32 %v2541, %v2656
    %v2750 = vadd.f32 %v2542, %v2648
    %v2751 = vadd.f32 %v2543, %v2652
    %v2752 = vadd.f32 %v2544, %v2656
    %v2753 = vadd.f32 %v2545, %v2648
    %v2754 = vadd.f32 %v2546, %v2652
    %v2755 = vadd.f32 %v2547, %v2656
    %v2756 = vadd.f32 %v2548, %v2648
    %v2757 = vadd.f32 %v2549, %v2652
    %v2758 = vadd.f32 %v2550, %v2656
    %v2759 = vadd.f32 %v2551, %v2648
    %v2760 = vadd.f32 %v2552, %v2652
    %v2761 = vadd.f32 %v2553, %v2656
    %v2762 = vadd.f32 %v2554, %v2648
    %v2763 = vadd.f32 %v2555, %v2652
    %v2764 = vadd.f32 %v2556, %v2656
    %v2765 = vadd.f32 %v2557, %v2648
    %v2766 = vadd.f32 %v2558, %v2652
    %v2767 = vadd.f32 %v2559, %v2656
    %v2768 = vadd.f32 %v2560, %v2648
    %v2769 = vadd.f32 %v2561, %v2652
    %v2770 = vadd.f32 %v2562, %v2656
    %v2771 = vadd.f32 %v2563, %v2648
    %v2772 = vadd.f32 %v2564, %v2652
    %v2773 = vadd.f32 %v2565, %v2656
    %v2774 = vadd.f32 %v2566, %v2648
    %v2775 = vadd.f32 %v2567, %v2652
    %v2776 = vadd.f32 %v2568, %v2656
    %v2777 = vadd.f32 %v2569, %v2648
    %v2778 = vadd.f32 %v2570, %v2652
    %v2779 = vadd.f32 %v2571, %v2656
    %v2780 = vadd.f32 %v2572, %v2648
    %v2781 = vadd.f32 %v2573, %v2652
    %v2782 = vadd.f32 %v2574, %v2656
    %v2783 = vadd.f32 %v2575, %v2648
    %v2784 = vadd.f32 %v2576, %v2652
    %v2785 = vadd.f32 %v2577, %v2656
    %v2786 = vadd.f32 %v2578, %v2648
    %v2787 = vadd.f32 %v2579, %v2652
    %v2788 = vadd.f32 %v2580, %v2656
    %v2789 = vadd.f32 %v2581, %v2648
    %v2790 = vadd.f32 %v2582, %v2652
    %v2791 = vadd.f32 %v2583, %v2656
    %v2792 = vadd.f32 %v2584, %v2648
    %v2793 = vadd.f32 %v2585, %v2652
    %v2794 = vadd.f32 %v2586, %v2656
    %v2795 = vadd.f32 %v2587, %v2648
    %v2796 = vadd.f32 %v2588, %v2652
    %v2797 = vadd.f32 %v2589, %v2656
    %v2798 = vadd.f32 %v2590, %v2648
    %v2799 = vadd.f32 %v2591, %v2652
    %v2800 = vadd.f32 %v2592, %v2656
    %v2801 = vadd.f32 %v2593, %v2648
    %v2802 = vadd.f32 %v2594, %v2652
    %v2803 = vadd.f32 %v2595, %v2656
    %v2804 = vadd.f32 %v2596, %v2648
    %v2805 = vadd.f32 %v2597, %v2652
    %v2806 = vadd.f32 %v2598, %v2656
    %v2807 = vadd.f32 %v2599, %v2648
    %v2808 = vadd.f32 %v2600, %v2652
    %v2809 = vadd.f32 %v2601, %v2656
    %v2810 = vadd.f32 %v2602, %v2648
    %v2811 = vadd.f32 %v2603, %v2652
    %v2812 = vadd.f32 %v2604, %v2656
    %v2813 = vadd.f32 %v2605, %v2648
    %v2814 = vadd.f32 %v2606, %v2652
    %v2815 = vadd.f32 %v2607, %v2656
    %v2816 = vadd.f32 %v2608, %v2648
    %v2817 = vadd.f32 %v2609, %v2652
    %v2818 = vadd.f32 %v2610, %v2656
    %v2819 = vadd.f32 %v2611, %v2648
    %v2820 = vadd.f32 %v2612, %v2652
    %v2821 = vadd.f32 %v2613, %v2656
    %v2822 = vadd.f32 %v2614, %v2648
    %v2823 = vadd.f32 %v2615, %v2652
    %v2824 = vadd.f32 %v2616, %v2656
    %v2825 = vadd.f32 %v2617, %v2648
    %v2826 = vadd.f32 %v2618, %v2652
    %v2827 = vadd.f32 %v2619, %v2656
    %v2828 = vadd.f32 %v2620, %v2648
    %v2829 = vadd.f32 %v2621, %v2652
    %v2830 = vadd.f32 %v2622, %v2656
    %v2831 = vadd.f32 %v2623, %v2648
    %v2832 = vadd.f32 %v2624, %v2652
    %v2833 = vadd.f32 %v2625, %v2656
    %v2834 = vadd.f32 %v2626, %v2648
    %v2835 = vadd.f32 %v2627, %v2652
    %v2836 = vadd.f32 %v2628, %v2656
    %v2837 = vadd.f32 %v2629, %v2648
    %v2838 = vadd.f32 %v2630, %v2652
    %v2839 = vadd.f32 %v2631, %v2656
    %v2840 = vadd.f32 %v2632, %v2648
    %v2841 = vadd.f32 %v2633, %v2652
    %v2842 = vadd.f32 %v2634, %v2656
    %v2843 = vadd.f32 %v2635, %v2648
    %v2844 = vadd.f32 %v2636, %v2652
    %v2845 = vadd.f32 %v2637, %v2656
    %v2846 = vadd.f32 %v2638, %v2648
    %v2847 = vadd.f32 %v2639, %v2652
    %v2848 = vadd.f32 %v2640, %v2656
    %v2849 = vadd.f32 %v2641, %v2648
    %v2850 = vadd.f32 %v2642, %v2652
    %v2851 = vadd.f32 %v2643, %v2656
    %v2852 = vmax.f32 %v2660, 0.0
    %v2853 = vmax.f32 %v2661, 0.0
    %v2854 = vmax.f32 %v2662, 0.0
    %v2855 = vmax.f32 %v2663, 0.0
    %v2856 = vmax.f32 %v2664, 0.0
    %v2857 = vmax.f32 %v2665, 0.0
    %v2858 = vmax.f32 %v2666, 0.0
    %v2859 = vmax.f32 %v2667, 0.0
    %v2860 = vmax.f32 %v2668, 0.0
    %v2861 = vmax.f32 %v2669, 0.0
    %v2862 = vmax.f32 %v2670, 0.0
    %v2863 = vmax.f32 %v2671, 0.0
    %v2864 = vmax.f32 %v2672, 0.0
    %v2865 = vmax.f32 %v2673, 0.0
    %v2866 = vmax.f32 %v2674, 0.0
    %v2867 = vmax.f32 %v2675, 0.0
    %v2868 = vmax.f32 %v2676, 0.0
    %v2869 = vmax.f32 %v2677, 0.0
    %v2870 = vmax.f32 %v2678, 0.0
    %v2871 = vmax.f32 %v2679, 0.0
    %v2872 = vmax.f32 %v2680, 0.0
    %v2873 = vmax.f32 %v2681, 0.0
    %v2874 = vmax.f32 %v2682, 0.0
    %v2875 = vmax.f32 %v2683, 0.0
    %v2876 = vmax.f32 %v2684, 0.0
    %v2877 = vmax.f32 %v2685, 0.0
    %v2878 = vmax.f32 %v2686, 0.0
    %v2879 = vmax.f32 %v2687, 0.0
    %v2880 = vmax.f32 %v2688, 0.0
    %v2881 = vmax.f32 %v2689, 0.0
    %v2882 = vmax.f32 %v2690, 0.0
    %v2883 = vmax.f32 %v2691, 0.0
    %v2884 = vmax.f32 %v2692, 0.0
    %v2885 = vmax.f32 %v2693, 0.0
    %v2886 = vmax.f32 %v2694, 0.0
    %v2887 = vmax.f32 %v2695, 0.0
    %v2888 = vmax.f32 %v2696, 0.0
    %v2889 = vmax.f32 %v2697, 0.0
    %v2890 = vmax.f32 %v2698, 0.0
    %v2891 = vmax.f32 %v2699, 0.0
    %v2892 = vmax.f32 %v2700, 0.0
    %v2893 = vmax.f32 %v2701, 0.0
    %v2894 = vmax.f32 %v2702, 0.0
    %v2895 = vmax.f32 %v2703, 0.0
    %v2896 = vmax.f32 %v2704, 0.0
    %v2897 = vmax.f32 %v2705, 0.0
    %v2898 = vmax.f32 %v2706, 0.0
    %v2899 = vmax.f32 %v2707, 0.0
    %v2900 = vmax.f32 %v2708, 0.0
    %v2901 = vmax.f32 %v2709, 0.0
    %v2902 = vmax.f32 %v2710, 0.0
    %v2903 = vmax.f32 %v2711, 0.0
    %v2904 = vmax.f32 %v2712, 0.0
    %v2905 = vmax.f32 %v2713, 0.0
    %v2906 = vmax.f32 %v2714, 0.0
    %v2907 = vmax.f32 %v2715, 0.0
    %v2908 = vmax.f32 %v2716, 0.0
    %v2909 = vmax.f32 %v2717, 0.0
    %v2910 = vmax.f32 %v2718, 0.0
    %v2911 = vmax.f32 %v2719, 0.0
    %v2912 = vmax.f32 %v2720, 0.0
    %v2913 = vmax.f32 %v2721, 0.0
    %v2914 = vmax.f32 %v2722, 0.0
    %v2915 = vmax.f32 %v2723, 0.0
    %v2916 = vmax.f32 %v2724, 0.0
    %v2917 = vmax.f32 %v2725, 0.0
    %v2918 = vmax.f32 %v2726, 0.0
    %v2919 = vmax.f32 %v2727, 0.0
    %v2920 = vmax.f32 %v2728, 0.0
    %v2921 = vmax.f32 %v2729, 0.0
    %v2922 = vmax.f32 %v2730, 0.0
    %v2923 = vmax.f32 %v2731, 0.0
    %v2924 = vmax.f32 %v2732, 0.0
    %v2925 = vmax.f32 %v2733, 0.0
    %v2926 = vmax.f32 %v2734, 0.0
    %v2927 = vmax.f32 %v2735, 0.0
    %v2928 = vmax.f32 %v2736, 0.0
    %v2929 = vmax.f32 %v2737, 0.0
    %v2930 = vmax.f32 %v2738, 0.0
    %v2931 = vmax.f32 %v2739, 0.0
    %v2932 = vmax.f32 %v2740, 0.0
    %v2933 = vmax.f32 %v2741, 0.0
    %v2934 = vmax.f32 %v2742, 0.0
    %v2935 = vmax.f32 %v2743, 0.0
    %v2936 = vmax.f32 %v2744, 0.0
    %v2937 = vmax.f32 %v2745, 0.0
    %v2938 = vmax.f32 %v2746, 0.0
    %v2939 = vmax.f32 %v2747, 0.0
    %v2940 = vmax.f32 %v2748, 0.0
    %v2941 = vmax.f32 %v2749, 0.0
    %v2942 = vmax.f32 %v2750, 0.0
    %v2943 = vmax.f32 %v2751, 0.0
    %v2944 = vmax.f32 %v2752, 0.0
    %v2945 = vmax.f32 %v2753, 0.0
    %v2946 = vmax.f32 %v2754, 0.0
    %v2947 = vmax.f32 %v2755, 0.0
    %v2948 = vmax.f32 %v2756, 0.0
    %v2949 = vmax.f32 %v2757, 0.0
    %v2950 = vmax.f32 %v2758, 0.0
    %v2951 = vmax.f32 %v2759, 0.0
    %v2952 = vmax.f32 %v2760, 0.0
    %v2953 = vmax.f32 %v2761, 0.0
    %v2954 = vmax.f32 %v2762, 0.0
    %v2955 = vmax.f32 %v2763, 0.0
    %v2956 = vmax.f32 %v2764, 0.0
    %v2957 = vmax.f32 %v2765, 0.0
    %v2958 = vmax.f32 %v2766, 0.0
    %v2959 = vmax.f32 %v2767, 0.0
    %v2960 = vmax.f32 %v2768, 0.0
    %v2961 = vmax.f32 %v2769, 0.0
    %v2962 = vmax.f32 %v2770, 0.0
    %v2963 = vmax.f32 %v2771, 0.0
    %v2964 = vmax.f32 %v2772, 0.0
    %v2965 = vmax.f32 %v2773, 0.0
    %v2966 = vmax.f32 %v2774, 0.0
    %v2967 = vmax.f32 %v2775, 0.0
    %v2968 = vmax.f32 %v2776, 0.0
    %v2969 = vmax.f32 %v2777, 0.0
    %v2970 = vmax.f32 %v2778, 0.0
    %v2971 = vmax.f32 %v2779, 0.0
    %v2972 = vmax.f32 %v2780, 0.0
    %v2973 = vmax.f32 %v2781, 0.0
    %v2974 = vmax.f32 %v2782, 0.0
    %v2975 = vmax.f32 %v2783, 0.0
    %v2976 = vmax.f32 %v2784, 0.0
    %v2977 = vmax.f32 %v2785, 0.0
    %v2978 = vmax.f32 %v2786, 0.0
    %v2979 = vmax.f32 %v2787, 0.0
    %v2980 = vmax.f32 %v2788, 0.0
    %v2981 = vmax.f32 %v2789, 0.0
    %v2982 = vmax.f32 %v2790, 0.0
    %v2983 = vmax.f32 %v2791, 0.0
    %v2984 = vmax.f32 %v2792, 0.0
    %v2985 = vmax.f32 %v2793, 0.0
    %v2986 = vmax.f32 %v2794, 0.0
    %v2987 = vmax.f32 %v2795, 0.0
    %v2988 = vmax.f32 %v2796, 0.0
    %v2989 = vmax.f32 %v2797, 0.0
    %v2990 = vmax.f32 %v2798, 0.0
    %v2991 = vmax.f32 %v2799, 0.0
    %v2992 = vmax.f32 %v2800, 0.0
    %v2993 = vmax.f32 %v2801, 0.0
    %v2994 = vmax.f32 %v2802, 0.0
    %v2995 = vmax.f32 %v2803, 0.0
    %v2996 = vmax.f32 %v2804, 0.0
    %v2997 = vmax.f32 %v2805, 0.0
    %v2998 = vmax.f32 %v2806, 0.0
    %v2999 = vmax.f32 %v2807, 0.0
    %v3000 = vmax.f32 %v2808, 0.0
    %v3001 = vmax.f32 %v2809, 0.0
    %v3002 = vmax.f32 %v2810, 0.0
    %v3003 = vmax.f32 %v2811, 0.0
    %v3004 = vmax.f32 %v2812, 0.0
    %v3005 = vmax.f32 %v2813, 0.0
    %v3006 = vmax.f32 %v2814, 0.0
    %v3007 = vmax.f32 %v2815, 0.0
    %v3008 = vmax.f32 %v2816, 0.0
    %v3009 = vmax.f32 %v2817, 0.0
    %v3010 = vmax.f32 %v2818, 0.0
    %v3011 = vmax.f32 %v2819, 0.0
    %v3012 = vmax.f32 %v2820, 0.0
    %v3013 = vmax.f32 %v2821, 0.0
    %v3014 = vmax.f32 %v2822, 0.0
    %v3015 = vmax.f32 %v2823, 0.0
    %v3016 = vmax.f32 %v2824, 0.0
    %v3017 = vmax.f32 %v2825, 0.0
    %v3018 = vmax.f32 %v2826, 0.0
    %v3019 = vmax.f32 %v2827, 0.0
    %v3020 = vmax.f32 %v2828, 0.0
    %v3021 = vmax.f32 %v2829, 0.0
    %v3022 = vmax.f32 %v2830, 0.0
    %v3023 = vmax.f32 %v2831, 0.0
    %v3024 = vmax.f32 %v2832, 0.0
    %v3025 = vmax.f32 %v2833, 0.0
    %v3026 = vmax.f32 %v2834, 0.0
    %v3027 = vmax.f32 %v2835, 0.0
    %v3028 = vmax.f32 %v2836, 0.0
    %v3029 = vmax.f32 %v2837, 0.0
    %v3030 = vmax.f32 %v2838, 0.0
    %v3031 = vmax.f32 %v2839, 0.0
    %v3032 = vmax.f32 %v2840, 0.0
    %v3033 = vmax.f32 %v2841, 0.0
    %v3034 = vmax.f32 %v2842, 0.0
    %v3035 = vmax.f32 %v2843, 0.0
    %v3036 = vmax.f32 %v2844, 0.0
    %v3037 = vmax.f32 %v2845, 0.0
    %v3038 = vmax.f32 %v2846, 0.0
    %v3039 = vmax.f32 %v2847, 0.0
    %v3040 = vmax.f32 %v2848, 0.0
    %v3041 = vmax.f32 %v2849, 0.0
    %v3042 = vmax.f32 %v2850, 0.0
    %v3043 = vmax.f32 %v2851, 0.0
    %v3044 = vadd.f32 %v2852, %v2855
    %v3045 = vadd.f32 %v3044, %v2858
    %v3046 = vadd.f32 %v3045, %v2861
    %v3047 = vadd.f32 %v3046, %v2864
    %v3048 = vadd.f32 %v3047, %v2867
    %v3049 = vadd.f32 %v3048, %v2870
    %v3050 = vadd.f32 %v3049, %v2873
    %v3051 = vadd.f32 %v3050, %v2876
    %v3052 = vadd.f32 %v3051, %v2879
    %v3053 = vadd.f32 %v3052, %v2882
    %v3054 = vadd.f32 %v3053, %v2885
    %v3055 = vadd.f32 %v3054, %v2888
    %v3056 = vadd.f32 %v3055, %v2891
    %v3057 = vadd.f32 %v3056, %v2894
    %v3058 = vadd.f32 %v3057, %v2897
    %v3059 = vadd.f32 %v3058, %v2900
    %v3060 = vadd.f32 %v3059, %v2903
    %v3061 = vadd.f32 %v3060, %v2906
    %v3062 = vadd.f32 %v3061, %v2909
    %v3063 = vadd.f32 %v3062, %v2912
    %v3064 = vadd.f32 %v3063, %v2915
    %v3065 = vadd.f32 %v3064, %v2918
    %v3066 = vadd.f32 %v3065, %v2921
    %v3067 = vadd.f32 %v3066, %v2924
    %v3068 = vadd.f32 %v3067, %v2927
    %v3069 = vadd.f32 %v3068, %v2930
    %v3070 = vadd.f32 %v3069, %v2933
    %v3071 = vadd.f32 %v3070, %v2936
    %v3072 = vadd.f32 %v3071, %v2939
    %v3073 = vadd.f32 %v3072, %v2942
    %v3074 = vadd.f32 %v3073, %v2945
    %v3075 = vrot.slane %v3074, 4
    %v3076 = vadd.f32 %v3074, %v3075
    %v3077 = vrot.slane %v3076, 2
    %v3078 = vadd.f32 %v3076, %v3077
    %v3079 = vrot.slane %v3078, 1
    %v3080 = vadd.f32 %v3078, %v3079
    %v3081 = vadd.f32 %v2853, %v2856
    %v3082 = vadd.f32 %v3081, %v2859
    %v3083 = vadd.f32 %v3082, %v2862
    %v3084 = vadd.f32 %v3083, %v2865
    %v3085 = vadd.f32 %v3084, %v2868
    %v3086 = vadd.f32 %v3085, %v2871
    %v3087 = vadd.f32 %v3086, %v2874
    %v3088 = vadd.f32 %v3087, %v2877
    %v3089 = vadd.f32 %v3088, %v2880
    %v3090 = vadd.f32 %v3089, %v2883
    %v3091 = vadd.f32 %v3090, %v2886
    %v3092 = vadd.f32 %v3091, %v2889
    %v3093 = vadd.f32 %v3092, %v2892
    %v3094 = vadd.f32 %v3093, %v2895
    %v3095 = vadd.f32 %v3094, %v2898
    %v3096 = vadd.f32 %v3095, %v2901
    %v3097 = vadd.f32 %v3096, %v2904
    %v3098 = vadd.f32 %v3097, %v2907
    %v3099 = vadd.f32 %v3098, %v2910
    %v3100 = vadd.f32 %v3099, %v2913
    %v3101 = vadd.f32 %v3100, %v2916
    %v3102 = vadd.f32 %v3101, %v2919
    %v3103 = vadd.f32 %v3102, %v2922
    %v3104 = vadd.f32 %v3103, %v2925
    %v3105 = vadd.f32 %v3104, %v2928
    %v3106 = vadd.f32 %v3105, %v2931
    %v3107 = vadd.f32 %v3106, %v2934
    %v3108 = vadd.f32 %v3107, %v2937
    %v3109 = vadd.f32 %v3108, %v2940
    %v3110 = vadd.f32 %v3109, %v2943
    %v3111 = vadd.f32 %v3110, %v2946
    %v3112 = vrot.slane %v3111, 4
    %v3113 = vadd.f32 %v3111, %v3112
    %v3114 = vrot.slane %v3113, 2
    %v3115 = vadd.f32 %v3113, %v3114
    %v3116 = vrot.slane %v3115, 1
    %v3117 = vadd.f32 %v3115, %v3116
    %v3118 = vadd.f32 %v2854, %v2857
    %v3119 = vadd.f32 %v3118, %v2860
    %v3120 = vadd.f32 %v3119, %v2863
    %v3121 = vadd.f32 %v3120, %v2866
    %v3122 = vadd.f32 %v3121, %v2869
    %v3123 = vadd.f32 %v3122, %v2872
    %v3124 = vadd.f32 %v3123, %v2875
    %v3125 = vadd.f32 %v3124, %v2878
    %v3126 = vadd.f32 %v3125, %v2881
    %v3127 = vadd.f32 %v3126, %v2884
    %v3128 = vadd.f32 %v3127, %v2887
    %v3129 = vadd.f32 %v3128, %v2890
    %v3130 = vadd.f32 %v3129, %v2893
    %v3131 = vadd.f32 %v3130, %v2896
    %v3132 = vadd.f32 %v3131, %v2899
    %v3133 = vadd.f32 %v3132, %v2902
    %v3134 = vadd.f32 %v3133, %v2905
    %v3135 = vadd.f32 %v3134, %v2908
    %v3136 = vadd.f32 %v3135, %v2911
    %v3137 = vadd.f32 %v3136, %v2914
    %v3138 = vadd.f32 %v3137, %v2917
    %v3139 = vadd.f32 %v3138, %v2920
    %v3140 = vadd.f32 %v3139, %v2923
    %v3141 = vadd.f32 %v3140, %v2926
    %v3142 = vadd.f32 %v3141, %v2929
    %v3143 = vadd.f32 %v3142, %v2932
    %v3144 = vadd.f32 %v3143, %v2935
    %v3145 = vadd.f32 %v3144, %v2938
    %v3146 = vadd.f32 %v3145, %v2941
    %v3147 = vadd.f32 %v3146, %v2944
    %v3148 = vadd.f32 %v3147, %v2947
    %v3149 = vrot.slane %v3148, 4
    %v3150 = vadd.f32 %v3148, %v3149
    %v3151 = vrot.slane %v3150, 2
    %v3152 = vadd.f32 %v3150, %v3151
    %v3153 = vrot.slane %v3152, 1
    %v3154 = vadd.f32 %v3152, %v3153
    %v3155 = vadd.f32 %v2948, %v2951
    %v3156 = vadd.f32 %v3155, %v2954
    %v3157 = vadd.f32 %v3156, %v2957
    %v3158 = vadd.f32 %v3157, %v2960
    %v3159 = vadd.f32 %v3158, %v2963
    %v3160 = vadd.f32 %v3159, %v2966
    %v3161 = vadd.f32 %v3160, %v2969
    %v3162 = vadd.f32 %v3161, %v2972
    %v3163 = vadd.f32 %v3162, %v2975
    %v3164 = vadd.f32 %v3163, %v2978
    %v3165 = vadd.f32 %v3164, %v2981
    %v3166 = vadd.f32 %v3165, %v2984
    %v3167 = vadd.f32 %v3166, %v2987
    %v3168 = vadd.f32 %v3167, %v2990
    %v3169 = vadd.f32 %v3168, %v2993
    %v3170 = vadd.f32 %v3169, %v2996
    %v3171 = vadd.f32 %v3170, %v2999
    %v3172 = vadd.f32 %v3171, %v3002
    %v3173 = vadd.f32 %v3172, %v3005
    %v3174 = vadd.f32 %v3173, %v3008
    %v3175 = vadd.f32 %v3174, %v3011
    %v3176 = vadd.f32 %v3175, %v3014
    %v3177 = vadd.f32 %v3176, %v3017
    %v3178 = vadd.f32 %v3177, %v3020
    %v3179 = vadd.f32 %v3178, %v3023
    %v3180 = vadd.f32 %v3179, %v3026
    %v3181 = vadd.f32 %v3180, %v3029
    %v3182 = vadd.f32 %v3181, %v3032
    %v3183 = vadd.f32 %v3182, %v3035
    %v3184 = vadd.f32 %v3183, %v3038
    %v3185 = vadd.f32 %v3184, %v3041
    %v3186 = vrot.slane %v3185, 4
    %v3187 = vadd.f32 %v3185, %v3186
    %v3188 = vrot.slane %v3187, 2
    %v3189 = vadd.f32 %v3187, %v3188
    %v3190 = vrot.slane %v3189, 1
    %v3191 = vadd.f32 %v3189, %v3190
    %v3192 = vadd.f32 %v2949, %v2952
    %v3193 = vadd.f32 %v3192, %v2955
    %v3194 = vadd.f32 %v3193, %v2958
    %v3195 = vadd.f32 %v3194, %v2961
    %v3196 = vadd.f32 %v3195, %v2964
    %v3197 = vadd.f32 %v3196, %v2967
    %v3198 = vadd.f32 %v3197, %v2970
    %v3199 = vadd.f32 %v3198, %v2973
    %v3200 = vadd.f32 %v3199, %v2976
    %v3201 = vadd.f32 %v3200, %v2979
    %v3202 = vadd.f32 %v3201, %v2982
    %v3203 = vadd.f32 %v3202, %v2985
    %v3204 = vadd.f32 %v3203, %v2988
    %v3205 = vadd.f32 %v3204, %v2991
    %v3206 = vadd.f32 %v3205, %v2994
    %v3207 = vadd.f32 %v3206, %v2997
    %v3208 = vadd.f32 %v3207, %v3000
    %v3209 = vadd.f32 %v3208, %v3003
    %v3210 = vadd.f32 %v3209, %v3006
    %v3211 = vadd.f32 %v3210, %v3009
    %v3212 = vadd.f32 %v3211, %v3012
    %v3213 = vadd.f32 %v3212, %v3015
    %v3214 = vadd.f32 %v3213, %v3018
    %v3215 = vadd.f32 %v3214, %v3021
    %v3216 = vadd.f32 %v3215, %v3024
    %v3217 = vadd.f32 %v3216, %v3027
    %v3218 = vadd.f32 %v3217, %v3030
    %v3219 = vadd.f32 %v3218, %v3033
    %v3220 = vadd.f32 %v3219, %v3036
    %v3221 = vadd.f32 %v3220, %v3039
    %v3222 = vadd.f32 %v3221, %v3042
    %v3223 = vrot.slane %v3222, 4
    %v3224 = vadd.f32 %v3222, %v3223
    %v3225 = vrot.slane %v3224, 2
    %v3226 = vadd.f32 %v3224, %v3225
    %v3227 = vrot.slane %v3226, 1
    %v3228 = vadd.f32 %v3226, %v3227
    %v3229 = vadd.f32 %v2950, %v2953
    %v3230 = vadd.f32 %v3229, %v2956
    %v3231 = vadd.f32 %v3230, %v2959
    %v3232 = vadd.f32 %v3231, %v2962
    %v3233 = vadd.f32 %v3232, %v2965
    %v3234 = vadd.f32 %v3233, %v2968
    %v3235 = vadd.f32 %v3234, %v2971
    %v3236 = vadd.f32 %v3235, %v2974
    %v3237 = vadd.f32 %v3236, %v2977
    %v3238 = vadd.f32 %v3237, %v2980
    %v3239 = vadd.f32 %v3238, %v2983
    %v3240 = vadd.f32 %v3239, %v2986
    %v3241 = vadd.f32 %v3240, %v2989
    %v3242 = vadd.f32 %v3241, %v2992
    %v3243 = vadd.f32 %v3242, %v2995
    %v3244 = vadd.f32 %v3243, %v2998
    %v3245 = vadd.f32 %v3244, %v3001
    %v3246 = vadd.f32 %v3245, %v3004
    %v3247 = vadd.f32 %v3246, %v3007
    %v3248 = vadd.f32 %v3247, %v3010
    %v3249 = vadd.f32 %v3248, %v3013
    %v3250 = vadd.f32 %v3249, %v3016
    %v3251 = vadd.f32 %v3250, %v3019
    %v3252 = vadd.f32 %v3251, %v3022
    %v3253 = vadd.f32 %v3252, %v3025
    %v3254 = vadd.f32 %v3253, %v3028
    %v3255 = vadd.f32 %v3254, %v3031
    %v3256 = vadd.f32 %v3255, %v3034
    %v3257 = vadd.f32 %v3256, %v3037
    %v3258 = vadd.f32 %v3257, %v3040
    %v3259 = vadd.f32 %v3258, %v3043
    %v3260 = vrot.slane %v3259, 4
    %v3261 = vadd.f32 %v3259, %v3260
    %v3262 = vrot.slane %v3261, 2
    %v3263 = vadd.f32 %v3261, %v3262
    %v3264 = vrot.slane %v3263, 1
    %v3265 = vadd.f32 %v3263, %v3264
    %v3266 = vmul.f32 %v3080, 0.00390625
    %v3267 = vmul.f32 %v3117, 0.00390625
    %v3268 = vmul.f32 %v3154, 0.00390625
    %v3269 = vmul.f32 %v3191, 0.00390625
    %v3270 = vmul.f32 %v3228, 0.00390625
    %v3271 = vmul.f32 %v3265, 0.00390625
    %v3272 = vld [vmem:[#allocation2] sm:$0xff]
    %v3273 = vld [vmem:[#allocation2 + $0x8] sm:$0xff]
    %v3274 = vld [vmem:[#allocation2 + $0x10] sm:$0xff]
    %v3275 = vld [vmem:[#allocation2 + $0x18] sm:$0xff]
    %v3276 = vld [vmem:[#allocation2 + $0x20] sm:$0xff]
    %v3277 = vld [vmem:[#allocation2 + $0x28] sm:$0xff]
    %v3278 = vld [vmem:[#allocation2 + $0x30] sm:$0xff]
    %v3279 = vld [vmem:[#allocation2 + $0x38] sm:$0xff]
    %v3280 = vld [vmem:[#allocation2 + $0x40] sm:$0xff]
    %v3281 = vld [vmem:[#allocation2 + $0x48] sm:$0xff]
    %v3282 = vld [vmem:[#allocation2 + $0x50] sm:$0xff]
    %v3283 = vld [vmem:[#allocation2 + $0x58] sm:$0xff]
    %v3284 = vld [vmem:[#allocation2 + $0x60] sm:$0xff]
    %v3285 = vld [vmem:[#allocation2 + $0x68] sm:$0xff]
    %v3286 = vld [vmem:[#allocation2 + $0x70] sm:$0xff]
    %v3287 = vld [vmem:[#allocation2 + $0x78] sm:$0xff]
    %v3288 = vld [vmem:[#allocation2 + $0x80] sm:$0xff]
    %v3289 = vld [vmem:[#allocation2 + $0x88] sm:$0xff]
    %v3290 = vld [vmem:[#allocation2 + $0x90] sm:$0xff]
    %v3291 = vld [vmem:[#allocation2 + $0x98] sm:$0xff]
    %v3292 = vld [vmem:[#allocation2 + $0xa0] sm:$0xff]
    %v3293 = vld [vmem:[#allocation2 + $0xa8] sm:$0xff]
    %v3294 = vld [vmem:[#allocation2 + $0xb0] sm:$0xff]
    %v3295 = vld [vmem:[#allocation2 + $0xb8] sm:$0xff]
    %v3296 = vld [vmem:[#allocation2 + $0xc0] sm:$0xff]
    %v3297 = vld [vmem:[#allocation2 + $0xc8] sm:$0xff]
    %v3298 = vld [vmem:[#allocation2 + $0xd0] sm:$0xff]
    %v3299 = vld [vmem:[#allocation2 + $0xd8] sm:$0xff]
    %v3300 = vld [vmem:[#allocation2 + $0xe0] sm:$0xff]
    %v3301 = vld [vmem:[#allocation2 + $0xe8] sm:$0xff]
    %v3302 = vld [vmem:[#allocation2 + $0xf0] sm:$0xff]
    %v3303 = vld [vmem:[#allocation2 + $0xf8] sm:$0xff]
    %v3304 = vld [vmem:[#allocation2 + $0x100] sm:$0xff]
    %v3305 = vld [vmem:[#allocation2 + $0x108] sm:$0xff]
    %v3306 = vld [vmem:[#allocation2 + $0x110] sm:$0xff]
    %v3307 = vld [vmem:[#allocation2 + $0x118] sm:$0xff]
    %v3308 = vld [vmem:[#allocation2 + $0x120] sm:$0xff]
    %v3309 = vld [vmem:[#allocation2 + $0x128] sm:$0xff]
    %v3310 = vld [vmem:[#allocation2 + $0x130] sm:$0xff]
    %v3311 = vld [vmem:[#allocation2 + $0x138] sm:$0xff]
    %v3312 = vld [vmem:[#allocation2 + $0x140] sm:$0xff]
    %v3313 = vld [vmem:[#allocation2 + $0x148] sm:$0xff]
    %v3314 = vld [vmem:[#allocation2 + $0x150] sm:$0xff]
    %v3315 = vld [vmem:[#allocation2 + $0x158] sm:$0xff]
    %v3316 = vld [vmem:[#allocation2 + $0x160] sm:$0xff]
    %v3317 = vld [vmem:[#allocation2 + $0x168] sm:$0xff]
    %v3318 = vld [vmem:[#allocation2 + $0x170] sm:$0xff]
    %v3319 = vld [vmem:[#allocation2 + $0x178] sm:$0xff]
    %v3320 = vld [vmem:[%s1 + $0xc] sm:$0xff]
    %v3321 = vld [vmem:[%s1 + $0x14] sm:$0xf]
    %v3322 = vld [vmem:[%s2 + $0x3] sm:$0x7]
    %v3325 = vlaneseq
    %v3326 = vshrl.u32 %v3325, 7
    %v3327 = vsub.s32 0, %v3326
    %v3328 = vrot.slane %v3320, %v3327
    %v3329 = vlaneseq
    %v3330 = vshrl.u32 %v3329, 7
    %v3331 = vsub.s32 4, %v3330
    %v3332 = vrot.slane %v3320, %v3331
    %v3333 = vlaneseq
    %v3334 = vshrl.u32 %v3333, 7
    %v3335 = vsub.s32 0, %v3334
    %v3336 = vrot.slane %v3321, %v3335
    %v3340 = vlaneseq
    %v3341 = vshrl.u32 %v3340, 7
    %v3342 = vsub.s32 0, %v3341
    %v3343 = vrot.slane %v3328, %v3342
    %v3344 = vlaneseq
    %v3345 = vshrl.u32 %v3344, 7
    %v3346 = vsub.s32 0, %v3345
    %v3347 = vrot.slane %v3332, %v3346
    %v3348 = vlaneseq
    %v3349 = vshrl.u32 %v3348, 7
    %v3350 = vsub.s32 0, %v3349
    %v3351 = vrot.slane %v3336, %v3350
    %v3352 = vmul.f32 %v105, %v3343
    %v3353 = vmul.f32 %v105, %v3347
    %v3354 = vmul.f32 %v105, %v3351
    %v3355 = vmul.f32 %v110, %v3343
    %v3356 = vmul.f32 %v110, %v3347
    %v3357 = vmul.f32 %v110, %v3351
    %v3358 = vmul.f32 %v115, %v3343
    %v3359 = vmul.f32 %v115, %v3347
    %v3360 = vmul.f32 %v115, %v3351
    %v3361 = vmul.f32 %v120, %v3343
    %v3362 = vmul.f32 %v120, %v3347
    %v3363 = vmul.f32 %v120, %v3351
    %v3364 = vmul.f32 %v125, %v3343
    %v3365 = vmul.f32 %v125, %v3347
    %v3366 = vmul.f32 %v125, %v3351
    %v3367 = vmul.f32 %v130, %v3343
    %v3368 = vmul.f32 %v130, %v3347
    %v3369 = vmul.f32 %v130, %v3351
    %v3370 = vmul.f32 %v135, %v3343
    %v3371 = vmul.f32 %v135, %v3347
    %v3372 = vmul.f32 %v135, %v3351
    %v3373 = vmul.f32 %v140, %v3343
    %v3374 = vmul.f32 %v140, %v3347
    %v3375 = vmul.f32 %v140, %v3351
    %v3376 = vmul.f32 %v145, %v3343
    %v3377 = vmul.f32 %v145, %v3347
    %v3378 = vmul.f32 %v145, %v3351
    %v3379 = vmul.f32 %v150, %v3343
    %v3380 = vmul.f32 %v150, %v3347
    %v3381 = vmul.f32 %v150, %v3351
    %v3382 = vmul.f32 %v155, %v3343
    %v3383 = vmul.f32 %v155, %v3347
    %v3384 = vmul.f32 %v155, %v3351
    %v3385 = vmul.f32 %v160, %v3343
    %v3386 = vmul.f32 %v160, %v3347
    %v3387 = vmul.f32 %v160, %v3351
    %v3388 = vmul.f32 %v165, %v3343
    %v3389 = vmul.f32 %v165, %v3347
    %v3390 = vmul.f32 %v165, %v3351
    %v3391 = vmul.f32 %v170, %v3343
    %v3392 = vmul.f32 %v170, %v3347
    %v3393 = vmul.f32 %v170, %v3351
    %v3394 = vmul.f32 %v175, %v3343
    %v3395 = vmul.f32 %v175, %v3347
    %v3396 = vmul.f32 %v175, %v3351
    %v3397 = vmul.f32 %v180, %v3343
    %v3398 = vmul.f32 %v180, %v3347
    %v3399 = vmul.f32 %v180, %v3351
    %v3400 = vmul.f32 %v185, %v3343
    %v3401 = vmul.f32 %v185, %v3347
    %v3402 = vmul.f32 %v185, %v3351
    %v3403 = vmul.f32 %v190, %v3343
    %v3404 = vmul.f32 %v190, %v3347
    %v3405 = vmul.f32 %v190, %v3351
    %v3406 = vmul.f32 %v195, %v3343
    %v3407 = vmul.f32 %v195, %v3347
    %v3408 = vmul.f32 %v195, %v3351
    %v3409 = vmul.f32 %v200, %v3343
    %v3410 = vmul.f32 %v200, %v3347
    %v3411 = vmul.f32 %v200, %v3351
    %v3412 = vmul.f32 %v205, %v3343
    %v3413 = vmul.f32 %v205, %v3347
    %v3414 = vmul.f32 %v205, %v3351
    %v3415 = vmul.f32 %v210, %v3343
    %v3416 = vmul.f32 %v210, %v3347
    %v3417 = vmul.f32 %v210, %v3351
    %v3418 = vmul.f32 %v215, %v3343
    %v3419 = vmul.f32 %v215, %v3347
    %v3420 = vmul.f32 %v215, %v3351
    %v3421 = vmul.f32 %v220, %v3343
    %v3422 = vmul.f32 %v220, %v3347
    %v3423 = vmul.f32 %v220, %v3351
    %v3424 = vmul.f32 %v225, %v3343
    %v3425 = vmul.f32 %v225, %v3347
    %v3426 = vmul.f32 %v225, %v3351
    %v3427 = vmul.f32 %v230, %v3343
    %v3428 = vmul.f32 %v230, %v3347
    %v3429 = vmul.f32 %v230, %v3351
    %v3430 = vmul.f32 %v235, %v3343
    %v3431 = vmul.f32 %v235, %v3347
    %v3432 = vmul.f32 %v235, %v3351
    %v3433 = vmul.f32 %v240, %v3343
    %v3434 = vmul.f32 %v240, %v3347
    %v3435 = vmul.f32 %v240, %v3351
    %v3436 = vmul.f32 %v245, %v3343
    %v3437 = vmul.f32 %v245, %v3347
    %v3438 = vmul.f32 %v245, %v3351
    %v3439 = vmul.f32 %v250, %v3343
    %v3440 = vmul.f32 %v250, %v3347
    %v3441 = vmul.f32 %v250, %v3351
    %v3442 = vmul.f32 %v255, %v3343
    %v3443 = vmul.f32 %v255, %v3347
    %v3444 = vmul.f32 %v255, %v3351
    %v3445 = vmul.f32 %v260, %v3343
    %v3446 = vmul.f32 %v260, %v3347
    %v3447 = vmul.f32 %v260, %v3351
    %v3448 = vmul.f32 %v265, %v3343
    %v3449 = vmul.f32 %v265, %v3347
    %v3450 = vmul.f32 %v265, %v3351
    %v3451 = vmul.f32 %v270, %v3343
    %v3452 = vmul.f32 %v270, %v3347
    %v3453 = vmul.f32 %v270, %v3351
    %v3454 = vmul.f32 %v275, %v3343
    %v3455 = vmul.f32 %v275, %v3347
    %v3456 = vmul.f32 %v275, %v3351
    %v3457 = vmul.f32 %v280, %v3343
    %v3458 = vmul.f32 %v280, %v3347
    %v3459 = vmul.f32 %v280, %v3351
    %v3460 = vmul.f32 %v285, %v3343
    %v3461 = vmul.f32 %v285, %v3347
    %v3462 = vmul.f32 %v285, %v3351
    %v3463 = vmul.f32 %v290, %v3343
    %v3464 = vmul.f32 %v290, %v3347
    %v3465 = vmul.f32 %v290, %v3351
    %v3466 = vmul.f32 %v295, %v3343
    %v3467 = vmul.f32 %v295, %v3347
    %v3468 = vmul.f32 %v295, %v3351
    %v3469 = vmul.f32 %v300, %v3343
    %v3470 = vmul.f32 %v300, %v3347
    %v3471 = vmul.f32 %v300, %v3351
    %v3472 = vmul.f32 %v305, %v3343
    %v3473 = vmul.f32 %v305, %v3347
    %v3474 = vmul.f32 %v305, %v3351
    %v3475 = vmul.f32 %v310, %v3343
    %v3476 = vmul.f32 %v310, %v3347
    %v3477 = vmul.f32 %v310, %v3351
    %v3478 = vmul.f32 %v315, %v3343
    %v3479 = vmul.f32 %v315, %v3347
    %v3480 = vmul.f32 %v315, %v3351
    %v3481 = vmul.f32 %v320, %v3343
    %v3482 = vmul.f32 %v320, %v3347
    %v3483 = vmul.f32 %v320, %v3351
    %v3484 = vmul.f32 %v325, %v3343
    %v3485 = vmul.f32 %v325, %v3347
    %v3486 = vmul.f32 %v325, %v3351
    %v3487 = vmul.f32 %v330, %v3343
    %v3488 = vmul.f32 %v330, %v3347
    %v3489 = vmul.f32 %v330, %v3351
    %v3490 = vmul.f32 %v335, %v3343
    %v3491 = vmul.f32 %v335, %v3347
    %v3492 = vmul.f32 %v335, %v3351
    %v3493 = vmul.f32 %v340, %v3343
    %v3494 = vmul.f32 %v340, %v3347
    %v3495 = vmul.f32 %v340, %v3351
    %v3496 = vmul.f32 %v345, %v3343
    %v3497 = vmul.f32 %v345, %v3347
    %v3498 = vmul.f32 %v345, %v3351
    %v3499 = vmul.f32 %v350, %v3343
    %v3500 = vmul.f32 %v350, %v3347
    %v3501 = vmul.f32 %v350, %v3351
    %v3502 = vmul.f32 %v355, %v3343
    %v3503 = vmul.f32 %v355, %v3347
    %v3504 = vmul.f32 %v355, %v3351
    %v3505 = vmul.f32 %v360, %v3343
    %v3506 = vmul.f32 %v360, %v3347
    %v3507 = vmul.f32 %v360, %v3351
    %v3508 = vmul.f32 %v365, %v3343
    %v3509 = vmul.f32 %v365, %v3347
    %v3510 = vmul.f32 %v365, %v3351
    %v3511 = vmul.f32 %v370, %v3343
    %v3512 = vmul.f32 %v370, %v3347
    %v3513 = vmul.f32 %v370, %v3351
    %v3514 = vmul.f32 %v375, %v3343
    %v3515 = vmul.f32 %v375, %v3347
    %v3516 = vmul.f32 %v375, %v3351
    %v3517 = vmul.f32 %v380, %v3343
    %v3518 = vmul.f32 %v380, %v3347
    %v3519 = vmul.f32 %v380, %v3351
    %v3520 = vmul.f32 %v385, %v3343
    %v3521 = vmul.f32 %v385, %v3347
    %v3522 = vmul.f32 %v385, %v3351
    %v3523 = vmul.f32 %v390, %v3343
    %v3524 = vmul.f32 %v390, %v3347
    %v3525 = vmul.f32 %v390, %v3351
    %v3526 = vmul.f32 %v395, %v3343
    %v3527 = vmul.f32 %v395, %v3347
    %v3528 = vmul.f32 %v395, %v3351
    %v3529 = vmul.f32 %v400, %v3343
    %v3530 = vmul.f32 %v400, %v3347
    %v3531 = vmul.f32 %v400, %v3351
    %v3532 = vmul.f32 %v405, %v3343
    %v3533 = vmul.f32 %v405, %v3347
    %v3534 = vmul.f32 %v405, %v3351
    %v3535 = vmul.f32 %v410, %v3343
    %v3536 = vmul.f32 %v410, %v3347
    %v3537 = vmul.f32 %v410, %v3351
    %v3538 = vmul.f32 %v415, %v3343
    %v3539 = vmul.f32 %v415, %v3347
    %v3540 = vmul.f32 %v415, %v3351
    %v3541 = vmul.f32 %v420, %v3343
    %v3542 = vmul.f32 %v420, %v3347
    %v3543 = vmul.f32 %v420, %v3351
    %v3544 = vlaneseq
    %v3545 = vshrl.u32 %v3544, 7
    %v3546 = vsub.s32 1, %v3545
    %v3547 = vrot.slane %v3320, %v3546
    %v3548 = vlaneseq
    %v3549 = vshrl.u32 %v3548, 7
    %v3550 = vsub.s32 5, %v3549
    %v3551 = vrot.slane %v3320, %v3550
    %v3552 = vlaneseq
    %v3553 = vshrl.u32 %v3552, 7
    %v3554 = vsub.s32 1, %v3553
    %v3555 = vrot.slane %v3321, %v3554
    %v3559 = vlaneseq
    %v3560 = vshrl.u32 %v3559, 7
    %v3561 = vsub.s32 1, %v3560
    %v3562 = vrot.slane %v3547, %v3561
    %v3563 = vlaneseq
    %v3564 = vshrl.u32 %v3563, 7
    %v3565 = vsub.s32 1, %v3564
    %v3566 = vrot.slane %v3551, %v3565
    %v3567 = vlaneseq
    %v3568 = vshrl.u32 %v3567, 7
    %v3569 = vsub.s32 1, %v3568
    %v3570 = vrot.slane %v3555, %v3569
    %v3571 = vmul.f32 %v645, %v3562
    %v3572 = vmul.f32 %v645, %v3566
    %v3573 = vmul.f32 %v645, %v3570
    %v3574 = vmul.f32 %v649, %v3562
    %v3575 = vmul.f32 %v649, %v3566
    %v3576 = vmul.f32 %v649, %v3570
    %v3577 = vmul.f32 %v653, %v3562
    %v3578 = vmul.f32 %v653, %v3566
    %v3579 = vmul.f32 %v653, %v3570
    %v3580 = vmul.f32 %v657, %v3562
    %v3581 = vmul.f32 %v657, %v3566
    %v3582 = vmul.f32 %v657, %v3570
    %v3583 = vmul.f32 %v661, %v3562
    %v3584 = vmul.f32 %v661, %v3566
    %v3585 = vmul.f32 %v661, %v3570
    %v3586 = vmul.f32 %v665, %v3562
    %v3587 = vmul.f32 %v665, %v3566
    %v3588 = vmul.f32 %v665, %v3570
    %v3589 = vmul.f32 %v669, %v3562
    %v3590 = vmul.f32 %v669, %v3566
    %v3591 = vmul.f32 %v669, %v3570
    %v3592 = vmul.f32 %v673, %v3562
    %v3593 = vmul.f32 %v673, %v3566
    %v3594 = vmul.f32 %v673, %v3570
    %v3595 = vmul.f32 %v677, %v3562
    %v3596 = vmul.f32 %v677, %v3566
    %v3597 = vmul.f32 %v677, %v3570
    %v3598 = vmul.f32 %v681, %v3562
    %v3599 = vmul.f32 %v681, %v3566
    %v3600 = vmul.f32 %v681, %v3570
    %v3601 = vmul.f32 %v685, %v3562
    %v3602 = vmul.f32 %v685, %v3566
    %v3603 = vmul.f32 %v685, %v3570
    %v3604 = vmul.f32 %v689, %v3562
    %v3605 = vmul.f32 %v689, %v3566
    %v3606 = vmul.f32 %v689, %v3570
    %v3607 = vmul.f32 %v693, %v3562
    %v3608 = vmul.f32 %v693, %v3566
    %v3609 = vmul.f32 %v693, %v3570
    %v3610 = vmul.f32 %v697, %v3562
    %v3611 = vmul.f32 %v697, %v3566
    %v3612 = vmul.f32 %v697, %v3570
    %v3613 = vmul.f32 %v701, %v3562
    %v3614 = vmul.f32 %v701, %v3566
    %v3615 = vmul.f32 %v701, %v3570
    %v3616 = vmul.f32 %v705, %v3562
    %v3617 = vmul.f32 %v705, %v3566
    %v3618 = vmul.f32 %v705, %v3570
    %v3619 = vmul.f32 %v709, %v3562
    %v3620 = vmul.f32 %v709, %v3566
    %v3621 = vmul.f32 %v709, %v3570
    %v3622 = vmul.f32 %v713, %v3562
    %v3623 = vmul.f32 %v713, %v3566
    %v3624 = vmul.f32 %v713, %v3570
    %v3625 = vmul.f32 %v717, %v3562
    %v3626 = vmul.f32 %v717, %v3566
    %v3627 = vmul.f32 %v717, %v3570
    %v3628 = vmul.f32 %v721, %v3562
    %v3629 = vmul.f32 %v721, %v3566
    %v3630 = vmul.f32 %v721, %v3570
    %v3631 = vmul.f32 %v725, %v3562
    %v3632 = vmul.f32 %v725, %v3566
    %v3633 = vmul.f32 %v725, %v3570
    %v3634 = vmul.f32 %v729, %v3562
    %v3635 = vmul.f32 %v729, %v3566
    %v3636 = vmul.f32 %v729, %v3570
    %v3637 = vmul.f32 %v733, %v3562
    %v3638 = vmul.f32 %v733, %v3566
    %v3639 = vmul.f32 %v733, %v3570
    %v3640 = vmul.f32 %v737, %v3562
    %v3641 = vmul.f32 %v737, %v3566
    %v3642 = vmul.f32 %v737, %v3570
    %v3643 = vmul.f32 %v741, %v3562
    %v3644 = vmul.f32 %v741, %v3566
    %v3645 = vmul.f32 %v741, %v3570
    %v3646 = vmul.f32 %v745, %v3562
    %v3647 = vmul.f32 %v745, %v3566
    %v3648 = vmul.f32 %v745, %v3570
    %v3649 = vmul.f32 %v749, %v3562
    %v3650 = vmul.f32 %v749, %v3566
    %v3651 = vmul.f32 %v749, %v3570
    %v3652 = vmul.f32 %v753, %v3562
    %v3653 = vmul.f32 %v753, %v3566
    %v3654 = vmul.f32 %v753, %v3570
    %v3655 = vmul.f32 %v757, %v3562
    %v3656 = vmul.f32 %v757, %v3566
    %v3657 = vmul.f32 %v757, %v3570
    %v3658 = vmul.f32 %v761, %v3562
    %v3659 = vmul.f32 %v761, %v3566
    %v3660 = vmul.f32 %v761, %v3570
    %v3661 = vmul.f32 %v765, %v3562
    %v3662 = vmul.f32 %v765, %v3566
    %v3663 = vmul.f32 %v765, %v3570
    %v3664 = vmul.f32 %v769, %v3562
    %v3665 = vmul.f32 %v769, %v3566
    %v3666 = vmul.f32 %v769, %v3570
    %v3667 = vmul.f32 %v773, %v3562
    %v3668 = vmul.f32 %v773, %v3566
    %v3669 = vmul.f32 %v773, %v3570
    %v3670 = vmul.f32 %v777, %v3562
    %v3671 = vmul.f32 %v777, %v3566
    %v3672 = vmul.f32 %v777, %v3570
    %v3673 = vmul.f32 %v781, %v3562
    %v3674 = vmul.f32 %v781, %v3566
    %v3675 = vmul.f32 %v781, %v3570
    %v3676 = vmul.f32 %v785, %v3562
    %v3677 = vmul.f32 %v785, %v3566
    %v3678 = vmul.f32 %v785, %v3570
    %v3679 = vmul.f32 %v789, %v3562
    %v3680 = vmul.f32 %v789, %v3566
    %v3681 = vmul.f32 %v789, %v3570
    %v3682 = vmul.f32 %v793, %v3562
    %v3683 = vmul.f32 %v793, %v3566
    %v3684 = vmul.f32 %v793, %v3570
    %v3685 = vmul.f32 %v797, %v3562
    %v3686 = vmul.f32 %v797, %v3566
    %v3687 = vmul.f32 %v797, %v3570
    %v3688 = vmul.f32 %v801, %v3562
    %v3689 = vmul.f32 %v801, %v3566
    %v3690 = vmul.f32 %v801, %v3570
    %v3691 = vmul.f32 %v805, %v3562
    %v3692 = vmul.f32 %v805, %v3566
    %v3693 = vmul.f32 %v805, %v3570
    %v3694 = vmul.f32 %v809, %v3562
    %v3695 = vmul.f32 %v809, %v3566
    %v3696 = vmul.f32 %v809, %v3570
    %v3697 = vmul.f32 %v813, %v3562
    %v3698 = vmul.f32 %v813, %v3566
    %v3699 = vmul.f32 %v813, %v3570
    %v3700 = vmul.f32 %v817, %v3562
    %v3701 = vmul.f32 %v817, %v3566
    %v3702 = vmul.f32 %v817, %v3570
    %v3703 = vmul.f32 %v821, %v3562
    %v3704 = vmul.f32 %v821, %v3566
    %v3705 = vmul.f32 %v821, %v3570
    %v3706 = vmul.f32 %v825, %v3562
    %v3707 = vmul.f32 %v825, %v3566
    %v3708 = vmul.f32 %v825, %v3570
    %v3709 = vmul.f32 %v829, %v3562
    %v3710 = vmul.f32 %v829, %v3566
    %v3711 = vmul.f32 %v829, %v3570
    %v3712 = vmul.f32 %v833, %v3562
    %v3713 = vmul.f32 %v833, %v3566
    %v3714 = vmul.f32 %v833, %v3570
    %v3715 = vmul.f32 %v837, %v3562
    %v3716 = vmul.f32 %v837, %v3566
    %v3717 = vmul.f32 %v837, %v3570
    %v3718 = vmul.f32 %v841, %v3562
    %v3719 = vmul.f32 %v841, %v3566
    %v3720 = vmul.f32 %v841, %v3570
    %v3721 = vmul.f32 %v845, %v3562
    %v3722 = vmul.f32 %v845, %v3566
    %v3723 = vmul.f32 %v845, %v3570
    %v3724 = vmul.f32 %v849, %v3562
    %v3725 = vmul.f32 %v849, %v3566
    %v3726 = vmul.f32 %v849, %v3570
    %v3727 = vmul.f32 %v853, %v3562
    %v3728 = vmul.f32 %v853, %v3566
    %v3729 = vmul.f32 %v853, %v3570
    %v3730 = vmul.f32 %v857, %v3562
    %v3731 = vmul.f32 %v857, %v3566
    %v3732 = vmul.f32 %v857, %v3570
    %v3733 = vmul.f32 %v861, %v3562
    %v3734 = vmul.f32 %v861, %v3566
    %v3735 = vmul.f32 %v861, %v3570
    %v3736 = vmul.f32 %v865, %v3562
    %v3737 = vmul.f32 %v865, %v3566
    %v3738 = vmul.f32 %v865, %v3570
    %v3739 = vmul.f32 %v869, %v3562
    %v3740 = vmul.f32 %v869, %v3566
    %v3741 = vmul.f32 %v869, %v3570
    %v3742 = vmul.f32 %v873, %v3562
    %v3743 = vmul.f32 %v873, %v3566
    %v3744 = vmul.f32 %v873, %v3570
    %v3745 = vmul.f32 %v877, %v3562
    %v3746 = vmul.f32 %v877, %v3566
    %v3747 = vmul.f32 %v877, %v3570
    %v3748 = vmul.f32 %v881, %v3562
    %v3749 = vmul.f32 %v881, %v3566
    %v3750 = vmul.f32 %v881, %v3570
    %v3751 = vmul.f32 %v885, %v3562
    %v3752 = vmul.f32 %v885, %v3566
    %v3753 = vmul.f32 %v885, %v3570
    %v3754 = vmul.f32 %v889, %v3562
    %v3755 = vmul.f32 %v889, %v3566
    %v3756 = vmul.f32 %v889, %v3570
    %v3757 = vmul.f32 %v893, %v3562
    %v3758 = vmul.f32 %v893, %v3566
    %v3759 = vmul.f32 %v893, %v3570
    %v3760 = vmul.f32 %v897, %v3562
    %v3761 = vmul.f32 %v897, %v3566
    %v3762 = vmul.f32 %v897, %v3570
    %v3763 = vadd.f32 %v3352, %v3571
    %v3764 = vadd.f32 %v3353, %v3572
    %v3765 = vadd.f32 %v3354, %v3573
    %v3766 = vadd.f32 %v3355, %v3574
    %v3767 = vadd.f32 %v3356, %v3575
    %v3768 = vadd.f32 %v3357, %v3576
    %v3769 = vadd.f32 %v3358, %v3577
    %v3770 = vadd.f32 %v3359, %v3578
    %v3771 = vadd.f32 %v3360, %v3579
    %v3772 = vadd.f32 %v3361, %v3580
    %v3773 = vadd.f32 %v3362, %v3581
    %v3774 = vadd.f32 %v3363, %v3582
    %v3775 = vadd.f32 %v3364, %v3583
    %v3776 = vadd.f32 %v3365, %v3584
    %v3777 = vadd.f32 %v3366, %v3585
    %v3778 = vadd.f32 %v3367, %v3586
    %v3779 = vadd.f32 %v3368, %v3587
    %v3780 = vadd.f32 %v3369, %v3588
    %v3781 = vadd.f32 %v3370, %v3589
    %v3782 = vadd.f32 %v3371, %v3590
    %v3783 = vadd.f32 %v3372, %v3591
    %v3784 = vadd.f32 %v3373, %v3592
    %v3785 = vadd.f32 %v3374, %v3593
    %v3786 = vadd.f32 %v3375, %v3594
    %v3787 = vadd.f32 %v3376, %v3595
    %v3788 = vadd.f32 %v3377, %v3596
    %v3789 = vadd.f32 %v3378, %v3597
    %v3790 = vadd.f32 %v3379, %v3598
    %v3791 = vadd.f32 %v3380, %v3599
    %v3792 = vadd.f32 %v3381, %v3600
    %v3793 = vadd.f32 %v3382, %v3601
    %v3794 = vadd.f32 %v3383, %v3602
    %v3795 = vadd.f32 %v3384, %v3603
    %v3796 = vadd.f32 %v3385, %v3604
    %v3797 = vadd.f32 %v3386, %v3605
    %v3798 = vadd.f32 %v3387, %v3606
    %v3799 = vadd.f32 %v3388, %v3607
    %v3800 = vadd.f32 %v3389, %v3608
    %v3801 = vadd.f32 %v3390, %v3609
    %v3802 = vadd.f32 %v3391, %v3610
    %v3803 = vadd.f32 %v3392, %v3611
    %v3804 = vadd.f32 %v3393, %v3612
    %v3805 = vadd.f32 %v3394, %v3613
    %v3806 = vadd.f32 %v3395, %v3614
    %v3807 = vadd.f32 %v3396, %v3615
    %v3808 = vadd.f32 %v3397, %v3616
    %v3809 = vadd.f32 %v3398, %v3617
    %v3810 = vadd.f32 %v3399, %v3618
    %v3811 = vadd.f32 %v3400, %v3619
    %v3812 = vadd.f32 %v3401, %v3620
    %v3813 = vadd.f32 %v3402, %v3621
    %v3814 = vadd.f32 %v3403, %v3622
    %v3815 = vadd.f32 %v3404, %v3623
    %v3816 = vadd.f32 %v3405, %v3624
    %v3817 = vadd.f32 %v3406, %v3625
    %v3818 = vadd.f32 %v3407, %v3626
    %v3819 = vadd.f32 %v3408, %v3627
    %v3820 = vadd.f32 %v3409, %v3628
    %v3821 = vadd.f32 %v3410, %v3629
    %v3822 = vadd.f32 %v3411, %v3630
    %v3823 = vadd.f32 %v3412, %v3631
    %v3824 = vadd.f32 %v3413, %v3632
    %v3825 = vadd.f32 %v3414, %v3633
    %v3826 = vadd.f32 %v3415, %v3634
    %v3827 = vadd.f32 %v3416, %v3635
    %v3828 = vadd.f32 %v3417, %v3636
    %v3829 = vadd.f32 %v3418, %v3637
    %v3830 = vadd.f32 %v3419, %v3638
    %v3831 = vadd.f32 %v3420, %v3639
    %v3832 = vadd.f32 %v3421, %v3640
    %v3833 = vadd.f32 %v3422, %v3641
    %v3834 = vadd.f32 %v3423, %v3642
    %v3835 = vadd.f32 %v3424, %v3643
    %v3836 = vadd.f32 %v3425, %v3644
    %v3837 = vadd.f32 %v3426, %v3645
    %v3838 = vadd.f32 %v3427, %v3646
    %v3839 = vadd.f32 %v3428, %v3647
    %v3840 = vadd.f32 %v3429, %v3648
    %v3841 = vadd.f32 %v3430, %v3649
    %v3842 = vadd.f32 %v3431, %v3650
    %v3843 = vadd.f32 %v3432, %v3651
    %v3844 = vadd.f32 %v3433, %v3652
    %v3845 = vadd.f32 %v3434, %v3653
    %v3846 = vadd.f32 %v3435, %v3654
    %v3847 = vadd.f32 %v3436, %v3655
    %v3848 = vadd.f32 %v3437, %v3656
    %v3849 = vadd.f32 %v3438, %v3657
    %v3850 = vadd.f32 %v3439, %v3658
    %v3851 = vadd.f32 %v3440, %v3659
    %v3852 = vadd.f32 %v3441, %v3660
    %v3853 = vadd.f32 %v3442, %v3661
    %v3854 = vadd.f32 %v3443, %v3662
    %v3855 = vadd.f32 %v3444, %v3663
    %v3856 = vadd.f32 %v3445, %v3664
    %v3857 = vadd.f32 %v3446, %v3665
    %v3858 = vadd.f32 %v3447, %v3666
    %v3859 = vadd.f32 %v3448, %v3667
    %v3860 = vadd.f32 %v3449, %v3668
    %v3861 = vadd.f32 %v3450, %v3669
    %v3862 = vadd.f32 %v3451, %v3670
    %v3863 = vadd.f32 %v3452, %v3671
    %v3864 = vadd.f32 %v3453, %v3672
    %v3865 = vadd.f32 %v3454, %v3673
    %v3866 = vadd.f32 %v3455, %v3674
    %v3867 = vadd.f32 %v3456, %v3675
    %v3868 = vadd.f32 %v3457, %v3676
    %v3869 = vadd.f32 %v3458, %v3677
    %v3870 = vadd.f32 %v3459, %v3678
    %v3871 = vadd.f32 %v3460, %v3679
    %v3872 = vadd.f32 %v3461, %v3680
    %v3873 = vadd.f32 %v3462, %v3681
    %v3874 = vadd.f32 %v3463, %v3682
    %v3875 = vadd.f32 %v3464, %v3683
    %v3876 = vadd.f32 %v3465, %v3684
    %v3877 = vadd.f32 %v3466, %v3685
    %v3878 = vadd.f32 %v3467, %v3686
    %v3879 = vadd.f32 %v3468, %v3687
    %v3880 = vadd.f32 %v3469, %v3688
    %v3881 = vadd.f32 %v3470, %v3689
    %v3882 = vadd.f32 %v3471, %v3690
    %v3883 = vadd.f32 %v3472, %v3691
    %v3884 = vadd.f32 %v3473, %v3692
    %v3885 = vadd.f32 %v3474, %v3693
    %v3886 = vadd.f32 %v3475, %v3694
    %v3887 = vadd.f32 %v3476, %v3695
    %v3888 = vadd.f32 %v3477, %v3696
    %v3889 = vadd.f32 %v3478, %v3697
    %v3890 = vadd.f32 %v3479, %v3698
    %v3891 = vadd.f32 %v3480, %v3699
    %v3892 = vadd.f32 %v3481, %v3700
    %v3893 = vadd.f32 %v3482, %v3701
    %v3894 = vadd.f32 %v3483, %v3702
    %v3895 = vadd.f32 %v3484, %v3703
    %v3896 = vadd.f32 %v3485, %v3704
    %v3897 = vadd.f32 %v3486, %v3705
    %v3898 = vadd.f32 %v3487, %v3706
    %v3899 = vadd.f32 %v3488, %v3707
    %v3900 = vadd.f32 %v3489, %v3708
    %v3901 = vadd.f32 %v3490, %v3709
    %v3902 = vadd.f32 %v3491, %v3710
    %v3903 = vadd.f32 %v3492, %v3711
    %v3904 = vadd.f32 %v3493, %v3712
    %v3905 = vadd.f32 %v3494, %v3713
    %v3906 = vadd.f32 %v3495, %v3714
    %v3907 = vadd.f32 %v3496, %v3715
    %v3908 = vadd.f32 %v3497, %v3716
    %v3909 = vadd.f32 %v3498, %v3717
    %v3910 = vadd.f32 %v3499, %v3718
    %v3911 = vadd.f32 %v3500, %v3719
    %v3912 = vadd.f32 %v3501, %v3720
    %v3913 = vadd.f32 %v3502, %v3721
    %v3914 = vadd.f32 %v3503, %v3722
    %v3915 = vadd.f32 %v3504, %v3723
    %v3916 = vadd.f32 %v3505, %v3724
    %v3917 = vadd.f32 %v3506, %v3725
    %v3918 = vadd.f32 %v3507, %v3726
    %v3919 = vadd.f32 %v3508, %v3727
    %v3920 = vadd.f32 %v3509, %v3728
    %v3921 = vadd.f32 %v3510, %v3729
    %v3922 = vadd.f32 %v3511, %v3730
    %v3923 = vadd.f32 %v3512, %v3731
    %v3924 = vadd.f32 %v3513, %v3732
    %v3925 = vadd.f32 %v3514, %v3733
    %v3926 = vadd.f32 %v3515, %v3734
    %v3927 = vadd.f32 %v3516, %v3735
    %v3928 = vadd.f32 %v3517, %v3736
    %v3929 = vadd.f32 %v3518, %v3737
    %v3930 = vadd.f32 %v3519, %v3738
    %v3931 = vadd.f32 %v3520, %v3739
    %v3932 = vadd.f32 %v3521, %v3740
    %v3933 = vadd.f32 %v3522, %v3741
    %v3934 = vadd.f32 %v3523, %v3742
    %v3935 = vadd.f32 %v3524, %v3743
    %v3936 = vadd.f32 %v3525, %v3744
    %v3937 = vadd.f32 %v3526, %v3745
    %v3938 = vadd.f32 %v3527, %v3746
    %v3939 = vadd.f32 %v3528, %v3747
    %v3940 = vadd.f32 %v3529, %v3748
    %v3941 = vadd.f32 %v3530, %v3749
    %v3942 = vadd.f32 %v3531, %v3750
    %v3943 = vadd.f32 %v3532, %v3751
    %v3944 = vadd.f32 %v3533, %v3752
    %v3945 = vadd.f32 %v3534, %v3753
    %v3946 = vadd.f32 %v3535, %v3754
    %v3947 = vadd.f32 %v3536, %v3755
    %v3948 = vadd.f32 %v3537, %v3756
    %v3949 = vadd.f32 %v3538, %v3757
    %v3950 = vadd.f32 %v3539, %v3758
    %v3951 = vadd.f32 %v3540, %v3759
    %v3952 = vadd.f32 %v3541, %v3760
    %v3953 = vadd.f32 %v3542, %v3761
    %v3954 = vadd.f32 %v3543, %v3762
    %v3955 = vlaneseq
    %v3956 = vshrl.u32 %v3955, 7
    %v3957 = vsub.s32 2, %v3956
    %v3958 = vrot.slane %v3320, %v3957
    %v3959 = vlaneseq
    %v3960 = vshrl.u32 %v3959, 7
    %v3961 = vsub.s32 6, %v3960
    %v3962 = vrot.slane %v3320, %v3961
    %v3963 = vlaneseq
    %v3964 = vshrl.u32 %v3963, 7
    %v3965 = vsub.s32 2, %v3964
    %v3966 = vrot.slane %v3321, %v3965
    %v3970 = vlaneseq
    %v3971 = vshrl.u32 %v3970, 7
    %v3972 = vsub.s32 2, %v3971
    %v3973 = vrot.slane %v3958, %v3972
    %v3974 = vlaneseq
    %v3975 = vshrl.u32 %v3974, 7
    %v3976 = vsub.s32 2, %v3975
    %v3977 = vrot.slane %v3962, %v3976
    %v3978 = vlaneseq
    %v3979 = vshrl.u32 %v3978, 7
    %v3980 = vsub.s32 2, %v3979
    %v3981 = vrot.slane %v3966, %v3980
    %v3982 = vmul.f32 %v1312, %v3973
    %v3983 = vmul.f32 %v1312, %v3977
    %v3984 = vmul.f32 %v1312, %v3981
    %v3985 = vmul.f32 %v1316, %v3973
    %v3986 = vmul.f32 %v1316, %v3977
    %v3987 = vmul.f32 %v1316, %v3981
    %v3988 = vmul.f32 %v1320, %v3973
    %v3989 = vmul.f32 %v1320, %v3977
    %v3990 = vmul.f32 %v1320, %v3981
    %v3991 = vmul.f32 %v1324, %v3973
    %v3992 = vmul.f32 %v1324, %v3977
    %v3993 = vmul.f32 %v1324, %v3981
    %v3994 = vmul.f32 %v1328, %v3973
    %v3995 = vmul.f32 %v1328, %v3977
    %v3996 = vmul.f32 %v1328, %v3981
    %v3997 = vmul.f32 %v1332, %v3973
    %v3998 = vmul.f32 %v1332, %v3977
    %v3999 = vmul.f32 %v1332, %v3981
    %v4000 = vmul.f32 %v1336, %v3973
    %v4001 = vmul.f32 %v1336, %v3977
    %v4002 = vmul.f32 %v1336, %v3981
    %v4003 = vmul.f32 %v1340, %v3973
    %v4004 = vmul.f32 %v1340, %v3977
    %v4005 = vmul.f32 %v1340, %v3981
    %v4006 = vmul.f32 %v1344, %v3973
    %v4007 = vmul.f32 %v1344, %v3977
    %v4008 = vmul.f32 %v1344, %v3981
    %v4009 = vmul.f32 %v1348, %v3973
    %v4010 = vmul.f32 %v1348, %v3977
    %v4011 = vmul.f32 %v1348, %v3981
    %v4012 = vmul.f32 %v1352, %v3973
    %v4013 = vmul.f32 %v1352, %v3977
    %v4014 = vmul.f32 %v1352, %v3981
    %v4015 = vmul.f32 %v1356, %v3973
    %v4016 = vmul.f32 %v1356, %v3977
    %v4017 = vmul.f32 %v1356, %v3981
    %v4018 = vmul.f32 %v1360, %v3973
    %v4019 = vmul.f32 %v1360, %v3977
    %v4020 = vmul.f32 %v1360, %v3981
    %v4021 = vmul.f32 %v1364, %v3973
    %v4022 = vmul.f32 %v1364, %v3977
    %v4023 = vmul.f32 %v1364, %v3981
    %v4024 = vmul.f32 %v1368, %v3973
    %v4025 = vmul.f32 %v1368, %v3977
    %v4026 = vmul.f32 %v1368, %v3981
    %v4027 = vmul.f32 %v1372, %v3973
    %v4028 = vmul.f32 %v1372, %v3977
    %v4029 = vmul.f32 %v1372, %v3981
    %v4030 = vmul.f32 %v1376, %v3973
    %v4031 = vmul.f32 %v1376, %v3977
    %v4032 = vmul.f32 %v1376, %v3981
    %v4033 = vmul.f32 %v1380, %v3973
    %v4034 = vmul.f32 %v1380, %v3977
    %v4035 = vmul.f32 %v1380, %v3981
    %v4036 = vmul.f32 %v1384, %v3973
    %v4037 = vmul.f32 %v1384, %v3977
    %v4038 = vmul.f32 %v1384, %v3981
    %v4039 = vmul.f32 %v1388, %v3973
    %v4040 = vmul.f32 %v1388, %v3977
    %v4041 = vmul.f32 %v1388, %v3981
    %v4042 = vmul.f32 %v1392, %v3973
    %v4043 = vmul.f32 %v1392, %v3977
    %v4044 = vmul.f32 %v1392, %v3981
    %v4045 = vmul.f32 %v1396, %v3973
    %v4046 = vmul.f32 %v1396, %v3977
    %v4047 = vmul.f32 %v1396, %v3981
    %v4048 = vmul.f32 %v1400, %v3973
    %v4049 = vmul.f32 %v1400, %v3977
    %v4050 = vmul.f32 %v1400, %v3981
    %v4051 = vmul.f32 %v1404, %v3973
    %v4052 = vmul.f32 %v1404, %v3977
    %v4053 = vmul.f32 %v1404, %v3981
    %v4054 = vmul.f32 %v1408, %v3973
    %v4055 = vmul.f32 %v1408, %v3977
    %v4056 = vmul.f32 %v1408, %v3981
    %v4057 = vmul.f32 %v1412, %v3973
    %v4058 = vmul.f32 %v1412, %v3977
    %v4059 = vmul.f32 %v1412, %v3981
    %v4060 = vmul.f32 %v1416, %v3973
    %v4061 = vmul.f32 %v1416, %v3977
    %v4062 = vmul.f32 %v1416, %v3981
    %v4063 = vmul.f32 %v1420, %v3973
    %v4064 = vmul.f32 %v1420, %v3977
    %v4065 = vmul.f32 %v1420, %v3981
    %v4066 = vmul.f32 %v1424, %v3973
    %v4067 = vmul.f32 %v1424, %v3977
    %v4068 = vmul.f32 %v1424, %v3981
    %v4069 = vmul.f32 %v1428, %v3973
    %v4070 = vmul.f32 %v1428, %v3977
    %v4071 = vmul.f32 %v1428, %v3981
    %v4072 = vmul.f32 %v1432, %v3973
    %v4073 = vmul.f32 %v1432, %v3977
    %v4074 = vmul.f32 %v1432, %v3981
    %v4075 = vmul.f32 %v1436, %v3973
    %v4076 = vmul.f32 %v1436, %v3977
    %v4077 = vmul.f32 %v1436, %v3981
    %v4078 = vmul.f32 %v1440, %v3973
    %v4079 = vmul.f32 %v1440, %v3977
    %v4080 = vmul.f32 %v1440, %v3981
    %v4081 = vmul.f32 %v1444, %v3973
    %v4082 = vmul.f32 %v1444, %v3977
    %v4083 = vmul.f32 %v1444, %v3981
    %v4084 = vmul.f32 %v1448, %v3973
    %v4085 = vmul.f32 %v1448, %v3977
    %v4086 = vmul.f32 %v1448, %v3981
    %v4087 = vmul.f32 %v1452, %v3973
    %v4088 = vmul.f32 %v1452, %v3977
    %v4089 = vmul.f32 %v1452, %v3981
    %v4090 = vmul.f32 %v1456, %v3973
    %v4091 = vmul.f32 %v1456, %v3977
    %v4092 = vmul.f32 %v1456, %v3981
    %v4093 = vmul.f32 %v1460, %v3973
    %v4094 = vmul.f32 %v1460, %v3977
    %v4095 = vmul.f32 %v1460, %v3981
    %v4096 = vmul.f32 %v1464, %v3973
    %v4097 = vmul.f32 %v1464, %v3977
    %v4098 = vmul.f32 %v1464, %v3981
    %v4099 = vmul.f32 %v1468, %v3973
    %v4100 = vmul.f32 %v1468, %v3977
    %v4101 = vmul.f32 %v1468, %v3981
    %v4102 = vmul.f32 %v1472, %v3973
    %v4103 = vmul.f32 %v1472, %v3977
    %v4104 = vmul.f32 %v1472, %v3981
    %v4105 = vmul.f32 %v1476, %v3973
    %v4106 = vmul.f32 %v1476, %v3977
    %v4107 = vmul.f32 %v1476, %v3981
    %v4108 = vmul.f32 %v1480, %v3973
    %v4109 = vmul.f32 %v1480, %v3977
    %v4110 = vmul.f32 %v1480, %v3981
    %v4111 = vmul.f32 %v1484, %v3973
    %v4112 = vmul.f32 %v1484, %v3977
    %v4113 = vmul.f32 %v1484, %v3981
    %v4114 = vmul.f32 %v1488, %v3973
    %v4115 = vmul.f32 %v1488, %v3977
    %v4116 = vmul.f32 %v1488, %v3981
    %v4117 = vmul.f32 %v1492, %v3973
    %v4118 = vmul.f32 %v1492, %v3977
    %v4119 = vmul.f32 %v1492, %v3981
    %v4120 = vmul.f32 %v1496, %v3973
    %v4121 = vmul.f32 %v1496, %v3977
    %v4122 = vmul.f32 %v1496, %v3981
    %v4123 = vmul.f32 %v1500, %v3973
    %v4124 = vmul.f32 %v1500, %v3977
    %v4125 = vmul.f32 %v1500, %v3981
    %v4126 = vmul.f32 %v1504, %v3973
    %v4127 = vmul.f32 %v1504, %v3977
    %v4128 = vmul.f32 %v1504, %v3981
    %v4129 = vmul.f32 %v1508, %v3973
    %v4130 = vmul.f32 %v1508, %v3977
    %v4131 = vmul.f32 %v1508, %v3981
    %v4132 = vmul.f32 %v1512, %v3973
    %v4133 = vmul.f32 %v1512, %v3977
    %v4134 = vmul.f32 %v1512, %v3981
    %v4135 = vmul.f32 %v1516, %v3973
    %v4136 = vmul.f32 %v1516, %v3977
    %v4137 = vmul.f32 %v1516, %v3981
    %v4138 = vmul.f32 %v1520, %v3973
    %v4139 = vmul.f32 %v1520, %v3977
    %v4140 = vmul.f32 %v1520, %v3981
    %v4141 = vmul.f32 %v1524, %v3973
    %v4142 = vmul.f32 %v1524, %v3977
    %v4143 = vmul.f32 %v1524, %v3981
    %v4144 = vmul.f32 %v1528, %v3973
    %v4145 = vmul.f32 %v1528, %v3977
    %v4146 = vmul.f32 %v1528, %v3981
    %v4147 = vmul.f32 %v1532, %v3973
    %v4148 = vmul.f32 %v1532, %v3977
    %v4149 = vmul.f32 %v1532, %v3981
    %v4150 = vmul.f32 %v1536, %v3973
    %v4151 = vmul.f32 %v1536, %v3977
    %v4152 = vmul.f32 %v1536, %v3981
    %v4153 = vmul.f32 %v1540, %v3973
    %v4154 = vmul.f32 %v1540, %v3977
    %v4155 = vmul.f32 %v1540, %v3981
    %v4156 = vmul.f32 %v1544, %v3973
    %v4157 = vmul.f32 %v1544, %v3977
    %v4158 = vmul.f32 %v1544, %v3981
    %v4159 = vmul.f32 %v1548, %v3973
    %v4160 = vmul.f32 %v1548, %v3977
    %v4161 = vmul.f32 %v1548, %v3981
    %v4162 = vmul.f32 %v1552, %v3973
    %v4163 = vmul.f32 %v1552, %v3977
    %v4164 = vmul.f32 %v1552, %v3981
    %v4165 = vmul.f32 %v1556, %v3973
    %v4166 = vmul.f32 %v1556, %v3977
    %v4167 = vmul.f32 %v1556, %v3981
    %v4168 = vmul.f32 %v1560, %v3973
    %v4169 = vmul.f32 %v1560, %v3977
    %v4170 = vmul.f32 %v1560, %v3981
    %v4171 = vmul.f32 %v1564, %v3973
    %v4172 = vmul.f32 %v1564, %v3977
    %v4173 = vmul.f32 %v1564, %v3981
    %v4174 = vadd.f32 %v3763, %v3982
    %v4175 = vadd.f32 %v3764, %v3983
    %v4176 = vadd.f32 %v3765, %v3984
    %v4177 = vadd.f32 %v3766, %v3985
    %v4178 = vadd.f32 %v3767, %v3986
    %v4179 = vadd.f32 %v3768, %v3987
    %v4180 = vadd.f32 %v3769, %v3988
    %v4181 = vadd.f32 %v3770, %v3989
    %v4182 = vadd.f32 %v3771, %v3990
    %v4183 = vadd.f32 %v3772, %v3991
    %v4184 = vadd.f32 %v3773, %v3992
    %v4185 = vadd.f32 %v3774, %v3993
    %v4186 = vadd.f32 %v3775, %v3994
    %v4187 = vadd.f32 %v3776, %v3995
    %v4188 = vadd.f32 %v3777, %v3996
    %v4189 = vadd.f32 %v3778, %v3997
    %v4190 = vadd.f32 %v3779, %v3998
    %v4191 = vadd.f32 %v3780, %v3999
    %v4192 = vadd.f32 %v3781, %v4000
    %v4193 = vadd.f32 %v3782, %v4001
    %v4194 = vadd.f32 %v3783, %v4002
    %v4195 = vadd.f32 %v3784, %v4003
    %v4196 = vadd.f32 %v3785, %v4004
    %v4197 = vadd.f32 %v3786, %v4005
    %v4198 = vadd.f32 %v3787, %v4006
    %v4199 = vadd.f32 %v3788, %v4007
    %v4200 = vadd.f32 %v3789, %v4008
    %v4201 = vadd.f32 %v3790, %v4009
    %v4202 = vadd.f32 %v3791, %v4010
    %v4203 = vadd.f32 %v3792, %v4011
    %v4204 = vadd.f32 %v3793, %v4012
    %v4205 = vadd.f32 %v3794, %v4013
    %v4206 = vadd.f32 %v3795, %v4014
    %v4207 = vadd.f32 %v3796, %v4015
    %v4208 = vadd.f32 %v3797, %v4016
    %v4209 = vadd.f32 %v3798, %v4017
    %v4210 = vadd.f32 %v3799, %v4018
    %v4211 = vadd.f32 %v3800, %v4019
    %v4212 = vadd.f32 %v3801, %v4020
    %v4213 = vadd.f32 %v3802, %v4021
    %v4214 = vadd.f32 %v3803, %v4022
    %v4215 = vadd.f32 %v3804, %v4023
    %v4216 = vadd.f32 %v3805, %v4024
    %v4217 = vadd.f32 %v3806, %v4025
    %v4218 = vadd.f32 %v3807, %v4026
    %v4219 = vadd.f32 %v3808, %v4027
    %v4220 = vadd.f32 %v3809, %v4028
    %v4221 = vadd.f32 %v3810, %v4029
    %v4222 = vadd.f32 %v3811, %v4030
    %v4223 = vadd.f32 %v3812, %v4031
    %v4224 = vadd.f32 %v3813, %v4032
    %v4225 = vadd.f32 %v3814, %v4033
    %v4226 = vadd.f32 %v3815, %v4034
    %v4227 = vadd.f32 %v3816, %v4035
    %v4228 = vadd.f32 %v3817, %v4036
    %v4229 = vadd.f32 %v3818, %v4037
    %v4230 = vadd.f32 %v3819, %v4038
    %v4231 = vadd.f32 %v3820, %v4039
    %v4232 = vadd.f32 %v3821, %v4040
    %v4233 = vadd.f32 %v3822, %v4041
    %v4234 = vadd.f32 %v3823, %v4042
    %v4235 = vadd.f32 %v3824, %v4043
    %v4236 = vadd.f32 %v3825, %v4044
    %v4237 = vadd.f32 %v3826, %v4045
    %v4238 = vadd.f32 %v3827, %v4046
    %v4239 = vadd.f32 %v3828, %v4047
    %v4240 = vadd.f32 %v3829, %v4048
    %v4241 = vadd.f32 %v3830, %v4049
    %v4242 = vadd.f32 %v3831, %v4050
    %v4243 = vadd.f32 %v3832, %v4051
    %v4244 = vadd.f32 %v3833, %v4052
    %v4245 = vadd.f32 %v3834, %v4053
    %v4246 = vadd.f32 %v3835, %v4054
    %v4247 = vadd.f32 %v3836, %v4055
    %v4248 = vadd.f32 %v3837, %v4056
    %v4249 = vadd.f32 %v3838, %v4057
    %v4250 = vadd.f32 %v3839, %v4058
    %v4251 = vadd.f32 %v3840, %v4059
    %v4252 = vadd.f32 %v3841, %v4060
    %v4253 = vadd.f32 %v3842, %v4061
    %v4254 = vadd.f32 %v3843, %v4062
    %v4255 = vadd.f32 %v3844, %v4063
    %v4256 = vadd.f32 %v3845, %v4064
    %v4257 = vadd.f32 %v3846, %v4065
    %v4258 = vadd.f32 %v3847, %v4066
    %v4259 = vadd.f32 %v3848, %v4067
    %v4260 = vadd.f32 %v3849, %v4068
    %v4261 = vadd.f32 %v3850, %v4069
    %v4262 = vadd.f32 %v3851, %v4070
    %v4263 = vadd.f32 %v3852, %v4071
    %v4264 = vadd.f32 %v3853, %v4072
    %v4265 = vadd.f32 %v3854, %v4073
    %v4266 = vadd.f32 %v3855, %v4074
    %v4267 = vadd.f32 %v3856, %v4075
    %v4268 = vadd.f32 %v3857, %v4076
    %v4269 = vadd.f32 %v3858, %v4077
    %v4270 = vadd.f32 %v3859, %v4078
    %v4271 = vadd.f32 %v3860, %v4079
    %v4272 = vadd.f32 %v3861, %v4080
    %v4273 = vadd.f32 %v3862, %v4081
    %v4274 = vadd.f32 %v3863, %v4082
    %v4275 = vadd.f32 %v3864, %v4083
    %v4276 = vadd.f32 %v3865, %v4084
    %v4277 = vadd.f32 %v3866, %v4085
    %v4278 = vadd.f32 %v3867, %v4086
    %v4279 = vadd.f32 %v3868, %v4087
    %v4280 = vadd.f32 %v3869, %v4088
    %v4281 = vadd.f32 %v3870, %v4089
    %v4282 = vadd.f32 %v3871, %v4090
    %v4283 = vadd.f32 %v3872, %v4091
    %v4284 = vadd.f32 %v3873, %v4092
    %v4285 = vadd.f32 %v3874, %v4093
    %v4286 = vadd.f32 %v3875, %v4094
    %v4287 = vadd.f32 %v3876, %v4095
    %v4288 = vadd.f32 %v3877, %v4096
    %v4289 = vadd.f32 %v3878, %v4097
    %v4290 = vadd.f32 %v3879, %v4098
    %v4291 = vadd.f32 %v3880, %v4099
    %v4292 = vadd.f32 %v3881, %v4100
    %v4293 = vadd.f32 %v3882, %v4101
    %v4294 = vadd.f32 %v3883, %v4102
    %v4295 = vadd.f32 %v3884, %v4103
    %v4296 = vadd.f32 %v3885, %v4104
    %v4297 = vadd.f32 %v3886, %v4105
    %v4298 = vadd.f32 %v3887, %v4106
    %v4299 = vadd.f32 %v3888, %v4107
    %v4300 = vadd.f32 %v3889, %v4108
    %v4301 = vadd.f32 %v3890, %v4109
    %v4302 = vadd.f32 %v3891, %v4110
    %v4303 = vadd.f32 %v3892, %v4111
    %v4304 = vadd.f32 %v3893, %v4112
    %v4305 = vadd.f32 %v3894, %v4113
    %v4306 = vadd.f32 %v3895, %v4114
    %v4307 = vadd.f32 %v3896, %v4115
    %v4308 = vadd.f32 %v3897, %v4116
    %v4309 = vadd.f32 %v3898, %v4117
    %v4310 = vadd.f32 %v3899, %v4118
    %v4311 = vadd.f32 %v3900, %v4119
    %v4312 = vadd.f32 %v3901, %v4120
    %v4313 = vadd.f32 %v3902, %v4121
    %v4314 = vadd.f32 %v3903, %v4122
    %v4315 = vadd.f32 %v3904, %v4123
    %v4316 = vadd.f32 %v3905, %v4124
    %v4317 = vadd.f32 %v3906, %v4125
    %v4318 = vadd.f32 %v3907, %v4126
    %v4319 = vadd.f32 %v3908, %v4127
    %v4320 = vadd.f32 %v3909, %v4128
    %v4321 = vadd.f32 %v3910, %v4129
    %v4322 = vadd.f32 %v3911, %v4130
    %v4323 = vadd.f32 %v3912, %v4131
    %v4324 = vadd.f32 %v3913, %v4132
    %v4325 = vadd.f32 %v3914, %v4133
    %v4326 = vadd.f32 %v3915, %v4134
    %v4327 = vadd.f32 %v3916, %v4135
    %v4328 = vadd.f32 %v3917, %v4136
    %v4329 = vadd.f32 %v3918, %v4137
    %v4330 = vadd.f32 %v3919, %v4138
    %v4331 = vadd.f32 %v3920, %v4139
    %v4332 = vadd.f32 %v3921, %v4140
    %v4333 = vadd.f32 %v3922, %v4141
    %v4334 = vadd.f32 %v3923, %v4142
    %v4335 = vadd.f32 %v3924, %v4143
    %v4336 = vadd.f32 %v3925, %v4144
    %v4337 = vadd.f32 %v3926, %v4145
    %v4338 = vadd.f32 %v3927, %v4146
    %v4339 = vadd.f32 %v3928, %v4147
    %v4340 = vadd.f32 %v3929, %v4148
    %v4341 = vadd.f32 %v3930, %v4149
    %v4342 = vadd.f32 %v3931, %v4150
    %v4343 = vadd.f32 %v3932, %v4151
    %v4344 = vadd.f32 %v3933, %v4152
    %v4345 = vadd.f32 %v3934, %v4153
    %v4346 = vadd.f32 %v3935, %v4154
    %v4347 = vadd.f32 %v3936, %v4155
    %v4348 = vadd.f32 %v3937, %v4156
    %v4349 = vadd.f32 %v3938, %v4157
    %v4350 = vadd.f32 %v3939, %v4158
    %v4351 = vadd.f32 %v3940, %v4159
    %v4352 = vadd.f32 %v3941, %v4160
    %v4353 = vadd.f32 %v3942, %v4161
    %v4354 = vadd.f32 %v3943, %v4162
    %v4355 = vadd.f32 %v3944, %v4163
    %v4356 = vadd.f32 %v3945, %v4164
    %v4357 = vadd.f32 %v3946, %v4165
    %v4358 = vadd.f32 %v3947, %v4166
    %v4359 = vadd.f32 %v3948, %v4167
    %v4360 = vadd.f32 %v3949, %v4168
    %v4361 = vadd.f32 %v3950, %v4169
    %v4362 = vadd.f32 %v3951, %v4170
    %v4363 = vadd.f32 %v3952, %v4171
    %v4364 = vadd.f32 %v3953, %v4172
    %v4365 = vadd.f32 %v3954, %v4173
    %v4366 = vlaneseq
    %v4367 = vshrl.u32 %v4366, 7
    %v4368 = vsub.s32 3, %v4367
    %v4369 = vrot.slane %v3320, %v4368
    %v4370 = vlaneseq
    %v4371 = vshrl.u32 %v4370, 7
    %v4372 = vsub.s32 7, %v4371
    %v4373 = vrot.slane %v3320, %v4372
    %v4374 = vlaneseq
    %v4375 = vshrl.u32 %v4374, 7
    %v4376 = vsub.s32 3, %v4375
    %v4377 = vrot.slane %v3321, %v4376
    %v4381 = vlaneseq
    %v4382 = vshrl.u32 %v4381, 7
    %v4383 = vsub.s32 3, %v4382
    %v4384 = vrot.slane %v4369, %v4383
    %v4385 = vlaneseq
    %v4386 = vshrl.u32 %v4385, 7
    %v4387 = vsub.s32 3, %v4386
    %v4388 = vrot.slane %v4373, %v4387
    %v4389 = vlaneseq
    %v4390 = vshrl.u32 %v4389, 7
    %v4391 = vsub.s32 3, %v4390
    %v4392 = vrot.slane %v4377, %v4391
    %v4393 = vmul.f32 %v1979, %v4384
    %v4394 = vmul.f32 %v1979, %v4388
    %v4395 = vmul.f32 %v1979, %v4392
    %v4396 = vmul.f32 %v1983, %v4384
    %v4397 = vmul.f32 %v1983, %v4388
    %v4398 = vmul.f32 %v1983, %v4392
    %v4399 = vmul.f32 %v1987, %v4384
    %v4400 = vmul.f32 %v1987, %v4388
    %v4401 = vmul.f32 %v1987, %v4392
    %v4402 = vmul.f32 %v1991, %v4384
    %v4403 = vmul.f32 %v1991, %v4388
    %v4404 = vmul.f32 %v1991, %v4392
    %v4405 = vmul.f32 %v1995, %v4384
    %v4406 = vmul.f32 %v1995, %v4388
    %v4407 = vmul.f32 %v1995, %v4392
    %v4408 = vmul.f32 %v1999, %v4384
    %v4409 = vmul.f32 %v1999, %v4388
    %v4410 = vmul.f32 %v1999, %v4392
    %v4411 = vmul.f32 %v2003, %v4384
    %v4412 = vmul.f32 %v2003, %v4388
    %v4413 = vmul.f32 %v2003, %v4392
    %v4414 = vmul.f32 %v2007, %v4384
    %v4415 = vmul.f32 %v2007, %v4388
    %v4416 = vmul.f32 %v2007, %v4392
    %v4417 = vmul.f32 %v2011, %v4384
    %v4418 = vmul.f32 %v2011, %v4388
    %v4419 = vmul.f32 %v2011, %v4392
    %v4420 = vmul.f32 %v2015, %v4384
    %v4421 = vmul.f32 %v2015, %v4388
    %v4422 = vmul.f32 %v2015, %v4392
    %v4423 = vmul.f32 %v2019, %v4384
    %v4424 = vmul.f32 %v2019, %v4388
    %v4425 = vmul.f32 %v2019, %v4392
    %v4426 = vmul.f32 %v2023, %v4384
    %v4427 = vmul.f32 %v2023, %v4388
    %v4428 = vmul.f32 %v2023, %v4392
    %v4429 = vmul.f32 %v2027, %v4384
    %v4430 = vmul.f32 %v2027, %v4388
    %v4431 = vmul.f32 %v2027, %v4392
    %v4432 = vmul.f32 %v2031, %v4384
    %v4433 = vmul.f32 %v2031, %v4388
    %v4434 = vmul.f32 %v2031, %v4392
    %v4435 = vmul.f32 %v2035, %v4384
    %v4436 = vmul.f32 %v2035, %v4388
    %v4437 = vmul.f32 %v2035, %v4392
    %v4438 = vmul.f32 %v2039, %v4384
    %v4439 = vmul.f32 %v2039, %v4388
    %v4440 = vmul.f32 %v2039, %v4392
    %v4441 = vmul.f32 %v2043, %v4384
    %v4442 = vmul.f32 %v2043, %v4388
    %v4443 = vmul.f32 %v2043, %v4392
    %v4444 = vmul.f32 %v2047, %v4384
    %v4445 = vmul.f32 %v2047, %v4388
    %v4446 = vmul.f32 %v2047, %v4392
    %v4447 = vmul.f32 %v2051, %v4384
    %v4448 = vmul.f32 %v2051, %v4388
    %v4449 = vmul.f32 %v2051, %v4392
    %v4450 = vmul.f32 %v2055, %v4384
    %v4451 = vmul.f32 %v2055, %v4388
    %v4452 = vmul.f32 %v2055, %v4392
    %v4453 = vmul.f32 %v2059, %v4384
    %v4454 = vmul.f32 %v2059, %v4388
    %v4455 = vmul.f32 %v2059, %v4392
    %v4456 = vmul.f32 %v2063, %v4384
    %v4457 = vmul.f32 %v2063, %v4388
    %v4458 = vmul.f32 %v2063, %v4392
    %v4459 = vmul.f32 %v2067, %v4384
    %v4460 = vmul.f32 %v2067, %v4388
    %v4461 = vmul.f32 %v2067, %v4392
    %v4462 = vmul.f32 %v2071, %v4384
    %v4463 = vmul.f32 %v2071, %v4388
    %v4464 = vmul.f32 %v2071, %v4392
    %v4465 = vmul.f32 %v2075, %v4384
    %v4466 = vmul.f32 %v2075, %v4388
    %v4467 = vmul.f32 %v2075, %v4392
    %v4468 = vmul.f32 %v2079, %v4384
    %v4469 = vmul.f32 %v2079, %v4388
    %v4470 = vmul.f32 %v2079, %v4392
    %v4471 = vmul.f32 %v2083, %v4384
    %v4472 = vmul.f32 %v2083, %v4388
    %v4473 = vmul.f32 %v2083, %v4392
    %v4474 = vmul.f32 %v2087, %v4384
    %v4475 = vmul.f32 %v2087, %v4388
    %v4476 = vmul.f32 %v2087, %v4392
    %v4477 = vmul.f32 %v2091, %v4384
    %v4478 = vmul.f32 %v2091, %v4388
    %v4479 = vmul.f32 %v2091, %v4392
    %v4480 = vmul.f32 %v2095, %v4384
    %v4481 = vmul.f32 %v2095, %v4388
    %v4482 = vmul.f32 %v2095, %v4392
    %v4483 = vmul.f32 %v2099, %v4384
    %v4484 = vmul.f32 %v2099, %v4388
    %v4485 = vmul.f32 %v2099, %v4392
    %v4486 = vmul.f32 %v2103, %v4384
    %v4487 = vmul.f32 %v2103, %v4388
    %v4488 = vmul.f32 %v2103, %v4392
    %v4489 = vmul.f32 %v2107, %v4384
    %v4490 = vmul.f32 %v2107, %v4388
    %v4491 = vmul.f32 %v2107, %v4392
    %v4492 = vmul.f32 %v2111, %v4384
    %v4493 = vmul.f32 %v2111, %v4388
    %v4494 = vmul.f32 %v2111, %v4392
    %v4495 = vmul.f32 %v2115, %v4384
    %v4496 = vmul.f32 %v2115, %v4388
    %v4497 = vmul.f32 %v2115, %v4392
    %v4498 = vmul.f32 %v2119, %v4384
    %v4499 = vmul.f32 %v2119, %v4388
    %v4500 = vmul.f32 %v2119, %v4392
    %v4501 = vmul.f32 %v2123, %v4384
    %v4502 = vmul.f32 %v2123, %v4388
    %v4503 = vmul.f32 %v2123, %v4392
    %v4504 = vmul.f32 %v2127, %v4384
    %v4505 = vmul.f32 %v2127, %v4388
    %v4506 = vmul.f32 %v2127, %v4392
    %v4507 = vmul.f32 %v2131, %v4384
    %v4508 = vmul.f32 %v2131, %v4388
    %v4509 = vmul.f32 %v2131, %v4392
    %v4510 = vmul.f32 %v2135, %v4384
    %v4511 = vmul.f32 %v2135, %v4388
    %v4512 = vmul.f32 %v2135, %v4392
    %v4513 = vmul.f32 %v2139, %v4384
    %v4514 = vmul.f32 %v2139, %v4388
    %v4515 = vmul.f32 %v2139, %v4392
    %v4516 = vmul.f32 %v2143, %v4384
    %v4517 = vmul.f32 %v2143, %v4388
    %v4518 = vmul.f32 %v2143, %v4392
    %v4519 = vmul.f32 %v2147, %v4384
    %v4520 = vmul.f32 %v2147, %v4388
    %v4521 = vmul.f32 %v2147, %v4392
    %v4522 = vmul.f32 %v2151, %v4384
    %v4523 = vmul.f32 %v2151, %v4388
    %v4524 = vmul.f32 %v2151, %v4392
    %v4525 = vmul.f32 %v2155, %v4384
    %v4526 = vmul.f32 %v2155, %v4388
    %v4527 = vmul.f32 %v2155, %v4392
    %v4528 = vmul.f32 %v2159, %v4384
    %v4529 = vmul.f32 %v2159, %v4388
    %v4530 = vmul.f32 %v2159, %v4392
    %v4531 = vmul.f32 %v2163, %v4384
    %v4532 = vmul.f32 %v2163, %v4388
    %v4533 = vmul.f32 %v2163, %v4392
    %v4534 = vmul.f32 %v2167, %v4384
    %v4535 = vmul.f32 %v2167, %v4388
    %v4536 = vmul.f32 %v2167, %v4392
    %v4537 = vmul.f32 %v2171, %v4384
    %v4538 = vmul.f32 %v2171, %v4388
    %v4539 = vmul.f32 %v2171, %v4392
    %v4540 = vmul.f32 %v2175, %v4384
    %v4541 = vmul.f32 %v2175, %v4388
    %v4542 = vmul.f32 %v2175, %v4392
    %v4543 = vmul.f32 %v2179, %v4384
    %v4544 = vmul.f32 %v2179, %v4388
    %v4545 = vmul.f32 %v2179, %v4392
    %v4546 = vmul.f32 %v2183, %v4384
    %v4547 = vmul.f32 %v2183, %v4388
    %v4548 = vmul.f32 %v2183, %v4392
    %v4549 = vmul.f32 %v2187, %v4384
    %v4550 = vmul.f32 %v2187, %v4388
    %v4551 = vmul.f32 %v2187, %v4392
    %v4552 = vmul.f32 %v2191, %v4384
    %v4553 = vmul.f32 %v2191, %v4388
    %v4554 = vmul.f32 %v2191, %v4392
    %v4555 = vmul.f32 %v2195, %v4384
    %v4556 = vmul.f32 %v2195, %v4388
    %v4557 = vmul.f32 %v2195, %v4392
    %v4558 = vmul.f32 %v2199, %v4384
    %v4559 = vmul.f32 %v2199, %v4388
    %v4560 = vmul.f32 %v2199, %v4392
    %v4561 = vmul.f32 %v2203, %v4384
    %v4562 = vmul.f32 %v2203, %v4388
    %v4563 = vmul.f32 %v2203, %v4392
    %v4564 = vmul.f32 %v2207, %v4384
    %v4565 = vmul.f32 %v2207, %v4388
    %v4566 = vmul.f32 %v2207, %v4392
    %v4567 = vmul.f32 %v2211, %v4384
    %v4568 = vmul.f32 %v2211, %v4388
    %v4569 = vmul.f32 %v2211, %v4392
    %v4570 = vmul.f32 %v2215, %v4384
    %v4571 = vmul.f32 %v2215, %v4388
    %v4572 = vmul.f32 %v2215, %v4392
    %v4573 = vmul.f32 %v2219, %v4384
    %v4574 = vmul.f32 %v2219, %v4388
    %v4575 = vmul.f32 %v2219, %v4392
    %v4576 = vmul.f32 %v2223, %v4384
    %v4577 = vmul.f32 %v2223, %v4388
    %v4578 = vmul.f32 %v2223, %v4392
    %v4579 = vmul.f32 %v2227, %v4384
    %v4580 = vmul.f32 %v2227, %v4388
    %v4581 = vmul.f32 %v2227, %v4392
    %v4582 = vmul.f32 %v2231, %v4384
    %v4583 = vmul.f32 %v2231, %v4388
    %v4584 = vmul.f32 %v2231, %v4392
    %v4585 = vadd.f32 %v4174, %v4393
    %v4586 = vadd.f32 %v4175, %v4394
    %v4587 = vadd.f32 %v4176, %v4395
    %v4588 = vadd.f32 %v4177, %v4396
    %v4589 = vadd.f32 %v4178, %v4397
    %v4590 = vadd.f32 %v4179, %v4398
    %v4591 = vadd.f32 %v4180, %v4399
    %v4592 = vadd.f32 %v4181, %v4400
    %v4593 = vadd.f32 %v4182, %v4401
    %v4594 = vadd.f32 %v4183, %v4402
    %v4595 = vadd.f32 %v4184, %v4403
    %v4596 = vadd.f32 %v4185, %v4404
    %v4597 = vadd.f32 %v4186, %v4405
    %v4598 = vadd.f32 %v4187, %v4406
    %v4599 = vadd.f32 %v4188, %v4407
    %v4600 = vadd.f32 %v4189, %v4408
    %v4601 = vadd.f32 %v4190, %v4409
    %v4602 = vadd.f32 %v4191, %v4410
    %v4603 = vadd.f32 %v4192, %v4411
    %v4604 = vadd.f32 %v4193, %v4412
    %v4605 = vadd.f32 %v4194, %v4413
    %v4606 = vadd.f32 %v4195, %v4414
    %v4607 = vadd.f32 %v4196, %v4415
    %v4608 = vadd.f32 %v4197, %v4416
    %v4609 = vadd.f32 %v4198, %v4417
    %v4610 = vadd.f32 %v4199, %v4418
    %v4611 = vadd.f32 %v4200, %v4419
    %v4612 = vadd.f32 %v4201, %v4420
    %v4613 = vadd.f32 %v4202, %v4421
    %v4614 = vadd.f32 %v4203, %v4422
    %v4615 = vadd.f32 %v4204, %v4423
    %v4616 = vadd.f32 %v4205, %v4424
    %v4617 = vadd.f32 %v4206, %v4425
    %v4618 = vadd.f32 %v4207, %v4426
    %v4619 = vadd.f32 %v4208, %v4427
    %v4620 = vadd.f32 %v4209, %v4428
    %v4621 = vadd.f32 %v4210, %v4429
    %v4622 = vadd.f32 %v4211, %v4430
    %v4623 = vadd.f32 %v4212, %v4431
    %v4624 = vadd.f32 %v4213, %v4432
    %v4625 = vadd.f32 %v4214, %v4433
    %v4626 = vadd.f32 %v4215, %v4434
    %v4627 = vadd.f32 %v4216, %v4435
    %v4628 = vadd.f32 %v4217, %v4436
    %v4629 = vadd.f32 %v4218, %v4437
    %v4630 = vadd.f32 %v4219, %v4438
    %v4631 = vadd.f32 %v4220, %v4439
    %v4632 = vadd.f32 %v4221, %v4440
    %v4633 = vadd.f32 %v4222, %v4441
    %v4634 = vadd.f32 %v4223, %v4442
    %v4635 = vadd.f32 %v4224, %v4443
    %v4636 = vadd.f32 %v4225, %v4444
    %v4637 = vadd.f32 %v4226, %v4445
    %v4638 = vadd.f32 %v4227, %v4446
    %v4639 = vadd.f32 %v4228, %v4447
    %v4640 = vadd.f32 %v4229, %v4448
    %v4641 = vadd.f32 %v4230, %v4449
    %v4642 = vadd.f32 %v4231, %v4450
    %v4643 = vadd.f32 %v4232, %v4451
    %v4644 = vadd.f32 %v4233, %v4452
    %v4645 = vadd.f32 %v4234, %v4453
    %v4646 = vadd.f32 %v4235, %v4454
    %v4647 = vadd.f32 %v4236, %v4455
    %v4648 = vadd.f32 %v4237, %v4456
    %v4649 = vadd.f32 %v4238, %v4457
    %v4650 = vadd.f32 %v4239, %v4458
    %v4651 = vadd.f32 %v4240, %v4459
    %v4652 = vadd.f32 %v4241, %v4460
    %v4653 = vadd.f32 %v4242, %v4461
    %v4654 = vadd.f32 %v4243, %v4462
    %v4655 = vadd.f32 %v4244, %v4463
    %v4656 = vadd.f32 %v4245, %v4464
    %v4657 = vadd.f32 %v4246, %v4465
    %v4658 = vadd.f32 %v4247, %v4466
    %v4659 = vadd.f32 %v4248, %v4467
    %v4660 = vadd.f32 %v4249, %v4468
    %v4661 = vadd.f32 %v4250, %v4469
    %v4662 = vadd.f32 %v4251, %v4470
    %v4663 = vadd.f32 %v4252, %v4471
    %v4664 = vadd.f32 %v4253, %v4472
    %v4665 = vadd.f32 %v4254, %v4473
    %v4666 = vadd.f32 %v4255, %v4474
    %v4667 = vadd.f32 %v4256, %v4475
    %v4668 = vadd.f32 %v4257, %v4476
    %v4669 = vadd.f32 %v4258, %v4477
    %v4670 = vadd.f32 %v4259, %v4478
    %v4671 = vadd.f32 %v4260, %v4479
    %v4672 = vadd.f32 %v4261, %v4480
    %v4673 = vadd.f32 %v4262, %v4481
    %v4674 = vadd.f32 %v4263, %v4482
    %v4675 = vadd.f32 %v4264, %v4483
    %v4676 = vadd.f32 %v4265, %v4484
    %v4677 = vadd.f32 %v4266, %v4485
    %v4678 = vadd.f32 %v4267, %v4486
    %v4679 = vadd.f32 %v4268, %v4487
    %v4680 = vadd.f32 %v4269, %v4488
    %v4681 = vadd.f32 %v4270, %v4489
    %v4682 = vadd.f32 %v4271, %v4490
    %v4683 = vadd.f32 %v4272, %v4491
    %v4684 = vadd.f32 %v4273, %v4492
    %v4685 = vadd.f32 %v4274, %v4493
    %v4686 = vadd.f32 %v4275, %v4494
    %v4687 = vadd.f32 %v4276, %v4495
    %v4688 = vadd.f32 %v4277, %v4496
    %v4689 = vadd.f32 %v4278, %v4497
    %v4690 = vadd.f32 %v4279, %v4498
    %v4691 = vadd.f32 %v4280, %v4499
    %v4692 = vadd.f32 %v4281, %v4500
    %v4693 = vadd.f32 %v4282, %v4501
    %v4694 = vadd.f32 %v4283, %v4502
    %v4695 = vadd.f32 %v4284, %v4503
    %v4696 = vadd.f32 %v4285, %v4504
    %v4697 = vadd.f32 %v4286, %v4505
    %v4698 = vadd.f32 %v4287, %v4506
    %v4699 = vadd.f32 %v4288, %v4507
    %v4700 = vadd.f32 %v4289, %v4508
    %v4701 = vadd.f32 %v4290, %v4509
    %v4702 = vadd.f32 %v4291, %v4510
    %v4703 = vadd.f32 %v4292, %v4511
    %v4704 = vadd.f32 %v4293, %v4512
    %v4705 = vadd.f32 %v4294, %v4513
    %v4706 = vadd.f32 %v4295, %v4514
    %v4707 = vadd.f32 %v4296, %v4515
    %v4708 = vadd.f32 %v4297, %v4516
    %v4709 = vadd.f32 %v4298, %v4517
    %v4710 = vadd.f32 %v4299, %v4518
    %v4711 = vadd.f32 %v4300, %v4519
    %v4712 = vadd.f32 %v4301, %v4520
    %v4713 = vadd.f32 %v4302, %v4521
    %v4714 = vadd.f32 %v4303, %v4522
    %v4715 = vadd.f32 %v4304, %v4523
    %v4716 = vadd.f32 %v4305, %v4524
    %v4717 = vadd.f32 %v4306, %v4525
    %v4718 = vadd.f32 %v4307, %v4526
    %v4719 = vadd.f32 %v4308, %v4527
    %v4720 = vadd.f32 %v4309, %v4528
    %v4721 = vadd.f32 %v4310, %v4529
    %v4722 = vadd.f32 %v4311, %v4530
    %v4723 = vadd.f32 %v4312, %v4531
    %v4724 = vadd.f32 %v4313, %v4532
    %v4725 = vadd.f32 %v4314, %v4533
    %v4726 = vadd.f32 %v4315, %v4534
    %v4727 = vadd.f32 %v4316, %v4535
    %v4728 = vadd.f32 %v4317, %v4536
    %v4729 = vadd.f32 %v4318, %v4537
    %v4730 = vadd.f32 %v4319, %v4538
    %v4731 = vadd.f32 %v4320, %v4539
    %v4732 = vadd.f32 %v4321, %v4540
    %v4733 = vadd.f32 %v4322, %v4541
    %v4734 = vadd.f32 %v4323, %v4542
    %v4735 = vadd.f32 %v4324, %v4543
    %v4736 = vadd.f32 %v4325, %v4544
    %v4737 = vadd.f32 %v4326, %v4545
    %v4738 = vadd.f32 %v4327, %v4546
    %v4739 = vadd.f32 %v4328, %v4547
    %v4740 = vadd.f32 %v4329, %v4548
    %v4741 = vadd.f32 %v4330, %v4549
    %v4742 = vadd.f32 %v4331, %v4550
    %v4743 = vadd.f32 %v4332, %v4551
    %v4744 = vadd.f32 %v4333, %v4552
    %v4745 = vadd.f32 %v4334, %v4553
    %v4746 = vadd.f32 %v4335, %v4554
    %v4747 = vadd.f32 %v4336, %v4555
    %v4748 = vadd.f32 %v4337, %v4556
    %v4749 = vadd.f32 %v4338, %v4557
    %v4750 = vadd.f32 %v4339, %v4558
    %v4751 = vadd.f32 %v4340, %v4559
    %v4752 = vadd.f32 %v4341, %v4560
    %v4753 = vadd.f32 %v4342, %v4561
    %v4754 = vadd.f32 %v4343, %v4562
    %v4755 = vadd.f32 %v4344, %v4563
    %v4756 = vadd.f32 %v4345, %v4564
    %v4757 = vadd.f32 %v4346, %v4565
    %v4758 = vadd.f32 %v4347, %v4566
    %v4759 = vadd.f32 %v4348, %v4567
    %v4760 = vadd.f32 %v4349, %v4568
    %v4761 = vadd.f32 %v4350, %v4569
    %v4762 = vadd.f32 %v4351, %v4570
    %v4763 = vadd.f32 %v4352, %v4571
    %v4764 = vadd.f32 %v4353, %v4572
    %v4765 = vadd.f32 %v4354, %v4573
    %v4766 = vadd.f32 %v4355, %v4574
    %v4767 = vadd.f32 %v4356, %v4575
    %v4768 = vadd.f32 %v4357, %v4576
    %v4769 = vadd.f32 %v4358, %v4577
    %v4770 = vadd.f32 %v4359, %v4578
    %v4771 = vadd.f32 %v4360, %v4579
    %v4772 = vadd.f32 %v4361, %v4580
    %v4773 = vadd.f32 %v4362, %v4581
    %v4774 = vadd.f32 %v4363, %v4582
    %v4775 = vadd.f32 %v4364, %v4583
    %v4776 = vadd.f32 %v4365, %v4584
    %v4778 = vlaneseq
    %v4779 = vshrl.u32 %v4778, 7
    %v4780 = vsub.s32 0, %v4779
    %v4781 = vrot.slane %v3322, %v4780
    %v4782 = vlaneseq
    %v4783 = vshrl.u32 %v4782, 7
    %v4784 = vsub.s32 1, %v4783
    %v4785 = vrot.slane %v3322, %v4784
    %v4786 = vlaneseq
    %v4787 = vshrl.u32 %v4786, 7
    %v4788 = vsub.s32 2, %v4787
    %v4789 = vrot.slane %v3322, %v4788
    %v4793 = vadd.f32 %v4585, %v4781
    %v4794 = vadd.f32 %v4586, %v4785
    %v4795 = vadd.f32 %v4587, %v4789
    %v4796 = vadd.f32 %v4588, %v4781
    %v4797 = vadd.f32 %v4589, %v4785
    %v4798 = vadd.f32 %v4590, %v4789
    %v4799 = vadd.f32 %v4591, %v4781
    %v4800 = vadd.f32 %v4592, %v4785
    %v4801 = vadd.f32 %v4593, %v4789
    %v4802 = vadd.f32 %v4594, %v4781
    %v4803 = vadd.f32 %v4595, %v4785
    %v4804 = vadd.f32 %v4596, %v4789
    %v4805 = vadd.f32 %v4597, %v4781
    %v4806 = vadd.f32 %v4598, %v4785
    %v4807 = vadd.f32 %v4599, %v4789
    %v4808 = vadd.f32 %v4600, %v4781
    %v4809 = vadd.f32 %v4601, %v4785
    %v4810 = vadd.f32 %v4602, %v4789
    %v4811 = vadd.f32 %v4603, %v4781
    %v4812 = vadd.f32 %v4604, %v4785
    %v4813 = vadd.f32 %v4605, %v4789
    %v4814 = vadd.f32 %v4606, %v4781
    %v4815 = vadd.f32 %v4607, %v4785
    %v4816 = vadd.f32 %v4608, %v4789
    %v4817 = vadd.f32 %v4609, %v4781
    %v4818 = vadd.f32 %v4610, %v4785
    %v4819 = vadd.f32 %v4611, %v4789
    %v4820 = vadd.f32 %v4612, %v4781
    %v4821 = vadd.f32 %v4613, %v4785
    %v4822 = vadd.f32 %v4614, %v4789
    %v4823 = vadd.f32 %v4615, %v4781
    %v4824 = vadd.f32 %v4616, %v4785
    %v4825 = vadd.f32 %v4617, %v4789
    %v4826 = vadd.f32 %v4618, %v4781
    %v4827 = vadd.f32 %v4619, %v4785
    %v4828 = vadd.f32 %v4620, %v4789
    %v4829 = vadd.f32 %v4621, %v4781
    %v4830 = vadd.f32 %v4622, %v4785
    %v4831 = vadd.f32 %v4623, %v4789
    %v4832 = vadd.f32 %v4624, %v4781
    %v4833 = vadd.f32 %v4625, %v4785
    %v4834 = vadd.f32 %v4626, %v4789
    %v4835 = vadd.f32 %v4627, %v4781
    %v4836 = vadd.f32 %v4628, %v4785
    %v4837 = vadd.f32 %v4629, %v4789
    %v4838 = vadd.f32 %v4630, %v4781
    %v4839 = vadd.f32 %v4631, %v4785
    %v4840 = vadd.f32 %v4632, %v4789
    %v4841 = vadd.f32 %v4633, %v4781
    %v4842 = vadd.f32 %v4634, %v4785
    %v4843 = vadd.f32 %v4635, %v4789
    %v4844 = vadd.f32 %v4636, %v4781
    %v4845 = vadd.f32 %v4637, %v4785
    %v4846 = vadd.f32 %v4638, %v4789
    %v4847 = vadd.f32 %v4639, %v4781
    %v4848 = vadd.f32 %v4640, %v4785
    %v4849 = vadd.f32 %v4641, %v4789
    %v4850 = vadd.f32 %v4642, %v4781
    %v4851 = vadd.f32 %v4643, %v4785
    %v4852 = vadd.f32 %v4644, %v4789
    %v4853 = vadd.f32 %v4645, %v4781
    %v4854 = vadd.f32 %v4646, %v4785
    %v4855 = vadd.f32 %v4647, %v4789
    %v4856 = vadd.f32 %v4648, %v4781
    %v4857 = vadd.f32 %v4649, %v4785
    %v4858 = vadd.f32 %v4650, %v4789
    %v4859 = vadd.f32 %v4651, %v4781
    %v4860 = vadd.f32 %v4652, %v4785
    %v4861 = vadd.f32 %v4653, %v4789
    %v4862 = vadd.f32 %v4654, %v4781
    %v4863 = vadd.f32 %v4655, %v4785
    %v4864 = vadd.f32 %v4656, %v4789
    %v4865 = vadd.f32 %v4657, %v4781
    %v4866 = vadd.f32 %v4658, %v4785
    %v4867 = vadd.f32 %v4659, %v4789
    %v4868 = vadd.f32 %v4660, %v4781
    %v4869 = vadd.f32 %v4661, %v4785
    %v4870 = vadd.f32 %v4662, %v4789
    %v4871 = vadd.f32 %v4663, %v4781
    %v4872 = vadd.f32 %v4664, %v4785
    %v4873 = vadd.f32 %v4665, %v4789
    %v4874 = vadd.f32 %v4666, %v4781
    %v4875 = vadd.f32 %v4667, %v4785
    %v4876 = vadd.f32 %v4668, %v4789
    %v4877 = vadd.f32 %v4669, %v4781
    %v4878 = vadd.f32 %v4670, %v4785
    %v4879 = vadd.f32 %v4671, %v4789
    %v4880 = vadd.f32 %v4672, %v4781
    %v4881 = vadd.f32 %v4673, %v4785
    %v4882 = vadd.f32 %v4674, %v4789
    %v4883 = vadd.f32 %v4675, %v4781
    %v4884 = vadd.f32 %v4676, %v4785
    %v4885 = vadd.f32 %v4677, %v4789
    %v4886 = vadd.f32 %v4678, %v4781
    %v4887 = vadd.f32 %v4679, %v4785
    %v4888 = vadd.f32 %v4680, %v4789
    %v4889 = vadd.f32 %v4681, %v4781
    %v4890 = vadd.f32 %v4682, %v4785
    %v4891 = vadd.f32 %v4683, %v4789
    %v4892 = vadd.f32 %v4684, %v4781
    %v4893 = vadd.f32 %v4685, %v4785
    %v4894 = vadd.f32 %v4686, %v4789
    %v4895 = vadd.f32 %v4687, %v4781
    %v4896 = vadd.f32 %v4688, %v4785
    %v4897 = vadd.f32 %v4689, %v4789
    %v4898 = vadd.f32 %v4690, %v4781
    %v4899 = vadd.f32 %v4691, %v4785
    %v4900 = vadd.f32 %v4692, %v4789
    %v4901 = vadd.f32 %v4693, %v4781
    %v4902 = vadd.f32 %v4694, %v4785
    %v4903 = vadd.f32 %v4695, %v4789
    %v4904 = vadd.f32 %v4696, %v4781
    %v4905 = vadd.f32 %v4697, %v4785
    %v4906 = vadd.f32 %v4698, %v4789
    %v4907 = vadd.f32 %v4699, %v4781
    %v4908 = vadd.f32 %v4700, %v4785
    %v4909 = vadd.f32 %v4701, %v4789
    %v4910 = vadd.f32 %v4702, %v4781
    %v4911 = vadd.f32 %v4703, %v4785
    %v4912 = vadd.f32 %v4704, %v4789
    %v4913 = vadd.f32 %v4705, %v4781
    %v4914 = vadd.f32 %v4706, %v4785
    %v4915 = vadd.f32 %v4707, %v4789
    %v4916 = vadd.f32 %v4708, %v4781
    %v4917 = vadd.f32 %v4709, %v4785
    %v4918 = vadd.f32 %v4710, %v4789
    %v4919 = vadd.f32 %v4711, %v4781
    %v4920 = vadd.f32 %v4712, %v4785
    %v4921 = vadd.f32 %v4713, %v4789
    %v4922 = vadd.f32 %v4714, %v4781
    %v4923 = vadd.f32 %v4715, %v4785
    %v4924 = vadd.f32 %v4716, %v4789
    %v4925 = vadd.f32 %v4717, %v4781
    %v4926 = vadd.f32 %v4718, %v4785
    %v4927 = vadd.f32 %v4719, %v4789
    %v4928 = vadd.f32 %v4720, %v4781
    %v4929 = vadd.f32 %v4721, %v4785
    %v4930 = vadd.f32 %v4722, %v4789
    %v4931 = vadd.f32 %v4723, %v4781
    %v4932 = vadd.f32 %v4724, %v4785
    %v4933 = vadd.f32 %v4725, %v4789
    %v4934 = vadd.f32 %v4726, %v4781
    %v4935 = vadd.f32 %v4727, %v4785
    %v4936 = vadd.f32 %v4728, %v4789
    %v4937 = vadd.f32 %v4729, %v4781
    %v4938 = vadd.f32 %v4730, %v4785
    %v4939 = vadd.f32 %v4731, %v4789
    %v4940 = vadd.f32 %v4732, %v4781
    %v4941 = vadd.f32 %v4733, %v4785
    %v4942 = vadd.f32 %v4734, %v4789
    %v4943 = vadd.f32 %v4735, %v4781
    %v4944 = vadd.f32 %v4736, %v4785
    %v4945 = vadd.f32 %v4737, %v4789
    %v4946 = vadd.f32 %v4738, %v4781
    %v4947 = vadd.f32 %v4739, %v4785
    %v4948 = vadd.f32 %v4740, %v4789
    %v4949 = vadd.f32 %v4741, %v4781
    %v4950 = vadd.f32 %v4742, %v4785
    %v4951 = vadd.f32 %v4743, %v4789
    %v4952 = vadd.f32 %v4744, %v4781
    %v4953 = vadd.f32 %v4745, %v4785
    %v4954 = vadd.f32 %v4746, %v4789
    %v4955 = vadd.f32 %v4747, %v4781
    %v4956 = vadd.f32 %v4748, %v4785
    %v4957 = vadd.f32 %v4749, %v4789
    %v4958 = vadd.f32 %v4750, %v4781
    %v4959 = vadd.f32 %v4751, %v4785
    %v4960 = vadd.f32 %v4752, %v4789
    %v4961 = vadd.f32 %v4753, %v4781
    %v4962 = vadd.f32 %v4754, %v4785
    %v4963 = vadd.f32 %v4755, %v4789
    %v4964 = vadd.f32 %v4756, %v4781
    %v4965 = vadd.f32 %v4757, %v4785
    %v4966 = vadd.f32 %v4758, %v4789
    %v4967 = vadd.f32 %v4759, %v4781
    %v4968 = vadd.f32 %v4760, %v4785
    %v4969 = vadd.f32 %v4761, %v4789
    %v4970 = vadd.f32 %v4762, %v4781
    %v4971 = vadd.f32 %v4763, %v4785
    %v4972 = vadd.f32 %v4764, %v4789
    %v4973 = vadd.f32 %v4765, %v4781
    %v4974 = vadd.f32 %v4766, %v4785
    %v4975 = vadd.f32 %v4767, %v4789
    %v4976 = vadd.f32 %v4768, %v4781
    %v4977 = vadd.f32 %v4769, %v4785
    %v4978 = vadd.f32 %v4770, %v4789
    %v4979 = vadd.f32 %v4771, %v4781
    %v4980 = vadd.f32 %v4772, %v4785
    %v4981 = vadd.f32 %v4773, %v4789
    %v4982 = vadd.f32 %v4774, %v4781
    %v4983 = vadd.f32 %v4775, %v4785
    %v4984 = vadd.f32 %v4776, %v4789
    %v4985 = vmax.f32 %v4793, 0.0
    %v4986 = vmax.f32 %v4794, 0.0
    %v4987 = vmax.f32 %v4795, 0.0
    %v4988 = vmax.f32 %v4796, 0.0
    %v4989 = vmax.f32 %v4797, 0.0
    %v4990 = vmax.f32 %v4798, 0.0
    %v4991 = vmax.f32 %v4799, 0.0
    %v4992 = vmax.f32 %v4800, 0.0
    %v4993 = vmax.f32 %v4801, 0.0
    %v4994 = vmax.f32 %v4802, 0.0
    %v4995 = vmax.f32 %v4803, 0.0
    %v4996 = vmax.f32 %v4804, 0.0
    %v4997 = vmax.f32 %v4805, 0.0
    %v4998 = vmax.f32 %v4806, 0.0
    %v4999 = vmax.f32 %v4807, 0.0
    %v5000 = vmax.f32 %v4808, 0.0
    %v5001 = vmax.f32 %v4809, 0.0
    %v5002 = vmax.f32 %v4810, 0.0
    %v5003 = vmax.f32 %v4811, 0.0
    %v5004 = vmax.f32 %v4812, 0.0
    %v5005 = vmax.f32 %v4813, 0.0
    %v5006 = vmax.f32 %v4814, 0.0
    %v5007 = vmax.f32 %v4815, 0.0
    %v5008 = vmax.f32 %v4816, 0.0
    %v5009 = vmax.f32 %v4817, 0.0
    %v5010 = vmax.f32 %v4818, 0.0
    %v5011 = vmax.f32 %v4819, 0.0
    %v5012 = vmax.f32 %v4820, 0.0
    %v5013 = vmax.f32 %v4821, 0.0
    %v5014 = vmax.f32 %v4822, 0.0
    %v5015 = vmax.f32 %v4823, 0.0
    %v5016 = vmax.f32 %v4824, 0.0
    %v5017 = vmax.f32 %v4825, 0.0
    %v5018 = vmax.f32 %v4826, 0.0
    %v5019 = vmax.f32 %v4827, 0.0
    %v5020 = vmax.f32 %v4828, 0.0
    %v5021 = vmax.f32 %v4829, 0.0
    %v5022 = vmax.f32 %v4830, 0.0
    %v5023 = vmax.f32 %v4831, 0.0
    %v5024 = vmax.f32 %v4832, 0.0
    %v5025 = vmax.f32 %v4833, 0.0
    %v5026 = vmax.f32 %v4834, 0.0
    %v5027 = vmax.f32 %v4835, 0.0
    %v5028 = vmax.f32 %v4836, 0.0
    %v5029 = vmax.f32 %v4837, 0.0
    %v5030 = vmax.f32 %v4838, 0.0
    %v5031 = vmax.f32 %v4839, 0.0
    %v5032 = vmax.f32 %v4840, 0.0
    %v5033 = vmax.f32 %v4841, 0.0
    %v5034 = vmax.f32 %v4842, 0.0
    %v5035 = vmax.f32 %v4843, 0.0
    %v5036 = vmax.f32 %v4844, 0.0
    %v5037 = vmax.f32 %v4845, 0.0
    %v5038 = vmax.f32 %v4846, 0.0
    %v5039 = vmax.f32 %v4847, 0.0
    %v5040 = vmax.f32 %v4848, 0.0
    %v5041 = vmax.f32 %v4849, 0.0
    %v5042 = vmax.f32 %v4850, 0.0
    %v5043 = vmax.f32 %v4851, 0.0
    %v5044 = vmax.f32 %v4852, 0.0
    %v5045 = vmax.f32 %v4853, 0.0
    %v5046 = vmax.f32 %v4854, 0.0
    %v5047 = vmax.f32 %v4855, 0.0
    %v5048 = vmax.f32 %v4856, 0.0
    %v5049 = vmax.f32 %v4857, 0.0
    %v5050 = vmax.f32 %v4858, 0.0
    %v5051 = vmax.f32 %v4859, 0.0
    %v5052 = vmax.f32 %v4860, 0.0
    %v5053 = vmax.f32 %v4861, 0.0
    %v5054 = vmax.f32 %v4862, 0.0
    %v5055 = vmax.f32 %v4863, 0.0
    %v5056 = vmax.f32 %v4864, 0.0
    %v5057 = vmax.f32 %v4865, 0.0
    %v5058 = vmax.f32 %v4866, 0.0
    %v5059 = vmax.f32 %v4867, 0.0
    %v5060 = vmax.f32 %v4868, 0.0
    %v5061 = vmax.f32 %v4869, 0.0
    %v5062 = vmax.f32 %v4870, 0.0
    %v5063 = vmax.f32 %v4871, 0.0
    %v5064 = vmax.f32 %v4872, 0.0
    %v5065 = vmax.f32 %v4873, 0.0
    %v5066 = vmax.f32 %v4874, 0.0
    %v5067 = vmax.f32 %v4875, 0.0
    %v5068 = vmax.f32 %v4876, 0.0
    %v5069 = vmax.f32 %v4877, 0.0
    %v5070 = vmax.f32 %v4878, 0.0
    %v5071 = vmax.f32 %v4879, 0.0
    %v5072 = vmax.f32 %v4880, 0.0
    %v5073 = vmax.f32 %v4881, 0.0
    %v5074 = vmax.f32 %v4882, 0.0
    %v5075 = vmax.f32 %v4883, 0.0
    %v5076 = vmax.f32 %v4884, 0.0
    %v5077 = vmax.f32 %v4885, 0.0
    %v5078 = vmax.f32 %v4886, 0.0
    %v5079 = vmax.f32 %v4887, 0.0
    %v5080 = vmax.f32 %v4888, 0.0
    %v5081 = vmax.f32 %v4889, 0.0
    %v5082 = vmax.f32 %v4890, 0.0
    %v5083 = vmax.f32 %v4891, 0.0
    %v5084 = vmax.f32 %v4892, 0.0
    %v5085 = vmax.f32 %v4893, 0.0
    %v5086 = vmax.f32 %v4894, 0.0
    %v5087 = vmax.f32 %v4895, 0.0
    %v5088 = vmax.f32 %v4896, 0.0
    %v5089 = vmax.f32 %v4897, 0.0
    %v5090 = vmax.f32 %v4898, 0.0
    %v5091 = vmax.f32 %v4899, 0.0
    %v5092 = vmax.f32 %v4900, 0.0
    %v5093 = vmax.f32 %v4901, 0.0
    %v5094 = vmax.f32 %v4902, 0.0
    %v5095 = vmax.f32 %v4903, 0.0
    %v5096 = vmax.f32 %v4904, 0.0
    %v5097 = vmax.f32 %v4905, 0.0
    %v5098 = vmax.f32 %v4906, 0.0
    %v5099 = vmax.f32 %v4907, 0.0
    %v5100 = vmax.f32 %v4908, 0.0
    %v5101 = vmax.f32 %v4909, 0.0
    %v5102 = vmax.f32 %v4910, 0.0
    %v5103 = vmax.f32 %v4911, 0.0
    %v5104 = vmax.f32 %v4912, 0.0
    %v5105 = vmax.f32 %v4913, 0.0
    %v5106 = vmax.f32 %v4914, 0.0
    %v5107 = vmax.f32 %v4915, 0.0
    %v5108 = vmax.f32 %v4916, 0.0
    %v5109 = vmax.f32 %v4917, 0.0
    %v5110 = vmax.f32 %v4918, 0.0
    %v5111 = vmax.f32 %v4919, 0.0
    %v5112 = vmax.f32 %v4920, 0.0
    %v5113 = vmax.f32 %v4921, 0.0
    %v5114 = vmax.f32 %v4922, 0.0
    %v5115 = vmax.f32 %v4923, 0.0
    %v5116 = vmax.f32 %v4924, 0.0
    %v5117 = vmax.f32 %v4925, 0.0
    %v5118 = vmax.f32 %v4926, 0.0
    %v5119 = vmax.f32 %v4927, 0.0
    %v5120 = vmax.f32 %v4928, 0.0
    %v5121 = vmax.f32 %v4929, 0.0
    %v5122 = vmax.f32 %v4930, 0.0
    %v5123 = vmax.f32 %v4931, 0.0
    %v5124 = vmax.f32 %v4932, 0.0
    %v5125 = vmax.f32 %v4933, 0.0
    %v5126 = vmax.f32 %v4934, 0.0
    %v5127 = vmax.f32 %v4935, 0.0
    %v5128 = vmax.f32 %v4936, 0.0
    %v5129 = vmax.f32 %v4937, 0.0
    %v5130 = vmax.f32 %v4938, 0.0
    %v5131 = vmax.f32 %v4939, 0.0
    %v5132 = vmax.f32 %v4940, 0.0
    %v5133 = vmax.f32 %v4941, 0.0
    %v5134 = vmax.f32 %v4942, 0.0
    %v5135 = vmax.f32 %v4943, 0.0
    %v5136 = vmax.f32 %v4944, 0.0
    %v5137 = vmax.f32 %v4945, 0.0
    %v5138 = vmax.f32 %v4946, 0.0
    %v5139 = vmax.f32 %v4947, 0.0
    %v5140 = vmax.f32 %v4948, 0.0
    %v5141 = vmax.f32 %v4949, 0.0
    %v5142 = vmax.f32 %v4950, 0.0
    %v5143 = vmax.f32 %v4951, 0.0
    %v5144 = vmax.f32 %v4952, 0.0
    %v5145 = vmax.f32 %v4953, 0.0
    %v5146 = vmax.f32 %v4954, 0.0
    %v5147 = vmax.f32 %v4955, 0.0
    %v5148 = vmax.f32 %v4956, 0.0
    %v5149 = vmax.f32 %v4957, 0.0
    %v5150 = vmax.f32 %v4958, 0.0
    %v5151 = vmax.f32 %v4959, 0.0
    %v5152 = vmax.f32 %v4960, 0.0
    %v5153 = vmax.f32 %v4961, 0.0
    %v5154 = vmax.f32 %v4962, 0.0
    %v5155 = vmax.f32 %v4963, 0.0
    %v5156 = vmax.f32 %v4964, 0.0
    %v5157 = vmax.f32 %v4965, 0.0
    %v5158 = vmax.f32 %v4966, 0.0
    %v5159 = vmax.f32 %v4967, 0.0
    %v5160 = vmax.f32 %v4968, 0.0
    %v5161 = vmax.f32 %v4969, 0.0
    %v5162 = vmax.f32 %v4970, 0.0
    %v5163 = vmax.f32 %v4971, 0.0
    %v5164 = vmax.f32 %v4972, 0.0
    %v5165 = vmax.f32 %v4973, 0.0
    %v5166 = vmax.f32 %v4974, 0.0
    %v5167 = vmax.f32 %v4975, 0.0
    %v5168 = vmax.f32 %v4976, 0.0
    %v5169 = vmax.f32 %v4977, 0.0
    %v5170 = vmax.f32 %v4978, 0.0
    %v5171 = vmax.f32 %v4979, 0.0
    %v5172 = vmax.f32 %v4980, 0.0
    %v5173 = vmax.f32 %v4981, 0.0
    %v5174 = vmax.f32 %v4982, 0.0
    %v5175 = vmax.f32 %v4983, 0.0
    %v5176 = vmax.f32 %v4984, 0.0
    %v5177 = vadd.f32 %v4985, %v4988
    %v5178 = vadd.f32 %v5177, %v4991
    %v5179 = vadd.f32 %v5178, %v4994
    %v5180 = vadd.f32 %v5179, %v4997
    %v5181 = vadd.f32 %v5180, %v5000
    %v5182 = vadd.f32 %v5181, %v5003
    %v5183 = vadd.f32 %v5182, %v5006
    %v5184 = vadd.f32 %v5183, %v5009
    %v5185 = vadd.f32 %v5184, %v5012
    %v5186 = vadd.f32 %v5185, %v5015
    %v5187 = vadd.f32 %v5186, %v5018
    %v5188 = vadd.f32 %v5187, %v5021
    %v5189 = vadd.f32 %v5188, %v5024
    %v5190 = vadd.f32 %v5189, %v5027
    %v5191 = vadd.f32 %v5190, %v5030
    %v5192 = vadd.f32 %v5191, %v5033
    %v5193 = vadd.f32 %v5192, %v5036
    %v5194 = vadd.f32 %v5193, %v5039
    %v5195 = vadd.f32 %v5194, %v5042
    %v5196 = vadd.f32 %v5195, %v5045
    %v5197 = vadd.f32 %v5196, %v5048
    %v5198 = vadd.f32 %v5197, %v5051
    %v5199 = vadd.f32 %v5198, %v5054
    %v5200 = vadd.f32 %v5199, %v5057
    %v5201 = vadd.f32 %v5200, %v5060
    %v5202 = vadd.f32 %v5201, %v5063
    %v5203 = vadd.f32 %v5202, %v5066
    %v5204 = vadd.f32 %v5203, %v5069
    %v5205 = vadd.f32 %v5204, %v5072
    %v5206 = vadd.f32 %v5205, %v5075
    %v5207 = vadd.f32 %v5206, %v5078
    %v5208 = vrot.slane %v5207, 4
    %v5209 = vadd.f32 %v5207, %v5208
    %v5210 = vrot.slane %v5209, 2
    %v5211 = vadd.f32 %v5209, %v5210
    %v5212 = vrot.slane %v5211, 1
    %v5213 = vadd.f32 %v5211, %v5212
    %v5214 = vadd.f32 %v4986, %v4989
    %v5215 = vadd.f32 %v5214, %v4992
    %v5216 = vadd.f32 %v5215, %v4995
    %v5217 = vadd.f32 %v5216, %v4998
    %v5218 = vadd.f32 %v5217, %v5001
    %v5219 = vadd.f32 %v5218, %v5004
    %v5220 = vadd.f32 %v5219, %v5007
    %v5221 = vadd.f32 %v5220, %v5010
    %v5222 = vadd.f32 %v5221, %v5013
    %v5223 = vadd.f32 %v5222, %v5016
    %v5224 = vadd.f32 %v5223, %v5019
    %v5225 = vadd.f32 %v5224, %v5022
    %v5226 = vadd.f32 %v5225, %v5025
    %v5227 = vadd.f32 %v5226, %v5028
    %v5228 = vadd.f32 %v5227, %v5031
    %v5229 = vadd.f32 %v5228, %v5034
    %v5230 = vadd.f32 %v5229, %v5037
    %v5231 = vadd.f32 %v5230, %v5040
    %v5232 = vadd.f32 %v5231, %v5043
    %v5233 = vadd.f32 %v5232, %v5046
    %v5234 = vadd.f32 %v5233, %v5049
    %v5235 = vadd.f32 %v5234, %v5052
    %v5236 = vadd.f32 %v5235, %v5055
    %v5237 = vadd.f32 %v5236, %v5058
    %v5238 = vadd.f32 %v5237, %v5061
    %v5239 = vadd.f32 %v5238, %v5064
    %v5240 = vadd.f32 %v5239, %v5067
    %v5241 = vadd.f32 %v5240, %v5070
    %v5242 = vadd.f32 %v5241, %v5073
    %v5243 = vadd.f32 %v5242, %v5076
    %v5244 = vadd.f32 %v5243, %v5079
    %v5245 = vrot.slane %v5244, 4
    %v5246 = vadd.f32 %v5244, %v5245
    %v5247 = vrot.slane %v5246, 2
    %v5248 = vadd.f32 %v5246, %v5247
    %v5249 = vrot.slane %v5248, 1
    %v5250 = vadd.f32 %v5248, %v5249
    %v5251 = vadd.f32 %v4987, %v4990
    %v5252 = vadd.f32 %v5251, %v4993
    %v5253 = vadd.f32 %v5252, %v4996
    %v5254 = vadd.f32 %v5253, %v4999
    %v5255 = vadd.f32 %v5254, %v5002
    %v5256 = vadd.f32 %v5255, %v5005
    %v5257 = vadd.f32 %v5256, %v5008
    %v5258 = vadd.f32 %v5257, %v5011
    %v5259 = vadd.f32 %v5258, %v5014
    %v5260 = vadd.f32 %v5259, %v5017
    %v5261 = vadd.f32 %v5260, %v5020
    %v5262 = vadd.f32 %v5261, %v5023
    %v5263 = vadd.f32 %v5262, %v5026
    %v5264 = vadd.f32 %v5263, %v5029
    %v5265 = vadd.f32 %v5264, %v5032
    %v5266 = vadd.f32 %v5265, %v5035
    %v5267 = vadd.f32 %v5266, %v5038
    %v5268 = vadd.f32 %v5267, %v5041
    %v5269 = vadd.f32 %v5268, %v5044
    %v5270 = vadd.f32 %v5269, %v5047
    %v5271 = vadd.f32 %v5270, %v5050
    %v5272 = vadd.f32 %v5271, %v5053
    %v5273 = vadd.f32 %v5272, %v5056
    %v5274 = vadd.f32 %v5273, %v5059
    %v5275 = vadd.f32 %v5274, %v5062
    %v5276 = vadd.f32 %v5275, %v5065
    %v5277 = vadd.f32 %v5276, %v5068
    %v5278 = vadd.f32 %v5277, %v5071
    %v5279 = vadd.f32 %v5278, %v5074
    %v5280 = vadd.f32 %v5279, %v5077
    %v5281 = vadd.f32 %v5280, %v5080
    %v5282 = vrot.slane %v5281, 4
    %v5283 = vadd.f32 %v5281, %v5282
    %v5284 = vrot.slane %v5283, 2
    %v5285 = vadd.f32 %v5283, %v5284
    %v5286 = vrot.slane %v5285, 1
    %v5287 = vadd.f32 %v5285, %v5286
    %v5288 = vadd.f32 %v5081, %v5084
    %v5289 = vadd.f32 %v5288, %v5087
    %v5290 = vadd.f32 %v5289, %v5090
    %v5291 = vadd.f32 %v5290, %v5093
    %v5292 = vadd.f32 %v5291, %v5096
    %v5293 = vadd.f32 %v5292, %v5099
    %v5294 = vadd.f32 %v5293, %v5102
    %v5295 = vadd.f32 %v5294, %v5105
    %v5296 = vadd.f32 %v5295, %v5108
    %v5297 = vadd.f32 %v5296, %v5111
    %v5298 = vadd.f32 %v5297, %v5114
    %v5299 = vadd.f32 %v5298, %v5117
    %v5300 = vadd.f32 %v5299, %v5120
    %v5301 = vadd.f32 %v5300, %v5123
    %v5302 = vadd.f32 %v5301, %v5126
    %v5303 = vadd.f32 %v5302, %v5129
    %v5304 = vadd.f32 %v5303, %v5132
    %v5305 = vadd.f32 %v5304, %v5135
    %v5306 = vadd.f32 %v5305, %v5138
    %v5307 = vadd.f32 %v5306, %v5141
    %v5308 = vadd.f32 %v5307, %v5144
    %v5309 = vadd.f32 %v5308, %v5147
    %v5310 = vadd.f32 %v5309, %v5150
    %v5311 = vadd.f32 %v5310, %v5153
    %v5312 = vadd.f32 %v5311, %v5156
    %v5313 = vadd.f32 %v5312, %v5159
    %v5314 = vadd.f32 %v5313, %v5162
    %v5315 = vadd.f32 %v5314, %v5165
    %v5316 = vadd.f32 %v5315, %v5168
    %v5317 = vadd.f32 %v5316, %v5171
    %v5318 = vadd.f32 %v5317, %v5174
    %v5319 = vrot.slane %v5318, 4
    %v5320 = vadd.f32 %v5318, %v5319
    %v5321 = vrot.slane %v5320, 2
    %v5322 = vadd.f32 %v5320, %v5321
    %v5323 = vrot.slane %v5322, 1
    %v5324 = vadd.f32 %v5322, %v5323
    %v5325 = vadd.f32 %v5082, %v5085
    %v5326 = vadd.f32 %v5325, %v5088
    %v5327 = vadd.f32 %v5326, %v5091
    %v5328 = vadd.f32 %v5327, %v5094
    %v5329 = vadd.f32 %v5328, %v5097
    %v5330 = vadd.f32 %v5329, %v5100
    %v5331 = vadd.f32 %v5330, %v5103
    %v5332 = vadd.f32 %v5331, %v5106
    %v5333 = vadd.f32 %v5332, %v5109
    %v5334 = vadd.f32 %v5333, %v5112
    %v5335 = vadd.f32 %v5334, %v5115
    %v5336 = vadd.f32 %v5335, %v5118
    %v5337 = vadd.f32 %v5336, %v5121
    %v5338 = vadd.f32 %v5337, %v5124
    %v5339 = vadd.f32 %v5338, %v5127
    %v5340 = vadd.f32 %v5339, %v5130
    %v5341 = vadd.f32 %v5340, %v5133
    %v5342 = vadd.f32 %v5341, %v5136
    %v5343 = vadd.f32 %v5342, %v5139
    %v5344 = vadd.f32 %v5343, %v5142
    %v5345 = vadd.f32 %v5344, %v5145
    %v5346 = vadd.f32 %v5345, %v5148
    %v5347 = vadd.f32 %v5346, %v5151
    %v5348 = vadd.f32 %v5347, %v5154
    %v5349 = vadd.f32 %v5348, %v5157
    %v5350 = vadd.f32 %v5349, %v5160
    %v5351 = vadd.f32 %v5350, %v5163
    %v5352 = vadd.f32 %v5351, %v5166
    %v5353 = vadd.f32 %v5352, %v5169
    %v5354 = vadd.f32 %v5353, %v5172
    %v5355 = vadd.f32 %v5354, %v5175
    %v5356 = vrot.slane %v5355, 4
    %v5357 = vadd.f32 %v5355, %v5356
    %v5358 = vrot.slane %v5357, 2
    %v5359 = vadd.f32 %v5357, %v5358
    %v5360 = vrot.slane %v5359, 1
    %v5361 = vadd.f32 %v5359, %v5360
    %v5362 = vadd.f32 %v5083, %v5086
    %v5363 = vadd.f32 %v5362, %v5089
    %v5364 = vadd.f32 %v5363, %v5092
    %v5365 = vadd.f32 %v5364, %v5095
    %v5366 = vadd.f32 %v5365, %v5098
    %v5367 = vadd.f32 %v5366, %v5101
    %v5368 = vadd.f32 %v5367, %v5104
    %v5369 = vadd.f32 %v5368, %v5107
    %v5370 = vadd.f32 %v5369, %v5110
    %v5371 = vadd.f32 %v5370, %v5113
    %v5372 = vadd.f32 %v5371, %v5116
    %v5373 = vadd.f32 %v5372, %v5119
    %v5374 = vadd.f32 %v5373, %v5122
    %v5375 = vadd.f32 %v5374, %v5125
    %v5376 = vadd.f32 %v5375, %v5128
    %v5377 = vadd.f32 %v5376, %v5131
    %v5378 = vadd.f32 %v5377, %v5134
    %v5379 = vadd.f32 %v5378, %v5137
    %v5380 = vadd.f32 %v5379, %v5140
    %v5381 = vadd.f32 %v5380, %v5143
    %v5382 = vadd.f32 %v5381, %v5146
    %v5383 = vadd.f32 %v5382, %v5149
    %v5384 = vadd.f32 %v5383, %v5152
    %v5385 = vadd.f32 %v5384, %v5155
    %v5386 = vadd.f32 %v5385, %v5158
    %v5387 = vadd.f32 %v5386, %v5161
    %v5388 = vadd.f32 %v5387, %v5164
    %v5389 = vadd.f32 %v5388, %v5167
    %v5390 = vadd.f32 %v5389, %v5170
    %v5391 = vadd.f32 %v5390, %v5173
    %v5392 = vadd.f32 %v5391, %v5176
    %v5393 = vrot.slane %v5392, 4
    %v5394 = vadd.f32 %v5392, %v5393
    %v5395 = vrot.slane %v5394, 2
    %v5396 = vadd.f32 %v5394, %v5395
    %v5397 = vrot.slane %v5396, 1
    %v5398 = vadd.f32 %v5396, %v5397
    %v5399 = vmul.f32 %v5213, 0.00390625
    %v5400 = vmul.f32 %v5250, 0.00390625
    %v5401 = vmul.f32 %v5287, 0.00390625
    %v5402 = vmul.f32 %v5324, 0.00390625
    %v5403 = vmul.f32 %v5361, 0.00390625
    %v5404 = vmul.f32 %v5398, 0.00390625
    %v5405 = vld [vmem:[#allocation2 + $0x180] sm:$0xff]
    %v5406 = vld [vmem:[#allocation2 + $0x188] sm:$0xff]
    %v5407 = vld [vmem:[#allocation2 + $0x190] sm:$0xff]
    %v5408 = vld [vmem:[#allocation2 + $0x198] sm:$0xff]
    %v5409 = vld [vmem:[#allocation2 + $0x1a0] sm:$0xff]
    %v5410 = vld [vmem:[#allocation2 + $0x1a8] sm:$0xff]
    %v5411 = vld [vmem:[#allocation2 + $0x1b0] sm:$0xff]
    %v5412 = vld [vmem:[#allocation2 + $0x1b8] sm:$0xff]
    %v5413 = vld [vmem:[#allocation2 + $0x1c0] sm:$0xff]
    %v5414 = vld [vmem:[#allocation2 + $0x1c8] sm:$0xff]
    %v5415 = vld [vmem:[#allocation2 + $0x1d0] sm:$0xff]
    %v5416 = vld [vmem:[#allocation2 + $0x1d8] sm:$0xff]
    %v5417 = vld [vmem:[#allocation2 + $0x1e0] sm:$0xff]
    %v5418 = vld [vmem:[#allocation2 + $0x1e8] sm:$0xff]
    %v5419 = vld [vmem:[#allocation2 + $0x1f0] sm:$0xff]
    %v5420 = vld [vmem:[#allocation2 + $0x1f8] sm:$0xff]
    %v5421 = vld [vmem:[#allocation2 + $0x200] sm:$0xff]
    %v5422 = vld [vmem:[#allocation2 + $0x208] sm:$0xff]
    %v5423 = vld [vmem:[#allocation2 + $0x210] sm:$0xff]
    %v5424 = vld [vmem:[#allocation2 + $0x218] sm:$0xff]
    %v5425 = vld [vmem:[#allocation2 + $0x220] sm:$0xff]
    %v5426 = vld [vmem:[#allocation2 + $0x228] sm:$0xff]
    %v5427 = vld [vmem:[#allocation2 + $0x230] sm:$0xff]
    %v5428 = vld [vmem:[#allocation2 + $0x238] sm:$0xff]
    %v5429 = vld [vmem:[#allocation2 + $0x240] sm:$0xff]
    %v5430 = vld [vmem:[#allocation2 + $0x248] sm:$0xff]
    %v5431 = vld [vmem:[#allocation2 + $0x250] sm:$0xff]
    %v5432 = vld [vmem:[#allocation2 + $0x258] sm:$0xff]
    %v5433 = vld [vmem:[#allocation2 + $0x260] sm:$0xff]
    %v5434 = vld [vmem:[#allocation2 + $0x268] sm:$0xff]
    %v5435 = vld [vmem:[#allocation2 + $0x270] sm:$0xff]
    %v5436 = vld [vmem:[#allocation2 + $0x278] sm:$0xff]
    %v5437 = vld [vmem:[#allocation2 + $0x280] sm:$0xff]
    %v5438 = vld [vmem:[#allocation2 + $0x288] sm:$0xff]
    %v5439 = vld [vmem:[#allocation2 + $0x290] sm:$0xff]
    %v5440 = vld [vmem:[#allocation2 + $0x298] sm:$0xff]
    %v5441 = vld [vmem:[#allocation2 + $0x2a0] sm:$0xff]
    %v5442 = vld [vmem:[#allocation2 + $0x2a8] sm:$0xff]
    %v5443 = vld [vmem:[#allocation2 + $0x2b0] sm:$0xff]
    %v5444 = vld [vmem:[#allocation2 + $0x2b8] sm:$0xff]
    %v5445 = vld [vmem:[#allocation2 + $0x2c0] sm:$0xff]
    %v5446 = vld [vmem:[#allocation2 + $0x2c8] sm:$0xff]
    %v5447 = vld [vmem:[#allocation2 + $0x2d0] sm:$0xff]
    %v5448 = vld [vmem:[#allocation2 + $0x2d8] sm:$0xff]
    %v5449 = vld [vmem:[#allocation2 + $0x2e0] sm:$0xff]
    %v5450 = vld [vmem:[#allocation2 + $0x2e8] sm:$0xff]
    %v5451 = vld [vmem:[#allocation2 + $0x2f0] sm:$0xff]
    %v5452 = vld [vmem:[#allocation2 + $0x2f8] sm:$0xff]
    %vm5459 = vcmask 1041409
    %v5460 = vsel %vm5459, %v5402, %v5399
    %v5461 = vsel %vm5459, %v5403, %v5400
    %v5462 = vsel %vm5459, %v5404, %v5401
    %5466 = vmatprep.subr.mxu0 0.0
    %5467 = vmatpush1.msra.mxu0 %v5405
    %5468 = vmatprep.subr.mxu0 0.0
    %5469 = vmatpush1.msra.mxu0 %v5406
    %5470 = vmatprep.subr.mxu0 0.0
    %5471 = vmatpush1.msra.mxu0 %v5407
    %5472 = vmatprep.subr.mxu0 0.0
    %5473 = vmatpush1.msra.mxu0 %v5408
    %5474 = vmatprep.subr.mxu0 0.0
    %5475 = vmatpush1.msra.mxu0 %v5409
    %5476 = vmatprep.subr.mxu0 0.0
    %5477 = vmatpush1.msra.mxu0 %v5410
    %5478 = vmatprep.subr.mxu0 0.0
    %5479 = vmatpush1.msra.mxu0 %v5411
    %5480 = vmatprep.subr.mxu0 0.0
    %5481 = vmatpush1.msra.mxu0 %v5412
    %5482 = vmatprep.subr.mxu0 0.0
    %5483 = vmatpush1.msra.mxu0 %v5413
    %5484 = vmatprep.subr.mxu0 0.0
    %5485 = vmatpush1.msra.mxu0 %v5414
    %5486 = vmatprep.subr.mxu0 0.0
    %5487 = vmatpush1.msra.mxu0 %v5415
    %5488 = vmatprep.subr.mxu0 0.0
    %5489 = vmatpush1.msra.mxu0 %v5416
    %5490 = vmatprep.subr.mxu0 0.0
    %5491 = vmatpush1.msra.mxu0 %v5417
    %5492 = vmatprep.subr.mxu0 0.0
    %5493 = vmatpush1.msra.mxu0 %v5418
    %5494 = vmatprep.subr.mxu0 0.0
    %5495 = vmatpush1.msra.mxu0 %v5419
    %5496 = vmatprep.subr.mxu0 0.0
    %5497 = vmatpush1.msra.mxu0 %v5420
    %5498 = vmatprep.subr.mxu0 0.0
    %5499 = vmatpush1.msra.mxu0 %v5421
    %5500 = vmatprep.subr.mxu0 0.0
    %5501 = vmatpush1.msra.mxu0 %v5422
    %5502 = vmatprep.subr.mxu0 0.0
    %5503 = vmatpush1.msra.mxu0 %v5423
    %5504 = vmatprep.subr.mxu0 0.0
    %5505 = vmatpush1.msra.mxu0 %v5424
    %5506 = vmatprep.subr.mxu0 0.0
    %5507 = vmatpush1.msra.mxu0 %v5425
    %5508 = vmatprep.subr.mxu0 0.0
    %5509 = vmatpush1.msra.mxu0 %v5426
    %5510 = vmatprep.subr.mxu0 0.0
    %5511 = vmatpush1.msra.mxu0 %v5427
    %5512 = vmatprep.subr.mxu0 0.0
    %5513 = vmatpush1.msra.mxu0 %v5428
    %5514 = vmatprep.subr.mxu0 0.0
    %5515 = vmatpush1.msra.mxu0 %v5429
    %5516 = vmatprep.subr.mxu0 0.0
    %5517 = vmatpush1.msra.mxu0 %v5430
    %5518 = vmatprep.subr.mxu0 0.0
    %5519 = vmatpush1.msra.mxu0 %v5431
    %5520 = vmatprep.subr.mxu0 0.0
    %5521 = vmatpush1.msra.mxu0 %v5432
    %5522 = vmatprep.subr.mxu0 0.0
    %5523 = vmatpush1.msra.mxu0 %v5433
    %5524 = vmatprep.subr.mxu0 0.0
    %5525 = vmatpush1.msra.mxu0 %v5434
    %5526 = vmatprep.subr.mxu0 0.0
    %5527 = vmatpush1.msra.mxu0 %v5435
    %5528 = vmatprep.subr.mxu0 0.0
    %5529 = vmatpush1.msra.mxu0 %v5436
    %5530 = vmatprep.mubr.f32.mxu0 %v5461
    %5531 = vmatmul.mubr.f32.gmra.mrb[0].mxu0 %v5460
    %v5532 = vpop.f32.mrb[0].mxu0
    %v5533 = vadd.f32 0.0, %v5532
    %v5534 = vpop.f32.mrb[0].mxu0
    %5535 = vdwg.mxu0
    %5536 = vmatprep.subr.mxu0 0.0
    %5537 = vmatpush1.msra.mxu0 %v5437
    %5538 = vmatprep.subr.mxu0 0.0
    %5539 = vmatpush1.msra.mxu0 %v5438
    %5540 = vmatprep.subr.mxu0 0.0
    %5541 = vmatpush1.msra.mxu0 %v5439
    %5542 = vmatprep.subr.mxu0 0.0
    %5543 = vmatpush1.msra.mxu0 %v5440
    %5544 = vmatprep.subr.mxu0 0.0
    %5545 = vmatpush1.msra.mxu0 %v5441
    %5546 = vmatprep.subr.mxu0 0.0
    %5547 = vmatpush1.msra.mxu0 %v5442
    %5548 = vmatprep.subr.mxu0 0.0
    %5549 = vmatpush1.msra.mxu0 %v5443
    %5550 = vmatprep.subr.mxu0 0.0
    %5551 = vmatpush1.msra.mxu0 %v5444
    %5552 = vmatprep.subr.mxu0 0.0
    %5553 = vmatpush1.msra.mxu0 %v5445
    %5554 = vmatprep.subr.mxu0 0.0
    %5555 = vmatpush1.msra.mxu0 %v5446
    %5556 = vmatprep.subr.mxu0 0.0
    %5557 = vmatpush1.msra.mxu0 %v5447
    %5558 = vmatprep.subr.mxu0 0.0
    %5559 = vmatpush1.msra.mxu0 %v5448
    %5560 = vmatprep.subr.mxu0 0.0
    %5561 = vmatpush1.msra.mxu0 %v5449
    %5562 = vmatprep.subr.mxu0 0.0
    %5563 = vmatpush1.msra.mxu0 %v5450
    %5564 = vmatprep.subr.mxu0 0.0
    %5565 = vmatpush1.msra.mxu0 %v5451
    %5566 = vmatprep.subr.mxu0 0.0
    %5567 = vmatpush1.msra.mxu0 %v5452
    %5568 = vmatprep.subr.mxu0 0.0
    %5569 = vmatpush1.msra.mxu0 0.0
    %5570 = vmatprep.subr.mxu0 0.0
    %5571 = vmatpush1.msra.mxu0 0.0
    %5572 = vmatprep.subr.mxu0 0.0
    %5573 = vmatpush1.msra.mxu0 0.0
    %5574 = vmatprep.subr.mxu0 0.0
    %5575 = vmatpush1.msra.mxu0 0.0
    %5576 = vmatprep.subr.mxu0 0.0
    %5577 = vmatpush1.msra.mxu0 0.0
    %5578 = vmatprep.subr.mxu0 0.0
    %5579 = vmatpush1.msra.mxu0 0.0
    %5580 = vmatprep.subr.mxu0 0.0
    %5581 = vmatpush1.msra.mxu0 0.0
    %5582 = vmatprep.subr.mxu0 0.0
    %5583 = vmatpush1.msra.mxu0 0.0
    %5584 = vmatprep.subr.mxu0 0.0
    %5585 = vmatpush1.msra.mxu0 0.0
    %5586 = vmatprep.subr.mxu0 0.0
    %5587 = vmatpush1.msra.mxu0 0.0
    %5588 = vmatprep.subr.mxu0 0.0
    %5589 = vmatpush1.msra.mxu0 0.0
    %5590 = vmatprep.subr.mxu0 0.0
    %5591 = vmatpush1.msra.mxu0 0.0
    %5592 = vmatprep.subr.mxu0 0.0
    %5593 = vmatpush1.msra.mxu0 0.0
    %5594 = vmatprep.subr.mxu0 0.0
    %5595 = vmatpush1.msra.mxu0 0.0
    %5596 = vmatprep.subr.mxu0 0.0
    %5597 = vmatpush1.msra.mxu0 0.0
    %5598 = vmatprep.subr.mxu0 0.0
    %5599 = vmatpush1.msra.mxu0 0.0
    %5600 = vmatprep.mubr.f32.mxu0 0.0
    %5601 = vmatmul.mubr.f32.gmra.mrb[0].mxu0 %v5462
    %v5602 = vpop.f32.mrb[0].mxu0
    %v5603 = vadd.f32 %v5533, %v5602
    %v5604 = vpop.f32.mrb[0].mxu0
    %5605 = vdwg.mxu0
    %v5612 = vsel %vm5459, %v3269, %v3266
    %v5613 = vsel %vm5459, %v3270, %v3267
    %v5614 = vsel %vm5459, %v3271, %v3268
    %5618 = vmatprep.subr.mxu0 0.0
    %5619 = vmatpush1.msra.mxu0 %v3272
    %5620 = vmatprep.subr.mxu0 0.0
    %5621 = vmatpush1.msra.mxu0 %v3273
    %5622 = vmatprep.subr.mxu0 0.0
    %5623 = vmatpush1.msra.mxu0 %v3274
    %5624 = vmatprep.subr.mxu0 0.0
    %5625 = vmatpush1.msra.mxu0 %v3275
    %5626 = vmatprep.subr.mxu0 0.0
    %5627 = vmatpush1.msra.mxu0 %v3276
    %5628 = vmatprep.subr.mxu0 0.0
    %5629 = vmatpush1.msra.mxu0 %v3277
    %5630 = vmatprep.subr.mxu0 0.0
    %5631 = vmatpush1.msra.mxu0 %v3278
    %5632 = vmatprep.subr.mxu0 0.0
    %5633 = vmatpush1.msra.mxu0 %v3279
    %5634 = vmatprep.subr.mxu0 0.0
    %5635 = vmatpush1.msra.mxu0 %v3280
    %5636 = vmatprep.subr.mxu0 0.0
    %5637 = vmatpush1.msra.mxu0 %v3281
    %5638 = vmatprep.subr.mxu0 0.0
    %5639 = vmatpush1.msra.mxu0 %v3282
    %5640 = vmatprep.subr.mxu0 0.0
    %5641 = vmatpush1.msra.mxu0 %v3283
    %5642 = vmatprep.subr.mxu0 0.0
    %5643 = vmatpush1.msra.mxu0 %v3284
    %5644 = vmatprep.subr.mxu0 0.0
    %5645 = vmatpush1.msra.mxu0 %v3285
    %5646 = vmatprep.subr.mxu0 0.0
    %5647 = vmatpush1.msra.mxu0 %v3286
    %5648 = vmatprep.subr.mxu0 0.0
    %5649 = vmatpush1.msra.mxu0 %v3287
    %5650 = vmatprep.subr.mxu0 0.0
    %5651 = vmatpush1.msra.mxu0 %v3288
    %5652 = vmatprep.subr.mxu0 0.0
    %5653 = vmatpush1.msra.mxu0 %v3289
    %5654 = vmatprep.subr.mxu0 0.0
    %5655 = vmatpush1.msra.mxu0 %v3290
    %5656 = vmatprep.subr.mxu0 0.0
    %5657 = vmatpush1.msra.mxu0 %v3291
    %5658 = vmatprep.subr.mxu0 0.0
    %5659 = vmatpush1.msra.mxu0 %v3292
    %5660 = vmatprep.subr.mxu0 0.0
    %5661 = vmatpush1.msra.mxu0 %v3293
    %5662 = vmatprep.subr.mxu0 0.0
    %5663 = vmatpush1.msra.mxu0 %v3294
    %5664 = vmatprep.subr.mxu0 0.0
    %5665 = vmatpush1.msra.mxu0 %v3295
    %5666 = vmatprep.subr.mxu0 0.0
    %5667 = vmatpush1.msra.mxu0 %v3296
    %5668 = vmatprep.subr.mxu0 0.0
    %5669 = vmatpush1.msra.mxu0 %v3297
    %5670 = vmatprep.subr.mxu0 0.0
    %5671 = vmatpush1.msra.mxu0 %v3298
    %5672 = vmatprep.subr.mxu0 0.0
    %5673 = vmatpush1.msra.mxu0 %v3299
    %5674 = vmatprep.subr.mxu0 0.0
    %5675 = vmatpush1.msra.mxu0 %v3300
    %5676 = vmatprep.subr.mxu0 0.0
    %5677 = vmatpush1.msra.mxu0 %v3301
    %5678 = vmatprep.subr.mxu0 0.0
    %5679 = vmatpush1.msra.mxu0 %v3302
    %5680 = vmatprep.subr.mxu0 0.0
    %5681 = vmatpush1.msra.mxu0 %v3303
    %5682 = vmatprep.mubr.f32.mxu0 %v5613
    %5683 = vmatmul.mubr.f32.gmra.mrb[0].mxu0 %v5612
    %v5684 = vpop.f32.mrb[0].mxu0
    %v5685 = vadd.f32 %v5603, %v5684
    %v5686 = vpop.f32.mrb[0].mxu0
    %5687 = vdwg.mxu0
    %5688 = vmatprep.subr.mxu0 0.0
    %5689 = vmatpush1.msra.mxu0 %v3304
    %5690 = vmatprep.subr.mxu0 0.0
    %5691 = vmatpush1.msra.mxu0 %v3305
    %5692 = vmatprep.subr.mxu0 0.0
    %5693 = vmatpush1.msra.mxu0 %v3306
    %5694 = vmatprep.subr.mxu0 0.0
    %5695 = vmatpush1.msra.mxu0 %v3307
    %5696 = vmatprep.subr.mxu0 0.0
    %5697 = vmatpush1.msra.mxu0 %v3308
    %5698 = vmatprep.subr.mxu0 0.0
    %5699 = vmatpush1.msra.mxu0 %v3309
    %5700 = vmatprep.subr.mxu0 0.0
    %5701 = vmatpush1.msra.mxu0 %v3310
    %5702 = vmatprep.subr.mxu0 0.0
    %5703 = vmatpush1.msra.mxu0 %v3311
    %5704 = vmatprep.subr.mxu0 0.0
    %5705 = vmatpush1.msra.mxu0 %v3312
    %5706 = vmatprep.subr.mxu0 0.0
    %5707 = vmatpush1.msra.mxu0 %v3313
    %5708 = vmatprep.subr.mxu0 0.0
    %5709 = vmatpush1.msra.mxu0 %v3314
    %5710 = vmatprep.subr.mxu0 0.0
    %5711 = vmatpush1.msra.mxu0 %v3315
    %5712 = vmatprep.subr.mxu0 0.0
    %5713 = vmatpush1.msra.mxu0 %v3316
    %5714 = vmatprep.subr.mxu0 0.0
    %5715 = vmatpush1.msra.mxu0 %v3317
    %5716 = vmatprep.subr.mxu0 0.0
    %5717 = vmatpush1.msra.mxu0 %v3318
    %5718 = vmatprep.subr.mxu0 0.0
    %5719 = vmatpush1.msra.mxu0 %v3319
    %5720 = vmatprep.subr.mxu0 0.0
    %5721 = vmatpush1.msra.mxu0 0.0
    %5722 = vmatprep.subr.mxu0 0.0
    %5723 = vmatpush1.msra.mxu0 0.0
    %5724 = vmatprep.subr.mxu0 0.0
    %5725 = vmatpush1.msra.mxu0 0.0
    %5726 = vmatprep.subr.mxu0 0.0
    %5727 = vmatpush1.msra.mxu0 0.0
    %5728 = vmatprep.subr.mxu0 0.0
    %5729 = vmatpush1.msra.mxu0 0.0
    %5730 = vmatprep.subr.mxu0 0.0
    %5731 = vmatpush1.msra.mxu0 0.0
    %5732 = vmatprep.subr.mxu0 0.0
    %5733 = vmatpush1.msra.mxu0 0.0
    %5734 = vmatprep.subr.mxu0 0.0
    %5735 = vmatpush1.msra.mxu0 0.0
    %5736 = vmatprep.subr.mxu0 0.0
    %5737 = vmatpush1.msra.mxu0 0.0
    %5738 = vmatprep.subr.mxu0 0.0
    %5739 = vmatpush1.msra.mxu0 0.0
    %5740 = vmatprep.subr.mxu0 0.0
    %5741 = vmatpush1.msra.mxu0 0.0
    %5742 = vmatprep.subr.mxu0 0.0
    %5743 = vmatpush1.msra.mxu0 0.0
    %5744 = vmatprep.subr.mxu0 0.0
    %5745 = vmatpush1.msra.mxu0 0.0
    %5746 = vmatprep.subr.mxu0 0.0
    %5747 = vmatpush1.msra.mxu0 0.0
    %5748 = vmatprep.subr.mxu0 0.0
    %5749 = vmatpush1.msra.mxu0 0.0
    %5750 = vmatprep.subr.mxu0 0.0
    %5751 = vmatpush1.msra.mxu0 0.0
    %5752 = vmatprep.mubr.f32.mxu0 0.0
    %5753 = vmatmul.mubr.f32.gmra.mrb[0].mxu0 %v5614
    %v5754 = vpop.f32.mrb[0].mxu0
    %v5755 = vadd.f32 %v5685, %v5754
    %v5756 = vpop.f32.mrb[0].mxu0
    %5757 = vdwg.mxu0
    %v5758 = vld [vmem:[%s1 + $0x18] sm:$0xff]
    %v5759 = vld [vmem:[%s1 + $0x20] sm:$0xf]
    %v5760 = vld [vmem:[%s2 + $0x6] sm:$0x7]
    %v5763 = vlaneseq
    %v5764 = vshrl.u32 %v5763, 7
    %v5765 = vsub.s32 0, %v5764
    %v5766 = vrot.slane %v5758, %v5765
    %v5767 = vlaneseq
    %v5768 = vshrl.u32 %v5767, 7
    %v5769 = vsub.s32 4, %v5768
    %v5770 = vrot.slane %v5758, %v5769
    %v5771 = vlaneseq
    %v5772 = vshrl.u32 %v5771, 7
    %v5773 = vsub.s32 0, %v5772
    %v5774 = vrot.slane %v5759, %v5773
    %v5778 = vlaneseq
    %v5779 = vshrl.u32 %v5778, 7
    %v5780 = vsub.s32 0, %v5779
    %v5781 = vrot.slane %v5766, %v5780
    %v5782 = vlaneseq
    %v5783 = vshrl.u32 %v5782, 7
    %v5784 = vsub.s32 0, %v5783
    %v5785 = vrot.slane %v5770, %v5784
    %v5786 = vlaneseq
    %v5787 = vshrl.u32 %v5786, 7
    %v5788 = vsub.s32 0, %v5787
    %v5789 = vrot.slane %v5774, %v5788
    %v5790 = vmul.f32 %v105, %v5781
    %v5791 = vmul.f32 %v105, %v5785
    %v5792 = vmul.f32 %v105, %v5789
    %v5793 = vmul.f32 %v110, %v5781
    %v5794 = vmul.f32 %v110, %v5785
    %v5795 = vmul.f32 %v110, %v5789
    %v5796 = vmul.f32 %v115, %v5781
    %v5797 = vmul.f32 %v115, %v5785
    %v5798 = vmul.f32 %v115, %v5789
    %v5799 = vmul.f32 %v120, %v5781
    %v5800 = vmul.f32 %v120, %v5785
    %v5801 = vmul.f32 %v120, %v5789
    %v5802 = vmul.f32 %v125, %v5781
    %v5803 = vmul.f32 %v125, %v5785
    %v5804 = vmul.f32 %v125, %v5789
    %v5805 = vmul.f32 %v130, %v5781
    %v5806 = vmul.f32 %v130, %v5785
    %v5807 = vmul.f32 %v130, %v5789
    %v5808 = vmul.f32 %v135, %v5781
    %v5809 = vmul.f32 %v135, %v5785
    %v5810 = vmul.f32 %v135, %v5789
    %v5811 = vmul.f32 %v140, %v5781
    %v5812 = vmul.f32 %v140, %v5785
    %v5813 = vmul.f32 %v140, %v5789
    %v5814 = vmul.f32 %v145, %v5781
    %v5815 = vmul.f32 %v145, %v5785
    %v5816 = vmul.f32 %v145, %v5789
    %v5817 = vmul.f32 %v150, %v5781
    %v5818 = vmul.f32 %v150, %v5785
    %v5819 = vmul.f32 %v150, %v5789
    %v5820 = vmul.f32 %v155, %v5781
    %v5821 = vmul.f32 %v155, %v5785
    %v5822 = vmul.f32 %v155, %v5789
    %v5823 = vmul.f32 %v160, %v5781
    %v5824 = vmul.f32 %v160, %v5785
    %v5825 = vmul.f32 %v160, %v5789
    %v5826 = vmul.f32 %v165, %v5781
    %v5827 = vmul.f32 %v165, %v5785
    %v5828 = vmul.f32 %v165, %v5789
    %v5829 = vmul.f32 %v170, %v5781
    %v5830 = vmul.f32 %v170, %v5785
    %v5831 = vmul.f32 %v170, %v5789
    %v5832 = vmul.f32 %v175, %v5781
    %v5833 = vmul.f32 %v175, %v5785
    %v5834 = vmul.f32 %v175, %v5789
    %v5835 = vmul.f32 %v180, %v5781
    %v5836 = vmul.f32 %v180, %v5785
    %v5837 = vmul.f32 %v180, %v5789
    %v5838 = vmul.f32 %v185, %v5781
    %v5839 = vmul.f32 %v185, %v5785
    %v5840 = vmul.f32 %v185, %v5789
    %v5841 = vmul.f32 %v190, %v5781
    %v5842 = vmul.f32 %v190, %v5785
    %v5843 = vmul.f32 %v190, %v5789
    %v5844 = vmul.f32 %v195, %v5781
    %v5845 = vmul.f32 %v195, %v5785
    %v5846 = vmul.f32 %v195, %v5789
    %v5847 = vmul.f32 %v200, %v5781
    %v5848 = vmul.f32 %v200, %v5785
    %v5849 = vmul.f32 %v200, %v5789
    %v5850 = vmul.f32 %v205, %v5781
    %v5851 = vmul.f32 %v205, %v5785
    %v5852 = vmul.f32 %v205, %v5789
    %v5853 = vmul.f32 %v210, %v5781
    %v5854 = vmul.f32 %v210, %v5785
    %v5855 = vmul.f32 %v210, %v5789
    %v5856 = vmul.f32 %v215, %v5781
    %v5857 = vmul.f32 %v215, %v5785
    %v5858 = vmul.f32 %v215, %v5789
    %v5859 = vmul.f32 %v220, %v5781
    %v5860 = vmul.f32 %v220, %v5785
    %v5861 = vmul.f32 %v220, %v5789
    %v5862 = vmul.f32 %v225, %v5781
    %v5863 = vmul.f32 %v225, %v5785
    %v5864 = vmul.f32 %v225, %v5789
    %v5865 = vmul.f32 %v230, %v5781
    %v5866 = vmul.f32 %v230, %v5785
    %v5867 = vmul.f32 %v230, %v5789
    %v5868 = vmul.f32 %v235, %v5781
    %v5869 = vmul.f32 %v235, %v5785
    %v5870 = vmul.f32 %v235, %v5789
    %v5871 = vmul.f32 %v240, %v5781
    %v5872 = vmul.f32 %v240, %v5785
    %v5873 = vmul.f32 %v240, %v5789
    %v5874 = vmul.f32 %v245, %v5781
    %v5875 = vmul.f32 %v245, %v5785
    %v5876 = vmul.f32 %v245, %v5789
    %v5877 = vmul.f32 %v250, %v5781
    %v5878 = vmul.f32 %v250, %v5785
    %v5879 = vmul.f32 %v250, %v5789
    %v5880 = vmul.f32 %v255, %v5781
    %v5881 = vmul.f32 %v255, %v5785
    %v5882 = vmul.f32 %v255, %v5789
    %v5883 = vmul.f32 %v260, %v5781
    %v5884 = vmul.f32 %v260, %v5785
    %v5885 = vmul.f32 %v260, %v5789
    %v5886 = vmul.f32 %v265, %v5781
    %v5887 = vmul.f32 %v265, %v5785
    %v5888 = vmul.f32 %v265, %v5789
    %v5889 = vmul.f32 %v270, %v5781
    %v5890 = vmul.f32 %v270, %v5785
    %v5891 = vmul.f32 %v270, %v5789
    %v5892 = vmul.f32 %v275, %v5781
    %v5893 = vmul.f32 %v275, %v5785
    %v5894 = vmul.f32 %v275, %v5789
    %v5895 = vmul.f32 %v280, %v5781
    %v5896 = vmul.f32 %v280, %v5785
    %v5897 = vmul.f32 %v280, %v5789
    %v5898 = vmul.f32 %v285, %v5781
    %v5899 = vmul.f32 %v285, %v5785
    %v5900 = vmul.f32 %v285, %v5789
    %v5901 = vmul.f32 %v290, %v5781
    %v5902 = vmul.f32 %v290, %v5785
    %v5903 = vmul.f32 %v290, %v5789
    %v5904 = vmul.f32 %v295, %v5781
    %v5905 = vmul.f32 %v295, %v5785
    %v5906 = vmul.f32 %v295, %v5789
    %v5907 = vmul.f32 %v300, %v5781
    %v5908 = vmul.f32 %v300, %v5785
    %v5909 = vmul.f32 %v300, %v5789
    %v5910 = vmul.f32 %v305, %v5781
    %v5911 = vmul.f32 %v305, %v5785
    %v5912 = vmul.f32 %v305, %v5789
    %v5913 = vmul.f32 %v310, %v5781
    %v5914 = vmul.f32 %v310, %v5785
    %v5915 = vmul.f32 %v310, %v5789
    %v5916 = vmul.f32 %v315, %v5781
    %v5917 = vmul.f32 %v315, %v5785
    %v5918 = vmul.f32 %v315, %v5789
    %v5919 = vmul.f32 %v320, %v5781
    %v5920 = vmul.f32 %v320, %v5785
    %v5921 = vmul.f32 %v320, %v5789
    %v5922 = vmul.f32 %v325, %v5781
    %v5923 = vmul.f32 %v325, %v5785
    %v5924 = vmul.f32 %v325, %v5789
    %v5925 = vmul.f32 %v330, %v5781
    %v5926 = vmul.f32 %v330, %v5785
    %v5927 = vmul.f32 %v330, %v5789
    %v5928 = vmul.f32 %v335, %v5781
    %v5929 = vmul.f32 %v335, %v5785
    %v5930 = vmul.f32 %v335, %v5789
    %v5931 = vmul.f32 %v340, %v5781
    %v5932 = vmul.f32 %v340, %v5785
    %v5933 = vmul.f32 %v340, %v5789
    %v5934 = vmul.f32 %v345, %v5781
    %v5935 = vmul.f32 %v345, %v5785
    %v5936 = vmul.f32 %v345, %v5789
    %v5937 = vmul.f32 %v350, %v5781
    %v5938 = vmul.f32 %v350, %v5785
    %v5939 = vmul.f32 %v350, %v5789
    %v5940 = vmul.f32 %v355, %v5781
    %v5941 = vmul.f32 %v355, %v5785
    %v5942 = vmul.f32 %v355, %v5789
    %v5943 = vmul.f32 %v360, %v5781
    %v5944 = vmul.f32 %v360, %v5785
    %v5945 = vmul.f32 %v360, %v5789
    %v5946 = vmul.f32 %v365, %v5781
    %v5947 = vmul.f32 %v365, %v5785
    %v5948 = vmul.f32 %v365, %v5789
    %v5949 = vmul.f32 %v370, %v5781
    %v5950 = vmul.f32 %v370, %v5785
    %v5951 = vmul.f32 %v370, %v5789
    %v5952 = vmul.f32 %v375, %v5781
    %v5953 = vmul.f32 %v375, %v5785
    %v5954 = vmul.f32 %v375, %v5789
    %v5955 = vmul.f32 %v380, %v5781
    %v5956 = vmul.f32 %v380, %v5785
    %v5957 = vmul.f32 %v380, %v5789
    %v5958 = vmul.f32 %v385, %v5781
    %v5959 = vmul.f32 %v385, %v5785
    %v5960 = vmul.f32 %v385, %v5789
    %v5961 = vmul.f32 %v390, %v5781
    %v5962 = vmul.f32 %v390, %v5785
    %v5963 = vmul.f32 %v390, %v5789
    %v5964 = vmul.f32 %v395, %v5781
    %v5965 = vmul.f32 %v395, %v5785
    %v5966 = vmul.f32 %v395, %v5789
    %v5967 = vmul.f32 %v400, %v5781
    %v5968 = vmul.f32 %v400, %v5785
    %v5969 = vmul.f32 %v400, %v5789
    %v5970 = vmul.f32 %v405, %v5781
    %v5971 = vmul.f32 %v405, %v5785
    %v5972 = vmul.f32 %v405, %v5789
    %v5973 = vmul.f32 %v410, %v5781
    %v5974 = vmul.f32 %v410, %v5785
    %v5975 = vmul.f32 %v410, %v5789
    %v5976 = vmul.f32 %v415, %v5781
    %v5977 = vmul.f32 %v415, %v5785
    %v5978 = vmul.f32 %v415, %v5789
    %v5979 = vmul.f32 %v420, %v5781
    %v5980 = vmul.f32 %v420, %v5785
    %v5981 = vmul.f32 %v420, %v5789
    %v5982 = vlaneseq
    %v5983 = vshrl.u32 %v5982, 7
    %v5984 = vsub.s32 1, %v5983
    %v5985 = vrot.slane %v5758, %v5984
    %v5986 = vlaneseq
    %v5987 = vshrl.u32 %v5986, 7
    %v5988 = vsub.s32 5, %v5987
    %v5989 = vrot.slane %v5758, %v5988
    %v5990 = vlaneseq
    %v5991 = vshrl.u32 %v5990, 7
    %v5992 = vsub.s32 1, %v5991
    %v5993 = vrot.slane %v5759, %v5992
    %v5997 = vlaneseq
    %v5998 = vshrl.u32 %v5997, 7
    %v5999 = vsub.s32 1, %v5998
    %v6000 = vrot.slane %v5985, %v5999
    %v6001 = vlaneseq
    %v6002 = vshrl.u32 %v6001, 7
    %v6003 = vsub.s32 1, %v6002
    %v6004 = vrot.slane %v5989, %v6003
    %v6005 = vlaneseq
    %v6006 = vshrl.u32 %v6005, 7
    %v6007 = vsub.s32 1, %v6006
    %v6008 = vrot.slane %v5993, %v6007
    %v6009 = vmul.f32 %v645, %v6000
    %v6010 = vmul.f32 %v645, %v6004
    %v6011 = vmul.f32 %v645, %v6008
    %v6012 = vmul.f32 %v649, %v6000
    %v6013 = vmul.f32 %v649, %v6004
    %v6014 = vmul.f32 %v649, %v6008
    %v6015 = vmul.f32 %v653, %v6000
    %v6016 = vmul.f32 %v653, %v6004
    %v6017 = vmul.f32 %v653, %v6008
    %v6018 = vmul.f32 %v657, %v6000
    %v6019 = vmul.f32 %v657, %v6004
    %v6020 = vmul.f32 %v657, %v6008
    %v6021 = vmul.f32 %v661, %v6000
    %v6022 = vmul.f32 %v661, %v6004
    %v6023 = vmul.f32 %v661, %v6008
    %v6024 = vmul.f32 %v665, %v6000
    %v6025 = vmul.f32 %v665, %v6004
    %v6026 = vmul.f32 %v665, %v6008
    %v6027 = vmul.f32 %v669, %v6000
    %v6028 = vmul.f32 %v669, %v6004
    %v6029 = vmul.f32 %v669, %v6008
    %v6030 = vmul.f32 %v673, %v6000
    %v6031 = vmul.f32 %v673, %v6004
    %v6032 = vmul.f32 %v673, %v6008
    %v6033 = vmul.f32 %v677, %v6000
    %v6034 = vmul.f32 %v677, %v6004
    %v6035 = vmul.f32 %v677, %v6008
    %v6036 = vmul.f32 %v681, %v6000
    %v6037 = vmul.f32 %v681, %v6004
    %v6038 = vmul.f32 %v681, %v6008
    %v6039 = vmul.f32 %v685, %v6000
    %v6040 = vmul.f32 %v685, %v6004
    %v6041 = vmul.f32 %v685, %v6008
    %v6042 = vmul.f32 %v689, %v6000
    %v6043 = vmul.f32 %v689, %v6004
    %v6044 = vmul.f32 %v689, %v6008
    %v6045 = vmul.f32 %v693, %v6000
    %v6046 = vmul.f32 %v693, %v6004
    %v6047 = vmul.f32 %v693, %v6008
    %v6048 = vmul.f32 %v697, %v6000
    %v6049 = vmul.f32 %v697, %v6004
    %v6050 = vmul.f32 %v697, %v6008
    %v6051 = vmul.f32 %v701, %v6000
    %v6052 = vmul.f32 %v701, %v6004
    %v6053 = vmul.f32 %v701, %v6008
    %v6054 = vmul.f32 %v705, %v6000
    %v6055 = vmul.f32 %v705, %v6004
    %v6056 = vmul.f32 %v705, %v6008
    %v6057 = vmul.f32 %v709, %v6000
    %v6058 = vmul.f32 %v709, %v6004
    %v6059 = vmul.f32 %v709, %v6008
    %v6060 = vmul.f32 %v713, %v6000
    %v6061 = vmul.f32 %v713, %v6004
    %v6062 = vmul.f32 %v713, %v6008
    %v6063 = vmul.f32 %v717, %v6000
    %v6064 = vmul.f32 %v717, %v6004
    %v6065 = vmul.f32 %v717, %v6008
    %v6066 = vmul.f32 %v721, %v6000
    %v6067 = vmul.f32 %v721, %v6004
    %v6068 = vmul.f32 %v721, %v6008
    %v6069 = vmul.f32 %v725, %v6000
    %v6070 = vmul.f32 %v725, %v6004
    %v6071 = vmul.f32 %v725, %v6008
    %v6072 = vmul.f32 %v729, %v6000
    %v6073 = vmul.f32 %v729, %v6004
    %v6074 = vmul.f32 %v729, %v6008
    %v6075 = vmul.f32 %v733, %v6000
    %v6076 = vmul.f32 %v733, %v6004
    %v6077 = vmul.f32 %v733, %v6008
    %v6078 = vmul.f32 %v737, %v6000
    %v6079 = vmul.f32 %v737, %v6004
    %v6080 = vmul.f32 %v737, %v6008
    %v6081 = vmul.f32 %v741, %v6000
    %v6082 = vmul.f32 %v741, %v6004
    %v6083 = vmul.f32 %v741, %v6008
    %v6084 = vmul.f32 %v745, %v6000
    %v6085 = vmul.f32 %v745, %v6004
    %v6086 = vmul.f32 %v745, %v6008
    %v6087 = vmul.f32 %v749, %v6000
    %v6088 = vmul.f32 %v749, %v6004
    %v6089 = vmul.f32 %v749, %v6008
    %v6090 = vmul.f32 %v753, %v6000
    %v6091 = vmul.f32 %v753, %v6004
    %v6092 = vmul.f32 %v753, %v6008
    %v6093 = vmul.f32 %v757, %v6000
    %v6094 = vmul.f32 %v757, %v6004
    %v6095 = vmul.f32 %v757, %v6008
    %v6096 = vmul.f32 %v761, %v6000
    %v6097 = vmul.f32 %v761, %v6004
    %v6098 = vmul.f32 %v761, %v6008
    %v6099 = vmul.f32 %v765, %v6000
    %v6100 = vmul.f32 %v765, %v6004
    %v6101 = vmul.f32 %v765, %v6008
    %v6102 = vmul.f32 %v769, %v6000
    %v6103 = vmul.f32 %v769, %v6004
    %v6104 = vmul.f32 %v769, %v6008
    %v6105 = vmul.f32 %v773, %v6000
    %v6106 = vmul.f32 %v773, %v6004
    %v6107 = vmul.f32 %v773, %v6008
    %v6108 = vmul.f32 %v777, %v6000
    %v6109 = vmul.f32 %v777, %v6004
    %v6110 = vmul.f32 %v777, %v6008
    %v6111 = vmul.f32 %v781, %v6000
    %v6112 = vmul.f32 %v781, %v6004
    %v6113 = vmul.f32 %v781, %v6008
    %v6114 = vmul.f32 %v785, %v6000
    %v6115 = vmul.f32 %v785, %v6004
    %v6116 = vmul.f32 %v785, %v6008
    %v6117 = vmul.f32 %v789, %v6000
    %v6118 = vmul.f32 %v789, %v6004
    %v6119 = vmul.f32 %v789, %v6008
    %v6120 = vmul.f32 %v793, %v6000
    %v6121 = vmul.f32 %v793, %v6004
    %v6122 = vmul.f32 %v793, %v6008
    %v6123 = vmul.f32 %v797, %v6000
    %v6124 = vmul.f32 %v797, %v6004
    %v6125 = vmul.f32 %v797, %v6008
    %v6126 = vmul.f32 %v801, %v6000
    %v6127 = vmul.f32 %v801, %v6004
    %v6128 = vmul.f32 %v801, %v6008
    %v6129 = vmul.f32 %v805, %v6000
    %v6130 = vmul.f32 %v805, %v6004
    %v6131 = vmul.f32 %v805, %v6008
    %v6132 = vmul.f32 %v809, %v6000
    %v6133 = vmul.f32 %v809, %v6004
    %v6134 = vmul.f32 %v809, %v6008
    %v6135 = vmul.f32 %v813, %v6000
    %v6136 = vmul.f32 %v813, %v6004
    %v6137 = vmul.f32 %v813, %v6008
    %v6138 = vmul.f32 %v817, %v6000
    %v6139 = vmul.f32 %v817, %v6004
    %v6140 = vmul.f32 %v817, %v6008
    %v6141 = vmul.f32 %v821, %v6000
    %v6142 = vmul.f32 %v821, %v6004
    %v6143 = vmul.f32 %v821, %v6008
    %v6144 = vmul.f32 %v825, %v6000
    %v6145 = vmul.f32 %v825, %v6004
    %v6146 = vmul.f32 %v825, %v6008
    %v6147 = vmul.f32 %v829, %v6000
    %v6148 = vmul.f32 %v829, %v6004
    %v6149 = vmul.f32 %v829, %v6008
    %v6150 = vmul.f32 %v833, %v6000
    %v6151 = vmul.f32 %v833, %v6004
    %v6152 = vmul.f32 %v833, %v6008
    %v6153 = vmul.f32 %v837, %v6000
    %v6154 = vmul.f32 %v837, %v6004
    %v6155 = vmul.f32 %v837, %v6008
    %v6156 = vmul.f32 %v841, %v6000
    %v6157 = vmul.f32 %v841, %v6004
    %v6158 = vmul.f32 %v841, %v6008
    %v6159 = vmul.f32 %v845, %v6000
    %v6160 = vmul.f32 %v845, %v6004
    %v6161 = vmul.f32 %v845, %v6008
    %v6162 = vmul.f32 %v849, %v6000
    %v6163 = vmul.f32 %v849, %v6004
    %v6164 = vmul.f32 %v849, %v6008
    %v6165 = vmul.f32 %v853, %v6000
    %v6166 = vmul.f32 %v853, %v6004
    %v6167 = vmul.f32 %v853, %v6008
    %v6168 = vmul.f32 %v857, %v6000
    %v6169 = vmul.f32 %v857, %v6004
    %v6170 = vmul.f32 %v857, %v6008
    %v6171 = vmul.f32 %v861, %v6000
    %v6172 = vmul.f32 %v861, %v6004
    %v6173 = vmul.f32 %v861, %v6008
    %v6174 = vmul.f32 %v865, %v6000
    %v6175 = vmul.f32 %v865, %v6004
    %v6176 = vmul.f32 %v865, %v6008
    %v6177 = vmul.f32 %v869, %v6000
    %v6178 = vmul.f32 %v869, %v6004
    %v6179 = vmul.f32 %v869, %v6008
    %v6180 = vmul.f32 %v873, %v6000
    %v6181 = vmul.f32 %v873, %v6004
    %v6182 = vmul.f32 %v873, %v6008
    %v6183 = vmul.f32 %v877, %v6000
    %v6184 = vmul.f32 %v877, %v6004
    %v6185 = vmul.f32 %v877, %v6008
    %v6186 = vmul.f32 %v881, %v6000
    %v6187 = vmul.f32 %v881, %v6004
    %v6188 = vmul.f32 %v881, %v6008
    %v6189 = vmul.f32 %v885, %v6000
    %v6190 = vmul.f32 %v885, %v6004
    %v6191 = vmul.f32 %v885, %v6008
    %v6192 = vmul.f32 %v889, %v6000
    %v6193 = vmul.f32 %v889, %v6004
    %v6194 = vmul.f32 %v889, %v6008
    %v6195 = vmul.f32 %v893, %v6000
    %v6196 = vmul.f32 %v893, %v6004
    %v6197 = vmul.f32 %v893, %v6008
    %v6198 = vmul.f32 %v897, %v6000
    %v6199 = vmul.f32 %v897, %v6004
    %v6200 = vmul.f32 %v897, %v6008
    %v6201 = vadd.f32 %v5790, %v6009
    %v6202 = vadd.f32 %v5791, %v6010
    %v6203 = vadd.f32 %v5792, %v6011
    %v6204 = vadd.f32 %v5793, %v6012
    %v6205 = vadd.f32 %v5794, %v6013
    %v6206 = vadd.f32 %v5795, %v6014
    %v6207 = vadd.f32 %v5796, %v6015
    %v6208 = vadd.f32 %v5797, %v6016
    %v6209 = vadd.f32 %v5798, %v6017
    %v6210 = vadd.f32 %v5799, %v6018
    %v6211 = vadd.f32 %v5800, %v6019
    %v6212 = vadd.f32 %v5801, %v6020
    %v6213 = vadd.f32 %v5802, %v6021
    %v6214 = vadd.f32 %v5803, %v6022
    %v6215 = vadd.f32 %v5804, %v6023
    %v6216 = vadd.f32 %v5805, %v6024
    %v6217 = vadd.f32 %v5806, %v6025
    %v6218 = vadd.f32 %v5807, %v6026
    %v6219 = vadd.f32 %v5808, %v6027
    %v6220 = vadd.f32 %v5809, %v6028
    %v6221 = vadd.f32 %v5810, %v6029
    %v6222 = vadd.f32 %v5811, %v6030
    %v6223 = vadd.f32 %v5812, %v6031
    %v6224 = vadd.f32 %v5813, %v6032
    %v6225 = vadd.f32 %v5814, %v6033
    %v6226 = vadd.f32 %v5815, %v6034
    %v6227 = vadd.f32 %v5816, %v6035
    %v6228 = vadd.f32 %v5817, %v6036
    %v6229 = vadd.f32 %v5818, %v6037
    %v6230 = vadd.f32 %v5819, %v6038
    %v6231 = vadd.f32 %v5820, %v6039
    %v6232 = vadd.f32 %v5821, %v6040
    %v6233 = vadd.f32 %v5822, %v6041
    %v6234 = vadd.f32 %v5823, %v6042
    %v6235 = vadd.f32 %v5824, %v6043
    %v6236 = vadd.f32 %v5825, %v6044
    %v6237 = vadd.f32 %v5826, %v6045
    %v6238 = vadd.f32 %v5827, %v6046
    %v6239 = vadd.f32 %v5828, %v6047
    %v6240 = vadd.f32 %v5829, %v6048
    %v6241 = vadd.f32 %v5830, %v6049
    %v6242 = vadd.f32 %v5831, %v6050
    %v6243 = vadd.f32 %v5832, %v6051
    %v6244 = vadd.f32 %v5833, %v6052
    %v6245 = vadd.f32 %v5834, %v6053
    %v6246 = vadd.f32 %v5835, %v6054
    %v6247 = vadd.f32 %v5836, %v6055
    %v6248 = vadd.f32 %v5837, %v6056
    %v6249 = vadd.f32 %v5838, %v6057
    %v6250 = vadd.f32 %v5839, %v6058
    %v6251 = vadd.f32 %v5840, %v6059
    %v6252 = vadd.f32 %v5841, %v6060
    %v6253 = vadd.f32 %v5842, %v6061
    %v6254 = vadd.f32 %v5843, %v6062
    %v6255 = vadd.f32 %v5844, %v6063
    %v6256 = vadd.f32 %v5845, %v6064
    %v6257 = vadd.f32 %v5846, %v6065
    %v6258 = vadd.f32 %v5847, %v6066
    %v6259 = vadd.f32 %v5848, %v6067
    %v6260 = vadd.f32 %v5849, %v6068
    %v6261 = vadd.f32 %v5850, %v6069
    %v6262 = vadd.f32 %v5851, %v6070
    %v6263 = vadd.f32 %v5852, %v6071
    %v6264 = vadd.f32 %v5853, %v6072
    %v6265 = vadd.f32 %v5854, %v6073
    %v6266 = vadd.f32 %v5855, %v6074
    %v6267 = vadd.f32 %v5856, %v6075
    %v6268 = vadd.f32 %v5857, %v6076
    %v6269 = vadd.f32 %v5858, %v6077
    %v6270 = vadd.f32 %v5859, %v6078
    %v6271 = vadd.f32 %v5860, %v6079
    %v6272 = vadd.f32 %v5861, %v6080
    %v6273 = vadd.f32 %v5862, %v6081
    %v6274 = vadd.f32 %v5863, %v6082
    %v6275 = vadd.f32 %v5864, %v6083
    %v6276 = vadd.f32 %v5865, %v6084
    %v6277 = vadd.f32 %v5866, %v6085
    %v6278 = vadd.f32 %v5867, %v6086
    %v6279 = vadd.f32 %v5868, %v6087
    %v6280 = vadd.f32 %v5869, %v6088
    %v6281 = vadd.f32 %v5870, %v6089
    %v6282 = vadd.f32 %v5871, %v6090
    %v6283 = vadd.f32 %v5872, %v6091
    %v6284 = vadd.f32 %v5873, %v6092
    %v6285 = vadd.f32 %v5874, %v6093
    %v6286 = vadd.f32 %v5875, %v6094
    %v6287 = vadd.f32 %v5876, %v6095
    %v6288 = vadd.f32 %v5877, %v6096
    %v6289 = vadd.f32 %v5878, %v6097
    %v6290 = vadd.f32 %v5879, %v6098
    %v6291 = vadd.f32 %v5880, %v6099
    %v6292 = vadd.f32 %v5881, %v6100
    %v6293 = vadd.f32 %v5882, %v6101
    %v6294 = vadd.f32 %v5883, %v6102
    %v6295 = vadd.f32 %v5884, %v6103
    %v6296 = vadd.f32 %v5885, %v6104
    %v6297 = vadd.f32 %v5886, %v6105
    %v6298 = vadd.f32 %v5887, %v6106
    %v6299 = vadd.f32 %v5888, %v6107
    %v6300 = vadd.f32 %v5889, %v6108
    %v6301 = vadd.f32 %v5890, %v6109
    %v6302 = vadd.f32 %v5891, %v6110
    %v6303 = vadd.f32 %v5892, %v6111
    %v6304 = vadd.f32 %v5893, %v6112
    %v6305 = vadd.f32 %v5894, %v6113
    %v6306 = vadd.f32 %v5895, %v6114
    %v6307 = vadd.f32 %v5896, %v6115
    %v6308 = vadd.f32 %v5897, %v6116
    %v6309 = vadd.f32 %v5898, %v6117
    %v6310 = vadd.f32 %v5899, %v6118
    %v6311 = vadd.f32 %v5900, %v6119
    %v6312 = vadd.f32 %v5901, %v6120
    %v6313 = vadd.f32 %v5902, %v6121
    %v6314 = vadd.f32 %v5903, %v6122
    %v6315 = vadd.f32 %v5904, %v6123
    %v6316 = vadd.f32 %v5905, %v6124
    %v6317 = vadd.f32 %v5906, %v6125
    %v6318 = vadd.f32 %v5907, %v6126
    %v6319 = vadd.f32 %v5908, %v6127
    %v6320 = vadd.f32 %v5909, %v6128
    %v6321 = vadd.f32 %v5910, %v6129
    %v6322 = vadd.f32 %v5911, %v6130
    %v6323 = vadd.f32 %v5912, %v6131
    %v6324 = vadd.f32 %v5913, %v6132
    %v6325 = vadd.f32 %v5914, %v6133
    %v6326 = vadd.f32 %v5915, %v6134
    %v6327 = vadd.f32 %v5916, %v6135
    %v6328 = vadd.f32 %v5917, %v6136
    %v6329 = vadd.f32 %v5918, %v6137
    %v6330 = vadd.f32 %v5919, %v6138
    %v6331 = vadd.f32 %v5920, %v6139
    %v6332 = vadd.f32 %v5921, %v6140
    %v6333 = vadd.f32 %v5922, %v6141
    %v6334 = vadd.f32 %v5923, %v6142
    %v6335 = vadd.f32 %v5924, %v6143
    %v6336 = vadd.f32 %v5925, %v6144
    %v6337 = vadd.f32 %v5926, %v6145
    %v6338 = vadd.f32 %v5927, %v6146
    %v6339 = vadd.f32 %v5928, %v6147
    %v6340 = vadd.f32 %v5929, %v6148
    %v6341 = vadd.f32 %v5930, %v6149
    %v6342 = vadd.f32 %v5931, %v6150
    %v6343 = vadd.f32 %v5932, %v6151
    %v6344 = vadd.f32 %v5933, %v6152
    %v6345 = vadd.f32 %v5934, %v6153
    %v6346 = vadd.f32 %v5935, %v6154
    %v6347 = vadd.f32 %v5936, %v6155
    %v6348 = vadd.f32 %v5937, %v6156
    %v6349 = vadd.f32 %v5938, %v6157
    %v6350 = vadd.f32 %v5939, %v6158
    %v6351 = vadd.f32 %v5940, %v6159
    %v6352 = vadd.f32 %v5941, %v6160
    %v6353 = vadd.f32 %v5942, %v6161
    %v6354 = vadd.f32 %v5943, %v6162
    %v6355 = vadd.f32 %v5944, %v6163
    %v6356 = vadd.f32 %v5945, %v6164
    %v6357 = vadd.f32 %v5946, %v6165
    %v6358 = vadd.f32 %v5947, %v6166
    %v6359 = vadd.f32 %v5948, %v6167
    %v6360 = vadd.f32 %v5949, %v6168
    %v6361 = vadd.f32 %v5950, %v6169
    %v6362 = vadd.f32 %v5951, %v6170
    %v6363 = vadd.f32 %v5952, %v6171
    %v6364 = vadd.f32 %v5953, %v6172
    %v6365 = vadd.f32 %v5954, %v6173
    %v6366 = vadd.f32 %v5955, %v6174
    %v6367 = vadd.f32 %v5956, %v6175
    %v6368 = vadd.f32 %v5957, %v6176
    %v6369 = vadd.f32 %v5958, %v6177
    %v6370 = vadd.f32 %v5959, %v6178
    %v6371 = vadd.f32 %v5960, %v6179
    %v6372 = vadd.f32 %v5961, %v6180
    %v6373 = vadd.f32 %v5962, %v6181
    %v6374 = vadd.f32 %v5963, %v6182
    %v6375 = vadd.f32 %v5964, %v6183
    %v6376 = vadd.f32 %v5965, %v6184
    %v6377 = vadd.f32 %v5966, %v6185
    %v6378 = vadd.f32 %v5967, %v6186
    %v6379 = vadd.f32 %v5968, %v6187
    %v6380 = vadd.f32 %v5969, %v6188
    %v6381 = vadd.f32 %v5970, %v6189
    %v6382 = vadd.f32 %v5971, %v6190
    %v6383 = vadd.f32 %v5972, %v6191
    %v6384 = vadd.f32 %v5973, %v6192
    %v6385 = vadd.f32 %v5974, %v6193
    %v6386 = vadd.f32 %v5975, %v6194
    %v6387 = vadd.f32 %v5976, %v6195
    %v6388 = vadd.f32 %v5977, %v6196
    %v6389 = vadd.f32 %v5978, %v6197
    %v6390 = vadd.f32 %v5979, %v6198
    %v6391 = vadd.f32 %v5980, %v6199
    %v6392 = vadd.f32 %v5981, %v6200
    %v6393 = vlaneseq
    %v6394 = vshrl.u32 %v6393, 7
    %v6395 = vsub.s32 2, %v6394
    %v6396 = vrot.slane %v5758, %v6395
    %v6397 = vlaneseq
    %v6398 = vshrl.u32 %v6397, 7
    %v6399 = vsub.s32 6, %v6398
    %v6400 = vrot.slane %v5758, %v6399
    %v6401 = vlaneseq
    %v6402 = vshrl.u32 %v6401, 7
    %v6403 = vsub.s32 2, %v6402
    %v6404 = vrot.slane %v5759, %v6403
    %v6408 = vlaneseq
    %v6409 = vshrl.u32 %v6408, 7
    %v6410 = vsub.s32 2, %v6409
    %v6411 = vrot.slane %v6396, %v6410
    %v6412 = vlaneseq
    %v6413 = vshrl.u32 %v6412, 7
    %v6414 = vsub.s32 2, %v6413
    %v6415 = vrot.slane %v6400, %v6414
    %v6416 = vlaneseq
    %v6417 = vshrl.u32 %v6416, 7
    %v6418 = vsub.s32 2, %v6417
    %v6419 = vrot.slane %v6404, %v6418
    %v6420 = vmul.f32 %v1312, %v6411
    %v6421 = vmul.f32 %v1312, %v6415
    %v6422 = vmul.f32 %v1312, %v6419
    %v6423 = vmul.f32 %v1316, %v6411
    %v6424 = vmul.f32 %v1316, %v6415
    %v6425 = vmul.f32 %v1316, %v6419
    %v6426 = vmul.f32 %v1320, %v6411
    %v6427 = vmul.f32 %v1320, %v6415
    %v6428 = vmul.f32 %v1320, %v6419
    %v6429 = vmul.f32 %v1324, %v6411
    %v6430 = vmul.f32 %v1324, %v6415
    %v6431 = vmul.f32 %v1324, %v6419
    %v6432 = vmul.f32 %v1328, %v6411
    %v6433 = vmul.f32 %v1328, %v6415
    %v6434 = vmul.f32 %v1328, %v6419
    %v6435 = vmul.f32 %v1332, %v6411
    %v6436 = vmul.f32 %v1332, %v6415
    %v6437 = vmul.f32 %v1332, %v6419
    %v6438 = vmul.f32 %v1336, %v6411
    %v6439 = vmul.f32 %v1336, %v6415
    %v6440 = vmul.f32 %v1336, %v6419
    %v6441 = vmul.f32 %v1340, %v6411
    %v6442 = vmul.f32 %v1340, %v6415
    %v6443 = vmul.f32 %v1340, %v6419
    %v6444 = vmul.f32 %v1344, %v6411
    %v6445 = vmul.f32 %v1344, %v6415
    %v6446 = vmul.f32 %v1344, %v6419
    %v6447 = vmul.f32 %v1348, %v6411
    %v6448 = vmul.f32 %v1348, %v6415
    %v6449 = vmul.f32 %v1348, %v6419
    %v6450 = vmul.f32 %v1352, %v6411
    %v6451 = vmul.f32 %v1352, %v6415
    %v6452 = vmul.f32 %v1352, %v6419
    %v6453 = vmul.f32 %v1356, %v6411
    %v6454 = vmul.f32 %v1356, %v6415
    %v6455 = vmul.f32 %v1356, %v6419
    %v6456 = vmul.f32 %v1360, %v6411
    %v6457 = vmul.f32 %v1360, %v6415
    %v6458 = vmul.f32 %v1360, %v6419
    %v6459 = vmul.f32 %v1364, %v6411
    %v6460 = vmul.f32 %v1364, %v6415
    %v6461 = vmul.f32 %v1364, %v6419
    %v6462 = vmul.f32 %v1368, %v6411
    %v6463 = vmul.f32 %v1368, %v6415
    %v6464 = vmul.f32 %v1368, %v6419
    %v6465 = vmul.f32 %v1372, %v6411
    %v6466 = vmul.f32 %v1372, %v6415
    %v6467 = vmul.f32 %v1372, %v6419
    %v6468 = vmul.f32 %v1376, %v6411
    %v6469 = vmul.f32 %v1376, %v6415
    %v6470 = vmul.f32 %v1376, %v6419
    %v6471 = vmul.f32 %v1380, %v6411
    %v6472 = vmul.f32 %v1380, %v6415
    %v6473 = vmul.f32 %v1380, %v6419
    %v6474 = vmul.f32 %v1384, %v6411
    %v6475 = vmul.f32 %v1384, %v6415
    %v6476 = vmul.f32 %v1384, %v6419
    %v6477 = vmul.f32 %v1388, %v6411
    %v6478 = vmul.f32 %v1388, %v6415
    %v6479 = vmul.f32 %v1388, %v6419
    %v6480 = vmul.f32 %v1392, %v6411
    %v6481 = vmul.f32 %v1392, %v6415
    %v6482 = vmul.f32 %v1392, %v6419
    %v6483 = vmul.f32 %v1396, %v6411
    %v6484 = vmul.f32 %v1396, %v6415
    %v6485 = vmul.f32 %v1396, %v6419
    %v6486 = vmul.f32 %v1400, %v6411
    %v6487 = vmul.f32 %v1400, %v6415
    %v6488 = vmul.f32 %v1400, %v6419
    %v6489 = vmul.f32 %v1404, %v6411
    %v6490 = vmul.f32 %v1404, %v6415
    %v6491 = vmul.f32 %v1404, %v6419
    %v6492 = vmul.f32 %v1408, %v6411
    %v6493 = vmul.f32 %v1408, %v6415
    %v6494 = vmul.f32 %v1408, %v6419
    %v6495 = vmul.f32 %v1412, %v6411
    %v6496 = vmul.f32 %v1412, %v6415
    %v6497 = vmul.f32 %v1412, %v6419
    %v6498 = vmul.f32 %v1416, %v6411
    %v6499 = vmul.f32 %v1416, %v6415
    %v6500 = vmul.f32 %v1416, %v6419
    %v6501 = vmul.f32 %v1420, %v6411
    %v6502 = vmul.f32 %v1420, %v6415
    %v6503 = vmul.f32 %v1420, %v6419
    %v6504 = vmul.f32 %v1424, %v6411
    %v6505 = vmul.f32 %v1424, %v6415
    %v6506 = vmul.f32 %v1424, %v6419
    %v6507 = vmul.f32 %v1428, %v6411
    %v6508 = vmul.f32 %v1428, %v6415
    %v6509 = vmul.f32 %v1428, %v6419
    %v6510 = vmul.f32 %v1432, %v6411
    %v6511 = vmul.f32 %v1432, %v6415
    %v6512 = vmul.f32 %v1432, %v6419
    %v6513 = vmul.f32 %v1436, %v6411
    %v6514 = vmul.f32 %v1436, %v6415
    %v6515 = vmul.f32 %v1436, %v6419
    %v6516 = vmul.f32 %v1440, %v6411
    %v6517 = vmul.f32 %v1440, %v6415
    %v6518 = vmul.f32 %v1440, %v6419
    %v6519 = vmul.f32 %v1444, %v6411
    %v6520 = vmul.f32 %v1444, %v6415
    %v6521 = vmul.f32 %v1444, %v6419
    %v6522 = vmul.f32 %v1448, %v6411
    %v6523 = vmul.f32 %v1448, %v6415
    %v6524 = vmul.f32 %v1448, %v6419
    %v6525 = vmul.f32 %v1452, %v6411
    %v6526 = vmul.f32 %v1452, %v6415
    %v6527 = vmul.f32 %v1452, %v6419
    %v6528 = vmul.f32 %v1456, %v6411
    %v6529 = vmul.f32 %v1456, %v6415
    %v6530 = vmul.f32 %v1456, %v6419
    %v6531 = vmul.f32 %v1460, %v6411
    %v6532 = vmul.f32 %v1460, %v6415
    %v6533 = vmul.f32 %v1460, %v6419
    %v6534 = vmul.f32 %v1464, %v6411
    %v6535 = vmul.f32 %v1464, %v6415
    %v6536 = vmul.f32 %v1464, %v6419
    %v6537 = vmul.f32 %v1468, %v6411
    %v6538 = vmul.f32 %v1468, %v6415
    %v6539 = vmul.f32 %v1468, %v6419
    %v6540 = vmul.f32 %v1472, %v6411
    %v6541 = vmul.f32 %v1472, %v6415
    %v6542 = vmul.f32 %v1472, %v6419
    %v6543 = vmul.f32 %v1476, %v6411
    %v6544 = vmul.f32 %v1476, %v6415
    %v6545 = vmul.f32 %v1476, %v6419
    %v6546 = vmul.f32 %v1480, %v6411
    %v6547 = vmul.f32 %v1480, %v6415
    %v6548 = vmul.f32 %v1480, %v6419
    %v6549 = vmul.f32 %v1484, %v6411
    %v6550 = vmul.f32 %v1484, %v6415
    %v6551 = vmul.f32 %v1484, %v6419
    %v6552 = vmul.f32 %v1488, %v6411
    %v6553 = vmul.f32 %v1488, %v6415
    %v6554 = vmul.f32 %v1488, %v6419
    %v6555 = vmul.f32 %v1492, %v6411
    %v6556 = vmul.f32 %v1492, %v6415
    %v6557 = vmul.f32 %v1492, %v6419
    %v6558 = vmul.f32 %v1496, %v6411
    %v6559 = vmul.f32 %v1496, %v6415
    %v6560 = vmul.f32 %v1496, %v6419
    %v6561 = vmul.f32 %v1500, %v6411
    %v6562 = vmul.f32 %v1500, %v6415
    %v6563 = vmul.f32 %v1500, %v6419
    %v6564 = vmul.f32 %v1504, %v6411
    %v6565 = vmul.f32 %v1504, %v6415
    %v6566 = vmul.f32 %v1504, %v6419
    %v6567 = vmul.f32 %v1508, %v6411
    %v6568 = vmul.f32 %v1508, %v6415
    %v6569 = vmul.f32 %v1508, %v6419
    %v6570 = vmul.f32 %v1512, %v6411
    %v6571 = vmul.f32 %v1512, %v6415
    %v6572 = vmul.f32 %v1512, %v6419
    %v6573 = vmul.f32 %v1516, %v6411
    %v6574 = vmul.f32 %v1516, %v6415
    %v6575 = vmul.f32 %v1516, %v6419
    %v6576 = vmul.f32 %v1520, %v6411
    %v6577 = vmul.f32 %v1520, %v6415
    %v6578 = vmul.f32 %v1520, %v6419
    %v6579 = vmul.f32 %v1524, %v6411
    %v6580 = vmul.f32 %v1524, %v6415
    %v6581 = vmul.f32 %v1524, %v6419
    %v6582 = vmul.f32 %v1528, %v6411
    %v6583 = vmul.f32 %v1528, %v6415
    %v6584 = vmul.f32 %v1528, %v6419
    %v6585 = vmul.f32 %v1532, %v6411
    %v6586 = vmul.f32 %v1532, %v6415
    %v6587 = vmul.f32 %v1532, %v6419
    %v6588 = vmul.f32 %v1536, %v6411
    %v6589 = vmul.f32 %v1536, %v6415
    %v6590 = vmul.f32 %v1536, %v6419
    %v6591 = vmul.f32 %v1540, %v6411
    %v6592 = vmul.f32 %v1540, %v6415
    %v6593 = vmul.f32 %v1540, %v6419
    %v6594 = vmul.f32 %v1544, %v6411
    %v6595 = vmul.f32 %v1544, %v6415
    %v6596 = vmul.f32 %v1544, %v6419
    %v6597 = vmul.f32 %v1548, %v6411
    %v6598 = vmul.f32 %v1548, %v6415
    %v6599 = vmul.f32 %v1548, %v6419
    %v6600 = vmul.f32 %v1552, %v6411
    %v6601 = vmul.f32 %v1552, %v6415
    %v6602 = vmul.f32 %v1552, %v6419
    %v6603 = vmul.f32 %v1556, %v6411
    %v6604 = vmul.f32 %v1556, %v6415
    %v6605 = vmul.f32 %v1556, %v6419
    %v6606 = vmul.f32 %v1560, %v6411
    %v6607 = vmul.f32 %v1560, %v6415
    %v6608 = vmul.f32 %v1560, %v6419
    %v6609 = vmul.f32 %v1564, %v6411
    %v6610 = vmul.f32 %v1564, %v6415
    %v6611 = vmul.f32 %v1564, %v6419
    %v6612 = vadd.f32 %v6201, %v6420
    %v6613 = vadd.f32 %v6202, %v6421
    %v6614 = vadd.f32 %v6203, %v6422
    %v6615 = vadd.f32 %v6204, %v6423
    %v6616 = vadd.f32 %v6205, %v6424
    %v6617 = vadd.f32 %v6206, %v6425
    %v6618 = vadd.f32 %v6207, %v6426
    %v6619 = vadd.f32 %v6208, %v6427
    %v6620 = vadd.f32 %v6209, %v6428
    %v6621 = vadd.f32 %v6210, %v6429
    %v6622 = vadd.f32 %v6211, %v6430
    %v6623 = vadd.f32 %v6212, %v6431
    %v6624 = vadd.f32 %v6213, %v6432
    %v6625 = vadd.f32 %v6214, %v6433
    %v6626 = vadd.f32 %v6215, %v6434
    %v6627 = vadd.f32 %v6216, %v6435
    %v6628 = vadd.f32 %v6217, %v6436
    %v6629 = vadd.f32 %v6218, %v6437
    %v6630 = vadd.f32 %v6219, %v6438
    %v6631 = vadd.f32 %v6220, %v6439
    %v6632 = vadd.f32 %v6221, %v6440
    %v6633 = vadd.f32 %v6222, %v6441
    %v6634 = vadd.f32 %v6223, %v6442
    %v6635 = vadd.f32 %v6224, %v6443
    %v6636 = vadd.f32 %v6225, %v6444
    %v6637 = vadd.f32 %v6226, %v6445
    %v6638 = vadd.f32 %v6227, %v6446
    %v6639 = vadd.f32 %v6228, %v6447
    %v6640 = vadd.f32 %v6229, %v6448
    %v6641 = vadd.f32 %v6230, %v6449
    %v6642 = vadd.f32 %v6231, %v6450
    %v6643 = vadd.f32 %v6232, %v6451
    %v6644 = vadd.f32 %v6233, %v6452
    %v6645 = vadd.f32 %v6234, %v6453
    %v6646 = vadd.f32 %v6235, %v6454
    %v6647 = vadd.f32 %v6236, %v6455
    %v6648 = vadd.f32 %v6237, %v6456
    %v6649 = vadd.f32 %v6238, %v6457
    %v6650 = vadd.f32 %v6239, %v6458
    %v6651 = vadd.f32 %v6240, %v6459
    %v6652 = vadd.f32 %v6241, %v6460
    %v6653 = vadd.f32 %v6242, %v6461
    %v6654 = vadd.f32 %v6243, %v6462
    %v6655 = vadd.f32 %v6244, %v6463
    %v6656 = vadd.f32 %v6245, %v6464
    %v6657 = vadd.f32 %v6246, %v6465
    %v6658 = vadd.f32 %v6247, %v6466
    %v6659 = vadd.f32 %v6248, %v6467
    %v6660 = vadd.f32 %v6249, %v6468
    %v6661 = vadd.f32 %v6250, %v6469
    %v6662 = vadd.f32 %v6251, %v6470
    %v6663 = vadd.f32 %v6252, %v6471
    %v6664 = vadd.f32 %v6253, %v6472
    %v6665 = vadd.f32 %v6254, %v6473
    %v6666 = vadd.f32 %v6255, %v6474
    %v6667 = vadd.f32 %v6256, %v6475
    %v6668 = vadd.f32 %v6257, %v6476
    %v6669 = vadd.f32 %v6258, %v6477
    %v6670 = vadd.f32 %v6259, %v6478
    %v6671 = vadd.f32 %v6260, %v6479
    %v6672 = vadd.f32 %v6261, %v6480
    %v6673 = vadd.f32 %v6262, %v6481
    %v6674 = vadd.f32 %v6263, %v6482
    %v6675 = vadd.f32 %v6264, %v6483
    %v6676 = vadd.f32 %v6265, %v6484
    %v6677 = vadd.f32 %v6266, %v6485
    %v6678 = vadd.f32 %v6267, %v6486
    %v6679 = vadd.f32 %v6268, %v6487
    %v6680 = vadd.f32 %v6269, %v6488
    %v6681 = vadd.f32 %v6270, %v6489
    %v6682 = vadd.f32 %v6271, %v6490
    %v6683 = vadd.f32 %v6272, %v6491
    %v6684 = vadd.f32 %v6273, %v6492
    %v6685 = vadd.f32 %v6274, %v6493
    %v6686 = vadd.f32 %v6275, %v6494
    %v6687 = vadd.f32 %v6276, %v6495
    %v6688 = vadd.f32 %v6277, %v6496
    %v6689 = vadd.f32 %v6278, %v6497
    %v6690 = vadd.f32 %v6279, %v6498
    %v6691 = vadd.f32 %v6280, %v6499
    %v6692 = vadd.f32 %v6281, %v6500
    %v6693 = vadd.f32 %v6282, %v6501
    %v6694 = vadd.f32 %v6283, %v6502
    %v6695 = vadd.f32 %v6284, %v6503
    %v6696 = vadd.f32 %v6285, %v6504
    %v6697 = vadd.f32 %v6286, %v6505
    %v6698 = vadd.f32 %v6287, %v6506
    %v6699 = vadd.f32 %v6288, %v6507
    %v6700 = vadd.f32 %v6289, %v6508
    %v6701 = vadd.f32 %v6290, %v6509
    %v6702 = vadd.f32 %v6291, %v6510
    %v6703 = vadd.f32 %v6292, %v6511
    %v6704 = vadd.f32 %v6293, %v6512
    %v6705 = vadd.f32 %v6294, %v6513
    %v6706 = vadd.f32 %v6295, %v6514
    %v6707 = vadd.f32 %v6296, %v6515
    %v6708 = vadd.f32 %v6297, %v6516
    %v6709 = vadd.f32 %v6298, %v6517
    %v6710 = vadd.f32 %v6299, %v6518
    %v6711 = vadd.f32 %v6300, %v6519
    %v6712 = vadd.f32 %v6301, %v6520
    %v6713 = vadd.f32 %v6302, %v6521
    %v6714 = vadd.f32 %v6303, %v6522
    %v6715 = vadd.f32 %v6304, %v6523
    %v6716 = vadd.f32 %v6305, %v6524
    %v6717 = vadd.f32 %v6306, %v6525
    %v6718 = vadd.f32 %v6307, %v6526
    %v6719 = vadd.f32 %v6308, %v6527
    %v6720 = vadd.f32 %v6309, %v6528
    %v6721 = vadd.f32 %v6310, %v6529
    %v6722 = vadd.f32 %v6311, %v6530
    %v6723 = vadd.f32 %v6312, %v6531
    %v6724 = vadd.f32 %v6313, %v6532
    %v6725 = vadd.f32 %v6314, %v6533
    %v6726 = vadd.f32 %v6315, %v6534
    %v6727 = vadd.f32 %v6316, %v6535
    %v6728 = vadd.f32 %v6317, %v6536
    %v6729 = vadd.f32 %v6318, %v6537
    %v6730 = vadd.f32 %v6319, %v6538
    %v6731 = vadd.f32 %v6320, %v6539
    %v6732 = vadd.f32 %v6321, %v6540
    %v6733 = vadd.f32 %v6322, %v6541
    %v6734 = vadd.f32 %v6323, %v6542
    %v6735 = vadd.f32 %v6324, %v6543
    %v6736 = vadd.f32 %v6325, %v6544
    %v6737 = vadd.f32 %v6326, %v6545
    %v6738 = vadd.f32 %v6327, %v6546
    %v6739 = vadd.f32 %v6328, %v6547
    %v6740 = vadd.f32 %v6329, %v6548
    %v6741 = vadd.f32 %v6330, %v6549
    %v6742 = vadd.f32 %v6331, %v6550
    %v6743 = vadd.f32 %v6332, %v6551
    %v6744 = vadd.f32 %v6333, %v6552
    %v6745 = vadd.f32 %v6334, %v6553
    %v6746 = vadd.f32 %v6335, %v6554
    %v6747 = vadd.f32 %v6336, %v6555
    %v6748 = vadd.f32 %v6337, %v6556
    %v6749 = vadd.f32 %v6338, %v6557
    %v6750 = vadd.f32 %v6339, %v6558
    %v6751 = vadd.f32 %v6340, %v6559
    %v6752 = vadd.f32 %v6341, %v6560
    %v6753 = vadd.f32 %v6342, %v6561
    %v6754 = vadd.f32 %v6343, %v6562
    %v6755 = vadd.f32 %v6344, %v6563
    %v6756 = vadd.f32 %v6345, %v6564
    %v6757 = vadd.f32 %v6346, %v6565
    %v6758 = vadd.f32 %v6347, %v6566
    %v6759 = vadd.f32 %v6348, %v6567
    %v6760 = vadd.f32 %v6349, %v6568
    %v6761 = vadd.f32 %v6350, %v6569
    %v6762 = vadd.f32 %v6351, %v6570
    %v6763 = vadd.f32 %v6352, %v6571
    %v6764 = vadd.f32 %v6353, %v6572
    %v6765 = vadd.f32 %v6354, %v6573
    %v6766 = vadd.f32 %v6355, %v6574
    %v6767 = vadd.f32 %v6356, %v6575
    %v6768 = vadd.f32 %v6357, %v6576
    %v6769 = vadd.f32 %v6358, %v6577
    %v6770 = vadd.f32 %v6359, %v6578
    %v6771 = vadd.f32 %v6360, %v6579
    %v6772 = vadd.f32 %v6361, %v6580
    %v6773 = vadd.f32 %v6362, %v6581
    %v6774 = vadd.f32 %v6363, %v6582
    %v6775 = vadd.f32 %v6364, %v6583
    %v6776 = vadd.f32 %v6365, %v6584
    %v6777 = vadd.f32 %v6366, %v6585
    %v6778 = vadd.f32 %v6367, %v6586
    %v6779 = vadd.f32 %v6368, %v6587
    %v6780 = vadd.f32 %v6369, %v6588
    %v6781 = vadd.f32 %v6370, %v6589
    %v6782 = vadd.f32 %v6371, %v6590
    %v6783 = vadd.f32 %v6372, %v6591
    %v6784 = vadd.f32 %v6373, %v6592
    %v6785 = vadd.f32 %v6374, %v6593
    %v6786 = vadd.f32 %v6375, %v6594
    %v6787 = vadd.f32 %v6376, %v6595
    %v6788 = vadd.f32 %v6377, %v6596
    %v6789 = vadd.f32 %v6378, %v6597
    %v6790 = vadd.f32 %v6379, %v6598
    %v6791 = vadd.f32 %v6380, %v6599
    %v6792 = vadd.f32 %v6381, %v6600
    %v6793 = vadd.f32 %v6382, %v6601
    %v6794 = vadd.f32 %v6383, %v6602
    %v6795 = vadd.f32 %v6384, %v6603
    %v6796 = vadd.f32 %v6385, %v6604
    %v6797 = vadd.f32 %v6386, %v6605
    %v6798 = vadd.f32 %v6387, %v6606
    %v6799 = vadd.f32 %v6388, %v6607
    %v6800 = vadd.f32 %v6389, %v6608
    %v6801 = vadd.f32 %v6390, %v6609
    %v6802 = vadd.f32 %v6391, %v6610
    %v6803 = vadd.f32 %v6392, %v6611
    %v6804 = vlaneseq
    %v6805 = vshrl.u32 %v6804, 7
    %v6806 = vsub.s32 3, %v6805
    %v6807 = vrot.slane %v5758, %v6806
    %v6808 = vlaneseq
    %v6809 = vshrl.u32 %v6808, 7
    %v6810 = vsub.s32 7, %v6809
    %v6811 = vrot.slane %v5758, %v6810
    %v6812 = vlaneseq
    %v6813 = vshrl.u32 %v6812, 7
    %v6814 = vsub.s32 3, %v6813
    %v6815 = vrot.slane %v5759, %v6814
    %v6819 = vlaneseq
    %v6820 = vshrl.u32 %v6819, 7
    %v6821 = vsub.s32 3, %v6820
    %v6822 = vrot.slane %v6807, %v6821
    %v6823 = vlaneseq
    %v6824 = vshrl.u32 %v6823, 7
    %v6825 = vsub.s32 3, %v6824
    %v6826 = vrot.slane %v6811, %v6825
    %v6827 = vlaneseq
    %v6828 = vshrl.u32 %v6827, 7
    %v6829 = vsub.s32 3, %v6828
    %v6830 = vrot.slane %v6815, %v6829
    %v6831 = vmul.f32 %v1979, %v6822
    %v6832 = vmul.f32 %v1979, %v6826
    %v6833 = vmul.f32 %v1979, %v6830
    %v6834 = vmul.f32 %v1983, %v6822
    %v6835 = vmul.f32 %v1983, %v6826
    %v6836 = vmul.f32 %v1983, %v6830
    %v6837 = vmul.f32 %v1987, %v6822
    %v6838 = vmul.f32 %v1987, %v6826
    %v6839 = vmul.f32 %v1987, %v6830
    %v6840 = vmul.f32 %v1991, %v6822
    %v6841 = vmul.f32 %v1991, %v6826
    %v6842 = vmul.f32 %v1991, %v6830
    %v6843 = vmul.f32 %v1995, %v6822
    %v6844 = vmul.f32 %v1995, %v6826
    %v6845 = vmul.f32 %v1995, %v6830
    %v6846 = vmul.f32 %v1999, %v6822
    %v6847 = vmul.f32 %v1999, %v6826
    %v6848 = vmul.f32 %v1999, %v6830
    %v6849 = vmul.f32 %v2003, %v6822
    %v6850 = vmul.f32 %v2003, %v6826
    %v6851 = vmul.f32 %v2003, %v6830
    %v6852 = vmul.f32 %v2007, %v6822
    %v6853 = vmul.f32 %v2007, %v6826
    %v6854 = vmul.f32 %v2007, %v6830
    %v6855 = vmul.f32 %v2011, %v6822
    %v6856 = vmul.f32 %v2011, %v6826
    %v6857 = vmul.f32 %v2011, %v6830
    %v6858 = vmul.f32 %v2015, %v6822
    %v6859 = vmul.f32 %v2015, %v6826
    %v6860 = vmul.f32 %v2015, %v6830
    %v6861 = vmul.f32 %v2019, %v6822
    %v6862 = vmul.f32 %v2019, %v6826
    %v6863 = vmul.f32 %v2019, %v6830
    %v6864 = vmul.f32 %v2023, %v6822
    %v6865 = vmul.f32 %v2023, %v6826
    %v6866 = vmul.f32 %v2023, %v6830
    %v6867 = vmul.f32 %v2027, %v6822
    %v6868 = vmul.f32 %v2027, %v6826
    %v6869 = vmul.f32 %v2027, %v6830
    %v6870 = vmul.f32 %v2031, %v6822
    %v6871 = vmul.f32 %v2031, %v6826
    %v6872 = vmul.f32 %v2031, %v6830
    %v6873 = vmul.f32 %v2035, %v6822
    %v6874 = vmul.f32 %v2035, %v6826
    %v6875 = vmul.f32 %v2035, %v6830
    %v6876 = vmul.f32 %v2039, %v6822
    %v6877 = vmul.f32 %v2039, %v6826
    %v6878 = vmul.f32 %v2039, %v6830
    %v6879 = vmul.f32 %v2043, %v6822
    %v6880 = vmul.f32 %v2043, %v6826
    %v6881 = vmul.f32 %v2043, %v6830
    %v6882 = vmul.f32 %v2047, %v6822
    %v6883 = vmul.f32 %v2047, %v6826
    %v6884 = vmul.f32 %v2047, %v6830
    %v6885 = vmul.f32 %v2051, %v6822
    %v6886 = vmul.f32 %v2051, %v6826
    %v6887 = vmul.f32 %v2051, %v6830
    %v6888 = vmul.f32 %v2055, %v6822
    %v6889 = vmul.f32 %v2055, %v6826
    %v6890 = vmul.f32 %v2055, %v6830
    %v6891 = vmul.f32 %v2059, %v6822
    %v6892 = vmul.f32 %v2059, %v6826
    %v6893 = vmul.f32 %v2059, %v6830
    %v6894 = vmul.f32 %v2063, %v6822
    %v6895 = vmul.f32 %v2063, %v6826
    %v6896 = vmul.f32 %v2063, %v6830
    %v6897 = vmul.f32 %v2067, %v6822
    %v6898 = vmul.f32 %v2067, %v6826
    %v6899 = vmul.f32 %v2067, %v6830
    %v6900 = vmul.f32 %v2071, %v6822
    %v6901 = vmul.f32 %v2071, %v6826
    %v6902 = vmul.f32 %v2071, %v6830
    %v6903 = vmul.f32 %v2075, %v6822
    %v6904 = vmul.f32 %v2075, %v6826
    %v6905 = vmul.f32 %v2075, %v6830
    %v6906 = vmul.f32 %v2079, %v6822
    %v6907 = vmul.f32 %v2079, %v6826
    %v6908 = vmul.f32 %v2079, %v6830
    %v6909 = vmul.f32 %v2083, %v6822
    %v6910 = vmul.f32 %v2083, %v6826
    %v6911 = vmul.f32 %v2083, %v6830
    %v6912 = vmul.f32 %v2087, %v6822
    %v6913 = vmul.f32 %v2087, %v6826
    %v6914 = vmul.f32 %v2087, %v6830
    %v6915 = vmul.f32 %v2091, %v6822
    %v6916 = vmul.f32 %v2091, %v6826
    %v6917 = vmul.f32 %v2091, %v6830
    %v6918 = vmul.f32 %v2095, %v6822
    %v6919 = vmul.f32 %v2095, %v6826
    %v6920 = vmul.f32 %v2095, %v6830
    %v6921 = vmul.f32 %v2099, %v6822
    %v6922 = vmul.f32 %v2099, %v6826
    %v6923 = vmul.f32 %v2099, %v6830
    %v6924 = vmul.f32 %v2103, %v6822
    %v6925 = vmul.f32 %v2103, %v6826
    %v6926 = vmul.f32 %v2103, %v6830
    %v6927 = vmul.f32 %v2107, %v6822
    %v6928 = vmul.f32 %v2107, %v6826
    %v6929 = vmul.f32 %v2107, %v6830
    %v6930 = vmul.f32 %v2111, %v6822
    %v6931 = vmul.f32 %v2111, %v6826
    %v6932 = vmul.f32 %v2111, %v6830
    %v6933 = vmul.f32 %v2115, %v6822
    %v6934 = vmul.f32 %v2115, %v6826
    %v6935 = vmul.f32 %v2115, %v6830
    %v6936 = vmul.f32 %v2119, %v6822
    %v6937 = vmul.f32 %v2119, %v6826
    %v6938 = vmul.f32 %v2119, %v6830
    %v6939 = vmul.f32 %v2123, %v6822
    %v6940 = vmul.f32 %v2123, %v6826
    %v6941 = vmul.f32 %v2123, %v6830
    %v6942 = vmul.f32 %v2127, %v6822
    %v6943 = vmul.f32 %v2127, %v6826
    %v6944 = vmul.f32 %v2127, %v6830
    %v6945 = vmul.f32 %v2131, %v6822
    %v6946 = vmul.f32 %v2131, %v6826
    %v6947 = vmul.f32 %v2131, %v6830
    %v6948 = vmul.f32 %v2135, %v6822
    %v6949 = vmul.f32 %v2135, %v6826
    %v6950 = vmul.f32 %v2135, %v6830
    %v6951 = vmul.f32 %v2139, %v6822
    %v6952 = vmul.f32 %v2139, %v6826
    %v6953 = vmul.f32 %v2139, %v6830
    %v6954 = vmul.f32 %v2143, %v6822
    %v6955 = vmul.f32 %v2143, %v6826
    %v6956 = vmul.f32 %v2143, %v6830
    %v6957 = vmul.f32 %v2147, %v6822
    %v6958 = vmul.f32 %v2147, %v6826
    %v6959 = vmul.f32 %v2147, %v6830
    %v6960 = vmul.f32 %v2151, %v6822
    %v6961 = vmul.f32 %v2151, %v6826
    %v6962 = vmul.f32 %v2151, %v6830
    %v6963 = vmul.f32 %v2155, %v6822
    %v6964 = vmul.f32 %v2155, %v6826
    %v6965 = vmul.f32 %v2155, %v6830
    %v6966 = vmul.f32 %v2159, %v6822
    %v6967 = vmul.f32 %v2159, %v6826
    %v6968 = vmul.f32 %v2159, %v6830
    %v6969 = vmul.f32 %v2163, %v6822
    %v6970 = vmul.f32 %v2163, %v6826
    %v6971 = vmul.f32 %v2163, %v6830
    %v6972 = vmul.f32 %v2167, %v6822
    %v6973 = vmul.f32 %v2167, %v6826
    %v6974 = vmul.f32 %v2167, %v6830
    %v6975 = vmul.f32 %v2171, %v6822
    %v6976 = vmul.f32 %v2171, %v6826
    %v6977 = vmul.f32 %v2171, %v6830
    %v6978 = vmul.f32 %v2175, %v6822
    %v6979 = vmul.f32 %v2175, %v6826
    %v6980 = vmul.f32 %v2175, %v6830
    %v6981 = vmul.f32 %v2179, %v6822
    %v6982 = vmul.f32 %v2179, %v6826
    %v6983 = vmul.f32 %v2179, %v6830
    %v6984 = vmul.f32 %v2183, %v6822
    %v6985 = vmul.f32 %v2183, %v6826
    %v6986 = vmul.f32 %v2183, %v6830
    %v6987 = vmul.f32 %v2187, %v6822
    %v6988 = vmul.f32 %v2187, %v6826
    %v6989 = vmul.f32 %v2187, %v6830
    %v6990 = vmul.f32 %v2191, %v6822
    %v6991 = vmul.f32 %v2191, %v6826
    %v6992 = vmul.f32 %v2191, %v6830
    %v6993 = vmul.f32 %v2195, %v6822
    %v6994 = vmul.f32 %v2195, %v6826
    %v6995 = vmul.f32 %v2195, %v6830
    %v6996 = vmul.f32 %v2199, %v6822
    %v6997 = vmul.f32 %v2199, %v6826
    %v6998 = vmul.f32 %v2199, %v6830
    %v6999 = vmul.f32 %v2203, %v6822
    %v7000 = vmul.f32 %v2203, %v6826
    %v7001 = vmul.f32 %v2203, %v6830
    %v7002 = vmul.f32 %v2207, %v6822
    %v7003 = vmul.f32 %v2207, %v6826
    %v7004 = vmul.f32 %v2207, %v6830
    %v7005 = vmul.f32 %v2211, %v6822
    %v7006 = vmul.f32 %v2211, %v6826
    %v7007 = vmul.f32 %v2211, %v6830
    %v7008 = vmul.f32 %v2215, %v6822
    %v7009 = vmul.f32 %v2215, %v6826
    %v7010 = vmul.f32 %v2215, %v6830
    %v7011 = vmul.f32 %v2219, %v6822
    %v7012 = vmul.f32 %v2219, %v6826
    %v7013 = vmul.f32 %v2219, %v6830
    %v7014 = vmul.f32 %v2223, %v6822
    %v7015 = vmul.f32 %v2223, %v6826
    %v7016 = vmul.f32 %v2223, %v6830
    %v7017 = vmul.f32 %v2227, %v6822
    %v7018 = vmul.f32 %v2227, %v6826
    %v7019 = vmul.f32 %v2227, %v6830
    %v7020 = vmul.f32 %v2231, %v6822
    %v7021 = vmul.f32 %v2231, %v6826
    %v7022 = vmul.f32 %v2231, %v6830
    %v7023 = vadd.f32 %v6612, %v6831
    %v7024 = vadd.f32 %v6613, %v6832
    %v7025 = vadd.f32 %v6614, %v6833
    %v7026 = vadd.f32 %v6615, %v6834
    %v7027 = vadd.f32 %v6616, %v6835
    %v7028 = vadd.f32 %v6617, %v6836
    %v7029 = vadd.f32 %v6618, %v6837
    %v7030 = vadd.f32 %v6619, %v6838
    %v7031 = vadd.f32 %v6620, %v6839
    %v7032 = vadd.f32 %v6621, %v6840
    %v7033 = vadd.f32 %v6622, %v6841
    %v7034 = vadd.f32 %v6623, %v6842
    %v7035 = vadd.f32 %v6624, %v6843
    %v7036 = vadd.f32 %v6625, %v6844
    %v7037 = vadd.f32 %v6626, %v6845
    %v7038 = vadd.f32 %v6627, %v6846
    %v7039 = vadd.f32 %v6628, %v6847
    %v7040 = vadd.f32 %v6629, %v6848
    %v7041 = vadd.f32 %v6630, %v6849
    %v7042 = vadd.f32 %v6631, %v6850
    %v7043 = vadd.f32 %v6632, %v6851
    %v7044 = vadd.f32 %v6633, %v6852
    %v7045 = vadd.f32 %v6634, %v6853
    %v7046 = vadd.f32 %v6635, %v6854
    %v7047 = vadd.f32 %v6636, %v6855
    %v7048 = vadd.f32 %v6637, %v6856
    %v7049 = vadd.f32 %v6638, %v6857
    %v7050 = vadd.f32 %v6639, %v6858
    %v7051 = vadd.f32 %v6640, %v6859
    %v7052 = vadd.f32 %v6641, %v6860
    %v7053 = vadd.f32 %v6642, %v6861
    %v7054 = vadd.f32 %v6643, %v6862
    %v7055 = vadd.f32 %v6644, %v6863
    %v7056 = vadd.f32 %v6645, %v6864
    %v7057 = vadd.f32 %v6646, %v6865
    %v7058 = vadd.f32 %v6647, %v6866
    %v7059 = vadd.f32 %v6648, %v6867
    %v7060 = vadd.f32 %v6649, %v6868
    %v7061 = vadd.f32 %v6650, %v6869
    %v7062 = vadd.f32 %v6651, %v6870
    %v7063 = vadd.f32 %v6652, %v6871
    %v7064 = vadd.f32 %v6653, %v6872
    %v7065 = vadd.f32 %v6654, %v6873
    %v7066 = vadd.f32 %v6655, %v6874
    %v7067 = vadd.f32 %v6656, %v6875
    %v7068 = vadd.f32 %v6657, %v6876
    %v7069 = vadd.f32 %v6658, %v6877
    %v7070 = vadd.f32 %v6659, %v6878
    %v7071 = vadd.f32 %v6660, %v6879
    %v7072 = vadd.f32 %v6661, %v6880
    %v7073 = vadd.f32 %v6662, %v6881
    %v7074 = vadd.f32 %v6663, %v6882
    %v7075 = vadd.f32 %v6664, %v6883
    %v7076 = vadd.f32 %v6665, %v6884
    %v7077 = vadd.f32 %v6666, %v6885
    %v7078 = vadd.f32 %v6667, %v6886
    %v7079 = vadd.f32 %v6668, %v6887
    %v7080 = vadd.f32 %v6669, %v6888
    %v7081 = vadd.f32 %v6670, %v6889
    %v7082 = vadd.f32 %v6671, %v6890
    %v7083 = vadd.f32 %v6672, %v6891
    %v7084 = vadd.f32 %v6673, %v6892
    %v7085 = vadd.f32 %v6674, %v6893
    %v7086 = vadd.f32 %v6675, %v6894
    %v7087 = vadd.f32 %v6676, %v6895
    %v7088 = vadd.f32 %v6677, %v6896
    %v7089 = vadd.f32 %v6678, %v6897
    %v7090 = vadd.f32 %v6679, %v6898
    %v7091 = vadd.f32 %v6680, %v6899
    %v7092 = vadd.f32 %v6681, %v6900
    %v7093 = vadd.f32 %v6682, %v6901
    %v7094 = vadd.f32 %v6683, %v6902
    %v7095 = vadd.f32 %v6684, %v6903
    %v7096 = vadd.f32 %v6685, %v6904
    %v7097 = vadd.f32 %v6686, %v6905
    %v7098 = vadd.f32 %v6687, %v6906
    %v7099 = vadd.f32 %v6688, %v6907
    %v7100 = vadd.f32 %v6689, %v6908
    %v7101 = vadd.f32 %v6690, %v6909
    %v7102 = vadd.f32 %v6691, %v6910
    %v7103 = vadd.f32 %v6692, %v6911
    %v7104 = vadd.f32 %v6693, %v6912
    %v7105 = vadd.f32 %v6694, %v6913
    %v7106 = vadd.f32 %v6695, %v6914
    %v7107 = vadd.f32 %v6696, %v6915
    %v7108 = vadd.f32 %v6697, %v6916
    %v7109 = vadd.f32 %v6698, %v6917
    %v7110 = vadd.f32 %v6699, %v6918
    %v7111 = vadd.f32 %v6700, %v6919
    %v7112 = vadd.f32 %v6701, %v6920
    %v7113 = vadd.f32 %v6702, %v6921
    %v7114 = vadd.f32 %v6703, %v6922
    %v7115 = vadd.f32 %v6704, %v6923
    %v7116 = vadd.f32 %v6705, %v6924
    %v7117 = vadd.f32 %v6706, %v6925
    %v7118 = vadd.f32 %v6707, %v6926
    %v7119 = vadd.f32 %v6708, %v6927
    %v7120 = vadd.f32 %v6709, %v6928
    %v7121 = vadd.f32 %v6710, %v6929
    %v7122 = vadd.f32 %v6711, %v6930
    %v7123 = vadd.f32 %v6712, %v6931
    %v7124 = vadd.f32 %v6713, %v6932
    %v7125 = vadd.f32 %v6714, %v6933
    %v7126 = vadd.f32 %v6715, %v6934
    %v7127 = vadd.f32 %v6716, %v6935
    %v7128 = vadd.f32 %v6717, %v6936
    %v7129 = vadd.f32 %v6718, %v6937
    %v7130 = vadd.f32 %v6719, %v6938
    %v7131 = vadd.f32 %v6720, %v6939
    %v7132 = vadd.f32 %v6721, %v6940
    %v7133 = vadd.f32 %v6722, %v6941
    %v7134 = vadd.f32 %v6723, %v6942
    %v7135 = vadd.f32 %v6724, %v6943
    %v7136 = vadd.f32 %v6725, %v6944
    %v7137 = vadd.f32 %v6726, %v6945
    %v7138 = vadd.f32 %v6727, %v6946
    %v7139 = vadd.f32 %v6728, %v6947
    %v7140 = vadd.f32 %v6729, %v6948
    %v7141 = vadd.f32 %v6730, %v6949
    %v7142 = vadd.f32 %v6731, %v6950
    %v7143 = vadd.f32 %v6732, %v6951
    %v7144 = vadd.f32 %v6733, %v6952
    %v7145 = vadd.f32 %v6734, %v6953
    %v7146 = vadd.f32 %v6735, %v6954
    %v7147 = vadd.f32 %v6736, %v6955
    %v7148 = vadd.f32 %v6737, %v6956
    %v7149 = vadd.f32 %v6738, %v6957
    %v7150 = vadd.f32 %v6739, %v6958
    %v7151 = vadd.f32 %v6740, %v6959
    %v7152 = vadd.f32 %v6741, %v6960
    %v7153 = vadd.f32 %v6742, %v6961
    %v7154 = vadd.f32 %v6743, %v6962
    %v7155 = vadd.f32 %v6744, %v6963
    %v7156 = vadd.f32 %v6745, %v6964
    %v7157 = vadd.f32 %v6746, %v6965
    %v7158 = vadd.f32 %v6747, %v6966
    %v7159 = vadd.f32 %v6748, %v6967
    %v7160 = vadd.f32 %v6749, %v6968
    %v7161 = vadd.f32 %v6750, %v6969
    %v7162 = vadd.f32 %v6751, %v6970
    %v7163 = vadd.f32 %v6752, %v6971
    %v7164 = vadd.f32 %v6753, %v6972
    %v7165 = vadd.f32 %v6754, %v6973
    %v7166 = vadd.f32 %v6755, %v6974
    %v7167 = vadd.f32 %v6756, %v6975
    %v7168 = vadd.f32 %v6757, %v6976
    %v7169 = vadd.f32 %v6758, %v6977
    %v7170 = vadd.f32 %v6759, %v6978
    %v7171 = vadd.f32 %v6760, %v6979
    %v7172 = vadd.f32 %v6761, %v6980
    %v7173 = vadd.f32 %v6762, %v6981
    %v7174 = vadd.f32 %v6763, %v6982
    %v7175 = vadd.f32 %v6764, %v6983
    %v7176 = vadd.f32 %v6765, %v6984
    %v7177 = vadd.f32 %v6766, %v6985
    %v7178 = vadd.f32 %v6767, %v6986
    %v7179 = vadd.f32 %v6768, %v6987
    %v7180 = vadd.f32 %v6769, %v6988
    %v7181 = vadd.f32 %v6770, %v6989
    %v7182 = vadd.f32 %v6771, %v6990
    %v7183 = vadd.f32 %v6772, %v6991
    %v7184 = vadd.f32 %v6773, %v6992
    %v7185 = vadd.f32 %v6774, %v6993
    %v7186 = vadd.f32 %v6775, %v6994
    %v7187 = vadd.f32 %v6776, %v6995
    %v7188 = vadd.f32 %v6777, %v6996
    %v7189 = vadd.f32 %v6778, %v6997
    %v7190 = vadd.f32 %v6779, %v6998
    %v7191 = vadd.f32 %v6780, %v6999
    %v7192 = vadd.f32 %v6781, %v7000
    %v7193 = vadd.f32 %v6782, %v7001
    %v7194 = vadd.f32 %v6783, %v7002
    %v7195 = vadd.f32 %v6784, %v7003
    %v7196 = vadd.f32 %v6785, %v7004
    %v7197 = vadd.f32 %v6786, %v7005
    %v7198 = vadd.f32 %v6787, %v7006
    %v7199 = vadd.f32 %v6788, %v7007
    %v7200 = vadd.f32 %v6789, %v7008
    %v7201 = vadd.f32 %v6790, %v7009
    %v7202 = vadd.f32 %v6791, %v7010
    %v7203 = vadd.f32 %v6792, %v7011
    %v7204 = vadd.f32 %v6793, %v7012
    %v7205 = vadd.f32 %v6794, %v7013
    %v7206 = vadd.f32 %v6795, %v7014
    %v7207 = vadd.f32 %v6796, %v7015
    %v7208 = vadd.f32 %v6797, %v7016
    %v7209 = vadd.f32 %v6798, %v7017
    %v7210 = vadd.f32 %v6799, %v7018
    %v7211 = vadd.f32 %v6800, %v7019
    %v7212 = vadd.f32 %v6801, %v7020
    %v7213 = vadd.f32 %v6802, %v7021
    %v7214 = vadd.f32 %v6803, %v7022
    %v7216 = vlaneseq
    %v7217 = vshrl.u32 %v7216, 7
    %v7218 = vsub.s32 0, %v7217
    %v7219 = vrot.slane %v5760, %v7218
    %v7220 = vlaneseq
    %v7221 = vshrl.u32 %v7220, 7
    %v7222 = vsub.s32 1, %v7221
    %v7223 = vrot.slane %v5760, %v7222
    %v7224 = vlaneseq
    %v7225 = vshrl.u32 %v7224, 7
    %v7226 = vsub.s32 2, %v7225
    %v7227 = vrot.slane %v5760, %v7226
    %v7231 = vadd.f32 %v7023, %v7219
    %v7232 = vadd.f32 %v7024, %v7223
    %v7233 = vadd.f32 %v7025, %v7227
    %v7234 = vadd.f32 %v7026, %v7219
    %v7235 = vadd.f32 %v7027, %v7223
    %v7236 = vadd.f32 %v7028, %v7227
    %v7237 = vadd.f32 %v7029, %v7219
    %v7238 = vadd.f32 %v7030, %v7223
    %v7239 = vadd.f32 %v7031, %v7227
    %v7240 = vadd.f32 %v7032, %v7219
    %v7241 = vadd.f32 %v7033, %v7223
    %v7242 = vadd.f32 %v7034, %v7227
    %v7243 = vadd.f32 %v7035, %v7219
    %v7244 = vadd.f32 %v7036, %v7223
    %v7245 = vadd.f32 %v7037, %v7227
    %v7246 = vadd.f32 %v7038, %v7219
    %v7247 = vadd.f32 %v7039, %v7223
    %v7248 = vadd.f32 %v7040, %v7227
    %v7249 = vadd.f32 %v7041, %v7219
    %v7250 = vadd.f32 %v7042, %v7223
    %v7251 = vadd.f32 %v7043, %v7227
    %v7252 = vadd.f32 %v7044, %v7219
    %v7253 = vadd.f32 %v7045, %v7223
    %v7254 = vadd.f32 %v7046, %v7227
    %v7255 = vadd.f32 %v7047, %v7219
    %v7256 = vadd.f32 %v7048, %v7223
    %v7257 = vadd.f32 %v7049, %v7227
    %v7258 = vadd.f32 %v7050, %v7219
    %v7259 = vadd.f32 %v7051, %v7223
    %v7260 = vadd.f32 %v7052, %v7227
    %v7261 = vadd.f32 %v7053, %v7219
    %v7262 = vadd.f32 %v7054, %v7223
    %v7263 = vadd.f32 %v7055, %v7227
    %v7264 = vadd.f32 %v7056, %v7219
    %v7265 = vadd.f32 %v7057, %v7223
    %v7266 = vadd.f32 %v7058, %v7227
    %v7267 = vadd.f32 %v7059, %v7219
    %v7268 = vadd.f32 %v7060, %v7223
    %v7269 = vadd.f32 %v7061, %v7227
    %v7270 = vadd.f32 %v7062, %v7219
    %v7271 = vadd.f32 %v7063, %v7223
    %v7272 = vadd.f32 %v7064, %v7227
    %v7273 = vadd.f32 %v7065, %v7219
    %v7274 = vadd.f32 %v7066, %v7223
    %v7275 = vadd.f32 %v7067, %v7227
    %v7276 = vadd.f32 %v7068, %v7219
    %v7277 = vadd.f32 %v7069, %v7223
    %v7278 = vadd.f32 %v7070, %v7227
    %v7279 = vadd.f32 %v7071, %v7219
    %v7280 = vadd.f32 %v7072, %v7223
    %v7281 = vadd.f32 %v7073, %v7227
    %v7282 = vadd.f32 %v7074, %v7219
    %v7283 = vadd.f32 %v7075, %v7223
    %v7284 = vadd.f32 %v7076, %v7227
    %v7285 = vadd.f32 %v7077, %v7219
    %v7286 = vadd.f32 %v7078, %v7223
    %v7287 = vadd.f32 %v7079, %v7227
    %v7288 = vadd.f32 %v7080, %v7219
    %v7289 = vadd.f32 %v7081, %v7223
    %v7290 = vadd.f32 %v7082, %v7227
    %v7291 = vadd.f32 %v7083, %v7219
    %v7292 = vadd.f32 %v7084, %v7223
    %v7293 = vadd.f32 %v7085, %v7227
    %v7294 = vadd.f32 %v7086, %v7219
    %v7295 = vadd.f32 %v7087, %v7223
    %v7296 = vadd.f32 %v7088, %v7227
    %v7297 = vadd.f32 %v7089, %v7219
    %v7298 = vadd.f32 %v7090, %v7223
    %v7299 = vadd.f32 %v7091, %v7227
    %v7300 = vadd.f32 %v7092, %v7219
    %v7301 = vadd.f32 %v7093, %v7223
    %v7302 = vadd.f32 %v7094, %v7227
    %v7303 = vadd.f32 %v7095, %v7219
    %v7304 = vadd.f32 %v7096, %v7223
    %v7305 = vadd.f32 %v7097, %v7227
    %v7306 = vadd.f32 %v7098, %v7219
    %v7307 = vadd.f32 %v7099, %v7223
    %v7308 = vadd.f32 %v7100, %v7227
    %v7309 = vadd.f32 %v7101, %v7219
    %v7310 = vadd.f32 %v7102, %v7223
    %v7311 = vadd.f32 %v7103, %v7227
    %v7312 = vadd.f32 %v7104, %v7219
    %v7313 = vadd.f32 %v7105, %v7223
    %v7314 = vadd.f32 %v7106, %v7227
    %v7315 = vadd.f32 %v7107, %v7219
    %v7316 = vadd.f32 %v7108, %v7223
    %v7317 = vadd.f32 %v7109, %v7227
    %v7318 = vadd.f32 %v7110, %v7219
    %v7319 = vadd.f32 %v7111, %v7223
    %v7320 = vadd.f32 %v7112, %v7227
    %v7321 = vadd.f32 %v7113, %v7219
    %v7322 = vadd.f32 %v7114, %v7223
    %v7323 = vadd.f32 %v7115, %v7227
    %v7324 = vadd.f32 %v7116, %v7219
    %v7325 = vadd.f32 %v7117, %v7223
    %v7326 = vadd.f32 %v7118, %v7227
    %v7327 = vadd.f32 %v7119, %v7219
    %v7328 = vadd.f32 %v7120, %v7223
    %v7329 = vadd.f32 %v7121, %v7227
    %v7330 = vadd.f32 %v7122, %v7219
    %v7331 = vadd.f32 %v7123, %v7223
    %v7332 = vadd.f32 %v7124, %v7227
    %v7333 = vadd.f32 %v7125, %v7219
    %v7334 = vadd.f32 %v7126, %v7223
    %v7335 = vadd.f32 %v7127, %v7227
    %v7336 = vadd.f32 %v7128, %v7219
    %v7337 = vadd.f32 %v7129, %v7223
    %v7338 = vadd.f32 %v7130, %v7227
    %v7339 = vadd.f32 %v7131, %v7219
    %v7340 = vadd.f32 %v7132, %v7223
    %v7341 = vadd.f32 %v7133, %v7227
    %v7342 = vadd.f32 %v7134, %v7219
    %v7343 = vadd.f32 %v7135, %v7223
    %v7344 = vadd.f32 %v7136, %v7227
    %v7345 = vadd.f32 %v7137, %v7219
    %v7346 = vadd.f32 %v7138, %v7223
    %v7347 = vadd.f32 %v7139, %v7227
    %v7348 = vadd.f32 %v7140, %v7219
    %v7349 = vadd.f32 %v7141, %v7223
    %v7350 = vadd.f32 %v7142, %v7227
    %v7351 = vadd.f32 %v7143, %v7219
    %v7352 = vadd.f32 %v7144, %v7223
    %v7353 = vadd.f32 %v7145, %v7227
    %v7354 = vadd.f32 %v7146, %v7219
    %v7355 = vadd.f32 %v7147, %v7223
    %v7356 = vadd.f32 %v7148, %v7227
    %v7357 = vadd.f32 %v7149, %v7219
    %v7358 = vadd.f32 %v7150, %v7223
    %v7359 = vadd.f32 %v7151, %v7227
    %v7360 = vadd.f32 %v7152, %v7219
    %v7361 = vadd.f32 %v7153, %v7223
    %v7362 = vadd.f32 %v7154, %v7227
    %v7363 = vadd.f32 %v7155, %v7219
    %v7364 = vadd.f32 %v7156, %v7223
    %v7365 = vadd.f32 %v7157, %v7227
    %v7366 = vadd.f32 %v7158, %v7219
    %v7367 = vadd.f32 %v7159, %v7223
    %v7368 = vadd.f32 %v7160, %v7227
    %v7369 = vadd.f32 %v7161, %v7219
    %v7370 = vadd.f32 %v7162, %v7223
    %v7371 = vadd.f32 %v7163, %v7227
    %v7372 = vadd.f32 %v7164, %v7219
    %v7373 = vadd.f32 %v7165, %v7223
    %v7374 = vadd.f32 %v7166, %v7227
    %v7375 = vadd.f32 %v7167, %v7219
    %v7376 = vadd.f32 %v7168, %v7223
    %v7377 = vadd.f32 %v7169, %v7227
    %v7378 = vadd.f32 %v7170, %v7219
    %v7379 = vadd.f32 %v7171, %v7223
    %v7380 = vadd.f32 %v7172, %v7227
    %v7381 = vadd.f32 %v7173, %v7219
    %v7382 = vadd.f32 %v7174, %v7223
    %v7383 = vadd.f32 %v7175, %v7227
    %v7384 = vadd.f32 %v7176, %v7219
    %v7385 = vadd.f32 %v7177, %v7223
    %v7386 = vadd.f32 %v7178, %v7227
    %v7387 = vadd.f32 %v7179, %v7219
    %v7388 = vadd.f32 %v7180, %v7223
    %v7389 = vadd.f32 %v7181, %v7227
    %v7390 = vadd.f32 %v7182, %v7219
    %v7391 = vadd.f32 %v7183, %v7223
    %v7392 = vadd.f32 %v7184, %v7227
    %v7393 = vadd.f32 %v7185, %v7219
    %v7394 = vadd.f32 %v7186, %v7223
    %v7395 = vadd.f32 %v7187, %v7227
    %v7396 = vadd.f32 %v7188, %v7219
    %v7397 = vadd.f32 %v7189, %v7223
    %v7398 = vadd.f32 %v7190, %v7227
    %v7399 = vadd.f32 %v7191, %v7219
    %v7400 = vadd.f32 %v7192, %v7223
    %v7401 = vadd.f32 %v7193, %v7227
    %v7402 = vadd.f32 %v7194, %v7219
    %v7403 = vadd.f32 %v7195, %v7223
    %v7404 = vadd.f32 %v7196, %v7227
    %v7405 = vadd.f32 %v7197, %v7219
    %v7406 = vadd.f32 %v7198, %v7223
    %v7407 = vadd.f32 %v7199, %v7227
    %v7408 = vadd.f32 %v7200, %v7219
    %v7409 = vadd.f32 %v7201, %v7223
    %v7410 = vadd.f32 %v7202, %v7227
    %v7411 = vadd.f32 %v7203, %v7219
    %v7412 = vadd.f32 %v7204, %v7223
    %v7413 = vadd.f32 %v7205, %v7227
    %v7414 = vadd.f32 %v7206, %v7219
    %v7415 = vadd.f32 %v7207, %v7223
    %v7416 = vadd.f32 %v7208, %v7227
    %v7417 = vadd.f32 %v7209, %v7219
    %v7418 = vadd.f32 %v7210, %v7223
    %v7419 = vadd.f32 %v7211, %v7227
    %v7420 = vadd.f32 %v7212, %v7219
    %v7421 = vadd.f32 %v7213, %v7223
    %v7422 = vadd.f32 %v7214, %v7227
    %v7423 = vmax.f32 %v7231, 0.0
    %v7424 = vmax.f32 %v7232, 0.0
    %v7425 = vmax.f32 %v7233, 0.0
    %v7426 = vmax.f32 %v7234, 0.0
    %v7427 = vmax.f32 %v7235, 0.0
    %v7428 = vmax.f32 %v7236, 0.0
    %v7429 = vmax.f32 %v7237, 0.0
    %v7430 = vmax.f32 %v7238, 0.0
    %v7431 = vmax.f32 %v7239, 0.0
    %v7432 = vmax.f32 %v7240, 0.0
    %v7433 = vmax.f32 %v7241, 0.0
    %v7434 = vmax.f32 %v7242, 0.0
    %v7435 = vmax.f32 %v7243, 0.0
    %v7436 = vmax.f32 %v7244, 0.0
    %v7437 = vmax.f32 %v7245, 0.0
    %v7438 = vmax.f32 %v7246, 0.0
    %v7439 = vmax.f32 %v7247, 0.0
    %v7440 = vmax.f32 %v7248, 0.0
    %v7441 = vmax.f32 %v7249, 0.0
    %v7442 = vmax.f32 %v7250, 0.0
    %v7443 = vmax.f32 %v7251, 0.0
    %v7444 = vmax.f32 %v7252, 0.0
    %v7445 = vmax.f32 %v7253, 0.0
    %v7446 = vmax.f32 %v7254, 0.0
    %v7447 = vmax.f32 %v7255, 0.0
    %v7448 = vmax.f32 %v7256, 0.0
    %v7449 = vmax.f32 %v7257, 0.0
    %v7450 = vmax.f32 %v7258, 0.0
    %v7451 = vmax.f32 %v7259, 0.0
    %v7452 = vmax.f32 %v7260, 0.0
    %v7453 = vmax.f32 %v7261, 0.0
    %v7454 = vmax.f32 %v7262, 0.0
    %v7455 = vmax.f32 %v7263, 0.0
    %v7456 = vmax.f32 %v7264, 0.0
    %v7457 = vmax.f32 %v7265, 0.0
    %v7458 = vmax.f32 %v7266, 0.0
    %v7459 = vmax.f32 %v7267, 0.0
    %v7460 = vmax.f32 %v7268, 0.0
    %v7461 = vmax.f32 %v7269, 0.0
    %v7462 = vmax.f32 %v7270, 0.0
    %v7463 = vmax.f32 %v7271, 0.0
    %v7464 = vmax.f32 %v7272, 0.0
    %v7465 = vmax.f32 %v7273, 0.0
    %v7466 = vmax.f32 %v7274, 0.0
    %v7467 = vmax.f32 %v7275, 0.0
    %v7468 = vmax.f32 %v7276, 0.0
    %v7469 = vmax.f32 %v7277, 0.0
    %v7470 = vmax.f32 %v7278, 0.0
    %v7471 = vmax.f32 %v7279, 0.0
    %v7472 = vmax.f32 %v7280, 0.0
    %v7473 = vmax.f32 %v7281, 0.0
    %v7474 = vmax.f32 %v7282, 0.0
    %v7475 = vmax.f32 %v7283, 0.0
    %v7476 = vmax.f32 %v7284, 0.0
    %v7477 = vmax.f32 %v7285, 0.0
    %v7478 = vmax.f32 %v7286, 0.0
    %v7479 = vmax.f32 %v7287, 0.0
    %v7480 = vmax.f32 %v7288, 0.0
    %v7481 = vmax.f32 %v7289, 0.0
    %v7482 = vmax.f32 %v7290, 0.0
    %v7483 = vmax.f32 %v7291, 0.0
    %v7484 = vmax.f32 %v7292, 0.0
    %v7485 = vmax.f32 %v7293, 0.0
    %v7486 = vmax.f32 %v7294, 0.0
    %v7487 = vmax.f32 %v7295, 0.0
    %v7488 = vmax.f32 %v7296, 0.0
    %v7489 = vmax.f32 %v7297, 0.0
    %v7490 = vmax.f32 %v7298, 0.0
    %v7491 = vmax.f32 %v7299, 0.0
    %v7492 = vmax.f32 %v7300, 0.0
    %v7493 = vmax.f32 %v7301, 0.0
    %v7494 = vmax.f32 %v7302, 0.0
    %v7495 = vmax.f32 %v7303, 0.0
    %v7496 = vmax.f32 %v7304, 0.0
    %v7497 = vmax.f32 %v7305, 0.0
    %v7498 = vmax.f32 %v7306, 0.0
    %v7499 = vmax.f32 %v7307, 0.0
    %v7500 = vmax.f32 %v7308, 0.0
    %v7501 = vmax.f32 %v7309, 0.0
    %v7502 = vmax.f32 %v7310, 0.0
    %v7503 = vmax.f32 %v7311, 0.0
    %v7504 = vmax.f32 %v7312, 0.0
    %v7505 = vmax.f32 %v7313, 0.0
    %v7506 = vmax.f32 %v7314, 0.0
    %v7507 = vmax.f32 %v7315, 0.0
    %v7508 = vmax.f32 %v7316, 0.0
    %v7509 = vmax.f32 %v7317, 0.0
    %v7510 = vmax.f32 %v7318, 0.0
    %v7511 = vmax.f32 %v7319, 0.0
    %v7512 = vmax.f32 %v7320, 0.0
    %v7513 = vmax.f32 %v7321, 0.0
    %v7514 = vmax.f32 %v7322, 0.0
    %v7515 = vmax.f32 %v7323, 0.0
    %v7516 = vmax.f32 %v7324, 0.0
    %v7517 = vmax.f32 %v7325, 0.0
    %v7518 = vmax.f32 %v7326, 0.0
    %v7519 = vmax.f32 %v7327, 0.0
    %v7520 = vmax.f32 %v7328, 0.0
    %v7521 = vmax.f32 %v7329, 0.0
    %v7522 = vmax.f32 %v7330, 0.0
    %v7523 = vmax.f32 %v7331, 0.0
    %v7524 = vmax.f32 %v7332, 0.0
    %v7525 = vmax.f32 %v7333, 0.0
    %v7526 = vmax.f32 %v7334, 0.0
    %v7527 = vmax.f32 %v7335, 0.0
    %v7528 = vmax.f32 %v7336, 0.0
    %v7529 = vmax.f32 %v7337, 0.0
    %v7530 = vmax.f32 %v7338, 0.0
    %v7531 = vmax.f32 %v7339, 0.0
    %v7532 = vmax.f32 %v7340, 0.0
    %v7533 = vmax.f32 %v7341, 0.0
    %v7534 = vmax.f32 %v7342, 0.0
    %v7535 = vmax.f32 %v7343, 0.0
    %v7536 = vmax.f32 %v7344, 0.0
    %v7537 = vmax.f32 %v7345, 0.0
    %v7538 = vmax.f32 %v7346, 0.0
    %v7539 = vmax.f32 %v7347, 0.0
    %v7540 = vmax.f32 %v7348, 0.0
    %v7541 = vmax.f32 %v7349, 0.0
    %v7542 = vmax.f32 %v7350, 0.0
    %v7543 = vmax.f32 %v7351, 0.0
    %v7544 = vmax.f32 %v7352, 0.0
    %v7545 = vmax.f32 %v7353, 0.0
    %v7546 = vmax.f32 %v7354, 0.0
    %v7547 = vmax.f32 %v7355, 0.0
    %v7548 = vmax.f32 %v7356, 0.0
    %v7549 = vmax.f32 %v7357, 0.0
    %v7550 = vmax.f32 %v7358, 0.0
    %v7551 = vmax.f32 %v7359, 0.0
    %v7552 = vmax.f32 %v7360, 0.0
    %v7553 = vmax.f32 %v7361, 0.0
    %v7554 = vmax.f32 %v7362, 0.0
    %v7555 = vmax.f32 %v7363, 0.0
    %v7556 = vmax.f32 %v7364, 0.0
    %v7557 = vmax.f32 %v7365, 0.0
    %v7558 = vmax.f32 %v7366, 0.0
    %v7559 = vmax.f32 %v7367, 0.0
    %v7560 = vmax.f32 %v7368, 0.0
    %v7561 = vmax.f32 %v7369, 0.0
    %v7562 = vmax.f32 %v7370, 0.0
    %v7563 = vmax.f32 %v7371, 0.0
    %v7564 = vmax.f32 %v7372, 0.0
    %v7565 = vmax.f32 %v7373, 0.0
    %v7566 = vmax.f32 %v7374, 0.0
    %v7567 = vmax.f32 %v7375, 0.0
    %v7568 = vmax.f32 %v7376, 0.0
    %v7569 = vmax.f32 %v7377, 0.0
    %v7570 = vmax.f32 %v7378, 0.0
    %v7571 = vmax.f32 %v7379, 0.0
    %v7572 = vmax.f32 %v7380, 0.0
    %v7573 = vmax.f32 %v7381, 0.0
    %v7574 = vmax.f32 %v7382, 0.0
    %v7575 = vmax.f32 %v7383, 0.0
    %v7576 = vmax.f32 %v7384, 0.0
    %v7577 = vmax.f32 %v7385, 0.0
    %v7578 = vmax.f32 %v7386, 0.0
    %v7579 = vmax.f32 %v7387, 0.0
    %v7580 = vmax.f32 %v7388, 0.0
    %v7581 = vmax.f32 %v7389, 0.0
    %v7582 = vmax.f32 %v7390, 0.0
    %v7583 = vmax.f32 %v7391, 0.0
    %v7584 = vmax.f32 %v7392, 0.0
    %v7585 = vmax.f32 %v7393, 0.0
    %v7586 = vmax.f32 %v7394, 0.0
    %v7587 = vmax.f32 %v7395, 0.0
    %v7588 = vmax.f32 %v7396, 0.0
    %v7589 = vmax.f32 %v7397, 0.0
    %v7590 = vmax.f32 %v7398, 0.0
    %v7591 = vmax.f32 %v7399, 0.0
    %v7592 = vmax.f32 %v7400, 0.0
    %v7593 = vmax.f32 %v7401, 0.0
    %v7594 = vmax.f32 %v7402, 0.0
    %v7595 = vmax.f32 %v7403, 0.0
    %v7596 = vmax.f32 %v7404, 0.0
    %v7597 = vmax.f32 %v7405, 0.0
    %v7598 = vmax.f32 %v7406, 0.0
    %v7599 = vmax.f32 %v7407, 0.0
    %v7600 = vmax.f32 %v7408, 0.0
    %v7601 = vmax.f32 %v7409, 0.0
    %v7602 = vmax.f32 %v7410, 0.0
    %v7603 = vmax.f32 %v7411, 0.0
    %v7604 = vmax.f32 %v7412, 0.0
    %v7605 = vmax.f32 %v7413, 0.0
    %v7606 = vmax.f32 %v7414, 0.0
    %v7607 = vmax.f32 %v7415, 0.0
    %v7608 = vmax.f32 %v7416, 0.0
    %v7609 = vmax.f32 %v7417, 0.0
    %v7610 = vmax.f32 %v7418, 0.0
    %v7611 = vmax.f32 %v7419, 0.0
    %v7612 = vmax.f32 %v7420, 0.0
    %v7613 = vmax.f32 %v7421, 0.0
    %v7614 = vmax.f32 %v7422, 0.0
    %v7615 = vadd.f32 %v7423, %v7426
    %v7616 = vadd.f32 %v7615, %v7429
    %v7617 = vadd.f32 %v7616, %v7432
    %v7618 = vadd.f32 %v7617, %v7435
    %v7619 = vadd.f32 %v7618, %v7438
    %v7620 = vadd.f32 %v7619, %v7441
    %v7621 = vadd.f32 %v7620, %v7444
    %v7622 = vadd.f32 %v7621, %v7447
    %v7623 = vadd.f32 %v7622, %v7450
    %v7624 = vadd.f32 %v7623, %v7453
    %v7625 = vadd.f32 %v7624, %v7456
    %v7626 = vadd.f32 %v7625, %v7459
    %v7627 = vadd.f32 %v7626, %v7462
    %v7628 = vadd.f32 %v7627, %v7465
    %v7629 = vadd.f32 %v7628, %v7468
    %v7630 = vadd.f32 %v7629, %v7471
    %v7631 = vadd.f32 %v7630, %v7474
    %v7632 = vadd.f32 %v7631, %v7477
    %v7633 = vadd.f32 %v7632, %v7480
    %v7634 = vadd.f32 %v7633, %v7483
    %v7635 = vadd.f32 %v7634, %v7486
    %v7636 = vadd.f32 %v7635, %v7489
    %v7637 = vadd.f32 %v7636, %v7492
    %v7638 = vadd.f32 %v7637, %v7495
    %v7639 = vadd.f32 %v7638, %v7498
    %v7640 = vadd.f32 %v7639, %v7501
    %v7641 = vadd.f32 %v7640, %v7504
    %v7642 = vadd.f32 %v7641, %v7507
    %v7643 = vadd.f32 %v7642, %v7510
    %v7644 = vadd.f32 %v7643, %v7513
    %v7645 = vadd.f32 %v7644, %v7516
    %v7646 = vrot.slane %v7645, 4
    %v7647 = vadd.f32 %v7645, %v7646
    %v7648 = vrot.slane %v7647, 2
    %v7649 = vadd.f32 %v7647, %v7648
    %v7650 = vrot.slane %v7649, 1
    %v7651 = vadd.f32 %v7649, %v7650
    %v7652 = vadd.f32 %v7424, %v7427
    %v7653 = vadd.f32 %v7652, %v7430
    %v7654 = vadd.f32 %v7653, %v7433
    %v7655 = vadd.f32 %v7654, %v7436
    %v7656 = vadd.f32 %v7655, %v7439
    %v7657 = vadd.f32 %v7656, %v7442
    %v7658 = vadd.f32 %v7657, %v7445
    %v7659 = vadd.f32 %v7658, %v7448
    %v7660 = vadd.f32 %v7659, %v7451
    %v7661 = vadd.f32 %v7660, %v7454
    %v7662 = vadd.f32 %v7661, %v7457
    %v7663 = vadd.f32 %v7662, %v7460
    %v7664 = vadd.f32 %v7663, %v7463
    %v7665 = vadd.f32 %v7664, %v7466
    %v7666 = vadd.f32 %v7665, %v7469
    %v7667 = vadd.f32 %v7666, %v7472
    %v7668 = vadd.f32 %v7667, %v7475
    %v7669 = vadd.f32 %v7668, %v7478
    %v7670 = vadd.f32 %v7669, %v7481
    %v7671 = vadd.f32 %v7670, %v7484
    %v7672 = vadd.f32 %v7671, %v7487
    %v7673 = vadd.f32 %v7672, %v7490
    %v7674 = vadd.f32 %v7673, %v7493
    %v7675 = vadd.f32 %v7674, %v7496
    %v7676 = vadd.f32 %v7675, %v7499
    %v7677 = vadd.f32 %v7676, %v7502
    %v7678 = vadd.f32 %v7677, %v7505
    %v7679 = vadd.f32 %v7678, %v7508
    %v7680 = vadd.f32 %v7679, %v7511
    %v7681 = vadd.f32 %v7680, %v7514
    %v7682 = vadd.f32 %v7681, %v7517
    %v7683 = vrot.slane %v7682, 4
    %v7684 = vadd.f32 %v7682, %v7683
    %v7685 = vrot.slane %v7684, 2
    %v7686 = vadd.f32 %v7684, %v7685
    %v7687 = vrot.slane %v7686, 1
    %v7688 = vadd.f32 %v7686, %v7687
    %v7689 = vadd.f32 %v7425, %v7428
    %v7690 = vadd.f32 %v7689, %v7431
    %v7691 = vadd.f32 %v7690, %v7434
    %v7692 = vadd.f32 %v7691, %v7437
    %v7693 = vadd.f32 %v7692, %v7440
    %v7694 = vadd.f32 %v7693, %v7443
    %v7695 = vadd.f32 %v7694, %v7446
    %v7696 = vadd.f32 %v7695, %v7449
    %v7697 = vadd.f32 %v7696, %v7452
    %v7698 = vadd.f32 %v7697, %v7455
    %v7699 = vadd.f32 %v7698, %v7458
    %v7700 = vadd.f32 %v7699, %v7461
    %v7701 = vadd.f32 %v7700, %v7464
    %v7702 = vadd.f32 %v7701, %v7467
    %v7703 = vadd.f32 %v7702, %v7470
    %v7704 = vadd.f32 %v7703, %v7473
    %v7705 = vadd.f32 %v7704, %v7476
    %v7706 = vadd.f32 %v7705, %v7479
    %v7707 = vadd.f32 %v7706, %v7482
    %v7708 = vadd.f32 %v7707, %v7485
    %v7709 = vadd.f32 %v7708, %v7488
    %v7710 = vadd.f32 %v7709, %v7491
    %v7711 = vadd.f32 %v7710, %v7494
    %v7712 = vadd.f32 %v7711, %v7497
    %v7713 = vadd.f32 %v7712, %v7500
    %v7714 = vadd.f32 %v7713, %v7503
    %v7715 = vadd.f32 %v7714, %v7506
    %v7716 = vadd.f32 %v7715, %v7509
    %v7717 = vadd.f32 %v7716, %v7512
    %v7718 = vadd.f32 %v7717, %v7515
    %v7719 = vadd.f32 %v7718, %v7518
    %v7720 = vrot.slane %v7719, 4
    %v7721 = vadd.f32 %v7719, %v7720
    %v7722 = vrot.slane %v7721, 2
    %v7723 = vadd.f32 %v7721, %v7722
    %v7724 = vrot.slane %v7723, 1
    %v7725 = vadd.f32 %v7723, %v7724
    %v7726 = vadd.f32 %v7519, %v7522
    %v7727 = vadd.f32 %v7726, %v7525
    %v7728 = vadd.f32 %v7727, %v7528
    %v7729 = vadd.f32 %v7728, %v7531
    %v7730 = vadd.f32 %v7729, %v7534
    %v7731 = vadd.f32 %v7730, %v7537
    %v7732 = vadd.f32 %v7731, %v7540
    %v7733 = vadd.f32 %v7732, %v7543
    %v7734 = vadd.f32 %v7733, %v7546
    %v7735 = vadd.f32 %v7734, %v7549
    %v7736 = vadd.f32 %v7735, %v7552
    %v7737 = vadd.f32 %v7736, %v7555
    %v7738 = vadd.f32 %v7737, %v7558
    %v7739 = vadd.f32 %v7738, %v7561
    %v7740 = vadd.f32 %v7739, %v7564
    %v7741 = vadd.f32 %v7740, %v7567
    %v7742 = vadd.f32 %v7741, %v7570
    %v7743 = vadd.f32 %v7742, %v7573
    %v7744 = vadd.f32 %v7743, %v7576
    %v7745 = vadd.f32 %v7744, %v7579
    %v7746 = vadd.f32 %v7745, %v7582
    %v7747 = vadd.f32 %v7746, %v7585
    %v7748 = vadd.f32 %v7747, %v7588
    %v7749 = vadd.f32 %v7748, %v7591
    %v7750 = vadd.f32 %v7749, %v7594
    %v7751 = vadd.f32 %v7750, %v7597
    %v7752 = vadd.f32 %v7751, %v7600
    %v7753 = vadd.f32 %v7752, %v7603
    %v7754 = vadd.f32 %v7753, %v7606
    %v7755 = vadd.f32 %v7754, %v7609
    %v7756 = vadd.f32 %v7755, %v7612
    %v7757 = vrot.slane %v7756, 4
    %v7758 = vadd.f32 %v7756, %v7757
    %v7759 = vrot.slane %v7758, 2
    %v7760 = vadd.f32 %v7758, %v7759
    %v7761 = vrot.slane %v7760, 1
    %v7762 = vadd.f32 %v7760, %v7761
    %v7763 = vadd.f32 %v7520, %v7523
    %v7764 = vadd.f32 %v7763, %v7526
    %v7765 = vadd.f32 %v7764, %v7529
    %v7766 = vadd.f32 %v7765, %v7532
    %v7767 = vadd.f32 %v7766, %v7535
    %v7768 = vadd.f32 %v7767, %v7538
    %v7769 = vadd.f32 %v7768, %v7541
    %v7770 = vadd.f32 %v7769, %v7544
    %v7771 = vadd.f32 %v7770, %v7547
    %v7772 = vadd.f32 %v7771, %v7550
    %v7773 = vadd.f32 %v7772, %v7553
    %v7774 = vadd.f32 %v7773, %v7556
    %v7775 = vadd.f32 %v7774, %v7559
    %v7776 = vadd.f32 %v7775, %v7562
    %v7777 = vadd.f32 %v7776, %v7565
    %v7778 = vadd.f32 %v7777, %v7568
    %v7779 = vadd.f32 %v7778, %v7571
    %v7780 = vadd.f32 %v7779, %v7574
    %v7781 = vadd.f32 %v7780, %v7577
    %v7782 = vadd.f32 %v7781, %v7580
    %v7783 = vadd.f32 %v7782, %v7583
    %v7784 = vadd.f32 %v7783, %v7586
    %v7785 = vadd.f32 %v7784, %v7589
    %v7786 = vadd.f32 %v7785, %v7592
    %v7787 = vadd.f32 %v7786, %v7595
    %v7788 = vadd.f32 %v7787, %v7598
    %v7789 = vadd.f32 %v7788, %v7601
    %v7790 = vadd.f32 %v7789, %v7604
    %v7791 = vadd.f32 %v7790, %v7607
    %v7792 = vadd.f32 %v7791, %v7610
    %v7793 = vadd.f32 %v7792, %v7613
    %v7794 = vrot.slane %v7793, 4
    %v7795 = vadd.f32 %v7793, %v7794
    %v7796 = vrot.slane %v7795, 2
    %v7797 = vadd.f32 %v7795, %v7796
    %v7798 = vrot.slane %v7797, 1
    %v7799 = vadd.f32 %v7797, %v7798
    %v7800 = vadd.f32 %v7521, %v7524
    %v7801 = vadd.f32 %v7800, %v7527
    %v7802 = vadd.f32 %v7801, %v7530
    %v7803 = vadd.f32 %v7802, %v7533
    %v7804 = vadd.f32 %v7803, %v7536
    %v7805 = vadd.f32 %v7804, %v7539
    %v7806 = vadd.f32 %v7805, %v7542
    %v7807 = vadd.f32 %v7806, %v7545
    %v7808 = vadd.f32 %v7807, %v7548
    %v7809 = vadd.f32 %v7808, %v7551
    %v7810 = vadd.f32 %v7809, %v7554
    %v7811 = vadd.f32 %v7810, %v7557
    %v7812 = vadd.f32 %v7811, %v7560
    %v7813 = vadd.f32 %v7812, %v7563
    %v7814 = vadd.f32 %v7813, %v7566
    %v7815 = vadd.f32 %v7814, %v7569
    %v7816 = vadd.f32 %v7815, %v7572
    %v7817 = vadd.f32 %v7816, %v7575
    %v7818 = vadd.f32 %v7817, %v7578
    %v7819 = vadd.f32 %v7818, %v7581
    %v7820 = vadd.f32 %v7819, %v7584
    %v7821 = vadd.f32 %v7820, %v7587
    %v7822 = vadd.f32 %v7821, %v7590
    %v7823 = vadd.f32 %v7822, %v7593
    %v7824 = vadd.f32 %v7823, %v7596
    %v7825 = vadd.f32 %v7824, %v7599
    %v7826 = vadd.f32 %v7825, %v7602
    %v7827 = vadd.f32 %v7826, %v7605
    %v7828 = vadd.f32 %v7827, %v7608
    %v7829 = vadd.f32 %v7828, %v7611
    %v7830 = vadd.f32 %v7829, %v7614
    %v7831 = vrot.slane %v7830, 4
    %v7832 = vadd.f32 %v7830, %v7831
    %v7833 = vrot.slane %v7832, 2
    %v7834 = vadd.f32 %v7832, %v7833
    %v7835 = vrot.slane %v7834, 1
    %v7836 = vadd.f32 %v7834, %v7835
    %v7837 = vmul.f32 %v7651, 0.00390625
    %v7838 = vmul.f32 %v7688, 0.00390625
    %v7839 = vmul.f32 %v7725, 0.00390625
    %v7840 = vmul.f32 %v7762, 0.00390625
    %v7841 = vmul.f32 %v7799, 0.00390625
    %v7842 = vmul.f32 %v7836, 0.00390625
    %v7843 = vld [vmem:[#allocation2 + $0x300] sm:$0xff]
    %v7844 = vld [vmem:[#allocation2 + $0x308] sm:$0xff]
    %v7845 = vld [vmem:[#allocation2 + $0x310] sm:$0xff]
    %v7846 = vld [vmem:[#allocation2 + $0x318] sm:$0xff]
    %v7847 = vld [vmem:[#allocation2 + $0x320] sm:$0xff]
    %v7848 = vld [vmem:[#allocation2 + $0x328] sm:$0xff]
    %v7849 = vld [vmem:[#allocation2 + $0x330] sm:$0xff]
    %v7850 = vld [vmem:[#allocation2 + $0x338] sm:$0xff]
    %v7851 = vld [vmem:[#allocation2 + $0x340] sm:$0xff]
    %v7852 = vld [vmem:[#allocation2 + $0x348] sm:$0xff]
    %v7853 = vld [vmem:[#allocation2 + $0x350] sm:$0xff]
    %v7854 = vld [vmem:[#allocation2 + $0x358] sm:$0xff]
    %v7855 = vld [vmem:[#allocation2 + $0x360] sm:$0xff]
    %v7856 = vld [vmem:[#allocation2 + $0x368] sm:$0xff]
    %v7857 = vld [vmem:[#allocation2 + $0x370] sm:$0xff]
    %v7858 = vld [vmem:[#allocation2 + $0x378] sm:$0xff]
    %v7859 = vld [vmem:[#allocation2 + $0x380] sm:$0xff]
    %v7860 = vld [vmem:[#allocation2 + $0x388] sm:$0xff]
    %v7861 = vld [vmem:[#allocation2 + $0x390] sm:$0xff]
    %v7862 = vld [vmem:[#allocation2 + $0x398] sm:$0xff]
    %v7863 = vld [vmem:[#allocation2 + $0x3a0] sm:$0xff]
    %v7864 = vld [vmem:[#allocation2 + $0x3a8] sm:$0xff]
    %v7865 = vld [vmem:[#allocation2 + $0x3b0] sm:$0xff]
    %v7866 = vld [vmem:[#allocation2 + $0x3b8] sm:$0xff]
    %v7867 = vld [vmem:[#allocation2 + $0x3c0] sm:$0xff]
    %v7868 = vld [vmem:[#allocation2 + $0x3c8] sm:$0xff]
    %v7869 = vld [vmem:[#allocation2 + $0x3d0] sm:$0xff]
    %v7870 = vld [vmem:[#allocation2 + $0x3d8] sm:$0xff]
    %v7871 = vld [vmem:[#allocation2 + $0x3e0] sm:$0xff]
    %v7872 = vld [vmem:[#allocation2 + $0x3e8] sm:$0xff]
    %v7873 = vld [vmem:[#allocation2 + $0x3f0] sm:$0xff]
    %v7874 = vld [vmem:[#allocation2 + $0x3f8] sm:$0xff]
    %v7875 = vld [vmem:[#allocation2 + $0x400] sm:$0xff]
    %v7876 = vld [vmem:[#allocation2 + $0x408] sm:$0xff]
    %v7877 = vld [vmem:[#allocation2 + $0x410] sm:$0xff]
    %v7878 = vld [vmem:[#allocation2 + $0x418] sm:$0xff]
    %v7879 = vld [vmem:[#allocation2 + $0x420] sm:$0xff]
    %v7880 = vld [vmem:[#allocation2 + $0x428] sm:$0xff]
    %v7881 = vld [vmem:[#allocation2 + $0x430] sm:$0xff]
    %v7882 = vld [vmem:[#allocation2 + $0x438] sm:$0xff]
    %v7883 = vld [vmem:[#allocation2 + $0x440] sm:$0xff]
    %v7884 = vld [vmem:[#allocation2 + $0x448] sm:$0xff]
    %v7885 = vld [vmem:[#allocation2 + $0x450] sm:$0xff]
    %v7886 = vld [vmem:[#allocation2 + $0x458] sm:$0xff]
    %v7887 = vld [vmem:[#allocation2 + $0x460] sm:$0xff]
    %v7888 = vld [vmem:[#allocation2 + $0x468] sm:$0xff]
    %v7889 = vld [vmem:[#allocation2 + $0x470] sm:$0xff]
    %v7890 = vld [vmem:[#allocation2 + $0x478] sm:$0xff]
    %v7897 = vsel %vm5459, %v7840, %v7837
    %v7898 = vsel %vm5459, %v7841, %v7838
    %v7899 = vsel %vm5459, %v7842, %v7839
    %7903 = vmatprep.subr.mxu0 0.0
    %7904 = vmatpush1.msra.mxu0 %v7843
    %7905 = vmatprep.subr.mxu0 0.0
    %7906 = vmatpush1.msra.mxu0 %v7844
    %7907 = vmatprep.subr.mxu0 0.0
    %7908 = vmatpush1.msra.mxu0 %v7845
    %7909 = vmatprep.subr.mxu0 0.0
    %7910 = vmatpush1.msra.mxu0 %v7846
    %7911 = vmatprep.subr.mxu0 0.0
    %7912 = vmatpush1.msra.mxu0 %v7847
    %7913 = vmatprep.subr.mxu0 0.0
    %7914 = vmatpush1.msra.mxu0 %v7848
    %7915 = vmatprep.subr.mxu0 0.0
    %7916 = vmatpush1.msra.mxu0 %v7849
    %7917 = vmatprep.subr.mxu0 0.0
    %7918 = vmatpush1.msra.mxu0 %v7850
    %7919 = vmatprep.subr.mxu0 0.0
    %7920 = vmatpush1.msra.mxu0 %v7851
    %7921 = vmatprep.subr.mxu0 0.0
    %7922 = vmatpush1.msra.mxu0 %v7852
    %7923 = vmatprep.subr.mxu0 0.0
    %7924 = vmatpush1.msra.mxu0 %v7853
    %7925 = vmatprep.subr.mxu0 0.0
    %7926 = vmatpush1.msra.mxu0 %v7854
    %7927 = vmatprep.subr.mxu0 0.0
    %7928 = vmatpush1.msra.mxu0 %v7855
    %7929 = vmatprep.subr.mxu0 0.0
    %7930 = vmatpush1.msra.mxu0 %v7856
    %7931 = vmatprep.subr.mxu0 0.0
    %7932 = vmatpush1.msra.mxu0 %v7857
    %7933 = vmatprep.subr.mxu0 0.0
    %7934 = vmatpush1.msra.mxu0 %v7858
    %7935 = vmatprep.subr.mxu0 0.0
    %7936 = vmatpush1.msra.mxu0 %v7859
    %7937 = vmatprep.subr.mxu0 0.0
    %7938 = vmatpush1.msra.mxu0 %v7860
    %7939 = vmatprep.subr.mxu0 0.0
    %7940 = vmatpush1.msra.mxu0 %v7861
    %7941 = vmatprep.subr.mxu0 0.0
    %7942 = vmatpush1.msra.mxu0 %v7862
    %7943 = vmatprep.subr.mxu0 0.0
    %7944 = vmatpush1.msra.mxu0 %v7863
    %7945 = vmatprep.subr.mxu0 0.0
    %7946 = vmatpush1.msra.mxu0 %v7864
    %7947 = vmatprep.subr.mxu0 0.0
    %7948 = vmatpush1.msra.mxu0 %v7865
    %7949 = vmatprep.subr.mxu0 0.0
    %7950 = vmatpush1.msra.mxu0 %v7866
    %7951 = vmatprep.subr.mxu0 0.0
    %7952 = vmatpush1.msra.mxu0 %v7867
    %7953 = vmatprep.subr.mxu0 0.0
    %7954 = vmatpush1.msra.mxu0 %v7868
    %7955 = vmatprep.subr.mxu0 0.0
    %7956 = vmatpush1.msra.mxu0 %v7869
    %7957 = vmatprep.subr.mxu0 0.0
    %7958 = vmatpush1.msra.mxu0 %v7870
    %7959 = vmatprep.subr.mxu0 0.0
    %7960 = vmatpush1.msra.mxu0 %v7871
    %7961 = vmatprep.subr.mxu0 0.0
    %7962 = vmatpush1.msra.mxu0 %v7872
    %7963 = vmatprep.subr.mxu0 0.0
    %7964 = vmatpush1.msra.mxu0 %v7873
    %7965 = vmatprep.subr.mxu0 0.0
    %7966 = vmatpush1.msra.mxu0 %v7874
    %7967 = vmatprep.mubr.f32.mxu0 %v7898
    %7968 = vmatmul.mubr.f32.gmra.mrb[0].mxu0 %v7897
    %v7969 = vpop.f32.mrb[0].mxu0
    %v7970 = vadd.f32 0.0, %v7969
    %v7971 = vpop.f32.mrb[0].mxu0
    %7972 = vdwg.mxu0
    %7973 = vmatprep.subr.mxu0 0.0
    %7974 = vmatpush1.msra.mxu0 %v7875
    %7975 = vmatprep.subr.mxu0 0.0
    %7976 = vmatpush1.msra.mxu0 %v7876
    %7977 = vmatprep.subr.mxu0 0.0
    %7978 = vmatpush1.msra.mxu0 %v7877
    %7979 = vmatprep.subr.mxu0 0.0
    %7980 = vmatpush1.msra.mxu0 %v7878
    %7981 = vmatprep.subr.mxu0 0.0
    %7982 = vmatpush1.msra.mxu0 %v7879
    %7983 = vmatprep.subr.mxu0 0.0
    %7984 = vmatpush1.msra.mxu0 %v7880
    %7985 = vmatprep.subr.mxu0 0.0
    %7986 = vmatpush1.msra.mxu0 %v7881
    %7987 = vmatprep.subr.mxu0 0.0
    %7988 = vmatpush1.msra.mxu0 %v7882
    %7989 = vmatprep.subr.mxu0 0.0
    %7990 = vmatpush1.msra.mxu0 %v7883
    %7991 = vmatprep.subr.mxu0 0.0
    %7992 = vmatpush1.msra.mxu0 %v7884
    %7993 = vmatprep.subr.mxu0 0.0
    %7994 = vmatpush1.msra.mxu0 %v7885
    %7995 = vmatprep.subr.mxu0 0.0
    %7996 = vmatpush1.msra.mxu0 %v7886
    %7997 = vmatprep.subr.mxu0 0.0
    %7998 = vmatpush1.msra.mxu0 %v7887
    %7999 = vmatprep.subr.mxu0 0.0
    %8000 = vmatpush1.msra.mxu0 %v7888
    %8001 = vmatprep.subr.mxu0 0.0
    %8002 = vmatpush1.msra.mxu0 %v7889
    %8003 = vmatprep.subr.mxu0 0.0
    %8004 = vmatpush1.msra.mxu0 %v7890
    %8005 = vmatprep.subr.mxu0 0.0
    %8006 = vmatpush1.msra.mxu0 0.0
    %8007 = vmatprep.subr.mxu0 0.0
    %8008 = vmatpush1.msra.mxu0 0.0
    %8009 = vmatprep.subr.mxu0 0.0
    %8010 = vmatpush1.msra.mxu0 0.0
    %8011 = vmatprep.subr.mxu0 0.0
    %8012 = vmatpush1.msra.mxu0 0.0
    %8013 = vmatprep.subr.mxu0 0.0
    %8014 = vmatpush1.msra.mxu0 0.0
    %8015 = vmatprep.subr.mxu0 0.0
    %8016 = vmatpush1.msra.mxu0 0.0
    %8017 = vmatprep.subr.mxu0 0.0
    %8018 = vmatpush1.msra.mxu0 0.0
    %8019 = vmatprep.subr.mxu0 0.0
    %8020 = vmatpush1.msra.mxu0 0.0
    %8021 = vmatprep.subr.mxu0 0.0
    %8022 = vmatpush1.msra.mxu0 0.0
    %8023 = vmatprep.subr.mxu0 0.0
    %8024 = vmatpush1.msra.mxu0 0.0
    %8025 = vmatprep.subr.mxu0 0.0
    %8026 = vmatpush1.msra.mxu0 0.0
    %8027 = vmatprep.subr.mxu0 0.0
    %8028 = vmatpush1.msra.mxu0 0.0
    %8029 = vmatprep.subr.mxu0 0.0
    %8030 = vmatpush1.msra.mxu0 0.0
    %8031 = vmatprep.subr.mxu0 0.0
    %8032 = vmatpush1.msra.mxu0 0.0
    %8033 = vmatprep.subr.mxu0 0.0
    %8034 = vmatpush1.msra.mxu0 0.0
    %8035 = vmatprep.subr.mxu0 0.0
    %8036 = vmatpush1.msra.mxu0 0.0
    %8037 = vmatprep.mubr.f32.mxu0 0.0
    %8038 = vmatmul.mubr.f32.gmra.mrb[0].mxu0 %v7899
    %v8039 = vpop.f32.mrb[0].mxu0
    %v8040 = vadd.f32 %v7970, %v8039
    %v8041 = vpop.f32.mrb[0].mxu0
    %8042 = vdwg.mxu0
    %v8043 = vadd.f32 %v5755, %v8040
    %v8044 = vld [vmem:[%s1 + $0x24] sm:$0xff]
    %v8045 = vld [vmem:[%s1 + $0x2c] sm:$0xf]
    %v8046 = vld [vmem:[%s2 + $0x9] sm:$0x7]
    %v8049 = vlaneseq
    %v8050 = vshrl.u32 %v8049, 7
    %v8051 = vsub.s32 0, %v8050
    %v8052 = vrot.slane %v8044, %v8051
    %v8053 = vlaneseq
    %v8054 = vshrl.u32 %v8053, 7
    %v8055 = vsub.s32 4, %v8054
    %v8056 = vrot.slane %v8044, %v8055
    %v8057 = vlaneseq
    %v8058 = vshrl.u32 %v8057, 7
    %v8059 = vsub.s32 0, %v8058
    %v8060 = vrot.slane %v8045, %v8059
    %v8064 = vlaneseq
    %v8065 = vshrl.u32 %v8064, 7
    %v8066 = vsub.s32 0, %v8065
    %v8067 = vrot.slane %v8052, %v8066
    %v8068 = vlaneseq
    %v8069 = vshrl.u32 %v8068, 7
    %v8070 = vsub.s32 0, %v8069
    %v8071 = vrot.slane %v8056, %v8070
    %v8072 = vlaneseq
    %v8073 = vshrl.u32 %v8072, 7
    %v8074 = vsub.s32 0, %v8073
    %v8075 = vrot.slane %v8060, %v8074
    %v8076 = vmul.f32 %v105, %v8067
    %v8077 = vmul.f32 %v105, %v8071
    %v8078 = vmul.f32 %v105, %v8075
    %v8079 = vmul.f32 %v110, %v8067
    %v8080 = vmul.f32 %v110, %v8071
    %v8081 = vmul.f32 %v110, %v8075
    %v8082 = vmul.f32 %v115, %v8067
    %v8083 = vmul.f32 %v115, %v8071
    %v8084 = vmul.f32 %v115, %v8075
    %v8085 = vmul.f32 %v120, %v8067
    %v8086 = vmul.f32 %v120, %v8071
    %v8087 = vmul.f32 %v120, %v8075
    %v8088 = vmul.f32 %v125, %v8067
    %v8089 = vmul.f32 %v125, %v8071
    %v8090 = vmul.f32 %v125, %v8075
    %v8091 = vmul.f32 %v130, %v8067
    %v8092 = vmul.f32 %v130, %v8071
    %v8093 = vmul.f32 %v130, %v8075
    %v8094 = vmul.f32 %v135, %v8067
    %v8095 = vmul.f32 %v135, %v8071
    %v8096 = vmul.f32 %v135, %v8075
    %v8097 = vmul.f32 %v140, %v8067
    %v8098 = vmul.f32 %v140, %v8071
    %v8099 = vmul.f32 %v140, %v8075
    %v8100 = vmul.f32 %v145, %v8067
    %v8101 = vmul.f32 %v145, %v8071
    %v8102 = vmul.f32 %v145, %v8075
    %v8103 = vmul.f32 %v150, %v8067
    %v8104 = vmul.f32 %v150, %v8071
    %v8105 = vmul.f32 %v150, %v8075
    %v8106 = vmul.f32 %v155, %v8067
    %v8107 = vmul.f32 %v155, %v8071
    %v8108 = vmul.f32 %v155, %v8075
    %v8109 = vmul.f32 %v160, %v8067
    %v8110 = vmul.f32 %v160, %v8071
    %v8111 = vmul.f32 %v160, %v8075
    %v8112 = vmul.f32 %v165, %v8067
    %v8113 = vmul.f32 %v165, %v8071
    %v8114 = vmul.f32 %v165, %v8075
    %v8115 = vmul.f32 %v170, %v8067
    %v8116 = vmul.f32 %v170, %v8071
    %v8117 = vmul.f32 %v170, %v8075
    %v8118 = vmul.f32 %v175, %v8067
    %v8119 = vmul.f32 %v175, %v8071
    %v8120 = vmul.f32 %v175, %v8075
    %v8121 = vmul.f32 %v180, %v8067
    %v8122 = vmul.f32 %v180, %v8071
    %v8123 = vmul.f32 %v180, %v8075
    %v8124 = vmul.f32 %v185, %v8067
    %v8125 = vmul.f32 %v185, %v8071
    %v8126 = vmul.f32 %v185, %v8075
    %v8127 = vmul.f32 %v190, %v8067
    %v8128 = vmul.f32 %v190, %v8071
    %v8129 = vmul.f32 %v190, %v8075
    %v8130 = vmul.f32 %v195, %v8067
    %v8131 = vmul.f32 %v195, %v8071
    %v8132 = vmul.f32 %v195, %v8075
    %v8133 = vmul.f32 %v200, %v8067
    %v8134 = vmul.f32 %v200, %v8071
    %v8135 = vmul.f32 %v200, %v8075
    %v8136 = vmul.f32 %v205, %v8067
    %v8137 = vmul.f32 %v205, %v8071
    %v8138 = vmul.f32 %v205, %v8075
    %v8139 = vmul.f32 %v210, %v8067
    %v8140 = vmul.f32 %v210, %v8071
    %v8141 = vmul.f32 %v210, %v8075
    %v8142 = vmul.f32 %v215, %v8067
    %v8143 = vmul.f32 %v215, %v8071
    %v8144 = vmul.f32 %v215, %v8075
    %v8145 = vmul.f32 %v220, %v8067
    %v8146 = vmul.f32 %v220, %v8071
    %v8147 = vmul.f32 %v220, %v8075
    %v8148 = vmul.f32 %v225, %v8067
    %v8149 = vmul.f32 %v225, %v8071
    %v8150 = vmul.f32 %v225, %v8075
    %v8151 = vmul.f32 %v230, %v8067
    %v8152 = vmul.f32 %v230, %v8071
    %v8153 = vmul.f32 %v230, %v8075
    %v8154 = vmul.f32 %v235, %v8067
    %v8155 = vmul.f32 %v235, %v8071
    %v8156 = vmul.f32 %v235, %v8075
    %v8157 = vmul.f32 %v240, %v8067
    %v8158 = vmul.f32 %v240, %v8071
    %v8159 = vmul.f32 %v240, %v8075
    %v8160 = vmul.f32 %v245, %v8067
    %v8161 = vmul.f32 %v245, %v8071
    %v8162 = vmul.f32 %v245, %v8075
    %v8163 = vmul.f32 %v250, %v8067
    %v8164 = vmul.f32 %v250, %v8071
    %v8165 = vmul.f32 %v250, %v8075
    %v8166 = vmul.f32 %v255, %v8067
    %v8167 = vmul.f32 %v255, %v8071
    %v8168 = vmul.f32 %v255, %v8075
    %v8169 = vmul.f32 %v260, %v8067
    %v8170 = vmul.f32 %v260, %v8071
    %v8171 = vmul.f32 %v260, %v8075
    %v8172 = vmul.f32 %v265, %v8067
    %v8173 = vmul.f32 %v265, %v8071
    %v8174 = vmul.f32 %v265, %v8075
    %v8175 = vmul.f32 %v270, %v8067
    %v8176 = vmul.f32 %v270, %v8071
    %v8177 = vmul.f32 %v270, %v8075
    %v8178 = vmul.f32 %v275, %v8067
    %v8179 = vmul.f32 %v275, %v8071
    %v8180 = vmul.f32 %v275, %v8075
    %v8181 = vmul.f32 %v280, %v8067
    %v8182 = vmul.f32 %v280, %v8071
    %v8183 = vmul.f32 %v280, %v8075
    %v8184 = vmul.f32 %v285, %v8067
    %v8185 = vmul.f32 %v285, %v8071
    %v8186 = vmul.f32 %v285, %v8075
    %v8187 = vmul.f32 %v290, %v8067
    %v8188 = vmul.f32 %v290, %v8071
    %v8189 = vmul.f32 %v290, %v8075
    %v8190 = vmul.f32 %v295, %v8067
    %v8191 = vmul.f32 %v295, %v8071
    %v8192 = vmul.f32 %v295, %v8075
    %v8193 = vmul.f32 %v300, %v8067
    %v8194 = vmul.f32 %v300, %v8071
    %v8195 = vmul.f32 %v300, %v8075
    %v8196 = vmul.f32 %v305, %v8067
    %v8197 = vmul.f32 %v305, %v8071
    %v8198 = vmul.f32 %v305, %v8075
    %v8199 = vmul.f32 %v310, %v8067
    %v8200 = vmul.f32 %v310, %v8071
    %v8201 = vmul.f32 %v310, %v8075
    %v8202 = vmul.f32 %v315, %v8067
    %v8203 = vmul.f32 %v315, %v8071
    %v8204 = vmul.f32 %v315, %v8075
    %v8205 = vmul.f32 %v320, %v8067
    %v8206 = vmul.f32 %v320, %v8071
    %v8207 = vmul.f32 %v320, %v8075
    %v8208 = vmul.f32 %v325, %v8067
    %v8209 = vmul.f32 %v325, %v8071
    %v8210 = vmul.f32 %v325, %v8075
    %v8211 = vmul.f32 %v330, %v8067
    %v8212 = vmul.f32 %v330, %v8071
    %v8213 = vmul.f32 %v330, %v8075
    %v8214 = vmul.f32 %v335, %v8067
    %v8215 = vmul.f32 %v335, %v8071
    %v8216 = vmul.f32 %v335, %v8075
    %v8217 = vmul.f32 %v340, %v8067
    %v8218 = vmul.f32 %v340, %v8071
    %v8219 = vmul.f32 %v340, %v8075
    %v8220 = vmul.f32 %v345, %v8067
    %v8221 = vmul.f32 %v345, %v8071
    %v8222 = vmul.f32 %v345, %v8075
    %v8223 = vmul.f32 %v350, %v8067
    %v8224 = vmul.f32 %v350, %v8071
    %v8225 = vmul.f32 %v350, %v8075
    %v8226 = vmul.f32 %v355, %v8067
    %v8227 = vmul.f32 %v355, %v8071
    %v8228 = vmul.f32 %v355, %v8075
    %v8229 = vmul.f32 %v360, %v8067
    %v8230 = vmul.f32 %v360, %v8071
    %v8231 = vmul.f32 %v360, %v8075
    %v8232 = vmul.f32 %v365, %v8067
    %v8233 = vmul.f32 %v365, %v8071
    %v8234 = vmul.f32 %v365, %v8075
    %v8235 = vmul.f32 %v370, %v8067
    %v8236 = vmul.f32 %v370, %v8071
    %v8237 = vmul.f32 %v370, %v8075
    %v8238 = vmul.f32 %v375, %v8067
    %v8239 = vmul.f32 %v375, %v8071
    %v8240 = vmul.f32 %v375, %v8075
    %v8241 = vmul.f32 %v380, %v8067
    %v8242 = vmul.f32 %v380, %v8071
    %v8243 = vmul.f32 %v380, %v8075
    %v8244 = vmul.f32 %v385, %v8067
    %v8245 = vmul.f32 %v385, %v8071
    %v8246 = vmul.f32 %v385, %v8075
    %v8247 = vmul.f32 %v390, %v8067
    %v8248 = vmul.f32 %v390, %v8071
    %v8249 = vmul.f32 %v390, %v8075
    %v8250 = vmul.f32 %v395, %v8067
    %v8251 = vmul.f32 %v395, %v8071
    %v8252 = vmul.f32 %v395, %v8075
    %v8253 = vmul.f32 %v400, %v8067
    %v8254 = vmul.f32 %v400, %v8071
    %v8255 = vmul.f32 %v400, %v8075
    %v8256 = vmul.f32 %v405, %v8067
    %v8257 = vmul.f32 %v405, %v8071
    %v8258 = vmul.f32 %v405, %v8075
    %v8259 = vmul.f32 %v410, %v8067
    %v8260 = vmul.f32 %v410, %v8071
    %v8261 = vmul.f32 %v410, %v8075
    %v8262 = vmul.f32 %v415, %v8067
    %v8263 = vmul.f32 %v415, %v8071
    %v8264 = vmul.f32 %v415, %v8075
    %v8265 = vmul.f32 %v420, %v8067
    %v8266 = vmul.f32 %v420, %v8071
    %v8267 = vmul.f32 %v420, %v8075
    %v8268 = vlaneseq
    %v8269 = vshrl.u32 %v8268, 7
    %v8270 = vsub.s32 1, %v8269
    %v8271 = vrot.slane %v8044, %v8270
    %v8272 = vlaneseq
    %v8273 = vshrl.u32 %v8272, 7
    %v8274 = vsub.s32 5, %v8273
    %v8275 = vrot.slane %v8044, %v8274
    %v8276 = vlaneseq
    %v8277 = vshrl.u32 %v8276, 7
    %v8278 = vsub.s32 1, %v8277
    %v8279 = vrot.slane %v8045, %v8278
    %v8283 = vlaneseq
    %v8284 = vshrl.u32 %v8283, 7
    %v8285 = vsub.s32 1, %v8284
    %v8286 = vrot.slane %v8271, %v8285
    %v8287 = vlaneseq
    %v8288 = vshrl.u32 %v8287, 7
    %v8289 = vsub.s32 1, %v8288
    %v8290 = vrot.slane %v8275, %v8289
    %v8291 = vlaneseq
    %v8292 = vshrl.u32 %v8291, 7
    %v8293 = vsub.s32 1, %v8292
    %v8294 = vrot.slane %v8279, %v8293
    %v8295 = vmul.f32 %v645, %v8286
    %v8296 = vmul.f32 %v645, %v8290
    %v8297 = vmul.f32 %v645, %v8294
    %v8298 = vmul.f32 %v649, %v8286
    %v8299 = vmul.f32 %v649, %v8290
    %v8300 = vmul.f32 %v649, %v8294
    %v8301 = vmul.f32 %v653, %v8286
    %v8302 = vmul.f32 %v653, %v8290
    %v8303 = vmul.f32 %v653, %v8294
    %v8304 = vmul.f32 %v657, %v8286
    %v8305 = vmul.f32 %v657, %v8290
    %v8306 = vmul.f32 %v657, %v8294
    %v8307 = vmul.f32 %v661, %v8286
    %v8308 = vmul.f32 %v661, %v8290
    %v8309 = vmul.f32 %v661, %v8294
    %v8310 = vmul.f32 %v665, %v8286
    %v8311 = vmul.f32 %v665, %v8290
    %v8312 = vmul.f32 %v665, %v8294
    %v8313 = vmul.f32 %v669, %v8286
    %v8314 = vmul.f32 %v669, %v8290
    %v8315 = vmul.f32 %v669, %v8294
    %v8316 = vmul.f32 %v673, %v8286
    %v8317 = vmul.f32 %v673, %v8290
    %v8318 = vmul.f32 %v673, %v8294
    %v8319 = vmul.f32 %v677, %v8286
    %v8320 = vmul.f32 %v677, %v8290
    %v8321 = vmul.f32 %v677, %v8294
    %v8322 = vmul.f32 %v681, %v8286
    %v8323 = vmul.f32 %v681, %v8290
    %v8324 = vmul.f32 %v681, %v8294
    %v8325 = vmul.f32 %v685, %v8286
    %v8326 = vmul.f32 %v685, %v8290
    %v8327 = vmul.f32 %v685, %v8294
    %v8328 = vmul.f32 %v689, %v8286
    %v8329 = vmul.f32 %v689, %v8290
    %v8330 = vmul.f32 %v689, %v8294
    %v8331 = vmul.f32 %v693, %v8286
    %v8332 = vmul.f32 %v693, %v8290
    %v8333 = vmul.f32 %v693, %v8294
    %v8334 = vmul.f32 %v697, %v8286
    %v8335 = vmul.f32 %v697, %v8290
    %v8336 = vmul.f32 %v697, %v8294
    %v8337 = vmul.f32 %v701, %v8286
    %v8338 = vmul.f32 %v701, %v8290
    %v8339 = vmul.f32 %v701, %v8294
    %v8340 = vmul.f32 %v705, %v8286
    %v8341 = vmul.f32 %v705, %v8290
    %v8342 = vmul.f32 %v705, %v8294
    %v8343 = vmul.f32 %v709, %v8286
    %v8344 = vmul.f32 %v709, %v8290
    %v8345 = vmul.f32 %v709, %v8294
    %v8346 = vmul.f32 %v713, %v8286
    %v8347 = vmul.f32 %v713, %v8290
    %v8348 = vmul.f32 %v713, %v8294
    %v8349 = vmul.f32 %v717, %v8286
    %v8350 = vmul.f32 %v717, %v8290
    %v8351 = vmul.f32 %v717, %v8294
    %v8352 = vmul.f32 %v721, %v8286
    %v8353 = vmul.f32 %v721, %v8290
    %v8354 = vmul.f32 %v721, %v8294
    %v8355 = vmul.f32 %v725, %v8286
    %v8356 = vmul.f32 %v725, %v8290
    %v8357 = vmul.f32 %v725, %v8294
    %v8358 = vmul.f32 %v729, %v8286
    %v8359 = vmul.f32 %v729, %v8290
    %v8360 = vmul.f32 %v729, %v8294
    %v8361 = vmul.f32 %v733, %v8286
    %v8362 = vmul.f32 %v733, %v8290
    %v8363 = vmul.f32 %v733, %v8294
    %v8364 = vmul.f32 %v737, %v8286
    %v8365 = vmul.f32 %v737, %v8290
    %v8366 = vmul.f32 %v737, %v8294
    %v8367 = vmul.f32 %v741, %v8286
    %v8368 = vmul.f32 %v741, %v8290
    %v8369 = vmul.f32 %v741, %v8294
    %v8370 = vmul.f32 %v745, %v8286
    %v8371 = vmul.f32 %v745, %v8290
    %v8372 = vmul.f32 %v745, %v8294
    %v8373 = vmul.f32 %v749, %v8286
    %v8374 = vmul.f32 %v749, %v8290
    %v8375 = vmul.f32 %v749, %v8294
    %v8376 = vmul.f32 %v753, %v8286
    %v8377 = vmul.f32 %v753, %v8290
    %v8378 = vmul.f32 %v753, %v8294
    %v8379 = vmul.f32 %v757, %v8286
    %v8380 = vmul.f32 %v757, %v8290
    %v8381 = vmul.f32 %v757, %v8294
    %v8382 = vmul.f32 %v761, %v8286
    %v8383 = vmul.f32 %v761, %v8290
    %v8384 = vmul.f32 %v761, %v8294
    %v8385 = vmul.f32 %v765, %v8286
    %v8386 = vmul.f32 %v765, %v8290
    %v8387 = vmul.f32 %v765, %v8294
    %v8388 = vmul.f32 %v769, %v8286
    %v8389 = vmul.f32 %v769, %v8290
    %v8390 = vmul.f32 %v769, %v8294
    %v8391 = vmul.f32 %v773, %v8286
    %v8392 = vmul.f32 %v773, %v8290
    %v8393 = vmul.f32 %v773, %v8294
    %v8394 = vmul.f32 %v777, %v8286
    %v8395 = vmul.f32 %v777, %v8290
    %v8396 = vmul.f32 %v777, %v8294
    %v8397 = vmul.f32 %v781, %v8286
    %v8398 = vmul.f32 %v781, %v8290
    %v8399 = vmul.f32 %v781, %v8294
    %v8400 = vmul.f32 %v785, %v8286
    %v8401 = vmul.f32 %v785, %v8290
    %v8402 = vmul.f32 %v785, %v8294
    %v8403 = vmul.f32 %v789, %v8286
    %v8404 = vmul.f32 %v789, %v8290
    %v8405 = vmul.f32 %v789, %v8294
    %v8406 = vmul.f32 %v793, %v8286
    %v8407 = vmul.f32 %v793, %v8290
    %v8408 = vmul.f32 %v793, %v8294
    %v8409 = vmul.f32 %v797, %v8286
    %v8410 = vmul.f32 %v797, %v8290
    %v8411 = vmul.f32 %v797, %v8294
    %v8412 = vmul.f32 %v801, %v8286
    %v8413 = vmul.f32 %v801, %v8290
    %v8414 = vmul.f32 %v801, %v8294
    %v8415 = vmul.f32 %v805, %v8286
    %v8416 = vmul.f32 %v805, %v8290
    %v8417 = vmul.f32 %v805, %v8294
    %v8418 = vmul.f32 %v809, %v8286
    %v8419 = vmul.f32 %v809, %v8290
    %v8420 = vmul.f32 %v809, %v8294
    %v8421 = vmul.f32 %v813, %v8286
    %v8422 = vmul.f32 %v813, %v8290
    %v8423 = vmul.f32 %v813, %v8294
    %v8424 = vmul.f32 %v817, %v8286
    %v8425 = vmul.f32 %v817, %v8290
    %v8426 = vmul.f32 %v817, %v8294
    %v8427 = vmul.f32 %v821, %v8286
    %v8428 = vmul.f32 %v821, %v8290
    %v8429 = vmul.f32 %v821, %v8294
    %v8430 = vmul.f32 %v825, %v8286
    %v8431 = vmul.f32 %v825, %v8290
    %v8432 = vmul.f32 %v825, %v8294
    %v8433 = vmul.f32 %v829, %v8286
    %v8434 = vmul.f32 %v829, %v8290
    %v8435 = vmul.f32 %v829, %v8294
    %v8436 = vmul.f32 %v833, %v8286
    %v8437 = vmul.f32 %v833, %v8290
    %v8438 = vmul.f32 %v833, %v8294
    %v8439 = vmul.f32 %v837, %v8286
    %v8440 = vmul.f32 %v837, %v8290
    %v8441 = vmul.f32 %v837, %v8294
    %v8442 = vmul.f32 %v841, %v8286
    %v8443 = vmul.f32 %v841, %v8290
    %v8444 = vmul.f32 %v841, %v8294
    %v8445 = vmul.f32 %v845, %v8286
    %v8446 = vmul.f32 %v845, %v8290
    %v8447 = vmul.f32 %v845, %v8294
    %v8448 = vmul.f32 %v849, %v8286
    %v8449 = vmul.f32 %v849, %v8290
    %v8450 = vmul.f32 %v849, %v8294
    %v8451 = vmul.f32 %v853, %v8286
    %v8452 = vmul.f32 %v853, %v8290
    %v8453 = vmul.f32 %v853, %v8294
    %v8454 = vmul.f32 %v857, %v8286
    %v8455 = vmul.f32 %v857, %v8290
    %v8456 = vmul.f32 %v857, %v8294
    %v8457 = vmul.f32 %v861, %v8286
    %v8458 = vmul.f32 %v861, %v8290
    %v8459 = vmul.f32 %v861, %v8294
    %v8460 = vmul.f32 %v865, %v8286
    %v8461 = vmul.f32 %v865, %v8290
    %v8462 = vmul.f32 %v865, %v8294
    %v8463 = vmul.f32 %v869, %v8286
    %v8464 = vmul.f32 %v869, %v8290
    %v8465 = vmul.f32 %v869, %v8294
    %v8466 = vmul.f32 %v873, %v8286
    %v8467 = vmul.f32 %v873, %v8290
    %v8468 = vmul.f32 %v873, %v8294
    %v8469 = vmul.f32 %v877, %v8286
    %v8470 = vmul.f32 %v877, %v8290
    %v8471 = vmul.f32 %v877, %v8294
    %v8472 = vmul.f32 %v881, %v8286
    %v8473 = vmul.f32 %v881, %v8290
    %v8474 = vmul.f32 %v881, %v8294
    %v8475 = vmul.f32 %v885, %v8286
    %v8476 = vmul.f32 %v885, %v8290
    %v8477 = vmul.f32 %v885, %v8294
    %v8478 = vmul.f32 %v889, %v8286
    %v8479 = vmul.f32 %v889, %v8290
    %v8480 = vmul.f32 %v889, %v8294
    %v8481 = vmul.f32 %v893, %v8286
    %v8482 = vmul.f32 %v893, %v8290
    %v8483 = vmul.f32 %v893, %v8294
    %v8484 = vmul.f32 %v897, %v8286
    %v8485 = vmul.f32 %v897, %v8290
    %v8486 = vmul.f32 %v897, %v8294
    %v8487 = vadd.f32 %v8076, %v8295
    %v8488 = vadd.f32 %v8077, %v8296
    %v8489 = vadd.f32 %v8078, %v8297
    %v8490 = vadd.f32 %v8079, %v8298
    %v8491 = vadd.f32 %v8080, %v8299
    %v8492 = vadd.f32 %v8081, %v8300
    %v8493 = vadd.f32 %v8082, %v8301
    %v8494 = vadd.f32 %v8083, %v8302
    %v8495 = vadd.f32 %v8084, %v8303
    %v8496 = vadd.f32 %v8085, %v8304
    %v8497 = vadd.f32 %v8086, %v8305
    %v8498 = vadd.f32 %v8087, %v8306
    %v8499 = vadd.f32 %v8088, %v8307
    %v8500 = vadd.f32 %v8089, %v8308
    %v8501 = vadd.f32 %v8090, %v8309
    %v8502 = vadd.f32 %v8091, %v8310
    %v8503 = vadd.f32 %v8092, %v8311
    %v8504 = vadd.f32 %v8093, %v8312
    %v8505 = vadd.f32 %v8094, %v8313
    %v8506 = vadd.f32 %v8095, %v8314
    %v8507 = vadd.f32 %v8096, %v8315
    %v8508 = vadd.f32 %v8097, %v8316
    %v8509 = vadd.f32 %v8098, %v8317
    %v8510 = vadd.f32 %v8099, %v8318
    %v8511 = vadd.f32 %v8100, %v8319
    %v8512 = vadd.f32 %v8101, %v8320
    %v8513 = vadd.f32 %v8102, %v8321
    %v8514 = vadd.f32 %v8103, %v8322
    %v8515 = vadd.f32 %v8104, %v8323
    %v8516 = vadd.f32 %v8105, %v8324
    %v8517 = vadd.f32 %v8106, %v8325
    %v8518 = vadd.f32 %v8107, %v8326
    %v8519 = vadd.f32 %v8108, %v8327
    %v8520 = vadd.f32 %v8109, %v8328
    %v8521 = vadd.f32 %v8110, %v8329
    %v8522 = vadd.f32 %v8111, %v8330
    %v8523 = vadd.f32 %v8112, %v8331
    %v8524 = vadd.f32 %v8113, %v8332
    %v8525 = vadd.f32 %v8114, %v8333
    %v8526 = vadd.f32 %v8115, %v8334
    %v8527 = vadd.f32 %v8116, %v8335
    %v8528 = vadd.f32 %v8117, %v8336
    %v8529 = vadd.f32 %v8118, %v8337
    %v8530 = vadd.f32 %v8119, %v8338
    %v8531 = vadd.f32 %v8120, %v8339
    %v8532 = vadd.f32 %v8121, %v8340
    %v8533 = vadd.f32 %v8122, %v8341
    %v8534 = vadd.f32 %v8123, %v8342
    %v8535 = vadd.f32 %v8124, %v8343
    %v8536 = vadd.f32 %v8125, %v8344
    %v8537 = vadd.f32 %v8126, %v8345
    %v8538 = vadd.f32 %v8127, %v8346
    %v8539 = vadd.f32 %v8128, %v8347
    %v8540 = vadd.f32 %v8129, %v8348
    %v8541 = vadd.f32 %v8130, %v8349
    %v8542 = vadd.f32 %v8131, %v8350
    %v8543 = vadd.f32 %v8132, %v8351
    %v8544 = vadd.f32 %v8133, %v8352
    %v8545 = vadd.f32 %v8134, %v8353
    %v8546 = vadd.f32 %v8135, %v8354
    %v8547 = vadd.f32 %v8136, %v8355
    %v8548 = vadd.f32 %v8137, %v8356
    %v8549 = vadd.f32 %v8138, %v8357
    %v8550 = vadd.f32 %v8139, %v8358
    %v8551 = vadd.f32 %v8140, %v8359
    %v8552 = vadd.f32 %v8141, %v8360
    %v8553 = vadd.f32 %v8142, %v8361
    %v8554 = vadd.f32 %v8143, %v8362
    %v8555 = vadd.f32 %v8144, %v8363
    %v8556 = vadd.f32 %v8145, %v8364
    %v8557 = vadd.f32 %v8146, %v8365
    %v8558 = vadd.f32 %v8147, %v8366
    %v8559 = vadd.f32 %v8148, %v8367
    %v8560 = vadd.f32 %v8149, %v8368
    %v8561 = vadd.f32 %v8150, %v8369
    %v8562 = vadd.f32 %v8151, %v8370
    %v8563 = vadd.f32 %v8152, %v8371
    %v8564 = vadd.f32 %v8153, %v8372
    %v8565 = vadd.f32 %v8154, %v8373
    %v8566 = vadd.f32 %v8155, %v8374
    %v8567 = vadd.f32 %v8156, %v8375
    %v8568 = vadd.f32 %v8157, %v8376
    %v8569 = vadd.f32 %v8158, %v8377
    %v8570 = vadd.f32 %v8159, %v8378
    %v8571 = vadd.f32 %v8160, %v8379
    %v8572 = vadd.f32 %v8161, %v8380
    %v8573 = vadd.f32 %v8162, %v8381
    %v8574 = vadd.f32 %v8163, %v8382
    %v8575 = vadd.f32 %v8164, %v8383
    %v8576 = vadd.f32 %v8165, %v8384
    %v8577 = vadd.f32 %v8166, %v8385
    %v8578 = vadd.f32 %v8167, %v8386
    %v8579 = vadd.f32 %v8168, %v8387
    %v8580 = vadd.f32 %v8169, %v8388
    %v8581 = vadd.f32 %v8170, %v8389
    %v8582 = vadd.f32 %v8171, %v8390
    %v8583 = vadd.f32 %v8172, %v8391
    %v8584 = vadd.f32 %v8173, %v8392
    %v8585 = vadd.f32 %v8174, %v8393
    %v8586 = vadd.f32 %v8175, %v8394
    %v8587 = vadd.f32 %v8176, %v8395
    %v8588 = vadd.f32 %v8177, %v8396
    %v8589 = vadd.f32 %v8178, %v8397
    %v8590 = vadd.f32 %v8179, %v8398
    %v8591 = vadd.f32 %v8180, %v8399
    %v8592 = vadd.f32 %v8181, %v8400
    %v8593 = vadd.f32 %v8182, %v8401
    %v8594 = vadd.f32 %v8183, %v8402
    %v8595 = vadd.f32 %v8184, %v8403
    %v8596 = vadd.f32 %v8185, %v8404
    %v8597 = vadd.f32 %v8186, %v8405
    %v8598 = vadd.f32 %v8187, %v8406
    %v8599 = vadd.f32 %v8188, %v8407
    %v8600 = vadd.f32 %v8189, %v8408
    %v8601 = vadd.f32 %v8190, %v8409
    %v8602 = vadd.f32 %v8191, %v8410
    %v8603 = vadd.f32 %v8192, %v8411
    %v8604 = vadd.f32 %v8193, %v8412
    %v8605 = vadd.f32 %v8194, %v8413
    %v8606 = vadd.f32 %v8195, %v8414
    %v8607 = vadd.f32 %v8196, %v8415
    %v8608 = vadd.f32 %v8197, %v8416
    %v8609 = vadd.f32 %v8198, %v8417
    %v8610 = vadd.f32 %v8199, %v8418
    %v8611 = vadd.f32 %v8200, %v8419
    %v8612 = vadd.f32 %v8201, %v8420
    %v8613 = vadd.f32 %v8202, %v8421
    %v8614 = vadd.f32 %v8203, %v8422
    %v8615 = vadd.f32 %v8204, %v8423
    %v8616 = vadd.f32 %v8205, %v8424
    %v8617 = vadd.f32 %v8206, %v8425
    %v8618 = vadd.f32 %v8207, %v8426
    %v8619 = vadd.f32 %v8208, %v8427
    %v8620 = vadd.f32 %v8209, %v8428
    %v8621 = vadd.f32 %v8210, %v8429
    %v8622 = vadd.f32 %v8211, %v8430
    %v8623 = vadd.f32 %v8212, %v8431
    %v8624 = vadd.f32 %v8213, %v8432
    %v8625 = vadd.f32 %v8214, %v8433
    %v8626 = vadd.f32 %v8215, %v8434
    %v8627 = vadd.f32 %v8216, %v8435
    %v8628 = vadd.f32 %v8217, %v8436
    %v8629 = vadd.f32 %v8218, %v8437
    %v8630 = vadd.f32 %v8219, %v8438
    %v8631 = vadd.f32 %v8220, %v8439
    %v8632 = vadd.f32 %v8221, %v8440
    %v8633 = vadd.f32 %v8222, %v8441
    %v8634 = vadd.f32 %v8223, %v8442
    %v8635 = vadd.f32 %v8224, %v8443
    %v8636 = vadd.f32 %v8225, %v8444
    %v8637 = vadd.f32 %v8226, %v8445
    %v8638 = vadd.f32 %v8227, %v8446
    %v8639 = vadd.f32 %v8228, %v8447
    %v8640 = vadd.f32 %v8229, %v8448
    %v8641 = vadd.f32 %v8230, %v8449
    %v8642 = vadd.f32 %v8231, %v8450
    %v8643 = vadd.f32 %v8232, %v8451
    %v8644 = vadd.f32 %v8233, %v8452
    %v8645 = vadd.f32 %v8234, %v8453
    %v8646 = vadd.f32 %v8235, %v8454
    %v8647 = vadd.f32 %v8236, %v8455
    %v8648 = vadd.f32 %v8237, %v8456
    %v8649 = vadd.f32 %v8238, %v8457
    %v8650 = vadd.f32 %v8239, %v8458
    %v8651 = vadd.f32 %v8240, %v8459
    %v8652 = vadd.f32 %v8241, %v8460
    %v8653 = vadd.f32 %v8242, %v8461
    %v8654 = vadd.f32 %v8243, %v8462
    %v8655 = vadd.f32 %v8244, %v8463
    %v8656 = vadd.f32 %v8245, %v8464
    %v8657 = vadd.f32 %v8246, %v8465
    %v8658 = vadd.f32 %v8247, %v8466
    %v8659 = vadd.f32 %v8248, %v8467
    %v8660 = vadd.f32 %v8249, %v8468
    %v8661 = vadd.f32 %v8250, %v8469
    %v8662 = vadd.f32 %v8251, %v8470
    %v8663 = vadd.f32 %v8252, %v8471
    %v8664 = vadd.f32 %v8253, %v8472
    %v8665 = vadd.f32 %v8254, %v8473
    %v8666 = vadd.f32 %v8255, %v8474
    %v8667 = vadd.f32 %v8256, %v8475
    %v8668 = vadd.f32 %v8257, %v8476
    %v8669 = vadd.f32 %v8258, %v8477
    %v8670 = vadd.f32 %v8259, %v8478
    %v8671 = vadd.f32 %v8260, %v8479
    %v8672 = vadd.f32 %v8261, %v8480
    %v8673 = vadd.f32 %v8262, %v8481
    %v8674 = vadd.f32 %v8263, %v8482
    %v8675 = vadd.f32 %v8264, %v8483
    %v8676 = vadd.f32 %v8265, %v8484
    %v8677 = vadd.f32 %v8266, %v8485
    %v8678 = vadd.f32 %v8267, %v8486
    %v8679 = vlaneseq
    %v8680 = vshrl.u32 %v8679, 7
    %v8681 = vsub.s32 2, %v8680
    %v8682 = vrot.slane %v8044, %v8681
    %v8683 = vlaneseq
    %v8684 = vshrl.u32 %v8683, 7
    %v8685 = vsub.s32 6, %v8684
    %v8686 = vrot.slane %v8044, %v8685
    %v8687 = vlaneseq
    %v8688 = vshrl.u32 %v8687, 7
    %v8689 = vsub.s32 2, %v8688
    %v8690 = vrot.slane %v8045, %v8689
    %v8694 = vlaneseq
    %v8695 = vshrl.u32 %v8694, 7
    %v8696 = vsub.s32 2, %v8695
    %v8697 = vrot.slane %v8682, %v8696
    %v8698 = vlaneseq
    %v8699 = vshrl.u32 %v8698, 7
    %v8700 = vsub.s32 2, %v8699
    %v8701 = vrot.slane %v8686, %v8700
    %v8702 = vlaneseq
    %v8703 = vshrl.u32 %v8702, 7
    %v8704 = vsub.s32 2, %v8703
    %v8705 = vrot.slane %v8690, %v8704
    %v8706 = vmul.f32 %v1312, %v8697
    %v8707 = vmul.f32 %v1312, %v8701
    %v8708 = vmul.f32 %v1312, %v8705
    %v8709 = vmul.f32 %v1316, %v8697
    %v8710 = vmul.f32 %v1316, %v8701
    %v8711 = vmul.f32 %v1316, %v8705
    %v8712 = vmul.f32 %v1320, %v8697
    %v8713 = vmul.f32 %v1320, %v8701
    %v8714 = vmul.f32 %v1320, %v8705
    %v8715 = vmul.f32 %v1324, %v8697
    %v8716 = vmul.f32 %v1324, %v8701
    %v8717 = vmul.f32 %v1324, %v8705
    %v8718 = vmul.f32 %v1328, %v8697
    %v8719 = vmul.f32 %v1328, %v8701
    %v8720 = vmul.f32 %v1328, %v8705
    %v8721 = vmul.f32 %v1332, %v8697
    %v8722 = vmul.f32 %v1332, %v8701
    %v8723 = vmul.f32 %v1332, %v8705
    %v8724 = vmul.f32 %v1336, %v8697
    %v8725 = vmul.f32 %v1336, %v8701
    %v8726 = vmul.f32 %v1336, %v8705
    %v8727 = vmul.f32 %v1340, %v8697
    %v8728 = vmul.f32 %v1340, %v8701
    %v8729 = vmul.f32 %v1340, %v8705
    %v8730 = vmul.f32 %v1344, %v8697
    %v8731 = vmul.f32 %v1344, %v8701
    %v8732 = vmul.f32 %v1344, %v8705
    %v8733 = vmul.f32 %v1348, %v8697
    %v8734 = vmul.f32 %v1348, %v8701
    %v8735 = vmul.f32 %v1348, %v8705
    %v8736 = vmul.f32 %v1352, %v8697
    %v8737 = vmul.f32 %v1352, %v8701
    %v8738 = vmul.f32 %v1352, %v8705
    %v8739 = vmul.f32 %v1356, %v8697
    %v8740 = vmul.f32 %v1356, %v8701
    %v8741 = vmul.f32 %v1356, %v8705
    %v8742 = vmul.f32 %v1360, %v8697
    %v8743 = vmul.f32 %v1360, %v8701
    %v8744 = vmul.f32 %v1360, %v8705
    %v8745 = vmul.f32 %v1364, %v8697
    %v8746 = vmul.f32 %v1364, %v8701
    %v8747 = vmul.f32 %v1364, %v8705
    %v8748 = vmul.f32 %v1368, %v8697
    %v8749 = vmul.f32 %v1368, %v8701
    %v8750 = vmul.f32 %v1368, %v8705
    %v8751 = vmul.f32 %v1372, %v8697
    %v8752 = vmul.f32 %v1372, %v8701
    %v8753 = vmul.f32 %v1372, %v8705
    %v8754 = vmul.f32 %v1376, %v8697
    %v8755 = vmul.f32 %v1376, %v8701
    %v8756 = vmul.f32 %v1376, %v8705
    %v8757 = vmul.f32 %v1380, %v8697
    %v8758 = vmul.f32 %v1380, %v8701
    %v8759 = vmul.f32 %v1380, %v8705
    %v8760 = vmul.f32 %v1384, %v8697
    %v8761 = vmul.f32 %v1384, %v8701
    %v8762 = vmul.f32 %v1384, %v8705
    %v8763 = vmul.f32 %v1388, %v8697
    %v8764 = vmul.f32 %v1388, %v8701
    %v8765 = vmul.f32 %v1388, %v8705
    %v8766 = vmul.f32 %v1392, %v8697
    %v8767 = vmul.f32 %v1392, %v8701
    %v8768 = vmul.f32 %v1392, %v8705
    %v8769 = vmul.f32 %v1396, %v8697
    %v8770 = vmul.f32 %v1396, %v8701
    %v8771 = vmul.f32 %v1396, %v8705
    %v8772 = vmul.f32 %v1400, %v8697
    %v8773 = vmul.f32 %v1400, %v8701
    %v8774 = vmul.f32 %v1400, %v8705
    %v8775 = vmul.f32 %v1404, %v8697
    %v8776 = vmul.f32 %v1404, %v8701
    %v8777 = vmul.f32 %v1404, %v8705
    %v8778 = vmul.f32 %v1408, %v8697
    %v8779 = vmul.f32 %v1408, %v8701
    %v8780 = vmul.f32 %v1408, %v8705
    %v8781 = vmul.f32 %v1412, %v8697
    %v8782 = vmul.f32 %v1412, %v8701
    %v8783 = vmul.f32 %v1412, %v8705
    %v8784 = vmul.f32 %v1416, %v8697
    %v8785 = vmul.f32 %v1416, %v8701
    %v8786 = vmul.f32 %v1416, %v8705
    %v8787 = vmul.f32 %v1420, %v8697
    %v8788 = vmul.f32 %v1420, %v8701
    %v8789 = vmul.f32 %v1420, %v8705
    %v8790 = vmul.f32 %v1424, %v8697
    %v8791 = vmul.f32 %v1424, %v8701
    %v8792 = vmul.f32 %v1424, %v8705
    %v8793 = vmul.f32 %v1428, %v8697
    %v8794 = vmul.f32 %v1428, %v8701
    %v8795 = vmul.f32 %v1428, %v8705
    %v8796 = vmul.f32 %v1432, %v8697
    %v8797 = vmul.f32 %v1432, %v8701
    %v8798 = vmul.f32 %v1432, %v8705
    %v8799 = vmul.f32 %v1436, %v8697
    %v8800 = vmul.f32 %v1436, %v8701
    %v8801 = vmul.f32 %v1436, %v8705
    %v8802 = vmul.f32 %v1440, %v8697
    %v8803 = vmul.f32 %v1440, %v8701
    %v8804 = vmul.f32 %v1440, %v8705
    %v8805 = vmul.f32 %v1444, %v8697
    %v8806 = vmul.f32 %v1444, %v8701
    %v8807 = vmul.f32 %v1444, %v8705
    %v8808 = vmul.f32 %v1448, %v8697
    %v8809 = vmul.f32 %v1448, %v8701
    %v8810 = vmul.f32 %v1448, %v8705
    %v8811 = vmul.f32 %v1452, %v8697
    %v8812 = vmul.f32 %v1452, %v8701
    %v8813 = vmul.f32 %v1452, %v8705
    %v8814 = vmul.f32 %v1456, %v8697
    %v8815 = vmul.f32 %v1456, %v8701
    %v8816 = vmul.f32 %v1456, %v8705
    %v8817 = vmul.f32 %v1460, %v8697
    %v8818 = vmul.f32 %v1460, %v8701
    %v8819 = vmul.f32 %v1460, %v8705
    %v8820 = vmul.f32 %v1464, %v8697
    %v8821 = vmul.f32 %v1464, %v8701
    %v8822 = vmul.f32 %v1464, %v8705
    %v8823 = vmul.f32 %v1468, %v8697
    %v8824 = vmul.f32 %v1468, %v8701
    %v8825 = vmul.f32 %v1468, %v8705
    %v8826 = vmul.f32 %v1472, %v8697
    %v8827 = vmul.f32 %v1472, %v8701
    %v8828 = vmul.f32 %v1472, %v8705
    %v8829 = vmul.f32 %v1476, %v8697
    %v8830 = vmul.f32 %v1476, %v8701
    %v8831 = vmul.f32 %v1476, %v8705
    %v8832 = vmul.f32 %v1480, %v8697
    %v8833 = vmul.f32 %v1480, %v8701
    %v8834 = vmul.f32 %v1480, %v8705
    %v8835 = vmul.f32 %v1484, %v8697
    %v8836 = vmul.f32 %v1484, %v8701
    %v8837 = vmul.f32 %v1484, %v8705
    %v8838 = vmul.f32 %v1488, %v8697
    %v8839 = vmul.f32 %v1488, %v8701
    %v8840 = vmul.f32 %v1488, %v8705
    %v8841 = vmul.f32 %v1492, %v8697
    %v8842 = vmul.f32 %v1492, %v8701
    %v8843 = vmul.f32 %v1492, %v8705
    %v8844 = vmul.f32 %v1496, %v8697
    %v8845 = vmul.f32 %v1496, %v8701
    %v8846 = vmul.f32 %v1496, %v8705
    %v8847 = vmul.f32 %v1500, %v8697
    %v8848 = vmul.f32 %v1500, %v8701
    %v8849 = vmul.f32 %v1500, %v8705
    %v8850 = vmul.f32 %v1504, %v8697
    %v8851 = vmul.f32 %v1504, %v8701
    %v8852 = vmul.f32 %v1504, %v8705
    %v8853 = vmul.f32 %v1508, %v8697
    %v8854 = vmul.f32 %v1508, %v8701
    %v8855 = vmul.f32 %v1508, %v8705
    %v8856 = vmul.f32 %v1512, %v8697
    %v8857 = vmul.f32 %v1512, %v8701
    %v8858 = vmul.f32 %v1512, %v8705
    %v8859 = vmul.f32 %v1516, %v8697
    %v8860 = vmul.f32 %v1516, %v8701
    %v8861 = vmul.f32 %v1516, %v8705
    %v8862 = vmul.f32 %v1520, %v8697
    %v8863 = vmul.f32 %v1520, %v8701
    %v8864 = vmul.f32 %v1520, %v8705
    %v8865 = vmul.f32 %v1524, %v8697
    %v8866 = vmul.f32 %v1524, %v8701
    %v8867 = vmul.f32 %v1524, %v8705
    %v8868 = vmul.f32 %v1528, %v8697
    %v8869 = vmul.f32 %v1528, %v8701
    %v8870 = vmul.f32 %v1528, %v8705
    %v8871 = vmul.f32 %v1532, %v8697
    %v8872 = vmul.f32 %v1532, %v8701
    %v8873 = vmul.f32 %v1532, %v8705
    %v8874 = vmul.f32 %v1536, %v8697
    %v8875 = vmul.f32 %v1536, %v8701
    %v8876 = vmul.f32 %v1536, %v8705
    %v8877 = vmul.f32 %v1540, %v8697
    %v8878 = vmul.f32 %v1540, %v8701
    %v8879 = vmul.f32 %v1540, %v8705
    %v8880 = vmul.f32 %v1544, %v8697
    %v8881 = vmul.f32 %v1544, %v8701
    %v8882 = vmul.f32 %v1544, %v8705
    %v8883 = vmul.f32 %v1548, %v8697
    %v8884 = vmul.f32 %v1548, %v8701
    %v8885 = vmul.f32 %v1548, %v8705
    %v8886 = vmul.f32 %v1552, %v8697
    %v8887 = vmul.f32 %v1552, %v8701
    %v8888 = vmul.f32 %v1552, %v8705
    %v8889 = vmul.f32 %v1556, %v8697
    %v8890 = vmul.f32 %v1556, %v8701
    %v8891 = vmul.f32 %v1556, %v8705
    %v8892 = vmul.f32 %v1560, %v8697
    %v8893 = vmul.f32 %v1560, %v8701
    %v8894 = vmul.f32 %v1560, %v8705
    %v8895 = vmul.f32 %v1564, %v8697
    %v8896 = vmul.f32 %v1564, %v8701
    %v8897 = vmul.f32 %v1564, %v8705
    %v8898 = vadd.f32 %v8487, %v8706
    %v8899 = vadd.f32 %v8488, %v8707
    %v8900 = vadd.f32 %v8489, %v8708
    %v8901 = vadd.f32 %v8490, %v8709
    %v8902 = vadd.f32 %v8491, %v8710
    %v8903 = vadd.f32 %v8492, %v8711
    %v8904 = vadd.f32 %v8493, %v8712
    %v8905 = vadd.f32 %v8494, %v8713
    %v8906 = vadd.f32 %v8495, %v8714
    %v8907 = vadd.f32 %v8496, %v8715
    %v8908 = vadd.f32 %v8497, %v8716
    %v8909 = vadd.f32 %v8498, %v8717
    %v8910 = vadd.f32 %v8499, %v8718
    %v8911 = vadd.f32 %v8500, %v8719
    %v8912 = vadd.f32 %v8501, %v8720
    %v8913 = vadd.f32 %v8502, %v8721
    %v8914 = vadd.f32 %v8503, %v8722
    %v8915 = vadd.f32 %v8504, %v8723
    %v8916 = vadd.f32 %v8505, %v8724
    %v8917 = vadd.f32 %v8506, %v8725
    %v8918 = vadd.f32 %v8507, %v8726
    %v8919 = vadd.f32 %v8508, %v8727
    %v8920 = vadd.f32 %v8509, %v8728
    %v8921 = vadd.f32 %v8510, %v8729
    %v8922 = vadd.f32 %v8511, %v8730
    %v8923 = vadd.f32 %v8512, %v8731
    %v8924 = vadd.f32 %v8513, %v8732
    %v8925 = vadd.f32 %v8514, %v8733
    %v8926 = vadd.f32 %v8515, %v8734
    %v8927 = vadd.f32 %v8516, %v8735
    %v8928 = vadd.f32 %v8517, %v8736
    %v8929 = vadd.f32 %v8518, %v8737
    %v8930 = vadd.f32 %v8519, %v8738
    %v8931 = vadd.f32 %v8520, %v8739
    %v8932 = vadd.f32 %v8521, %v8740
    %v8933 = vadd.f32 %v8522, %v8741
    %v8934 = vadd.f32 %v8523, %v8742
    %v8935 = vadd.f32 %v8524, %v8743
    %v8936 = vadd.f32 %v8525, %v8744
    %v8937 = vadd.f32 %v8526, %v8745
    %v8938 = vadd.f32 %v8527, %v8746
    %v8939 = vadd.f32 %v8528, %v8747
    %v8940 = vadd.f32 %v8529, %v8748
    %v8941 = vadd.f32 %v8530, %v8749
    %v8942 = vadd.f32 %v8531, %v8750
    %v8943 = vadd.f32 %v8532, %v8751
    %v8944 = vadd.f32 %v8533, %v8752
    %v8945 = vadd.f32 %v8534, %v8753
    %v8946 = vadd.f32 %v8535, %v8754
    %v8947 = vadd.f32 %v8536, %v8755
    %v8948 = vadd.f32 %v8537, %v8756
    %v8949 = vadd.f32 %v8538, %v8757
    %v8950 = vadd.f32 %v8539, %v8758
    %v8951 = vadd.f32 %v8540, %v8759
    %v8952 = vadd.f32 %v8541, %v8760
    %v8953 = vadd.f32 %v8542, %v8761
    %v8954 = vadd.f32 %v8543, %v8762
    %v8955 = vadd.f32 %v8544, %v8763
    %v8956 = vadd.f32 %v8545, %v8764
    %v8957 = vadd.f32 %v8546, %v8765
    %v8958 = vadd.f32 %v8547, %v8766
    %v8959 = vadd.f32 %v8548, %v8767
    %v8960 = vadd.f32 %v8549, %v8768
    %v8961 = vadd.f32 %v8550, %v8769
    %v8962 = vadd.f32 %v8551, %v8770
    %v8963 = vadd.f32 %v8552, %v8771
    %v8964 = vadd.f32 %v8553, %v8772
    %v8965 = vadd.f32 %v8554, %v8773
    %v8966 = vadd.f32 %v8555, %v8774
    %v8967 = vadd.f32 %v8556, %v8775
    %v8968 = vadd.f32 %v8557, %v8776
    %v8969 = vadd.f32 %v8558, %v8777
    %v8970 = vadd.f32 %v8559, %v8778
    %v8971 = vadd.f32 %v8560, %v8779
    %v8972 = vadd.f32 %v8561, %v8780
    %v8973 = vadd.f32 %v8562, %v8781
    %v8974 = vadd.f32 %v8563, %v8782
    %v8975 = vadd.f32 %v8564, %v8783
    %v8976 = vadd.f32 %v8565, %v8784
    %v8977 = vadd.f32 %v8566, %v8785
    %v8978 = vadd.f32 %v8567, %v8786
    %v8979 = vadd.f32 %v8568, %v8787
    %v8980 = vadd.f32 %v8569, %v8788
    %v8981 = vadd.f32 %v8570, %v8789
    %v8982 = vadd.f32 %v8571, %v8790
    %v8983 = vadd.f32 %v8572, %v8791
    %v8984 = vadd.f32 %v8573, %v8792
    %v8985 = vadd.f32 %v8574, %v8793
    %v8986 = vadd.f32 %v8575, %v8794
    %v8987 = vadd.f32 %v8576, %v8795
    %v8988 = vadd.f32 %v8577, %v8796
    %v8989 = vadd.f32 %v8578, %v8797
    %v8990 = vadd.f32 %v8579, %v8798
    %v8991 = vadd.f32 %v8580, %v8799
    %v8992 = vadd.f32 %v8581, %v8800
    %v8993 = vadd.f32 %v8582, %v8801
    %v8994 = vadd.f32 %v8583, %v8802
    %v8995 = vadd.f32 %v8584, %v8803
    %v8996 = vadd.f32 %v8585, %v8804
    %v8997 = vadd.f32 %v8586, %v8805
    %v8998 = vadd.f32 %v8587, %v8806
    %v8999 = vadd.f32 %v8588, %v8807
    %v9000 = vadd.f32 %v8589, %v8808
    %v9001 = vadd.f32 %v8590, %v8809
    %v9002 = vadd.f32 %v8591, %v8810
    %v9003 = vadd.f32 %v8592, %v8811
    %v9004 = vadd.f32 %v8593, %v8812
    %v9005 = vadd.f32 %v8594, %v8813
    %v9006 = vadd.f32 %v8595, %v8814
    %v9007 = vadd.f32 %v8596, %v8815
    %v9008 = vadd.f32 %v8597, %v8816
    %v9009 = vadd.f32 %v8598, %v8817
    %v9010 = vadd.f32 %v8599, %v8818
    %v9011 = vadd.f32 %v8600, %v8819
    %v9012 = vadd.f32 %v8601, %v8820
    %v9013 = vadd.f32 %v8602, %v8821
    %v9014 = vadd.f32 %v8603, %v8822
    %v9015 = vadd.f32 %v8604, %v8823
    %v9016 = vadd.f32 %v8605, %v8824
    %v9017 = vadd.f32 %v8606, %v8825
    %v9018 = vadd.f32 %v8607, %v8826
    %v9019 = vadd.f32 %v8608, %v8827
    %v9020 = vadd.f32 %v8609, %v8828
    %v9021 = vadd.f32 %v8610, %v8829
    %v9022 = vadd.f32 %v8611, %v8830
    %v9023 = vadd.f32 %v8612, %v8831
    %v9024 = vadd.f32 %v8613, %v8832
    %v9025 = vadd.f32 %v8614, %v8833
    %v9026 = vadd.f32 %v8615, %v8834
    %v9027 = vadd.f32 %v8616, %v8835
    %v9028 = vadd.f32 %v8617, %v8836
    %v9029 = vadd.f32 %v8618, %v8837
    %v9030 = vadd.f32 %v8619, %v8838
    %v9031 = vadd.f32 %v8620, %v8839
    %v9032 = vadd.f32 %v8621, %v8840
    %v9033 = vadd.f32 %v8622, %v8841
    %v9034 = vadd.f32 %v8623, %v8842
    %v9035 = vadd.f32 %v8624, %v8843
    %v9036 = vadd.f32 %v8625, %v8844
    %v9037 = vadd.f32 %v8626, %v8845
    %v9038 = vadd.f32 %v8627, %v8846
    %v9039 = vadd.f32 %v8628, %v8847
    %v9040 = vadd.f32 %v8629, %v8848
    %v9041 = vadd.f32 %v8630, %v8849
    %v9042 = vadd.f32 %v8631, %v8850
    %v9043 = vadd.f32 %v8632, %v8851
    %v9044 = vadd.f32 %v8633, %v8852
    %v9045 = vadd.f32 %v8634, %v8853
    %v9046 = vadd.f32 %v8635, %v8854
    %v9047 = vadd.f32 %v8636, %v8855
    %v9048 = vadd.f32 %v8637, %v8856
    %v9049 = vadd.f32 %v8638, %v8857
    %v9050 = vadd.f32 %v8639, %v8858
    %v9051 = vadd.f32 %v8640, %v8859
    %v9052 = vadd.f32 %v8641, %v8860
    %v9053 = vadd.f32 %v8642, %v8861
    %v9054 = vadd.f32 %v8643, %v8862
    %v9055 = vadd.f32 %v8644, %v8863
    %v9056 = vadd.f32 %v8645, %v8864
    %v9057 = vadd.f32 %v8646, %v8865
    %v9058 = vadd.f32 %v8647, %v8866
    %v9059 = vadd.f32 %v8648, %v8867
    %v9060 = vadd.f32 %v8649, %v8868
    %v9061 = vadd.f32 %v8650, %v8869
    %v9062 = vadd.f32 %v8651, %v8870
    %v9063 = vadd.f32 %v8652, %v8871
    %v9064 = vadd.f32 %v8653, %v8872
    %v9065 = vadd.f32 %v8654, %v8873
    %v9066 = vadd.f32 %v8655, %v8874
    %v9067 = vadd.f32 %v8656, %v8875
    %v9068 = vadd.f32 %v8657, %v8876
    %v9069 = vadd.f32 %v8658, %v8877
    %v9070 = vadd.f32 %v8659, %v8878
    %v9071 = vadd.f32 %v8660, %v8879
    %v9072 = vadd.f32 %v8661, %v8880
    %v9073 = vadd.f32 %v8662, %v8881
    %v9074 = vadd.f32 %v8663, %v8882
    %v9075 = vadd.f32 %v8664, %v8883
    %v9076 = vadd.f32 %v8665, %v8884
    %v9077 = vadd.f32 %v8666, %v8885
    %v9078 = vadd.f32 %v8667, %v8886
    %v9079 = vadd.f32 %v8668, %v8887
    %v9080 = vadd.f32 %v8669, %v8888
    %v9081 = vadd.f32 %v8670, %v8889
    %v9082 = vadd.f32 %v8671, %v8890
    %v9083 = vadd.f32 %v8672, %v8891
    %v9084 = vadd.f32 %v8673, %v8892
    %v9085 = vadd.f32 %v8674, %v8893
    %v9086 = vadd.f32 %v8675, %v8894
    %v9087 = vadd.f32 %v8676, %v8895
    %v9088 = vadd.f32 %v8677, %v8896
    %v9089 = vadd.f32 %v8678, %v8897
    %v9090 = vlaneseq
    %v9091 = vshrl.u32 %v9090, 7
    %v9092 = vsub.s32 3, %v9091
    %v9093 = vrot.slane %v8044, %v9092
    %v9094 = vlaneseq
    %v9095 = vshrl.u32 %v9094, 7
    %v9096 = vsub.s32 7, %v9095
    %v9097 = vrot.slane %v8044, %v9096
    %v9098 = vlaneseq
    %v9099 = vshrl.u32 %v9098, 7
    %v9100 = vsub.s32 3, %v9099
    %v9101 = vrot.slane %v8045, %v9100
    %v9105 = vlaneseq
    %v9106 = vshrl.u32 %v9105, 7
    %v9107 = vsub.s32 3, %v9106
    %v9108 = vrot.slane %v9093, %v9107
    %v9109 = vlaneseq
    %v9110 = vshrl.u32 %v9109, 7
    %v9111 = vsub.s32 3, %v9110
    %v9112 = vrot.slane %v9097, %v9111
    %v9113 = vlaneseq
    %v9114 = vshrl.u32 %v9113, 7
    %v9115 = vsub.s32 3, %v9114
    %v9116 = vrot.slane %v9101, %v9115
    %v9117 = vmul.f32 %v1979, %v9108
    %v9118 = vmul.f32 %v1979, %v9112
    %v9119 = vmul.f32 %v1979, %v9116
    %v9120 = vmul.f32 %v1983, %v9108
    %v9121 = vmul.f32 %v1983, %v9112
    %v9122 = vmul.f32 %v1983, %v9116
    %v9123 = vmul.f32 %v1987, %v9108
    %v9124 = vmul.f32 %v1987, %v9112
    %v9125 = vmul.f32 %v1987, %v9116
    %v9126 = vmul.f32 %v1991, %v9108
    %v9127 = vmul.f32 %v1991, %v9112
    %v9128 = vmul.f32 %v1991, %v9116
    %v9129 = vmul.f32 %v1995, %v9108
    %v9130 = vmul.f32 %v1995, %v9112
    %v9131 = vmul.f32 %v1995, %v9116
    %v9132 = vmul.f32 %v1999, %v9108
    %v9133 = vmul.f32 %v1999, %v9112
    %v9134 = vmul.f32 %v1999, %v9116
    %v9135 = vmul.f32 %v2003, %v9108
    %v9136 = vmul.f32 %v2003, %v9112
    %v9137 = vmul.f32 %v2003, %v9116
    %v9138 = vmul.f32 %v2007, %v9108
    %v9139 = vmul.f32 %v2007, %v9112
    %v9140 = vmul.f32 %v2007, %v9116
    %v9141 = vmul.f32 %v2011, %v9108
    %v9142 = vmul.f32 %v2011, %v9112
    %v9143 = vmul.f32 %v2011, %v9116
    %v9144 = vmul.f32 %v2015, %v9108
    %v9145 = vmul.f32 %v2015, %v9112
    %v9146 = vmul.f32 %v2015, %v9116
    %v9147 = vmul.f32 %v2019, %v9108
    %v9148 = vmul.f32 %v2019, %v9112
    %v9149 = vmul.f32 %v2019, %v9116
    %v9150 = vmul.f32 %v2023, %v9108
    %v9151 = vmul.f32 %v2023, %v9112
    %v9152 = vmul.f32 %v2023, %v9116
    %v9153 = vmul.f32 %v2027, %v9108
    %v9154 = vmul.f32 %v2027, %v9112
    %v9155 = vmul.f32 %v2027, %v9116
    %v9156 = vmul.f32 %v2031, %v9108
    %v9157 = vmul.f32 %v2031, %v9112
    %v9158 = vmul.f32 %v2031, %v9116
    %v9159 = vmul.f32 %v2035, %v9108
    %v9160 = vmul.f32 %v2035, %v9112
    %v9161 = vmul.f32 %v2035, %v9116
    %v9162 = vmul.f32 %v2039, %v9108
    %v9163 = vmul.f32 %v2039, %v9112
    %v9164 = vmul.f32 %v2039, %v9116
    %v9165 = vmul.f32 %v2043, %v9108
    %v9166 = vmul.f32 %v2043, %v9112
    %v9167 = vmul.f32 %v2043, %v9116
    %v9168 = vmul.f32 %v2047, %v9108
    %v9169 = vmul.f32 %v2047, %v9112
    %v9170 = vmul.f32 %v2047, %v9116
    %v9171 = vmul.f32 %v2051, %v9108
    %v9172 = vmul.f32 %v2051, %v9112
    %v9173 = vmul.f32 %v2051, %v9116
    %v9174 = vmul.f32 %v2055, %v9108
    %v9175 = vmul.f32 %v2055, %v9112
    %v9176 = vmul.f32 %v2055, %v9116
    %v9177 = vmul.f32 %v2059, %v9108
    %v9178 = vmul.f32 %v2059, %v9112
    %v9179 = vmul.f32 %v2059, %v9116
    %v9180 = vmul.f32 %v2063, %v9108
    %v9181 = vmul.f32 %v2063, %v9112
    %v9182 = vmul.f32 %v2063, %v9116
    %v9183 = vmul.f32 %v2067, %v9108
    %v9184 = vmul.f32 %v2067, %v9112
    %v9185 = vmul.f32 %v2067, %v9116
    %v9186 = vmul.f32 %v2071, %v9108
    %v9187 = vmul.f32 %v2071, %v9112
    %v9188 = vmul.f32 %v2071, %v9116
    %v9189 = vmul.f32 %v2075, %v9108
    %v9190 = vmul.f32 %v2075, %v9112
    %v9191 = vmul.f32 %v2075, %v9116
    %v9192 = vmul.f32 %v2079, %v9108
    %v9193 = vmul.f32 %v2079, %v9112
    %v9194 = vmul.f32 %v2079, %v9116
    %v9195 = vmul.f32 %v2083, %v9108
    %v9196 = vmul.f32 %v2083, %v9112
    %v9197 = vmul.f32 %v2083, %v9116
    %v9198 = vmul.f32 %v2087, %v9108
    %v9199 = vmul.f32 %v2087, %v9112
    %v9200 = vmul.f32 %v2087, %v9116
    %v9201 = vmul.f32 %v2091, %v9108
    %v9202 = vmul.f32 %v2091, %v9112
    %v9203 = vmul.f32 %v2091, %v9116
    %v9204 = vmul.f32 %v2095, %v9108
    %v9205 = vmul.f32 %v2095, %v9112
    %v9206 = vmul.f32 %v2095, %v9116
    %v9207 = vmul.f32 %v2099, %v9108
    %v9208 = vmul.f32 %v2099, %v9112
    %v9209 = vmul.f32 %v2099, %v9116
    %v9210 = vmul.f32 %v2103, %v9108
    %v9211 = vmul.f32 %v2103, %v9112
    %v9212 = vmul.f32 %v2103, %v9116
    %v9213 = vmul.f32 %v2107, %v9108
    %v9214 = vmul.f32 %v2107, %v9112
    %v9215 = vmul.f32 %v2107, %v9116
    %v9216 = vmul.f32 %v2111, %v9108
    %v9217 = vmul.f32 %v2111, %v9112
    %v9218 = vmul.f32 %v2111, %v9116
    %v9219 = vmul.f32 %v2115, %v9108
    %v9220 = vmul.f32 %v2115, %v9112
    %v9221 = vmul.f32 %v2115, %v9116
    %v9222 = vmul.f32 %v2119, %v9108
    %v9223 = vmul.f32 %v2119, %v9112
    %v9224 = vmul.f32 %v2119, %v9116
    %v9225 = vmul.f32 %v2123, %v9108
    %v9226 = vmul.f32 %v2123, %v9112
    %v9227 = vmul.f32 %v2123, %v9116
    %v9228 = vmul.f32 %v2127, %v9108
    %v9229 = vmul.f32 %v2127, %v9112
    %v9230 = vmul.f32 %v2127, %v9116
    %v9231 = vmul.f32 %v2131, %v9108
    %v9232 = vmul.f32 %v2131, %v9112
    %v9233 = vmul.f32 %v2131, %v9116
    %v9234 = vmul.f32 %v2135, %v9108
    %v9235 = vmul.f32 %v2135, %v9112
    %v9236 = vmul.f32 %v2135, %v9116
    %v9237 = vmul.f32 %v2139, %v9108
    %v9238 = vmul.f32 %v2139, %v9112
    %v9239 = vmul.f32 %v2139, %v9116
    %v9240 = vmul.f32 %v2143, %v9108
    %v9241 = vmul.f32 %v2143, %v9112
    %v9242 = vmul.f32 %v2143, %v9116
    %v9243 = vmul.f32 %v2147, %v9108
    %v9244 = vmul.f32 %v2147, %v9112
    %v9245 = vmul.f32 %v2147, %v9116
    %v9246 = vmul.f32 %v2151, %v9108
    %v9247 = vmul.f32 %v2151, %v9112
    %v9248 = vmul.f32 %v2151, %v9116
    %v9249 = vmul.f32 %v2155, %v9108
    %v9250 = vmul.f32 %v2155, %v9112
    %v9251 = vmul.f32 %v2155, %v9116
    %v9252 = vmul.f32 %v2159, %v9108
    %v9253 = vmul.f32 %v2159, %v9112
    %v9254 = vmul.f32 %v2159, %v9116
    %v9255 = vmul.f32 %v2163, %v9108
    %v9256 = vmul.f32 %v2163, %v9112
    %v9257 = vmul.f32 %v2163, %v9116
    %v9258 = vmul.f32 %v2167, %v9108
    %v9259 = vmul.f32 %v2167, %v9112
    %v9260 = vmul.f32 %v2167, %v9116
    %v9261 = vmul.f32 %v2171, %v9108
    %v9262 = vmul.f32 %v2171, %v9112
    %v9263 = vmul.f32 %v2171, %v9116
    %v9264 = vmul.f32 %v2175, %v9108
    %v9265 = vmul.f32 %v2175, %v9112
    %v9266 = vmul.f32 %v2175, %v9116
    %v9267 = vmul.f32 %v2179, %v9108
    %v9268 = vmul.f32 %v2179, %v9112
    %v9269 = vmul.f32 %v2179, %v9116
    %v9270 = vmul.f32 %v2183, %v9108
    %v9271 = vmul.f32 %v2183, %v9112
    %v9272 = vmul.f32 %v2183, %v9116
    %v9273 = vmul.f32 %v2187, %v9108
    %v9274 = vmul.f32 %v2187, %v9112
    %v9275 = vmul.f32 %v2187, %v9116
    %v9276 = vmul.f32 %v2191, %v9108
    %v9277 = vmul.f32 %v2191, %v9112
    %v9278 = vmul.f32 %v2191, %v9116
    %v9279 = vmul.f32 %v2195, %v9108
    %v9280 = vmul.f32 %v2195, %v9112
    %v9281 = vmul.f32 %v2195, %v9116
    %v9282 = vmul.f32 %v2199, %v9108
    %v9283 = vmul.f32 %v2199, %v9112
    %v9284 = vmul.f32 %v2199, %v9116
    %v9285 = vmul.f32 %v2203, %v9108
    %v9286 = vmul.f32 %v2203, %v9112
    %v9287 = vmul.f32 %v2203, %v9116
    %v9288 = vmul.f32 %v2207, %v9108
    %v9289 = vmul.f32 %v2207, %v9112
    %v9290 = vmul.f32 %v2207, %v9116
    %v9291 = vmul.f32 %v2211, %v9108
    %v9292 = vmul.f32 %v2211, %v9112
    %v9293 = vmul.f32 %v2211, %v9116
    %v9294 = vmul.f32 %v2215, %v9108
    %v9295 = vmul.f32 %v2215, %v9112
    %v9296 = vmul.f32 %v2215, %v9116
    %v9297 = vmul.f32 %v2219, %v9108
    %v9298 = vmul.f32 %v2219, %v9112
    %v9299 = vmul.f32 %v2219, %v9116
    %v9300 = vmul.f32 %v2223, %v9108
    %v9301 = vmul.f32 %v2223, %v9112
    %v9302 = vmul.f32 %v2223, %v9116
    %v9303 = vmul.f32 %v2227, %v9108
    %v9304 = vmul.f32 %v2227, %v9112
    %v9305 = vmul.f32 %v2227, %v9116
    %v9306 = vmul.f32 %v2231, %v9108
    %v9307 = vmul.f32 %v2231, %v9112
    %v9308 = vmul.f32 %v2231, %v9116
    %v9309 = vadd.f32 %v8898, %v9117
    %v9310 = vadd.f32 %v8899, %v9118
    %v9311 = vadd.f32 %v8900, %v9119
    %v9312 = vadd.f32 %v8901, %v9120
    %v9313 = vadd.f32 %v8902, %v9121
    %v9314 = vadd.f32 %v8903, %v9122
    %v9315 = vadd.f32 %v8904, %v9123
    %v9316 = vadd.f32 %v8905, %v9124
    %v9317 = vadd.f32 %v8906, %v9125
    %v9318 = vadd.f32 %v8907, %v9126
    %v9319 = vadd.f32 %v8908, %v9127
    %v9320 = vadd.f32 %v8909, %v9128
    %v9321 = vadd.f32 %v8910, %v9129
    %v9322 = vadd.f32 %v8911, %v9130
    %v9323 = vadd.f32 %v8912, %v9131
    %v9324 = vadd.f32 %v8913, %v9132
    %v9325 = vadd.f32 %v8914, %v9133
    %v9326 = vadd.f32 %v8915, %v9134
    %v9327 = vadd.f32 %v8916, %v9135
    %v9328 = vadd.f32 %v8917, %v9136
    %v9329 = vadd.f32 %v8918, %v9137
    %v9330 = vadd.f32 %v8919, %v9138
    %v9331 = vadd.f32 %v8920, %v9139
    %v9332 = vadd.f32 %v8921, %v9140
    %v9333 = vadd.f32 %v8922, %v9141
    %v9334 = vadd.f32 %v8923, %v9142
    %v9335 = vadd.f32 %v8924, %v9143
    %v9336 = vadd.f32 %v8925, %v9144
    %v9337 = vadd.f32 %v8926, %v9145
    %v9338 = vadd.f32 %v8927, %v9146
    %v9339 = vadd.f32 %v8928, %v9147
    %v9340 = vadd.f32 %v8929, %v9148
    %v9341 = vadd.f32 %v8930, %v9149
    %v9342 = vadd.f32 %v8931, %v9150
    %v9343 = vadd.f32 %v8932, %v9151
    %v9344 = vadd.f32 %v8933, %v9152
    %v9345 = vadd.f32 %v8934, %v9153
    %v9346 = vadd.f32 %v8935, %v9154
    %v9347 = vadd.f32 %v8936, %v9155
    %v9348 = vadd.f32 %v8937, %v9156
    %v9349 = vadd.f32 %v8938, %v9157
    %v9350 = vadd.f32 %v8939, %v9158
    %v9351 = vadd.f32 %v8940, %v9159
    %v9352 = vadd.f32 %v8941, %v9160
    %v9353 = vadd.f32 %v8942, %v9161
    %v9354 = vadd.f32 %v8943, %v9162
    %v9355 = vadd.f32 %v8944, %v9163
    %v9356 = vadd.f32 %v8945, %v9164
    %v9357 = vadd.f32 %v8946, %v9165
    %v9358 = vadd.f32 %v8947, %v9166
    %v9359 = vadd.f32 %v8948, %v9167
    %v9360 = vadd.f32 %v8949, %v9168
    %v9361 = vadd.f32 %v8950, %v9169
    %v9362 = vadd.f32 %v8951, %v9170
    %v9363 = vadd.f32 %v8952, %v9171
    %v9364 = vadd.f32 %v8953, %v9172
    %v9365 = vadd.f32 %v8954, %v9173
    %v9366 = vadd.f32 %v8955, %v9174
    %v9367 = vadd.f32 %v8956, %v9175
    %v9368 = vadd.f32 %v8957, %v9176
    %v9369 = vadd.f32 %v8958, %v9177
    %v9370 = vadd.f32 %v8959, %v9178
    %v9371 = vadd.f32 %v8960, %v9179
    %v9372 = vadd.f32 %v8961, %v9180
    %v9373 = vadd.f32 %v8962, %v9181
    %v9374 = vadd.f32 %v8963, %v9182
    %v9375 = vadd.f32 %v8964, %v9183
    %v9376 = vadd.f32 %v8965, %v9184
    %v9377 = vadd.f32 %v8966, %v9185
    %v9378 = vadd.f32 %v8967, %v9186
    %v9379 = vadd.f32 %v8968, %v9187
    %v9380 = vadd.f32 %v8969, %v9188
    %v9381 = vadd.f32 %v8970, %v9189
    %v9382 = vadd.f32 %v8971, %v9190
    %v9383 = vadd.f32 %v8972, %v9191
    %v9384 = vadd.f32 %v8973, %v9192
    %v9385 = vadd.f32 %v8974, %v9193
    %v9386 = vadd.f32 %v8975, %v9194
    %v9387 = vadd.f32 %v8976, %v9195
    %v9388 = vadd.f32 %v8977, %v9196
    %v9389 = vadd.f32 %v8978, %v9197
    %v9390 = vadd.f32 %v8979, %v9198
    %v9391 = vadd.f32 %v8980, %v9199
    %v9392 = vadd.f32 %v8981, %v9200
    %v9393 = vadd.f32 %v8982, %v9201
    %v9394 = vadd.f32 %v8983, %v9202
    %v9395 = vadd.f32 %v8984, %v9203
    %v9396 = vadd.f32 %v8985, %v9204
    %v9397 = vadd.f32 %v8986, %v9205
    %v9398 = vadd.f32 %v8987, %v9206
    %v9399 = vadd.f32 %v8988, %v9207
    %v9400 = vadd.f32 %v8989, %v9208
    %v9401 = vadd.f32 %v8990, %v9209
    %v9402 = vadd.f32 %v8991, %v9210
    %v9403 = vadd.f32 %v8992, %v9211
    %v9404 = vadd.f32 %v8993, %v9212
    %v9405 = vadd.f32 %v8994, %v9213
    %v9406 = vadd.f32 %v8995, %v9214
    %v9407 = vadd.f32 %v8996, %v9215
    %v9408 = vadd.f32 %v8997, %v9216
    %v9409 = vadd.f32 %v8998, %v9217
    %v9410 = vadd.f32 %v8999, %v9218
    %v9411 = vadd.f32 %v9000, %v9219
    %v9412 = vadd.f32 %v9001, %v9220
    %v9413 = vadd.f32 %v9002, %v9221
    %v9414 = vadd.f32 %v9003, %v9222
    %v9415 = vadd.f32 %v9004, %v9223
    %v9416 = vadd.f32 %v9005, %v9224
    %v9417 = vadd.f32 %v9006, %v9225
    %v9418 = vadd.f32 %v9007, %v9226
    %v9419 = vadd.f32 %v9008, %v9227
    %v9420 = vadd.f32 %v9009, %v9228
    %v9421 = vadd.f32 %v9010, %v9229
    %v9422 = vadd.f32 %v9011, %v9230
    %v9423 = vadd.f32 %v9012, %v9231
    %v9424 = vadd.f32 %v9013, %v9232
    %v9425 = vadd.f32 %v9014, %v9233
    %v9426 = vadd.f32 %v9015, %v9234
    %v9427 = vadd.f32 %v9016, %v9235
    %v9428 = vadd.f32 %v9017, %v9236
    %v9429 = vadd.f32 %v9018, %v9237
    %v9430 = vadd.f32 %v9019, %v9238
    %v9431 = vadd.f32 %v9020, %v9239
    %v9432 = vadd.f32 %v9021, %v9240
    %v9433 = vadd.f32 %v9022, %v9241
    %v9434 = vadd.f32 %v9023, %v9242
    %v9435 = vadd.f32 %v9024, %v9243
    %v9436 = vadd.f32 %v9025, %v9244
    %v9437 = vadd.f32 %v9026, %v9245
    %v9438 = vadd.f32 %v9027, %v9246
    %v9439 = vadd.f32 %v9028, %v9247
    %v9440 = vadd.f32 %v9029, %v9248
    %v9441 = vadd.f32 %v9030, %v9249
    %v9442 = vadd.f32 %v9031, %v9250
    %v9443 = vadd.f32 %v9032, %v9251
    %v9444 = vadd.f32 %v9033, %v9252
    %v9445 = vadd.f32 %v9034, %v9253
    %v9446 = vadd.f32 %v9035, %v9254
    %v9447 = vadd.f32 %v9036, %v9255
    %v9448 = vadd.f32 %v9037, %v9256
    %v9449 = vadd.f32 %v9038, %v9257
    %v9450 = vadd.f32 %v9039, %v9258
    %v9451 = vadd.f32 %v9040, %v9259
    %v9452 = vadd.f32 %v9041, %v9260
    %v9453 = vadd.f32 %v9042, %v9261
    %v9454 = vadd.f32 %v9043, %v9262
    %v9455 = vadd.f32 %v9044, %v9263
    %v9456 = vadd.f32 %v9045, %v9264
    %v9457 = vadd.f32 %v9046, %v9265
    %v9458 = vadd.f32 %v9047, %v9266
    %v9459 = vadd.f32 %v9048, %v9267
    %v9460 = vadd.f32 %v9049, %v9268
    %v9461 = vadd.f32 %v9050, %v9269
    %v9462 = vadd.f32 %v9051, %v9270
    %v9463 = vadd.f32 %v9052, %v9271
    %v9464 = vadd.f32 %v9053, %v9272
    %v9465 = vadd.f32 %v9054, %v9273
    %v9466 = vadd.f32 %v9055, %v9274
    %v9467 = vadd.f32 %v9056, %v9275
    %v9468 = vadd.f32 %v9057, %v9276
    %v9469 = vadd.f32 %v9058, %v9277
    %v9470 = vadd.f32 %v9059, %v9278
    %v9471 = vadd.f32 %v9060, %v9279
    %v9472 = vadd.f32 %v9061, %v9280
    %v9473 = vadd.f32 %v9062, %v9281
    %v9474 = vadd.f32 %v9063, %v9282
    %v9475 = vadd.f32 %v9064, %v9283
    %v9476 = vadd.f32 %v9065, %v9284
    %v9477 = vadd.f32 %v9066, %v9285
    %v9478 = vadd.f32 %v9067, %v9286
    %v9479 = vadd.f32 %v9068, %v9287
    %v9480 = vadd.f32 %v9069, %v9288
    %v9481 = vadd.f32 %v9070, %v9289
    %v9482 = vadd.f32 %v9071, %v9290
    %v9483 = vadd.f32 %v9072, %v9291
    %v9484 = vadd.f32 %v9073, %v9292
    %v9485 = vadd.f32 %v9074, %v9293
    %v9486 = vadd.f32 %v9075, %v9294
    %v9487 = vadd.f32 %v9076, %v9295
    %v9488 = vadd.f32 %v9077, %v9296
    %v9489 = vadd.f32 %v9078, %v9297
    %v9490 = vadd.f32 %v9079, %v9298
    %v9491 = vadd.f32 %v9080, %v9299
    %v9492 = vadd.f32 %v9081, %v9300
    %v9493 = vadd.f32 %v9082, %v9301
    %v9494 = vadd.f32 %v9083, %v9302
    %v9495 = vadd.f32 %v9084, %v9303
    %v9496 = vadd.f32 %v9085, %v9304
    %v9497 = vadd.f32 %v9086, %v9305
    %v9498 = vadd.f32 %v9087, %v9306
    %v9499 = vadd.f32 %v9088, %v9307
    %v9500 = vadd.f32 %v9089, %v9308
    %v9502 = vlaneseq
    %v9503 = vshrl.u32 %v9502, 7
    %v9504 = vsub.s32 0, %v9503
    %v9505 = vrot.slane %v8046, %v9504
    %v9506 = vlaneseq
    %v9507 = vshrl.u32 %v9506, 7
    %v9508 = vsub.s32 1, %v9507
    %v9509 = vrot.slane %v8046, %v9508
    %v9510 = vlaneseq
    %v9511 = vshrl.u32 %v9510, 7
    %v9512 = vsub.s32 2, %v9511
    %v9513 = vrot.slane %v8046, %v9512
    %v9517 = vadd.f32 %v9309, %v9505
    %v9518 = vadd.f32 %v9310, %v9509
    %v9519 = vadd.f32 %v9311, %v9513
    %v9520 = vadd.f32 %v9312, %v9505
    %v9521 = vadd.f32 %v9313, %v9509
    %v9522 = vadd.f32 %v9314, %v9513
    %v9523 = vadd.f32 %v9315, %v9505
    %v9524 = vadd.f32 %v9316, %v9509
    %v9525 = vadd.f32 %v9317, %v9513
    %v9526 = vadd.f32 %v9318, %v9505
    %v9527 = vadd.f32 %v9319, %v9509
    %v9528 = vadd.f32 %v9320, %v9513
    %v9529 = vadd.f32 %v9321, %v9505
    %v9530 = vadd.f32 %v9322, %v9509
    %v9531 = vadd.f32 %v9323, %v9513
    %v9532 = vadd.f32 %v9324, %v9505
    %v9533 = vadd.f32 %v9325, %v9509
    %v9534 = vadd.f32 %v9326, %v9513
    %v9535 = vadd.f32 %v9327, %v9505
    %v9536 = vadd.f32 %v9328, %v9509
    %v9537 = vadd.f32 %v9329, %v9513
    %v9538 = vadd.f32 %v9330, %v9505
    %v9539 = vadd.f32 %v9331, %v9509
    %v9540 = vadd.f32 %v9332, %v9513
    %v9541 = vadd.f32 %v9333, %v9505
    %v9542 = vadd.f32 %v9334, %v9509
    %v9543 = vadd.f32 %v9335, %v9513
    %v9544 = vadd.f32 %v9336, %v9505
    %v9545 = vadd.f32 %v9337, %v9509
    %v9546 = vadd.f32 %v9338, %v9513
    %v9547 = vadd.f32 %v9339, %v9505
    %v9548 = vadd.f32 %v9340, %v9509
    %v9549 = vadd.f32 %v9341, %v9513
    %v9550 = vadd.f32 %v9342, %v9505
    %v9551 = vadd.f32 %v9343, %v9509
    %v9552 = vadd.f32 %v9344, %v9513
    %v9553 = vadd.f32 %v9345, %v9505
    %v9554 = vadd.f32 %v9346, %v9509
    %v9555 = vadd.f32 %v9347, %v9513
    %v9556 = vadd.f32 %v9348, %v9505
    %v9557 = vadd.f32 %v9349, %v9509
    %v9558 = vadd.f32 %v9350, %v9513
    %v9559 = vadd.f32 %v9351, %v9505
    %v9560 = vadd.f32 %v9352, %v9509
    %v9561 = vadd.f32 %v9353, %v9513
    %v9562 = vadd.f32 %v9354, %v9505
    %v9563 = vadd.f32 %v9355, %v9509
    %v9564 = vadd.f32 %v9356, %v9513
    %v9565 = vadd.f32 %v9357, %v9505
    %v9566 = vadd.f32 %v9358, %v9509
    %v9567 = vadd.f32 %v9359, %v9513
    %v9568 = vadd.f32 %v9360, %v9505
    %v9569 = vadd.f32 %v9361, %v9509
    %v9570 = vadd.f32 %v9362, %v9513
    %v9571 = vadd.f32 %v9363, %v9505
    %v9572 = vadd.f32 %v9364, %v9509
    %v9573 = vadd.f32 %v9365, %v9513
    %v9574 = vadd.f32 %v9366, %v9505
    %v9575 = vadd.f32 %v9367, %v9509
    %v9576 = vadd.f32 %v9368, %v9513
    %v9577 = vadd.f32 %v9369, %v9505
    %v9578 = vadd.f32 %v9370, %v9509
    %v9579 = vadd.f32 %v9371, %v9513
    %v9580 = vadd.f32 %v9372, %v9505
    %v9581 = vadd.f32 %v9373, %v9509
    %v9582 = vadd.f32 %v9374, %v9513
    %v9583 = vadd.f32 %v9375, %v9505
    %v9584 = vadd.f32 %v9376, %v9509
    %v9585 = vadd.f32 %v9377, %v9513
    %v9586 = vadd.f32 %v9378, %v9505
    %v9587 = vadd.f32 %v9379, %v9509
    %v9588 = vadd.f32 %v9380, %v9513
    %v9589 = vadd.f32 %v9381, %v9505
    %v9590 = vadd.f32 %v9382, %v9509
    %v9591 = vadd.f32 %v9383, %v9513
    %v9592 = vadd.f32 %v9384, %v9505
    %v9593 = vadd.f32 %v9385, %v9509
    %v9594 = vadd.f32 %v9386, %v9513
    %v9595 = vadd.f32 %v9387, %v9505
    %v9596 = vadd.f32 %v9388, %v9509
    %v9597 = vadd.f32 %v9389, %v9513
    %v9598 = vadd.f32 %v9390, %v9505
    %v9599 = vadd.f32 %v9391, %v9509
    %v9600 = vadd.f32 %v9392, %v9513
    %v9601 = vadd.f32 %v9393, %v9505
    %v9602 = vadd.f32 %v9394, %v9509
    %v9603 = vadd.f32 %v9395, %v9513
    %v9604 = vadd.f32 %v9396, %v9505
    %v9605 = vadd.f32 %v9397, %v9509
    %v9606 = vadd.f32 %v9398, %v9513
    %v9607 = vadd.f32 %v9399, %v9505
    %v9608 = vadd.f32 %v9400, %v9509
    %v9609 = vadd.f32 %v9401, %v9513
    %v9610 = vadd.f32 %v9402, %v9505
    %v9611 = vadd.f32 %v9403, %v9509
    %v9612 = vadd.f32 %v9404, %v9513
    %v9613 = vadd.f32 %v9405, %v9505
    %v9614 = vadd.f32 %v9406, %v9509
    %v9615 = vadd.f32 %v9407, %v9513
    %v9616 = vadd.f32 %v9408, %v9505
    %v9617 = vadd.f32 %v9409, %v9509
    %v9618 = vadd.f32 %v9410, %v9513
    %v9619 = vadd.f32 %v9411, %v9505
    %v9620 = vadd.f32 %v9412, %v9509
    %v9621 = vadd.f32 %v9413, %v9513
    %v9622 = vadd.f32 %v9414, %v9505
    %v9623 = vadd.f32 %v9415, %v9509
    %v9624 = vadd.f32 %v9416, %v9513
    %v9625 = vadd.f32 %v9417, %v9505
    %v9626 = vadd.f32 %v9418, %v9509
    %v9627 = vadd.f32 %v9419, %v9513
    %v9628 = vadd.f32 %v9420, %v9505
    %v9629 = vadd.f32 %v9421, %v9509
    %v9630 = vadd.f32 %v9422, %v9513
    %v9631 = vadd.f32 %v9423, %v9505
    %v9632 = vadd.f32 %v9424, %v9509
    %v9633 = vadd.f32 %v9425, %v9513
    %v9634 = vadd.f32 %v9426, %v9505
    %v9635 = vadd.f32 %v9427, %v9509
    %v9636 = vadd.f32 %v9428, %v9513
    %v9637 = vadd.f32 %v9429, %v9505
    %v9638 = vadd.f32 %v9430, %v9509
    %v9639 = vadd.f32 %v9431, %v9513
    %v9640 = vadd.f32 %v9432, %v9505
    %v9641 = vadd.f32 %v9433, %v9509
    %v9642 = vadd.f32 %v9434, %v9513
    %v9643 = vadd.f32 %v9435, %v9505
    %v9644 = vadd.f32 %v9436, %v9509
    %v9645 = vadd.f32 %v9437, %v9513
    %v9646 = vadd.f32 %v9438, %v9505
    %v9647 = vadd.f32 %v9439, %v9509
    %v9648 = vadd.f32 %v9440, %v9513
    %v9649 = vadd.f32 %v9441, %v9505
    %v9650 = vadd.f32 %v9442, %v9509
    %v9651 = vadd.f32 %v9443, %v9513
    %v9652 = vadd.f32 %v9444, %v9505
    %v9653 = vadd.f32 %v9445, %v9509
    %v9654 = vadd.f32 %v9446, %v9513
    %v9655 = vadd.f32 %v9447, %v9505
    %v9656 = vadd.f32 %v9448, %v9509
    %v9657 = vadd.f32 %v9449, %v9513
    %v9658 = vadd.f32 %v9450, %v9505
    %v9659 = vadd.f32 %v9451, %v9509
    %v9660 = vadd.f32 %v9452, %v9513
    %v9661 = vadd.f32 %v9453, %v9505
    %v9662 = vadd.f32 %v9454, %v9509
    %v9663 = vadd.f32 %v9455, %v9513
    %v9664 = vadd.f32 %v9456, %v9505
    %v9665 = vadd.f32 %v9457, %v9509
    %v9666 = vadd.f32 %v9458, %v9513
    %v9667 = vadd.f32 %v9459, %v9505
    %v9668 = vadd.f32 %v9460, %v9509
    %v9669 = vadd.f32 %v9461, %v9513
    %v9670 = vadd.f32 %v9462, %v9505
    %v9671 = vadd.f32 %v9463, %v9509
    %v9672 = vadd.f32 %v9464, %v9513
    %v9673 = vadd.f32 %v9465, %v9505
    %v9674 = vadd.f32 %v9466, %v9509
    %v9675 = vadd.f32 %v9467, %v9513
    %v9676 = vadd.f32 %v9468, %v9505
    %v9677 = vadd.f32 %v9469, %v9509
    %v9678 = vadd.f32 %v9470, %v9513
    %v9679 = vadd.f32 %v9471, %v9505
    %v9680 = vadd.f32 %v9472, %v9509
    %v9681 = vadd.f32 %v9473, %v9513
    %v9682 = vadd.f32 %v9474, %v9505
    %v9683 = vadd.f32 %v9475, %v9509
    %v9684 = vadd.f32 %v9476, %v9513
    %v9685 = vadd.f32 %v9477, %v9505
    %v9686 = vadd.f32 %v9478, %v9509
    %v9687 = vadd.f32 %v9479, %v9513
    %v9688 = vadd.f32 %v9480, %v9505
    %v9689 = vadd.f32 %v9481, %v9509
    %v9690 = vadd.f32 %v9482, %v9513
    %v9691 = vadd.f32 %v9483, %v9505
    %v9692 = vadd.f32 %v9484, %v9509
    %v9693 = vadd.f32 %v9485, %v9513
    %v9694 = vadd.f32 %v9486, %v9505
    %v9695 = vadd.f32 %v9487, %v9509
    %v9696 = vadd.f32 %v9488, %v9513
    %v9697 = vadd.f32 %v9489, %v9505
    %v9698 = vadd.f32 %v9490, %v9509
    %v9699 = vadd.f32 %v9491, %v9513
    %v9700 = vadd.f32 %v9492, %v9505
    %v9701 = vadd.f32 %v9493, %v9509
    %v9702 = vadd.f32 %v9494, %v9513
    %v9703 = vadd.f32 %v9495, %v9505
    %v9704 = vadd.f32 %v9496, %v9509
    %v9705 = vadd.f32 %v9497, %v9513
    %v9706 = vadd.f32 %v9498, %v9505
    %v9707 = vadd.f32 %v9499, %v9509
    %v9708 = vadd.f32 %v9500, %v9513
    %v9709 = vmax.f32 %v9517, 0.0
    %v9710 = vmax.f32 %v9518, 0.0
    %v9711 = vmax.f32 %v9519, 0.0
    %v9712 = vmax.f32 %v9520, 0.0
    %v9713 = vmax.f32 %v9521, 0.0
    %v9714 = vmax.f32 %v9522, 0.0
    %v9715 = vmax.f32 %v9523, 0.0
    %v9716 = vmax.f32 %v9524, 0.0
    %v9717 = vmax.f32 %v9525, 0.0
    %v9718 = vmax.f32 %v9526, 0.0
    %v9719 = vmax.f32 %v9527, 0.0
    %v9720 = vmax.f32 %v9528, 0.0
    %v9721 = vmax.f32 %v9529, 0.0
    %v9722 = vmax.f32 %v9530, 0.0
    %v9723 = vmax.f32 %v9531, 0.0
    %v9724 = vmax.f32 %v9532, 0.0
    %v9725 = vmax.f32 %v9533, 0.0
    %v9726 = vmax.f32 %v9534, 0.0
    %v9727 = vmax.f32 %v9535, 0.0
    %v9728 = vmax.f32 %v9536, 0.0
    %v9729 = vmax.f32 %v9537, 0.0
    %v9730 = vmax.f32 %v9538, 0.0
    %v9731 = vmax.f32 %v9539, 0.0
    %v9732 = vmax.f32 %v9540, 0.0
    %v9733 = vmax.f32 %v9541, 0.0
    %v9734 = vmax.f32 %v9542, 0.0
    %v9735 = vmax.f32 %v9543, 0.0
    %v9736 = vmax.f32 %v9544, 0.0
    %v9737 = vmax.f32 %v9545, 0.0
    %v9738 = vmax.f32 %v9546, 0.0
    %v9739 = vmax.f32 %v9547, 0.0
    %v9740 = vmax.f32 %v9548, 0.0
    %v9741 = vmax.f32 %v9549, 0.0
    %v9742 = vmax.f32 %v9550, 0.0
    %v9743 = vmax.f32 %v9551, 0.0
    %v9744 = vmax.f32 %v9552, 0.0
    %v9745 = vmax.f32 %v9553, 0.0
    %v9746 = vmax.f32 %v9554, 0.0
    %v9747 = vmax.f32 %v9555, 0.0
    %v9748 = vmax.f32 %v9556, 0.0
    %v9749 = vmax.f32 %v9557, 0.0
    %v9750 = vmax.f32 %v9558, 0.0
    %v9751 = vmax.f32 %v9559, 0.0
    %v9752 = vmax.f32 %v9560, 0.0
    %v9753 = vmax.f32 %v9561, 0.0
    %v9754 = vmax.f32 %v9562, 0.0
    %v9755 = vmax.f32 %v9563, 0.0
    %v9756 = vmax.f32 %v9564, 0.0
    %v9757 = vmax.f32 %v9565, 0.0
    %v9758 = vmax.f32 %v9566, 0.0
    %v9759 = vmax.f32 %v9567, 0.0
    %v9760 = vmax.f32 %v9568, 0.0
    %v9761 = vmax.f32 %v9569, 0.0
    %v9762 = vmax.f32 %v9570, 0.0
    %v9763 = vmax.f32 %v9571, 0.0
    %v9764 = vmax.f32 %v9572, 0.0
    %v9765 = vmax.f32 %v9573, 0.0
    %v9766 = vmax.f32 %v9574, 0.0
    %v9767 = vmax.f32 %v9575, 0.0
    %v9768 = vmax.f32 %v9576, 0.0
    %v9769 = vmax.f32 %v9577, 0.0
    %v9770 = vmax.f32 %v9578, 0.0
    %v9771 = vmax.f32 %v9579, 0.0
    %v9772 = vmax.f32 %v9580, 0.0
    %v9773 = vmax.f32 %v9581, 0.0
    %v9774 = vmax.f32 %v9582, 0.0
    %v9775 = vmax.f32 %v9583, 0.0
    %v9776 = vmax.f32 %v9584, 0.0
    %v9777 = vmax.f32 %v9585, 0.0
    %v9778 = vmax.f32 %v9586, 0.0
    %v9779 = vmax.f32 %v9587, 0.0
    %v9780 = vmax.f32 %v9588, 0.0
    %v9781 = vmax.f32 %v9589, 0.0
    %v9782 = vmax.f32 %v9590, 0.0
    %v9783 = vmax.f32 %v9591, 0.0
    %v9784 = vmax.f32 %v9592, 0.0
    %v9785 = vmax.f32 %v9593, 0.0
    %v9786 = vmax.f32 %v9594, 0.0
    %v9787 = vmax.f32 %v9595, 0.0
    %v9788 = vmax.f32 %v9596, 0.0
    %v9789 = vmax.f32 %v9597, 0.0
    %v9790 = vmax.f32 %v9598, 0.0
    %v9791 = vmax.f32 %v9599, 0.0
    %v9792 = vmax.f32 %v9600, 0.0
    %v9793 = vmax.f32 %v9601, 0.0
    %v9794 = vmax.f32 %v9602, 0.0
    %v9795 = vmax.f32 %v9603, 0.0
    %v9796 = vmax.f32 %v9604, 0.0
    %v9797 = vmax.f32 %v9605, 0.0
    %v9798 = vmax.f32 %v9606, 0.0
    %v9799 = vmax.f32 %v9607, 0.0
    %v9800 = vmax.f32 %v9608, 0.0
    %v9801 = vmax.f32 %v9609, 0.0
    %v9802 = vmax.f32 %v9610, 0.0
    %v9803 = vmax.f32 %v9611, 0.0
    %v9804 = vmax.f32 %v9612, 0.0
    %v9805 = vmax.f32 %v9613, 0.0
    %v9806 = vmax.f32 %v9614, 0.0
    %v9807 = vmax.f32 %v9615, 0.0
    %v9808 = vmax.f32 %v9616, 0.0
    %v9809 = vmax.f32 %v9617, 0.0
    %v9810 = vmax.f32 %v9618, 0.0
    %v9811 = vmax.f32 %v9619, 0.0
    %v9812 = vmax.f32 %v9620, 0.0
    %v9813 = vmax.f32 %v9621, 0.0
    %v9814 = vmax.f32 %v9622, 0.0
    %v9815 = vmax.f32 %v9623, 0.0
    %v9816 = vmax.f32 %v9624, 0.0
    %v9817 = vmax.f32 %v9625, 0.0
    %v9818 = vmax.f32 %v9626, 0.0
    %v9819 = vmax.f32 %v9627, 0.0
    %v9820 = vmax.f32 %v9628, 0.0
    %v9821 = vmax.f32 %v9629, 0.0
    %v9822 = vmax.f32 %v9630, 0.0
    %v9823 = vmax.f32 %v9631, 0.0
    %v9824 = vmax.f32 %v9632, 0.0
    %v9825 = vmax.f32 %v9633, 0.0
    %v9826 = vmax.f32 %v9634, 0.0
    %v9827 = vmax.f32 %v9635, 0.0
    %v9828 = vmax.f32 %v9636, 0.0
    %v9829 = vmax.f32 %v9637, 0.0
    %v9830 = vmax.f32 %v9638, 0.0
    %v9831 = vmax.f32 %v9639, 0.0
    %v9832 = vmax.f32 %v9640, 0.0
    %v9833 = vmax.f32 %v9641, 0.0
    %v9834 = vmax.f32 %v9642, 0.0
    %v9835 = vmax.f32 %v9643, 0.0
    %v9836 = vmax.f32 %v9644, 0.0
    %v9837 = vmax.f32 %v9645, 0.0
    %v9838 = vmax.f32 %v9646, 0.0
    %v9839 = vmax.f32 %v9647, 0.0
    %v9840 = vmax.f32 %v9648, 0.0
    %v9841 = vmax.f32 %v9649, 0.0
    %v9842 = vmax.f32 %v9650, 0.0
    %v9843 = vmax.f32 %v9651, 0.0
    %v9844 = vmax.f32 %v9652, 0.0
    %v9845 = vmax.f32 %v9653, 0.0
    %v9846 = vmax.f32 %v9654, 0.0
    %v9847 = vmax.f32 %v9655, 0.0
    %v9848 = vmax.f32 %v9656, 0.0
    %v9849 = vmax.f32 %v9657, 0.0
    %v9850 = vmax.f32 %v9658, 0.0
    %v9851 = vmax.f32 %v9659, 0.0
    %v9852 = vmax.f32 %v9660, 0.0
    %v9853 = vmax.f32 %v9661, 0.0
    %v9854 = vmax.f32 %v9662, 0.0
    %v9855 = vmax.f32 %v9663, 0.0
    %v9856 = vmax.f32 %v9664, 0.0
    %v9857 = vmax.f32 %v9665, 0.0
    %v9858 = vmax.f32 %v9666, 0.0
    %v9859 = vmax.f32 %v9667, 0.0
    %v9860 = vmax.f32 %v9668, 0.0
    %v9861 = vmax.f32 %v9669, 0.0
    %v9862 = vmax.f32 %v9670, 0.0
    %v9863 = vmax.f32 %v9671, 0.0
    %v9864 = vmax.f32 %v9672, 0.0
    %v9865 = vmax.f32 %v9673, 0.0
    %v9866 = vmax.f32 %v9674, 0.0
    %v9867 = vmax.f32 %v9675, 0.0
    %v9868 = vmax.f32 %v9676, 0.0
    %v9869 = vmax.f32 %v9677, 0.0
    %v9870 = vmax.f32 %v9678, 0.0
    %v9871 = vmax.f32 %v9679, 0.0
    %v9872 = vmax.f32 %v9680, 0.0
    %v9873 = vmax.f32 %v9681, 0.0
    %v9874 = vmax.f32 %v9682, 0.0
    %v9875 = vmax.f32 %v9683, 0.0
    %v9876 = vmax.f32 %v9684, 0.0
    %v9877 = vmax.f32 %v9685, 0.0
    %v9878 = vmax.f32 %v9686, 0.0
    %v9879 = vmax.f32 %v9687, 0.0
    %v9880 = vmax.f32 %v9688, 0.0
    %v9881 = vmax.f32 %v9689, 0.0
    %v9882 = vmax.f32 %v9690, 0.0
    %v9883 = vmax.f32 %v9691, 0.0
    %v9884 = vmax.f32 %v9692, 0.0
    %v9885 = vmax.f32 %v9693, 0.0
    %v9886 = vmax.f32 %v9694, 0.0
    %v9887 = vmax.f32 %v9695, 0.0
    %v9888 = vmax.f32 %v9696, 0.0
    %v9889 = vmax.f32 %v9697, 0.0
    %v9890 = vmax.f32 %v9698, 0.0
    %v9891 = vmax.f32 %v9699, 0.0
    %v9892 = vmax.f32 %v9700, 0.0
    %v9893 = vmax.f32 %v9701, 0.0
    %v9894 = vmax.f32 %v9702, 0.0
    %v9895 = vmax.f32 %v9703, 0.0
    %v9896 = vmax.f32 %v9704, 0.0
    %v9897 = vmax.f32 %v9705, 0.0
    %v9898 = vmax.f32 %v9706, 0.0
    %v9899 = vmax.f32 %v9707, 0.0
    %v9900 = vmax.f32 %v9708, 0.0
    %v9901 = vadd.f32 %v9709, %v9712
    %v9902 = vadd.f32 %v9901, %v9715
    %v9903 = vadd.f32 %v9902, %v9718
    %v9904 = vadd.f32 %v9903, %v9721
    %v9905 = vadd.f32 %v9904, %v9724
    %v9906 = vadd.f32 %v9905, %v9727
    %v9907 = vadd.f32 %v9906, %v9730
    %v9908 = vadd.f32 %v9907, %v9733
    %v9909 = vadd.f32 %v9908, %v9736
    %v9910 = vadd.f32 %v9909, %v9739
    %v9911 = vadd.f32 %v9910, %v9742
    %v9912 = vadd.f32 %v9911, %v9745
    %v9913 = vadd.f32 %v9912, %v9748
    %v9914 = vadd.f32 %v9913, %v9751
    %v9915 = vadd.f32 %v9914, %v9754
    %v9916 = vadd.f32 %v9915, %v9757
    %v9917 = vadd.f32 %v9916, %v9760
    %v9918 = vadd.f32 %v9917, %v9763
    %v9919 = vadd.f32 %v9918, %v9766
    %v9920 = vadd.f32 %v9919, %v9769
    %v9921 = vadd.f32 %v9920, %v9772
    %v9922 = vadd.f32 %v9921, %v9775
    %v9923 = vadd.f32 %v9922, %v9778
    %v9924 = vadd.f32 %v9923, %v9781
    %v9925 = vadd.f32 %v9924, %v9784
    %v9926 = vadd.f32 %v9925, %v9787
    %v9927 = vadd.f32 %v9926, %v9790
    %v9928 = vadd.f32 %v9927, %v9793
    %v9929 = vadd.f32 %v9928, %v9796
    %v9930 = vadd.f32 %v9929, %v9799
    %v9931 = vadd.f32 %v9930, %v9802
    %v9932 = vrot.slane %v9931, 4
    %v9933 = vadd.f32 %v9931, %v9932
    %v9934 = vrot.slane %v9933, 2
    %v9935 = vadd.f32 %v9933, %v9934
    %v9936 = vrot.slane %v9935, 1
    %v9937 = vadd.f32 %v9935, %v9936
    %v9938 = vadd.f32 %v9710, %v9713
    %v9939 = vadd.f32 %v9938, %v9716
    %v9940 = vadd.f32 %v9939, %v9719
    %v9941 = vadd.f32 %v9940, %v9722
    %v9942 = vadd.f32 %v9941, %v9725
    %v9943 = vadd.f32 %v9942, %v9728
    %v9944 = vadd.f32 %v9943, %v9731
    %v9945 = vadd.f32 %v9944, %v9734
    %v9946 = vadd.f32 %v9945, %v9737
    %v9947 = vadd.f32 %v9946, %v9740
    %v9948 = vadd.f32 %v9947, %v9743
    %v9949 = vadd.f32 %v9948, %v9746
    %v9950 = vadd.f32 %v9949, %v9749
    %v9951 = vadd.f32 %v9950, %v9752
    %v9952 = vadd.f32 %v9951, %v9755
    %v9953 = vadd.f32 %v9952, %v9758
    %v9954 = vadd.f32 %v9953, %v9761
    %v9955 = vadd.f32 %v9954, %v9764
    %v9956 = vadd.f32 %v9955, %v9767
    %v9957 = vadd.f32 %v9956, %v9770
    %v9958 = vadd.f32 %v9957, %v9773
    %v9959 = vadd.f32 %v9958, %v9776
    %v9960 = vadd.f32 %v9959, %v9779
    %v9961 = vadd.f32 %v9960, %v9782
    %v9962 = vadd.f32 %v9961, %v9785
    %v9963 = vadd.f32 %v9962, %v9788
    %v9964 = vadd.f32 %v9963, %v9791
    %v9965 = vadd.f32 %v9964, %v9794
    %v9966 = vadd.f32 %v9965, %v9797
    %v9967 = vadd.f32 %v9966, %v9800
    %v9968 = vadd.f32 %v9967, %v9803
    %v9969 = vrot.slane %v9968, 4
    %v9970 = vadd.f32 %v9968, %v9969
    %v9971 = vrot.slane %v9970, 2
    %v9972 = vadd.f32 %v9970, %v9971
    %v9973 = vrot.slane %v9972, 1
    %v9974 = vadd.f32 %v9972, %v9973
    %v9975 = vadd.f32 %v9711, %v9714
    %v9976 = vadd.f32 %v9975, %v9717
    %v9977 = vadd.f32 %v9976, %v9720
    %v9978 = vadd.f32 %v9977, %v9723
    %v9979 = vadd.f32 %v9978, %v9726
    %v9980 = vadd.f32 %v9979, %v9729
    %v9981 = vadd.f32 %v9980, %v9732
    %v9982 = vadd.f32 %v9981, %v9735
    %v9983 = vadd.f32 %v9982, %v9738
    %v9984 = vadd.f32 %v9983, %v9741
    %v9985 = vadd.f32 %v9984, %v9744
    %v9986 = vadd.f32 %v9985, %v9747
    %v9987 = vadd.f32 %v9986, %v9750
    %v9988 = vadd.f32 %v9987, %v9753
    %v9989 = vadd.f32 %v9988, %v9756
    %v9990 = vadd.f32 %v9989, %v9759
    %v9991 = vadd.f32 %v9990, %v9762
    %v9992 = vadd.f32 %v9991, %v9765
    %v9993 = vadd.f32 %v9992, %v9768
    %v9994 = vadd.f32 %v9993, %v9771
    %v9995 = vadd.f32 %v9994, %v9774
    %v9996 = vadd.f32 %v9995, %v9777
    %v9997 = vadd.f32 %v9996, %v9780
    %v9998 = vadd.f32 %v9997, %v9783
    %v9999 = vadd.f32 %v9998, %v9786
    %v10000 = vadd.f32 %v9999, %v9789
    %v10001 = vadd.f32 %v10000, %v9792
    %v10002 = vadd.f32 %v10001, %v9795
    %v10003 = vadd.f32 %v10002, %v9798
    %v10004 = vadd.f32 %v10003, %v9801
    %v10005 = vadd.f32 %v10004, %v9804
    %v10006 = vrot.slane %v10005, 4
    %v10007 = vadd.f32 %v10005, %v10006
    %v10008 = vrot.slane %v10007, 2
    %v10009 = vadd.f32 %v10007, %v10008
    %v10010 = vrot.slane %v10009, 1
    %v10011 = vadd.f32 %v10009, %v10010
    %v10012 = vadd.f32 %v9805, %v9808
    %v10013 = vadd.f32 %v10012, %v9811
    %v10014 = vadd.f32 %v10013, %v9814
    %v10015 = vadd.f32 %v10014, %v9817
    %v10016 = vadd.f32 %v10015, %v9820
    %v10017 = vadd.f32 %v10016, %v9823
    %v10018 = vadd.f32 %v10017, %v9826
    %v10019 = vadd.f32 %v10018, %v9829
    %v10020 = vadd.f32 %v10019, %v9832
    %v10021 = vadd.f32 %v10020, %v9835
    %v10022 = vadd.f32 %v10021, %v9838
    %v10023 = vadd.f32 %v10022, %v9841
    %v10024 = vadd.f32 %v10023, %v9844
    %v10025 = vadd.f32 %v10024, %v9847
    %v10026 = vadd.f32 %v10025, %v9850
    %v10027 = vadd.f32 %v10026, %v9853
    %v10028 = vadd.f32 %v10027, %v9856
    %v10029 = vadd.f32 %v10028, %v9859
    %v10030 = vadd.f32 %v10029, %v9862
    %v10031 = vadd.f32 %v10030, %v9865
    %v10032 = vadd.f32 %v10031, %v9868
    %v10033 = vadd.f32 %v10032, %v9871
    %v10034 = vadd.f32 %v10033, %v9874
    %v10035 = vadd.f32 %v10034, %v9877
    %v10036 = vadd.f32 %v10035, %v9880
    %v10037 = vadd.f32 %v10036, %v9883
    %v10038 = vadd.f32 %v10037, %v9886
    %v10039 = vadd.f32 %v10038, %v9889
    %v10040 = vadd.f32 %v10039, %v9892
    %v10041 = vadd.f32 %v10040, %v9895
    %v10042 = vadd.f32 %v10041, %v9898
    %v10043 = vrot.slane %v10042, 4
    %v10044 = vadd.f32 %v10042, %v10043
    %v10045 = vrot.slane %v10044, 2
    %v10046 = vadd.f32 %v10044, %v10045
    %v10047 = vrot.slane %v10046, 1
    %v10048 = vadd.f32 %v10046, %v10047
    %v10049 = vadd.f32 %v9806, %v9809
    %v10050 = vadd.f32 %v10049, %v9812
    %v10051 = vadd.f32 %v10050, %v9815
    %v10052 = vadd.f32 %v10051, %v9818
    %v10053 = vadd.f32 %v10052, %v9821
    %v10054 = vadd.f32 %v10053, %v9824
    %v10055 = vadd.f32 %v10054, %v9827
    %v10056 = vadd.f32 %v10055, %v9830
    %v10057 = vadd.f32 %v10056, %v9833
    %v10058 = vadd.f32 %v10057, %v9836
    %v10059 = vadd.f32 %v10058, %v9839
    %v10060 = vadd.f32 %v10059, %v9842
    %v10061 = vadd.f32 %v10060, %v9845
    %v10062 = vadd.f32 %v10061, %v9848
    %v10063 = vadd.f32 %v10062, %v9851
    %v10064 = vadd.f32 %v10063, %v9854
    %v10065 = vadd.f32 %v10064, %v9857
    %v10066 = vadd.f32 %v10065, %v9860
    %v10067 = vadd.f32 %v10066, %v9863
    %v10068 = vadd.f32 %v10067, %v9866
    %v10069 = vadd.f32 %v10068, %v9869
    %v10070 = vadd.f32 %v10069, %v9872
    %v10071 = vadd.f32 %v10070, %v9875
    %v10072 = vadd.f32 %v10071, %v9878
    %v10073 = vadd.f32 %v10072, %v9881
    %v10074 = vadd.f32 %v10073, %v9884
    %v10075 = vadd.f32 %v10074, %v9887
    %v10076 = vadd.f32 %v10075, %v9890
    %v10077 = vadd.f32 %v10076, %v9893
    %v10078 = vadd.f32 %v10077, %v9896
    %v10079 = vadd.f32 %v10078, %v9899
    %v10080 = vrot.slane %v10079, 4
    %v10081 = vadd.f32 %v10079, %v10080
    %v10082 = vrot.slane %v10081, 2
    %v10083 = vadd.f32 %v10081, %v10082
    %v10084 = vrot.slane %v10083, 1
    %v10085 = vadd.f32 %v10083, %v10084
    %v10086 = vadd.f32 %v9807, %v9810
    %v10087 = vadd.f32 %v10086, %v9813
    %v10088 = vadd.f32 %v10087, %v9816
    %v10089 = vadd.f32 %v10088, %v9819
    %v10090 = vadd.f32 %v10089, %v9822
    %v10091 = vadd.f32 %v10090, %v9825
    %v10092 = vadd.f32 %v10091, %v9828
    %v10093 = vadd.f32 %v10092, %v9831
    %v10094 = vadd.f32 %v10093, %v9834
    %v10095 = vadd.f32 %v10094, %v9837
    %v10096 = vadd.f32 %v10095, %v9840
    %v10097 = vadd.f32 %v10096, %v9843
    %v10098 = vadd.f32 %v10097, %v9846
    %v10099 = vadd.f32 %v10098, %v9849
    %v10100 = vadd.f32 %v10099, %v9852
    %v10101 = vadd.f32 %v10100, %v9855
    %v10102 = vadd.f32 %v10101, %v9858
    %v10103 = vadd.f32 %v10102, %v9861
    %v10104 = vadd.f32 %v10103, %v9864
    %v10105 = vadd.f32 %v10104, %v9867
    %v10106 = vadd.f32 %v10105, %v9870
    %v10107 = vadd.f32 %v10106, %v9873
    %v10108 = vadd.f32 %v10107, %v9876
    %v10109 = vadd.f32 %v10108, %v9879
    %v10110 = vadd.f32 %v10109, %v9882
    %v10111 = vadd.f32 %v10110, %v9885
    %v10112 = vadd.f32 %v10111, %v9888
    %v10113 = vadd.f32 %v10112, %v9891
    %v10114 = vadd.f32 %v10113, %v9894
    %v10115 = vadd.f32 %v10114, %v9897
    %v10116 = vadd.f32 %v10115, %v9900
    %v10117 = vrot.slane %v10116, 4
    %v10118 = vadd.f32 %v10116, %v10117
    %v10119 = vrot.slane %v10118, 2
    %v10120 = vadd.f32 %v10118, %v10119
    %v10121 = vrot.slane %v10120, 1
    %v10122 = vadd.f32 %v10120, %v10121
    %v10123 = vmul.f32 %v9937, 0.00390625
    %v10124 = vmul.f32 %v9974, 0.00390625
    %v10125 = vmul.f32 %v10011, 0.00390625
    %v10126 = vmul.f32 %v10048, 0.00390625
    %v10127 = vmul.f32 %v10085, 0.00390625
    %v10128 = vmul.f32 %v10122, 0.00390625
    %v10129 = vld [vmem:[#allocation2 + $0x480] sm:$0xff]
    %v10130 = vld [vmem:[#allocation2 + $0x488] sm:$0xff]
    %v10131 = vld [vmem:[#allocation2 + $0x490] sm:$0xff]
    %v10132 = vld [vmem:[#allocation2 + $0x498] sm:$0xff]
    %v10133 = vld [vmem:[#allocation2 + $0x4a0] sm:$0xff]
    %v10134 = vld [vmem:[#allocation2 + $0x4a8] sm:$0xff]
    %v10135 = vld [vmem:[#allocation2 + $0x4b0] sm:$0xff]
    %v10136 = vld [vmem:[#allocation2 + $0x4b8] sm:$0xff]
    %v10137 = vld [vmem:[#allocation2 + $0x4c0] sm:$0xff]
    %v10138 = vld [vmem:[#allocation2 + $0x4c8] sm:$0xff]
    %v10139 = vld [vmem:[#allocation2 + $0x4d0] sm:$0xff]
    %v10140 = vld [vmem:[#allocation2 + $0x4d8] sm:$0xff]
    %v10141 = vld [vmem:[#allocation2 + $0x4e0] sm:$0xff]
    %v10142 = vld [vmem:[#allocation2 + $0x4e8] sm:$0xff]
    %v10143 = vld [vmem:[#allocation2 + $0x4f0] sm:$0xff]
    %v10144 = vld [vmem:[#allocation2 + $0x4f8] sm:$0xff]
    %v10145 = vld [vmem:[#allocation2 + $0x500] sm:$0xff]
    %v10146 = vld [vmem:[#allocation2 + $0x508] sm:$0xff]
    %v10147 = vld [vmem:[#allocation2 + $0x510] sm:$0xff]
    %v10148 = vld [vmem:[#allocation2 + $0x518] sm:$0xff]
    %v10149 = vld [vmem:[#allocation2 + $0x520] sm:$0xff]
    %v10150 = vld [vmem:[#allocation2 + $0x528] sm:$0xff]
    %v10151 = vld [vmem:[#allocation2 + $0x530] sm:$0xff]
    %v10152 = vld [vmem:[#allocation2 + $0x538] sm:$0xff]
    %v10153 = vld [vmem:[#allocation2 + $0x540] sm:$0xff]
    %v10154 = vld [vmem:[#allocation2 + $0x548] sm:$0xff]
    %v10155 = vld [vmem:[#allocation2 + $0x550] sm:$0xff]
    %v10156 = vld [vmem:[#allocation2 + $0x558] sm:$0xff]
    %v10157 = vld [vmem:[#allocation2 + $0x560] sm:$0xff]
    %v10158 = vld [vmem:[#allocation2 + $0x568] sm:$0xff]
    %v10159 = vld [vmem:[#allocation2 + $0x570] sm:$0xff]
    %v10160 = vld [vmem:[#allocation2 + $0x578] sm:$0xff]
    %v10161 = vld [vmem:[#allocation2 + $0x580] sm:$0xff]
    %v10162 = vld [vmem:[#allocation2 + $0x588] sm:$0xff]
    %v10163 = vld [vmem:[#allocation2 + $0x590] sm:$0xff]
    %v10164 = vld [vmem:[#allocation2 + $0x598] sm:$0xff]
    %v10165 = vld [vmem:[#allocation2 + $0x5a0] sm:$0xff]
    %v10166 = vld [vmem:[#allocation2 + $0x5a8] sm:$0xff]
    %v10167 = vld [vmem:[#allocation2 + $0x5b0] sm:$0xff]
    %v10168 = vld [vmem:[#allocation2 + $0x5b8] sm:$0xff]
    %v10169 = vld [vmem:[#allocation2 + $0x5c0] sm:$0xff]
    %v10170 = vld [vmem:[#allocation2 + $0x5c8] sm:$0xff]
    %v10171 = vld [vmem:[#allocation2 + $0x5d0] sm:$0xff]
    %v10172 = vld [vmem:[#allocation2 + $0x5d8] sm:$0xff]
    %v10173 = vld [vmem:[#allocation2 + $0x5e0] sm:$0xff]
    %v10174 = vld [vmem:[#allocation2 + $0x5e8] sm:$0xff]
    %v10175 = vld [vmem:[#allocation2 + $0x5f0] sm:$0xff]
    %v10176 = vld [vmem:[#allocation2 + $0x5f8] sm:$0xff]
    %v10183 = vsel %vm5459, %v10126, %v10123
    %v10184 = vsel %vm5459, %v10127, %v10124
    %v10185 = vsel %vm5459, %v10128, %v10125
    %10189 = vmatprep.subr.mxu0 0.0
    %10190 = vmatpush1.msra.mxu0 %v10129
    %10191 = vmatprep.subr.mxu0 0.0
    %10192 = vmatpush1.msra.mxu0 %v10130
    %10193 = vmatprep.subr.mxu0 0.0
    %10194 = vmatpush1.msra.mxu0 %v10131
    %10195 = vmatprep.subr.mxu0 0.0
    %10196 = vmatpush1.msra.mxu0 %v10132
    %10197 = vmatprep.subr.mxu0 0.0
    %10198 = vmatpush1.msra.mxu0 %v10133
    %10199 = vmatprep.subr.mxu0 0.0
    %10200 = vmatpush1.msra.mxu0 %v10134
    %10201 = vmatprep.subr.mxu0 0.0
    %10202 = vmatpush1.msra.mxu0 %v10135
    %10203 = vmatprep.subr.mxu0 0.0
    %10204 = vmatpush1.msra.mxu0 %v10136
    %10205 = vmatprep.subr.mxu0 0.0
    %10206 = vmatpush1.msra.mxu0 %v10137
    %10207 = vmatprep.subr.mxu0 0.0
    %10208 = vmatpush1.msra.mxu0 %v10138
    %10209 = vmatprep.subr.mxu0 0.0
    %10210 = vmatpush1.msra.mxu0 %v10139
    %10211 = vmatprep.subr.mxu0 0.0
    %10212 = vmatpush1.msra.mxu0 %v10140
    %10213 = vmatprep.subr.mxu0 0.0
    %10214 = vmatpush1.msra.mxu0 %v10141
    %10215 = vmatprep.subr.mxu0 0.0
    %10216 = vmatpush1.msra.mxu0 %v10142
    %10217 = vmatprep.subr.mxu0 0.0
    %10218 = vmatpush1.msra.mxu0 %v10143
    %10219 = vmatprep.subr.mxu0 0.0
    %10220 = vmatpush1.msra.mxu0 %v10144
    %10221 = vmatprep.subr.mxu0 0.0
    %10222 = vmatpush1.msra.mxu0 %v10145
    %10223 = vmatprep.subr.mxu0 0.0
    %10224 = vmatpush1.msra.mxu0 %v10146
    %10225 = vmatprep.subr.mxu0 0.0
    %10226 = vmatpush1.msra.mxu0 %v10147
    %10227 = vmatprep.subr.mxu0 0.0
    %10228 = vmatpush1.msra.mxu0 %v10148
    %10229 = vmatprep.subr.mxu0 0.0
    %10230 = vmatpush1.msra.mxu0 %v10149
    %10231 = vmatprep.subr.mxu0 0.0
    %10232 = vmatpush1.msra.mxu0 %v10150
    %10233 = vmatprep.subr.mxu0 0.0
    %10234 = vmatpush1.msra.mxu0 %v10151
    %10235 = vmatprep.subr.mxu0 0.0
    %10236 = vmatpush1.msra.mxu0 %v10152
    %10237 = vmatprep.subr.mxu0 0.0
    %10238 = vmatpush1.msra.mxu0 %v10153
    %10239 = vmatprep.subr.mxu0 0.0
    %10240 = vmatpush1.msra.mxu0 %v10154
    %10241 = vmatprep.subr.mxu0 0.0
    %10242 = vmatpush1.msra.mxu0 %v10155
    %10243 = vmatprep.subr.mxu0 0.0
    %10244 = vmatpush1.msra.mxu0 %v10156
    %10245 = vmatprep.subr.mxu0 0.0
    %10246 = vmatpush1.msra.mxu0 %v10157
    %10247 = vmatprep.subr.mxu0 0.0
    %10248 = vmatpush1.msra.mxu0 %v10158
    %10249 = vmatprep.subr.mxu0 0.0
    %10250 = vmatpush1.msra.mxu0 %v10159
    %10251 = vmatprep.subr.mxu0 0.0
    %10252 = vmatpush1.msra.mxu0 %v10160
    %10253 = vmatprep.mubr.f32.mxu0 %v10184
    %10254 = vmatmul.mubr.f32.gmra.mrb[0].mxu0 %v10183
    %v10255 = vpop.f32.mrb[0].mxu0
    %v10256 = vadd.f32 0.0, %v10255
    %v10257 = vpop.f32.mrb[0].mxu0
    %10258 = vdwg.mxu0
    %10259 = vmatprep.subr.mxu0 0.0
    %10260 = vmatpush1.msra.mxu0 %v10161
    %10261 = vmatprep.subr.mxu0 0.0
    %10262 = vmatpush1.msra.mxu0 %v10162
    %10263 = vmatprep.subr.mxu0 0.0
    %10264 = vmatpush1.msra.mxu0 %v10163
    %10265 = vmatprep.subr.mxu0 0.0
    %10266 = vmatpush1.msra.mxu0 %v10164
    %10267 = vmatprep.subr.mxu0 0.0
    %10268 = vmatpush1.msra.mxu0 %v10165
    %10269 = vmatprep.subr.mxu0 0.0
    %10270 = vmatpush1.msra.mxu0 %v10166
    %10271 = vmatprep.subr.mxu0 0.0
    %10272 = vmatpush1.msra.mxu0 %v10167
    %10273 = vmatprep.subr.mxu0 0.0
    %10274 = vmatpush1.msra.mxu0 %v10168
    %10275 = vmatprep.subr.mxu0 0.0
    %10276 = vmatpush1.msra.mxu0 %v10169
    %10277 = vmatprep.subr.mxu0 0.0
    %10278 = vmatpush1.msra.mxu0 %v10170
    %10279 = vmatprep.subr.mxu0 0.0
    %10280 = vmatpush1.msra.mxu0 %v10171
    %10281 = vmatprep.subr.mxu0 0.0
    %10282 = vmatpush1.msra.mxu0 %v10172
    %10283 = vmatprep.subr.mxu0 0.0
    %10284 = vmatpush1.msra.mxu0 %v10173
    %10285 = vmatprep.subr.mxu0 0.0
    %10286 = vmatpush1.msra.mxu0 %v10174
    %10287 = vmatprep.subr.mxu0 0.0
    %10288 = vmatpush1.msra.mxu0 %v10175
    %10289 = vmatprep.subr.mxu0 0.0
    %10290 = vmatpush1.msra.mxu0 %v10176
    %10291 = vmatprep.subr.mxu0 0.0
    %10292 = vmatpush1.msra.mxu0 0.0
    %10293 = vmatprep.subr.mxu0 0.0
    %10294 = vmatpush1.msra.mxu0 0.0
    %10295 = vmatprep.subr.mxu0 0.0
    %10296 = vmatpush1.msra.mxu0 0.0
    %10297 = vmatprep.subr.mxu0 0.0
    %10298 = vmatpush1.msra.mxu0 0.0
    %10299 = vmatprep.subr.mxu0 0.0
    %10300 = vmatpush1.msra.mxu0 0.0
    %10301 = vmatprep.subr.mxu0 0.0
    %10302 = vmatpush1.msra.mxu0 0.0
    %10303 = vmatprep.subr.mxu0 0.0
    %10304 = vmatpush1.msra.mxu0 0.0
    %10305 = vmatprep.subr.mxu0 0.0
    %10306 = vmatpush1.msra.mxu0 0.0
    %10307 = vmatprep.subr.mxu0 0.0
    %10308 = vmatpush1.msra.mxu0 0.0
    %10309 = vmatprep.subr.mxu0 0.0
    %10310 = vmatpush1.msra.mxu0 0.0
    %10311 = vmatprep.subr.mxu0 0.0
    %10312 = vmatpush1.msra.mxu0 0.0
    %10313 = vmatprep.subr.mxu0 0.0
    %10314 = vmatpush1.msra.mxu0 0.0
    %10315 = vmatprep.subr.mxu0 0.0
    %10316 = vmatpush1.msra.mxu0 0.0
    %10317 = vmatprep.subr.mxu0 0.0
    %10318 = vmatpush1.msra.mxu0 0.0
    %10319 = vmatprep.subr.mxu0 0.0
    %10320 = vmatpush1.msra.mxu0 0.0
    %10321 = vmatprep.subr.mxu0 0.0
    %10322 = vmatpush1.msra.mxu0 0.0
    %10323 = vmatprep.mubr.f32.mxu0 0.0
    %10324 = vmatmul.mubr.f32.gmra.mrb[0].mxu0 %v10185
    %v10325 = vpop.f32.mrb[0].mxu0
    %v10326 = vadd.f32 %v10256, %v10325
    %v10327 = vpop.f32.mrb[0].mxu0
    %10328 = vdwg.mxu0
    %v10329 = vadd.f32 %v8043, %v10326
    %v10330 = vld [vmem:[%s1 + $0x30] sm:$0xff]
    %v10331 = vld [vmem:[%s1 + $0x38] sm:$0xf]
    %v10332 = vld [vmem:[%s2 + $0xc] sm:$0x7]
    %v10335 = vlaneseq
    %v10336 = vshrl.u32 %v10335, 7
    %v10337 = vsub.s32 0, %v10336
    %v10338 = vrot.slane %v10330, %v10337
    %v10339 = vlaneseq
    %v10340 = vshrl.u32 %v10339, 7
    %v10341 = vsub.s32 4, %v10340
    %v10342 = vrot.slane %v10330, %v10341
    %v10343 = vlaneseq
    %v10344 = vshrl.u32 %v10343, 7
    %v10345 = vsub.s32 0, %v10344
    %v10346 = vrot.slane %v10331, %v10345
    %v10350 = vlaneseq
    %v10351 = vshrl.u32 %v10350, 7
    %v10352 = vsub.s32 0, %v10351
    %v10353 = vrot.slane %v10338, %v10352
    %v10354 = vlaneseq
    %v10355 = vshrl.u32 %v10354, 7
    %v10356 = vsub.s32 0, %v10355
    %v10357 = vrot.slane %v10342, %v10356
    %v10358 = vlaneseq
    %v10359 = vshrl.u32 %v10358, 7
    %v10360 = vsub.s32 0, %v10359
    %v10361 = vrot.slane %v10346, %v10360
    %v10362 = vmul.f32 %v105, %v10353
    %v10363 = vmul.f32 %v105, %v10357
    %v10364 = vmul.f32 %v105, %v10361
    %v10365 = vmul.f32 %v110, %v10353
    %v10366 = vmul.f32 %v110, %v10357
    %v10367 = vmul.f32 %v110, %v10361
    %v10368 = vmul.f32 %v115, %v10353
    %v10369 = vmul.f32 %v115, %v10357
    %v10370 = vmul.f32 %v115, %v10361
    %v10371 = vmul.f32 %v120, %v10353
    %v10372 = vmul.f32 %v120, %v10357
    %v10373 = vmul.f32 %v120, %v10361
    %v10374 = vmul.f32 %v125, %v10353
    %v10375 = vmul.f32 %v125, %v10357
    %v10376 = vmul.f32 %v125, %v10361
    %v10377 = vmul.f32 %v130, %v10353
    %v10378 = vmul.f32 %v130, %v10357
    %v10379 = vmul.f32 %v130, %v10361
    %v10380 = vmul.f32 %v135, %v10353
    %v10381 = vmul.f32 %v135, %v10357
    %v10382 = vmul.f32 %v135, %v10361
    %v10383 = vmul.f32 %v140, %v10353
    %v10384 = vmul.f32 %v140, %v10357
    %v10385 = vmul.f32 %v140, %v10361
    %v10386 = vmul.f32 %v145, %v10353
    %v10387 = vmul.f32 %v145, %v10357
    %v10388 = vmul.f32 %v145, %v10361
    %v10389 = vmul.f32 %v150, %v10353
    %v10390 = vmul.f32 %v150, %v10357
    %v10391 = vmul.f32 %v150, %v10361
    %v10392 = vmul.f32 %v155, %v10353
    %v10393 = vmul.f32 %v155, %v10357
    %v10394 = vmul.f32 %v155, %v10361
    %v10395 = vmul.f32 %v160, %v10353
    %v10396 = vmul.f32 %v160, %v10357
    %v10397 = vmul.f32 %v160, %v10361
    %v10398 = vmul.f32 %v165, %v10353
    %v10399 = vmul.f32 %v165, %v10357
    %v10400 = vmul.f32 %v165, %v10361
    %v10401 = vmul.f32 %v170, %v10353
    %v10402 = vmul.f32 %v170, %v10357
    %v10403 = vmul.f32 %v170, %v10361
    %v10404 = vmul.f32 %v175, %v10353
    %v10405 = vmul.f32 %v175, %v10357
    %v10406 = vmul.f32 %v175, %v10361
    %v10407 = vmul.f32 %v180, %v10353
    %v10408 = vmul.f32 %v180, %v10357
    %v10409 = vmul.f32 %v180, %v10361
    %v10410 = vmul.f32 %v185, %v10353
    %v10411 = vmul.f32 %v185, %v10357
    %v10412 = vmul.f32 %v185, %v10361
    %v10413 = vmul.f32 %v190, %v10353
    %v10414 = vmul.f32 %v190, %v10357
    %v10415 = vmul.f32 %v190, %v10361
    %v10416 = vmul.f32 %v195, %v10353
    %v10417 = vmul.f32 %v195, %v10357
    %v10418 = vmul.f32 %v195, %v10361
    %v10419 = vmul.f32 %v200, %v10353
    %v10420 = vmul.f32 %v200, %v10357
    %v10421 = vmul.f32 %v200, %v10361
    %v10422 = vmul.f32 %v205, %v10353
    %v10423 = vmul.f32 %v205, %v10357
    %v10424 = vmul.f32 %v205, %v10361
    %v10425 = vmul.f32 %v210, %v10353
    %v10426 = vmul.f32 %v210, %v10357
    %v10427 = vmul.f32 %v210, %v10361
    %v10428 = vmul.f32 %v215, %v10353
    %v10429 = vmul.f32 %v215, %v10357
    %v10430 = vmul.f32 %v215, %v10361
    %v10431 = vmul.f32 %v220, %v10353
    %v10432 = vmul.f32 %v220, %v10357
    %v10433 = vmul.f32 %v220, %v10361
    %v10434 = vmul.f32 %v225, %v10353
    %v10435 = vmul.f32 %v225, %v10357
    %v10436 = vmul.f32 %v225, %v10361
    %v10437 = vmul.f32 %v230, %v10353
    %v10438 = vmul.f32 %v230, %v10357
    %v10439 = vmul.f32 %v230, %v10361
    %v10440 = vmul.f32 %v235, %v10353
    %v10441 = vmul.f32 %v235, %v10357
    %v10442 = vmul.f32 %v235, %v10361
    %v10443 = vmul.f32 %v240, %v10353
    %v10444 = vmul.f32 %v240, %v10357
    %v10445 = vmul.f32 %v240, %v10361
    %v10446 = vmul.f32 %v245, %v10353
    %v10447 = vmul.f32 %v245, %v10357
    %v10448 = vmul.f32 %v245, %v10361
    %v10449 = vmul.f32 %v250, %v10353
    %v10450 = vmul.f32 %v250, %v10357
    %v10451 = vmul.f32 %v250, %v10361
    %v10452 = vmul.f32 %v255, %v10353
    %v10453 = vmul.f32 %v255, %v10357
    %v10454 = vmul.f32 %v255, %v10361
    %v10455 = vmul.f32 %v260, %v10353
    %v10456 = vmul.f32 %v260, %v10357
    %v10457 = vmul.f32 %v260, %v10361
    %v10458 = vmul.f32 %v265, %v10353
    %v10459 = vmul.f32 %v265, %v10357
    %v10460 = vmul.f32 %v265, %v10361
    %v10461 = vmul.f32 %v270, %v10353
    %v10462 = vmul.f32 %v270, %v10357
    %v10463 = vmul.f32 %v270, %v10361
    %v10464 = vmul.f32 %v275, %v10353
    %v10465 = vmul.f32 %v275, %v10357
    %v10466 = vmul.f32 %v275, %v10361
    %v10467 = vmul.f32 %v280, %v10353
    %v10468 = vmul.f32 %v280, %v10357
    %v10469 = vmul.f32 %v280, %v10361
    %v10470 = vmul.f32 %v285, %v10353
    %v10471 = vmul.f32 %v285, %v10357
    %v10472 = vmul.f32 %v285, %v10361
    %v10473 = vmul.f32 %v290, %v10353
    %v10474 = vmul.f32 %v290, %v10357
    %v10475 = vmul.f32 %v290, %v10361
    %v10476 = vmul.f32 %v295, %v10353
    %v10477 = vmul.f32 %v295, %v10357
    %v10478 = vmul.f32 %v295, %v10361
    %v10479 = vmul.f32 %v300, %v10353
    %v10480 = vmul.f32 %v300, %v10357
    %v10481 = vmul.f32 %v300, %v10361
    %v10482 = vmul.f32 %v305, %v10353
    %v10483 = vmul.f32 %v305, %v10357
    %v10484 = vmul.f32 %v305, %v10361
    %v10485 = vmul.f32 %v310, %v10353
    %v10486 = vmul.f32 %v310, %v10357
    %v10487 = vmul.f32 %v310, %v10361
    %v10488 = vmul.f32 %v315, %v10353
    %v10489 = vmul.f32 %v315, %v10357
    %v10490 = vmul.f32 %v315, %v10361
    %v10491 = vmul.f32 %v320, %v10353
    %v10492 = vmul.f32 %v320, %v10357
    %v10493 = vmul.f32 %v320, %v10361
    %v10494 = vmul.f32 %v325, %v10353
    %v10495 = vmul.f32 %v325, %v10357
    %v10496 = vmul.f32 %v325, %v10361
    %v10497 = vmul.f32 %v330, %v10353
    %v10498 = vmul.f32 %v330, %v10357
    %v10499 = vmul.f32 %v330, %v10361
    %v10500 = vmul.f32 %v335, %v10353
    %v10501 = vmul.f32 %v335, %v10357
    %v10502 = vmul.f32 %v335, %v10361
    %v10503 = vmul.f32 %v340, %v10353
    %v10504 = vmul.f32 %v340, %v10357
    %v10505 = vmul.f32 %v340, %v10361
    %v10506 = vmul.f32 %v345, %v10353
    %v10507 = vmul.f32 %v345, %v10357
    %v10508 = vmul.f32 %v345, %v10361
    %v10509 = vmul.f32 %v350, %v10353
    %v10510 = vmul.f32 %v350, %v10357
    %v10511 = vmul.f32 %v350, %v10361
    %v10512 = vmul.f32 %v355, %v10353
    %v10513 = vmul.f32 %v355, %v10357
    %v10514 = vmul.f32 %v355, %v10361
    %v10515 = vmul.f32 %v360, %v10353
    %v10516 = vmul.f32 %v360, %v10357
    %v10517 = vmul.f32 %v360, %v10361
    %v10518 = vmul.f32 %v365, %v10353
    %v10519 = vmul.f32 %v365, %v10357
    %v10520 = vmul.f32 %v365, %v10361
    %v10521 = vmul.f32 %v370, %v10353
    %v10522 = vmul.f32 %v370, %v10357
    %v10523 = vmul.f32 %v370, %v10361
    %v10524 = vmul.f32 %v375, %v10353
    %v10525 = vmul.f32 %v375, %v10357
    %v10526 = vmul.f32 %v375, %v10361
    %v10527 = vmul.f32 %v380, %v10353
    %v10528 = vmul.f32 %v380, %v10357
    %v10529 = vmul.f32 %v380, %v10361
    %v10530 = vmul.f32 %v385, %v10353
    %v10531 = vmul.f32 %v385, %v10357
    %v10532 = vmul.f32 %v385, %v10361
    %v10533 = vmul.f32 %v390, %v10353
    %v10534 = vmul.f32 %v390, %v10357
    %v10535 = vmul.f32 %v390, %v10361
    %v10536 = vmul.f32 %v395, %v10353
    %v10537 = vmul.f32 %v395, %v10357
    %v10538 = vmul.f32 %v395, %v10361
    %v10539 = vmul.f32 %v400, %v10353
    %v10540 = vmul.f32 %v400, %v10357
    %v10541 = vmul.f32 %v400, %v10361
    %v10542 = vmul.f32 %v405, %v10353
    %v10543 = vmul.f32 %v405, %v10357
    %v10544 = vmul.f32 %v405, %v10361
    %v10545 = vmul.f32 %v410, %v10353
    %v10546 = vmul.f32 %v410, %v10357
    %v10547 = vmul.f32 %v410, %v10361
    %v10548 = vmul.f32 %v415, %v10353
    %v10549 = vmul.f32 %v415, %v10357
    %v10550 = vmul.f32 %v415, %v10361
    %v10551 = vmul.f32 %v420, %v10353
    %v10552 = vmul.f32 %v420, %v10357
    %v10553 = vmul.f32 %v420, %v10361
    %v10554 = vlaneseq
    %v10555 = vshrl.u32 %v10554, 7
    %v10556 = vsub.s32 1, %v10555
    %v10557 = vrot.slane %v10330, %v10556
    %v10558 = vlaneseq
    %v10559 = vshrl.u32 %v10558, 7
    %v10560 = vsub.s32 5, %v10559
    %v10561 = vrot.slane %v10330, %v10560
    %v10562 = vlaneseq
    %v10563 = vshrl.u32 %v10562, 7
    %v10564 = vsub.s32 1, %v10563
    %v10565 = vrot.slane %v10331, %v10564
    %v10569 = vlaneseq
    %v10570 = vshrl.u32 %v10569, 7
    %v10571 = vsub.s32 1, %v10570
    %v10572 = vrot.slane %v10557, %v10571
    %v10573 = vlaneseq
    %v10574 = vshrl.u32 %v10573, 7
    %v10575 = vsub.s32 1, %v10574
    %v10576 = vrot.slane %v10561, %v10575
    %v10577 = vlaneseq
    %v10578 = vshrl.u32 %v10577, 7
    %v10579 = vsub.s32 1, %v10578
    %v10580 = vrot.slane %v10565, %v10579
    %v10581 = vmul.f32 %v645, %v10572
    %v10582 = vmul.f32 %v645, %v10576
    %v10583 = vmul.f32 %v645, %v10580
    %v10584 = vmul.f32 %v649, %v10572
    %v10585 = vmul.f32 %v649, %v10576
    %v10586 = vmul.f32 %v649, %v10580
    %v10587 = vmul.f32 %v653, %v10572
    %v10588 = vmul.f32 %v653, %v10576
    %v10589 = vmul.f32 %v653, %v10580
    %v10590 = vmul.f32 %v657, %v10572
    %v10591 = vmul.f32 %v657, %v10576
    %v10592 = vmul.f32 %v657, %v10580
    %v10593 = vmul.f32 %v661, %v10572
    %v10594 = vmul.f32 %v661, %v10576
    %v10595 = vmul.f32 %v661, %v10580
    %v10596 = vmul.f32 %v665, %v10572
    %v10597 = vmul.f32 %v665, %v10576
    %v10598 = vmul.f32 %v665, %v10580
    %v10599 = vmul.f32 %v669, %v10572
    %v10600 = vmul.f32 %v669, %v10576
    %v10601 = vmul.f32 %v669, %v10580
    %v10602 = vmul.f32 %v673, %v10572
    %v10603 = vmul.f32 %v673, %v10576
    %v10604 = vmul.f32 %v673, %v10580
    %v10605 = vmul.f32 %v677, %v10572
    %v10606 = vmul.f32 %v677, %v10576
    %v10607 = vmul.f32 %v677, %v10580
    %v10608 = vmul.f32 %v681, %v10572
    %v10609 = vmul.f32 %v681, %v10576
    %v10610 = vmul.f32 %v681, %v10580
    %v10611 = vmul.f32 %v685, %v10572
    %v10612 = vmul.f32 %v685, %v10576
    %v10613 = vmul.f32 %v685, %v10580
    %v10614 = vmul.f32 %v689, %v10572
    %v10615 = vmul.f32 %v689, %v10576
    %v10616 = vmul.f32 %v689, %v10580
    %v10617 = vmul.f32 %v693, %v10572
    %v10618 = vmul.f32 %v693, %v10576
    %v10619 = vmul.f32 %v693, %v10580
    %v10620 = vmul.f32 %v697, %v10572
    %v10621 = vmul.f32 %v697, %v10576
    %v10622 = vmul.f32 %v697, %v10580
    %v10623 = vmul.f32 %v701, %v10572
    %v10624 = vmul.f32 %v701, %v10576
    %v10625 = vmul.f32 %v701, %v10580
    %v10626 = vmul.f32 %v705, %v10572
    %v10627 = vmul.f32 %v705, %v10576
    %v10628 = vmul.f32 %v705, %v10580
    %v10629 = vmul.f32 %v709, %v10572
    %v10630 = vmul.f32 %v709, %v10576
    %v10631 = vmul.f32 %v709, %v10580
    %v10632 = vmul.f32 %v713, %v10572
    %v10633 = vmul.f32 %v713, %v10576
    %v10634 = vmul.f32 %v713, %v10580
    %v10635 = vmul.f32 %v717, %v10572
    %v10636 = vmul.f32 %v717, %v10576
    %v10637 = vmul.f32 %v717, %v10580
    %v10638 = vmul.f32 %v721, %v10572
    %v10639 = vmul.f32 %v721, %v10576
    %v10640 = vmul.f32 %v721, %v10580
    %v10641 = vmul.f32 %v725, %v10572
    %v10642 = vmul.f32 %v725, %v10576
    %v10643 = vmul.f32 %v725, %v10580
    %v10644 = vmul.f32 %v729, %v10572
    %v10645 = vmul.f32 %v729, %v10576
    %v10646 = vmul.f32 %v729, %v10580
    %v10647 = vmul.f32 %v733, %v10572
    %v10648 = vmul.f32 %v733, %v10576
    %v10649 = vmul.f32 %v733, %v10580
    %v10650 = vmul.f32 %v737, %v10572
    %v10651 = vmul.f32 %v737, %v10576
    %v10652 = vmul.f32 %v737, %v10580
    %v10653 = vmul.f32 %v741, %v10572
    %v10654 = vmul.f32 %v741, %v10576
    %v10655 = vmul.f32 %v741, %v10580
    %v10656 = vmul.f32 %v745, %v10572
    %v10657 = vmul.f32 %v745, %v10576
    %v10658 = vmul.f32 %v745, %v10580
    %v10659 = vmul.f32 %v749, %v10572
    %v10660 = vmul.f32 %v749, %v10576
    %v10661 = vmul.f32 %v749, %v10580
    %v10662 = vmul.f32 %v753, %v10572
    %v10663 = vmul.f32 %v753, %v10576
    %v10664 = vmul.f32 %v753, %v10580
    %v10665 = vmul.f32 %v757, %v10572
    %v10666 = vmul.f32 %v757, %v10576
    %v10667 = vmul.f32 %v757, %v10580
    %v10668 = vmul.f32 %v761, %v10572
    %v10669 = vmul.f32 %v761, %v10576
    %v10670 = vmul.f32 %v761, %v10580
    %v10671 = vmul.f32 %v765, %v10572
    %v10672 = vmul.f32 %v765, %v10576
    %v10673 = vmul.f32 %v765, %v10580
    %v10674 = vmul.f32 %v769, %v10572
    %v10675 = vmul.f32 %v769, %v10576
    %v10676 = vmul.f32 %v769, %v10580
    %v10677 = vmul.f32 %v773, %v10572
    %v10678 = vmul.f32 %v773, %v10576
    %v10679 = vmul.f32 %v773, %v10580
    %v10680 = vmul.f32 %v777, %v10572
    %v10681 = vmul.f32 %v777, %v10576
    %v10682 = vmul.f32 %v777, %v10580
    %v10683 = vmul.f32 %v781, %v10572
    %v10684 = vmul.f32 %v781, %v10576
    %v10685 = vmul.f32 %v781, %v10580
    %v10686 = vmul.f32 %v785, %v10572
    %v10687 = vmul.f32 %v785, %v10576
    %v10688 = vmul.f32 %v785, %v10580
    %v10689 = vmul.f32 %v789, %v10572
    %v10690 = vmul.f32 %v789, %v10576
    %v10691 = vmul.f32 %v789, %v10580
    %v10692 = vmul.f32 %v793, %v10572
    %v10693 = vmul.f32 %v793, %v10576
    %v10694 = vmul.f32 %v793, %v10580
    %v10695 = vmul.f32 %v797, %v10572
    %v10696 = vmul.f32 %v797, %v10576
    %v10697 = vmul.f32 %v797, %v10580
    %v10698 = vmul.f32 %v801, %v10572
    %v10699 = vmul.f32 %v801, %v10576
    %v10700 = vmul.f32 %v801, %v10580
    %v10701 = vmul.f32 %v805, %v10572
    %v10702 = vmul.f32 %v805, %v10576
    %v10703 = vmul.f32 %v805, %v10580
    %v10704 = vmul.f32 %v809, %v10572
    %v10705 = vmul.f32 %v809, %v10576
    %v10706 = vmul.f32 %v809, %v10580
    %v10707 = vmul.f32 %v813, %v10572
    %v10708 = vmul.f32 %v813, %v10576
    %v10709 = vmul.f32 %v813, %v10580
    %v10710 = vmul.f32 %v817, %v10572
    %v10711 = vmul.f32 %v817, %v10576
    %v10712 = vmul.f32 %v817, %v10580
    %v10713 = vmul.f32 %v821, %v10572
    %v10714 = vmul.f32 %v821, %v10576
    %v10715 = vmul.f32 %v821, %v10580
    %v10716 = vmul.f32 %v825, %v10572
    %v10717 = vmul.f32 %v825, %v10576
    %v10718 = vmul.f32 %v825, %v10580
    %v10719 = vmul.f32 %v829, %v10572
    %v10720 = vmul.f32 %v829, %v10576
    %v10721 = vmul.f32 %v829, %v10580
    %v10722 = vmul.f32 %v833, %v10572
    %v10723 = vmul.f32 %v833, %v10576
    %v10724 = vmul.f32 %v833, %v10580
    %v10725 = vmul.f32 %v837, %v10572
    %v10726 = vmul.f32 %v837, %v10576
    %v10727 = vmul.f32 %v837, %v10580
    %v10728 = vmul.f32 %v841, %v10572
    %v10729 = vmul.f32 %v841, %v10576
    %v10730 = vmul.f32 %v841, %v10580
    %v10731 = vmul.f32 %v845, %v10572
    %v10732 = vmul.f32 %v845, %v10576
    %v10733 = vmul.f32 %v845, %v10580
    %v10734 = vmul.f32 %v849, %v10572
    %v10735 = vmul.f32 %v849, %v10576
    %v10736 = vmul.f32 %v849, %v10580
    %v10737 = vmul.f32 %v853, %v10572
    %v10738 = vmul.f32 %v853, %v10576
    %v10739 = vmul.f32 %v853, %v10580
    %v10740 = vmul.f32 %v857, %v10572
    %v10741 = vmul.f32 %v857, %v10576
    %v10742 = vmul.f32 %v857, %v10580
    %v10743 = vmul.f32 %v861, %v10572
    %v10744 = vmul.f32 %v861, %v10576
    %v10745 = vmul.f32 %v861, %v10580
    %v10746 = vmul.f32 %v865, %v10572
    %v10747 = vmul.f32 %v865, %v10576
    %v10748 = vmul.f32 %v865, %v10580
    %v10749 = vmul.f32 %v869, %v10572
    %v10750 = vmul.f32 %v869, %v10576
    %v10751 = vmul.f32 %v869, %v10580
    %v10752 = vmul.f32 %v873, %v10572
    %v10753 = vmul.f32 %v873, %v10576
    %v10754 = vmul.f32 %v873, %v10580
    %v10755 = vmul.f32 %v877, %v10572
    %v10756 = vmul.f32 %v877, %v10576
    %v10757 = vmul.f32 %v877, %v10580
    %v10758 = vmul.f32 %v881, %v10572
    %v10759 = vmul.f32 %v881, %v10576
    %v10760 = vmul.f32 %v881, %v10580
    %v10761 = vmul.f32 %v885, %v10572
    %v10762 = vmul.f32 %v885, %v10576
    %v10763 = vmul.f32 %v885, %v10580
    %v10764 = vmul.f32 %v889, %v10572
    %v10765 = vmul.f32 %v889, %v10576
    %v10766 = vmul.f32 %v889, %v10580
    %v10767 = vmul.f32 %v893, %v10572
    %v10768 = vmul.f32 %v893, %v10576
    %v10769 = vmul.f32 %v893, %v10580
    %v10770 = vmul.f32 %v897, %v10572
    %v10771 = vmul.f32 %v897, %v10576
    %v10772 = vmul.f32 %v897, %v10580
    %v10773 = vadd.f32 %v10362, %v10581
    %v10774 = vadd.f32 %v10363, %v10582
    %v10775 = vadd.f32 %v10364, %v10583
    %v10776 = vadd.f32 %v10365, %v10584
    %v10777 = vadd.f32 %v10366, %v10585
    %v10778 = vadd.f32 %v10367, %v10586
    %v10779 = vadd.f32 %v10368, %v10587
    %v10780 = vadd.f32 %v10369, %v10588
    %v10781 = vadd.f32 %v10370, %v10589
    %v10782 = vadd.f32 %v10371, %v10590
    %v10783 = vadd.f32 %v10372, %v10591
    %v10784 = vadd.f32 %v10373, %v10592
    %v10785 = vadd.f32 %v10374, %v10593
    %v10786 = vadd.f32 %v10375, %v10594
    %v10787 = vadd.f32 %v10376, %v10595
    %v10788 = vadd.f32 %v10377, %v10596
    %v10789 = vadd.f32 %v10378, %v10597
    %v10790 = vadd.f32 %v10379, %v10598
    %v10791 = vadd.f32 %v10380, %v10599
    %v10792 = vadd.f32 %v10381, %v10600
    %v10793 = vadd.f32 %v10382, %v10601
    %v10794 = vadd.f32 %v10383, %v10602
    %v10795 = vadd.f32 %v10384, %v10603
    %v10796 = vadd.f32 %v10385, %v10604
    %v10797 = vadd.f32 %v10386, %v10605
    %v10798 = vadd.f32 %v10387, %v10606
    %v10799 = vadd.f32 %v10388, %v10607
    %v10800 = vadd.f32 %v10389, %v10608
    %v10801 = vadd.f32 %v10390, %v10609
    %v10802 = vadd.f32 %v10391, %v10610
    %v10803 = vadd.f32 %v10392, %v10611
    %v10804 = vadd.f32 %v10393, %v10612
    %v10805 = vadd.f32 %v10394, %v10613
    %v10806 = vadd.f32 %v10395, %v10614
    %v10807 = vadd.f32 %v10396, %v10615
    %v10808 = vadd.f32 %v10397, %v10616
    %v10809 = vadd.f32 %v10398, %v10617
    %v10810 = vadd.f32 %v10399, %v10618
    %v10811 = vadd.f32 %v10400, %v10619
    %v10812 = vadd.f32 %v10401, %v10620
    %v10813 = vadd.f32 %v10402, %v10621
    %v10814 = vadd.f32 %v10403, %v10622
    %v10815 = vadd.f32 %v10404, %v10623
    %v10816 = vadd.f32 %v10405, %v10624
    %v10817 = vadd.f32 %v10406, %v10625
    %v10818 = vadd.f32 %v10407, %v10626
    %v10819 = vadd.f32 %v10408, %v10627
    %v10820 = vadd.f32 %v10409, %v10628
    %v10821 = vadd.f32 %v10410, %v10629
    %v10822 = vadd.f32 %v10411, %v10630
    %v10823 = vadd.f32 %v10412, %v10631
    %v10824 = vadd.f32 %v10413, %v10632
    %v10825 = vadd.f32 %v10414, %v10633
    %v10826 = vadd.f32 %v10415, %v10634
    %v10827 = vadd.f32 %v10416, %v10635
    %v10828 = vadd.f32 %v10417, %v10636
    %v10829 = vadd.f32 %v10418, %v10637
    %v10830 = vadd.f32 %v10419, %v10638
    %v10831 = vadd.f32 %v10420, %v10639
    %v10832 = vadd.f32 %v10421, %v10640
    %v10833 = vadd.f32 %v10422, %v10641
    %v10834 = vadd.f32 %v10423, %v10642
    %v10835 = vadd.f32 %v10424, %v10643
    %v10836 = vadd.f32 %v10425, %v10644
    %v10837 = vadd.f32 %v10426, %v10645
    %v10838 = vadd.f32 %v10427, %v10646
    %v10839 = vadd.f32 %v10428, %v10647
    %v10840 = vadd.f32 %v10429, %v10648
    %v10841 = vadd.f32 %v10430, %v10649
    %v10842 = vadd.f32 %v10431, %v10650
    %v10843 = vadd.f32 %v10432, %v10651
    %v10844 = vadd.f32 %v10433, %v10652
    %v10845 = vadd.f32 %v10434, %v10653
    %v10846 = vadd.f32 %v10435, %v10654
    %v10847 = vadd.f32 %v10436, %v10655
    %v10848 = vadd.f32 %v10437, %v10656
    %v10849 = vadd.f32 %v10438, %v10657
    %v10850 = vadd.f32 %v10439, %v10658
    %v10851 = vadd.f32 %v10440, %v10659
    %v10852 = vadd.f32 %v10441, %v10660
    %v10853 = vadd.f32 %v10442, %v10661
    %v10854 = vadd.f32 %v10443, %v10662
    %v10855 = vadd.f32 %v10444, %v10663
    %v10856 = vadd.f32 %v10445, %v10664
    %v10857 = vadd.f32 %v10446, %v10665
    %v10858 = vadd.f32 %v10447, %v10666
    %v10859 = vadd.f32 %v10448, %v10667
    %v10860 = vadd.f32 %v10449, %v10668
    %v10861 = vadd.f32 %v10450, %v10669
    %v10862 = vadd.f32 %v10451, %v10670
    %v10863 = vadd.f32 %v10452, %v10671
    %v10864 = vadd.f32 %v10453, %v10672
    %v10865 = vadd.f32 %v10454, %v10673
    %v10866 = vadd.f32 %v10455, %v10674
    %v10867 = vadd.f32 %v10456, %v10675
    %v10868 = vadd.f32 %v10457, %v10676
    %v10869 = vadd.f32 %v10458, %v10677
    %v10870 = vadd.f32 %v10459, %v10678
    %v10871 = vadd.f32 %v10460, %v10679
    %v10872 = vadd.f32 %v10461, %v10680
    %v10873 = vadd.f32 %v10462, %v10681
    %v10874 = vadd.f32 %v10463, %v10682
    %v10875 = vadd.f32 %v10464, %v10683
    %v10876 = vadd.f32 %v10465, %v10684
    %v10877 = vadd.f32 %v10466, %v10685
    %v10878 = vadd.f32 %v10467, %v10686
    %v10879 = vadd.f32 %v10468, %v10687
    %v10880 = vadd.f32 %v10469, %v10688
    %v10881 = vadd.f32 %v10470, %v10689
    %v10882 = vadd.f32 %v10471, %v10690
    %v10883 = vadd.f32 %v10472, %v10691
    %v10884 = vadd.f32 %v10473, %v10692
    %v10885 = vadd.f32 %v10474, %v10693
    %v10886 = vadd.f32 %v10475, %v10694
    %v10887 = vadd.f32 %v10476, %v10695
    %v10888 = vadd.f32 %v10477, %v10696
    %v10889 = vadd.f32 %v10478, %v10697
    %v10890 = vadd.f32 %v10479, %v10698
    %v10891 = vadd.f32 %v10480, %v10699
    %v10892 = vadd.f32 %v10481, %v10700
    %v10893 = vadd.f32 %v10482, %v10701
    %v10894 = vadd.f32 %v10483, %v10702
    %v10895 = vadd.f32 %v10484, %v10703
    %v10896 = vadd.f32 %v10485, %v10704
    %v10897 = vadd.f32 %v10486, %v10705
    %v10898 = vadd.f32 %v10487, %v10706
    %v10899 = vadd.f32 %v10488, %v10707
    %v10900 = vadd.f32 %v10489, %v10708
    %v10901 = vadd.f32 %v10490, %v10709
    %v10902 = vadd.f32 %v10491, %v10710
    %v10903 = vadd.f32 %v10492, %v10711
    %v10904 = vadd.f32 %v10493, %v10712
    %v10905 = vadd.f32 %v10494, %v10713
    %v10906 = vadd.f32 %v10495, %v10714
    %v10907 = vadd.f32 %v10496, %v10715
    %v10908 = vadd.f32 %v10497, %v10716
    %v10909 = vadd.f32 %v10498, %v10717
    %v10910 = vadd.f32 %v10499, %v10718
    %v10911 = vadd.f32 %v10500, %v10719
    %v10912 = vadd.f32 %v10501, %v10720
    %v10913 = vadd.f32 %v10502, %v10721
    %v10914 = vadd.f32 %v10503, %v10722
    %v10915 = vadd.f32 %v10504, %v10723
    %v10916 = vadd.f32 %v10505, %v10724
    %v10917 = vadd.f32 %v10506, %v10725
    %v10918 = vadd.f32 %v10507, %v10726
    %v10919 = vadd.f32 %v10508, %v10727
    %v10920 = vadd.f32 %v10509, %v10728
    %v10921 = vadd.f32 %v10510, %v10729
    %v10922 = vadd.f32 %v10511, %v10730
    %v10923 = vadd.f32 %v10512, %v10731
    %v10924 = vadd.f32 %v10513, %v10732
    %v10925 = vadd.f32 %v10514, %v10733
    %v10926 = vadd.f32 %v10515, %v10734
    %v10927 = vadd.f32 %v10516, %v10735
    %v10928 = vadd.f32 %v10517, %v10736
    %v10929 = vadd.f32 %v10518, %v10737
    %v10930 = vadd.f32 %v10519, %v10738
    %v10931 = vadd.f32 %v10520, %v10739
    %v10932 = vadd.f32 %v10521, %v10740
    %v10933 = vadd.f32 %v10522, %v10741
    %v10934 = vadd.f32 %v10523, %v10742
    %v10935 = vadd.f32 %v10524, %v10743
    %v10936 = vadd.f32 %v10525, %v10744
    %v10937 = vadd.f32 %v10526, %v10745
    %v10938 = vadd.f32 %v10527, %v10746
    %v10939 = vadd.f32 %v10528, %v10747
    %v10940 = vadd.f32 %v10529, %v10748
    %v10941 = vadd.f32 %v10530, %v10749
    %v10942 = vadd.f32 %v10531, %v10750
    %v10943 = vadd.f32 %v10532, %v10751
    %v10944 = vadd.f32 %v10533, %v10752
    %v10945 = vadd.f32 %v10534, %v10753
    %v10946 = vadd.f32 %v10535, %v10754
    %v10947 = vadd.f32 %v10536, %v10755
    %v10948 = vadd.f32 %v10537, %v10756
    %v10949 = vadd.f32 %v10538, %v10757
    %v10950 = vadd.f32 %v10539, %v10758
    %v10951 = vadd.f32 %v10540, %v10759
    %v10952 = vadd.f32 %v10541, %v10760
    %v10953 = vadd.f32 %v10542, %v10761
    %v10954 = vadd.f32 %v10543, %v10762
    %v10955 = vadd.f32 %v10544, %v10763
    %v10956 = vadd.f32 %v10545, %v10764
    %v10957 = vadd.f32 %v10546, %v10765
    %v10958 = vadd.f32 %v10547, %v10766
    %v10959 = vadd.f32 %v10548, %v10767
    %v10960 = vadd.f32 %v10549, %v10768
    %v10961 = vadd.f32 %v10550, %v10769
    %v10962 = vadd.f32 %v10551, %v10770
    %v10963 = vadd.f32 %v10552, %v10771
    %v10964 = vadd.f32 %v10553, %v10772
    %v10965 = vlaneseq
    %v10966 = vshrl.u32 %v10965, 7
    %v10967 = vsub.s32 2, %v10966
    %v10968 = vrot.slane %v10330, %v10967
    %v10969 = vlaneseq
    %v10970 = vshrl.u32 %v10969, 7
    %v10971 = vsub.s32 6, %v10970
    %v10972 = vrot.slane %v10330, %v10971
    %v10973 = vlaneseq
    %v10974 = vshrl.u32 %v10973, 7
    %v10975 = vsub.s32 2, %v10974
    %v10976 = vrot.slane %v10331, %v10975
    %v10980 = vlaneseq
    %v10981 = vshrl.u32 %v10980, 7
    %v10982 = vsub.s32 2, %v10981
    %v10983 = vrot.slane %v10968, %v10982
    %v10984 = vlaneseq
    %v10985 = vshrl.u32 %v10984, 7
    %v10986 = vsub.s32 2, %v10985
    %v10987 = vrot.slane %v10972, %v10986
    %v10988 = vlaneseq
    %v10989 = vshrl.u32 %v10988, 7
    %v10990 = vsub.s32 2, %v10989
    %v10991 = vrot.slane %v10976, %v10990
    %v10992 = vmul.f32 %v1312, %v10983
    %v10993 = vmul.f32 %v1312, %v10987
    %v10994 = vmul.f32 %v1312, %v10991
    %v10995 = vmul.f32 %v1316, %v10983
    %v10996 = vmul.f32 %v1316, %v10987
    %v10997 = vmul.f32 %v1316, %v10991
    %v10998 = vmul.f32 %v1320, %v10983
    %v10999 = vmul.f32 %v1320, %v10987
    %v11000 = vmul.f32 %v1320, %v10991
    %v11001 = vmul.f32 %v1324, %v10983
    %v11002 = vmul.f32 %v1324, %v10987
    %v11003 = vmul.f32 %v1324, %v10991
    %v11004 = vmul.f32 %v1328, %v10983
    %v11005 = vmul.f32 %v1328, %v10987
    %v11006 = vmul.f32 %v1328, %v10991
    %v11007 = vmul.f32 %v1332, %v10983
    %v11008 = vmul.f32 %v1332, %v10987
    %v11009 = vmul.f32 %v1332, %v10991
    %v11010 = vmul.f32 %v1336, %v10983
    %v11011 = vmul.f32 %v1336, %v10987
    %v11012 = vmul.f32 %v1336, %v10991
    %v11013 = vmul.f32 %v1340, %v10983
    %v11014 = vmul.f32 %v1340, %v10987
    %v11015 = vmul.f32 %v1340, %v10991
    %v11016 = vmul.f32 %v1344, %v10983
    %v11017 = vmul.f32 %v1344, %v10987
    %v11018 = vmul.f32 %v1344, %v10991
    %v11019 = vmul.f32 %v1348, %v10983
    %v11020 = vmul.f32 %v1348, %v10987
    %v11021 = vmul.f32 %v1348, %v10991
    %v11022 = vmul.f32 %v1352, %v10983
    %v11023 = vmul.f32 %v1352, %v10987
    %v11024 = vmul.f32 %v1352, %v10991
    %v11025 = vmul.f32 %v1356, %v10983
    %v11026 = vmul.f32 %v1356, %v10987
    %v11027 = vmul.f32 %v1356, %v10991
    %v11028 = vmul.f32 %v1360, %v10983
    %v11029 = vmul.f32 %v1360, %v10987
    %v11030 = vmul.f32 %v1360, %v10991
    %v11031 = vmul.f32 %v1364, %v10983
    %v11032 = vmul.f32 %v1364, %v10987
    %v11033 = vmul.f32 %v1364, %v10991
    %v11034 = vmul.f32 %v1368, %v10983
    %v11035 = vmul.f32 %v1368, %v10987
    %v11036 = vmul.f32 %v1368, %v10991
    %v11037 = vmul.f32 %v1372, %v10983
    %v11038 = vmul.f32 %v1372, %v10987
    %v11039 = vmul.f32 %v1372, %v10991
    %v11040 = vmul.f32 %v1376, %v10983
    %v11041 = vmul.f32 %v1376, %v10987
    %v11042 = vmul.f32 %v1376, %v10991
    %v11043 = vmul.f32 %v1380, %v10983
    %v11044 = vmul.f32 %v1380, %v10987
    %v11045 = vmul.f32 %v1380, %v10991
    %v11046 = vmul.f32 %v1384, %v10983
    %v11047 = vmul.f32 %v1384, %v10987
    %v11048 = vmul.f32 %v1384, %v10991
    %v11049 = vmul.f32 %v1388, %v10983
    %v11050 = vmul.f32 %v1388, %v10987
    %v11051 = vmul.f32 %v1388, %v10991
    %v11052 = vmul.f32 %v1392, %v10983
    %v11053 = vmul.f32 %v1392, %v10987
    %v11054 = vmul.f32 %v1392, %v10991
    %v11055 = vmul.f32 %v1396, %v10983
    %v11056 = vmul.f32 %v1396, %v10987
    %v11057 = vmul.f32 %v1396, %v10991
    %v11058 = vmul.f32 %v1400, %v10983
    %v11059 = vmul.f32 %v1400, %v10987
    %v11060 = vmul.f32 %v1400, %v10991
    %v11061 = vmul.f32 %v1404, %v10983
    %v11062 = vmul.f32 %v1404, %v10987
    %v11063 = vmul.f32 %v1404, %v10991
    %v11064 = vmul.f32 %v1408, %v10983
    %v11065 = vmul.f32 %v1408, %v10987
    %v11066 = vmul.f32 %v1408, %v10991
    %v11067 = vmul.f32 %v1412, %v10983
    %v11068 = vmul.f32 %v1412, %v10987
    %v11069 = vmul.f32 %v1412, %v10991
    %v11070 = vmul.f32 %v1416, %v10983
    %v11071 = vmul.f32 %v1416, %v10987
    %v11072 = vmul.f32 %v1416, %v10991
    %v11073 = vmul.f32 %v1420, %v10983
    %v11074 = vmul.f32 %v1420, %v10987
    %v11075 = vmul.f32 %v1420, %v10991
    %v11076 = vmul.f32 %v1424, %v10983
    %v11077 = vmul.f32 %v1424, %v10987
    %v11078 = vmul.f32 %v1424, %v10991
    %v11079 = vmul.f32 %v1428, %v10983
    %v11080 = vmul.f32 %v1428, %v10987
    %v11081 = vmul.f32 %v1428, %v10991
    %v11082 = vmul.f32 %v1432, %v10983
    %v11083 = vmul.f32 %v1432, %v10987
    %v11084 = vmul.f32 %v1432, %v10991
    %v11085 = vmul.f32 %v1436, %v10983
    %v11086 = vmul.f32 %v1436, %v10987
    %v11087 = vmul.f32 %v1436, %v10991
    %v11088 = vmul.f32 %v1440, %v10983
    %v11089 = vmul.f32 %v1440, %v10987
    %v11090 = vmul.f32 %v1440, %v10991
    %v11091 = vmul.f32 %v1444, %v10983
    %v11092 = vmul.f32 %v1444, %v10987
    %v11093 = vmul.f32 %v1444, %v10991
    %v11094 = vmul.f32 %v1448, %v10983
    %v11095 = vmul.f32 %v1448, %v10987
    %v11096 = vmul.f32 %v1448, %v10991
    %v11097 = vmul.f32 %v1452, %v10983
    %v11098 = vmul.f32 %v1452, %v10987
    %v11099 = vmul.f32 %v1452, %v10991
    %v11100 = vmul.f32 %v1456, %v10983
    %v11101 = vmul.f32 %v1456, %v10987
    %v11102 = vmul.f32 %v1456, %v10991
    %v11103 = vmul.f32 %v1460, %v10983
    %v11104 = vmul.f32 %v1460, %v10987
    %v11105 = vmul.f32 %v1460, %v10991
    %v11106 = vmul.f32 %v1464, %v10983
    %v11107 = vmul.f32 %v1464, %v10987
    %v11108 = vmul.f32 %v1464, %v10991
    %v11109 = vmul.f32 %v1468, %v10983
    %v11110 = vmul.f32 %v1468, %v10987
    %v11111 = vmul.f32 %v1468, %v10991
    %v11112 = vmul.f32 %v1472, %v10983
    %v11113 = vmul.f32 %v1472, %v10987
    %v11114 = vmul.f32 %v1472, %v10991
    %v11115 = vmul.f32 %v1476, %v10983
    %v11116 = vmul.f32 %v1476, %v10987
    %v11117 = vmul.f32 %v1476, %v10991
    %v11118 = vmul.f32 %v1480, %v10983
    %v11119 = vmul.f32 %v1480, %v10987
    %v11120 = vmul.f32 %v1480, %v10991
    %v11121 = vmul.f32 %v1484, %v10983
    %v11122 = vmul.f32 %v1484, %v10987
    %v11123 = vmul.f32 %v1484, %v10991
    %v11124 = vmul.f32 %v1488, %v10983
    %v11125 = vmul.f32 %v1488, %v10987
    %v11126 = vmul.f32 %v1488, %v10991
    %v11127 = vmul.f32 %v1492, %v10983
    %v11128 = vmul.f32 %v1492, %v10987
    %v11129 = vmul.f32 %v1492, %v10991
    %v11130 = vmul.f32 %v1496, %v10983
    %v11131 = vmul.f32 %v1496, %v10987
    %v11132 = vmul.f32 %v1496, %v10991
    %v11133 = vmul.f32 %v1500, %v10983
    %v11134 = vmul.f32 %v1500, %v10987
    %v11135 = vmul.f32 %v1500, %v10991
    %v11136 = vmul.f32 %v1504, %v10983
    %v11137 = vmul.f32 %v1504, %v10987
    %v11138 = vmul.f32 %v1504, %v10991
    %v11139 = vmul.f32 %v1508, %v10983
    %v11140 = vmul.f32 %v1508, %v10987
    %v11141 = vmul.f32 %v1508, %v10991
    %v11142 = vmul.f32 %v1512, %v10983
    %v11143 = vmul.f32 %v1512, %v10987
    %v11144 = vmul.f32 %v1512, %v10991
    %v11145 = vmul.f32 %v1516, %v10983
    %v11146 = vmul.f32 %v1516, %v10987
    %v11147 = vmul.f32 %v1516, %v10991
    %v11148 = vmul.f32 %v1520, %v10983
    %v11149 = vmul.f32 %v1520, %v10987
    %v11150 = vmul.f32 %v1520, %v10991
    %v11151 = vmul.f32 %v1524, %v10983
    %v11152 = vmul.f32 %v1524, %v10987
    %v11153 = vmul.f32 %v1524, %v10991
    %v11154 = vmul.f32 %v1528, %v10983
    %v11155 = vmul.f32 %v1528, %v10987
    %v11156 = vmul.f32 %v1528, %v10991
    %v11157 = vmul.f32 %v1532, %v10983
    %v11158 = vmul.f32 %v1532, %v10987
    %v11159 = vmul.f32 %v1532, %v10991
    %v11160 = vmul.f32 %v1536, %v10983
    %v11161 = vmul.f32 %v1536, %v10987
    %v11162 = vmul.f32 %v1536, %v10991
    %v11163 = vmul.f32 %v1540, %v10983
    %v11164 = vmul.f32 %v1540, %v10987
    %v11165 = vmul.f32 %v1540, %v10991
    %v11166 = vmul.f32 %v1544, %v10983
    %v11167 = vmul.f32 %v1544, %v10987
    %v11168 = vmul.f32 %v1544, %v10991
    %v11169 = vmul.f32 %v1548, %v10983
    %v11170 = vmul.f32 %v1548, %v10987
    %v11171 = vmul.f32 %v1548, %v10991
    %v11172 = vmul.f32 %v1552, %v10983
    %v11173 = vmul.f32 %v1552, %v10987
    %v11174 = vmul.f32 %v1552, %v10991
    %v11175 = vmul.f32 %v1556, %v10983
    %v11176 = vmul.f32 %v1556, %v10987
    %v11177 = vmul.f32 %v1556, %v10991
    %v11178 = vmul.f32 %v1560, %v10983
    %v11179 = vmul.f32 %v1560, %v10987
    %v11180 = vmul.f32 %v1560, %v10991
    %v11181 = vmul.f32 %v1564, %v10983
    %v11182 = vmul.f32 %v1564, %v10987
    %v11183 = vmul.f32 %v1564, %v10991
    %v11184 = vadd.f32 %v10773, %v10992
    %v11185 = vadd.f32 %v10774, %v10993
    %v11186 = vadd.f32 %v10775, %v10994
    %v11187 = vadd.f32 %v10776, %v10995
    %v11188 = vadd.f32 %v10777, %v10996
    %v11189 = vadd.f32 %v10778, %v10997
    %v11190 = vadd.f32 %v10779, %v10998
    %v11191 = vadd.f32 %v10780, %v10999
    %v11192 = vadd.f32 %v10781, %v11000
    %v11193 = vadd.f32 %v10782, %v11001
    %v11194 = vadd.f32 %v10783, %v11002
    %v11195 = vadd.f32 %v10784, %v11003
    %v11196 = vadd.f32 %v10785, %v11004
    %v11197 = vadd.f32 %v10786, %v11005
    %v11198 = vadd.f32 %v10787, %v11006
    %v11199 = vadd.f32 %v10788, %v11007
    %v11200 = vadd.f32 %v10789, %v11008
    %v11201 = vadd.f32 %v10790, %v11009
    %v11202 = vadd.f32 %v10791, %v11010
    %v11203 = vadd.f32 %v10792, %v11011
    %v11204 = vadd.f32 %v10793, %v11012
    %v11205 = vadd.f32 %v10794, %v11013
    %v11206 = vadd.f32 %v10795, %v11014
    %v11207 = vadd.f32 %v10796, %v11015
    %v11208 = vadd.f32 %v10797, %v11016
    %v11209 = vadd.f32 %v10798, %v11017
    %v11210 = vadd.f32 %v10799, %v11018
    %v11211 = vadd.f32 %v10800, %v11019
    %v11212 = vadd.f32 %v10801, %v11020
    %v11213 = vadd.f32 %v10802, %v11021
    %v11214 = vadd.f32 %v10803, %v11022
    %v11215 = vadd.f32 %v10804, %v11023
    %v11216 = vadd.f32 %v10805, %v11024
    %v11217 = vadd.f32 %v10806, %v11025
    %v11218 = vadd.f32 %v10807, %v11026
    %v11219 = vadd.f32 %v10808, %v11027
    %v11220 = vadd.f32 %v10809, %v11028
    %v11221 = vadd.f32 %v10810, %v11029
    %v11222 = vadd.f32 %v10811, %v11030
    %v11223 = vadd.f32 %v10812, %v11031
    %v11224 = vadd.f32 %v10813, %v11032
    %v11225 = vadd.f32 %v10814, %v11033
    %v11226 = vadd.f32 %v10815, %v11034
    %v11227 = vadd.f32 %v10816, %v11035
    %v11228 = vadd.f32 %v10817, %v11036
    %v11229 = vadd.f32 %v10818, %v11037
    %v11230 = vadd.f32 %v10819, %v11038
    %v11231 = vadd.f32 %v10820, %v11039
    %v11232 = vadd.f32 %v10821, %v11040
    %v11233 = vadd.f32 %v10822, %v11041
    %v11234 = vadd.f32 %v10823, %v11042
    %v11235 = vadd.f32 %v10824, %v11043
    %v11236 = vadd.f32 %v10825, %v11044
    %v11237 = vadd.f32 %v10826, %v11045
    %v11238 = vadd.f32 %v10827, %v11046
    %v11239 = vadd.f32 %v10828, %v11047
    %v11240 = vadd.f32 %v10829, %v11048
    %v11241 = vadd.f32 %v10830, %v11049
    %v11242 = vadd.f32 %v10831, %v11050
    %v11243 = vadd.f32 %v10832, %v11051
    %v11244 = vadd.f32 %v10833, %v11052
    %v11245 = vadd.f32 %v10834, %v11053
    %v11246 = vadd.f32 %v10835, %v11054
    %v11247 = vadd.f32 %v10836, %v11055
    %v11248 = vadd.f32 %v10837, %v11056
    %v11249 = vadd.f32 %v10838, %v11057
    %v11250 = vadd.f32 %v10839, %v11058
    %v11251 = vadd.f32 %v10840, %v11059
    %v11252 = vadd.f32 %v10841, %v11060
    %v11253 = vadd.f32 %v10842, %v11061
    %v11254 = vadd.f32 %v10843, %v11062
    %v11255 = vadd.f32 %v10844, %v11063
    %v11256 = vadd.f32 %v10845, %v11064
    %v11257 = vadd.f32 %v10846, %v11065
    %v11258 = vadd.f32 %v10847, %v11066
    %v11259 = vadd.f32 %v10848, %v11067
    %v11260 = vadd.f32 %v10849, %v11068
    %v11261 = vadd.f32 %v10850, %v11069
    %v11262 = vadd.f32 %v10851, %v11070
    %v11263 = vadd.f32 %v10852, %v11071
    %v11264 = vadd.f32 %v10853, %v11072
    %v11265 = vadd.f32 %v10854, %v11073
    %v11266 = vadd.f32 %v10855, %v11074
    %v11267 = vadd.f32 %v10856, %v11075
    %v11268 = vadd.f32 %v10857, %v11076
    %v11269 = vadd.f32 %v10858, %v11077
    %v11270 = vadd.f32 %v10859, %v11078
    %v11271 = vadd.f32 %v10860, %v11079
    %v11272 = vadd.f32 %v10861, %v11080
    %v11273 = vadd.f32 %v10862, %v11081
    %v11274 = vadd.f32 %v10863, %v11082
    %v11275 = vadd.f32 %v10864, %v11083
    %v11276 = vadd.f32 %v10865, %v11084
    %v11277 = vadd.f32 %v10866, %v11085
    %v11278 = vadd.f32 %v10867, %v11086
    %v11279 = vadd.f32 %v10868, %v11087
    %v11280 = vadd.f32 %v10869, %v11088
    %v11281 = vadd.f32 %v10870, %v11089
    %v11282 = vadd.f32 %v10871, %v11090
    %v11283 = vadd.f32 %v10872, %v11091
    %v11284 = vadd.f32 %v10873, %v11092
    %v11285 = vadd.f32 %v10874, %v11093
    %v11286 = vadd.f32 %v10875, %v11094
    %v11287 = vadd.f32 %v10876, %v11095
    %v11288 = vadd.f32 %v10877, %v11096
    %v11289 = vadd.f32 %v10878, %v11097
    %v11290 = vadd.f32 %v10879, %v11098
    %v11291 = vadd.f32 %v10880, %v11099
    %v11292 = vadd.f32 %v10881, %v11100
    %v11293 = vadd.f32 %v10882, %v11101
    %v11294 = vadd.f32 %v10883, %v11102
    %v11295 = vadd.f32 %v10884, %v11103
    %v11296 = vadd.f32 %v10885, %v11104
    %v11297 = vadd.f32 %v10886, %v11105
    %v11298 = vadd.f32 %v10887, %v11106
    %v11299 = vadd.f32 %v10888, %v11107
    %v11300 = vadd.f32 %v10889, %v11108
    %v11301 = vadd.f32 %v10890, %v11109
    %v11302 = vadd.f32 %v10891, %v11110
    %v11303 = vadd.f32 %v10892, %v11111
    %v11304 = vadd.f32 %v10893, %v11112
    %v11305 = vadd.f32 %v10894, %v11113
    %v11306 = vadd.f32 %v10895, %v11114
    %v11307 = vadd.f32 %v10896, %v11115
    %v11308 = vadd.f32 %v10897, %v11116
    %v11309 = vadd.f32 %v10898, %v11117
    %v11310 = vadd.f32 %v10899, %v11118
    %v11311 = vadd.f32 %v10900, %v11119
    %v11312 = vadd.f32 %v10901, %v11120
    %v11313 = vadd.f32 %v10902, %v11121
    %v11314 = vadd.f32 %v10903, %v11122
    %v11315 = vadd.f32 %v10904, %v11123
    %v11316 = vadd.f32 %v10905, %v11124
    %v11317 = vadd.f32 %v10906, %v11125
    %v11318 = vadd.f32 %v10907, %v11126
    %v11319 = vadd.f32 %v10908, %v11127
    %v11320 = vadd.f32 %v10909, %v11128
    %v11321 = vadd.f32 %v10910, %v11129
    %v11322 = vadd.f32 %v10911, %v11130
    %v11323 = vadd.f32 %v10912, %v11131
    %v11324 = vadd.f32 %v10913, %v11132
    %v11325 = vadd.f32 %v10914, %v11133
    %v11326 = vadd.f32 %v10915, %v11134
    %v11327 = vadd.f32 %v10916, %v11135
    %v11328 = vadd.f32 %v10917, %v11136
    %v11329 = vadd.f32 %v10918, %v11137
    %v11330 = vadd.f32 %v10919, %v11138
    %v11331 = vadd.f32 %v10920, %v11139
    %v11332 = vadd.f32 %v10921, %v11140
    %v11333 = vadd.f32 %v10922, %v11141
    %v11334 = vadd.f32 %v10923, %v11142
    %v11335 = vadd.f32 %v10924, %v11143
    %v11336 = vadd.f32 %v10925, %v11144
    %v11337 = vadd.f32 %v10926, %v11145
    %v11338 = vadd.f32 %v10927, %v11146
    %v11339 = vadd.f32 %v10928, %v11147
    %v11340 = vadd.f32 %v10929, %v11148
    %v11341 = vadd.f32 %v10930, %v11149
    %v11342 = vadd.f32 %v10931, %v11150
    %v11343 = vadd.f32 %v10932, %v11151
    %v11344 = vadd.f32 %v10933, %v11152
    %v11345 = vadd.f32 %v10934, %v11153
    %v11346 = vadd.f32 %v10935, %v11154
    %v11347 = vadd.f32 %v10936, %v11155
    %v11348 = vadd.f32 %v10937, %v11156
    %v11349 = vadd.f32 %v10938, %v11157
    %v11350 = vadd.f32 %v10939, %v11158
    %v11351 = vadd.f32 %v10940, %v11159
    %v11352 = vadd.f32 %v10941, %v11160
    %v11353 = vadd.f32 %v10942, %v11161
    %v11354 = vadd.f32 %v10943, %v11162
    %v11355 = vadd.f32 %v10944, %v11163
    %v11356 = vadd.f32 %v10945, %v11164
    %v11357 = vadd.f32 %v10946, %v11165
    %v11358 = vadd.f32 %v10947, %v11166
    %v11359 = vadd.f32 %v10948, %v11167
    %v11360 = vadd.f32 %v10949, %v11168
    %v11361 = vadd.f32 %v10950, %v11169
    %v11362 = vadd.f32 %v10951, %v11170
    %v11363 = vadd.f32 %v10952, %v11171
    %v11364 = vadd.f32 %v10953, %v11172
    %v11365 = vadd.f32 %v10954, %v11173
    %v11366 = vadd.f32 %v10955, %v11174
    %v11367 = vadd.f32 %v10956, %v11175
    %v11368 = vadd.f32 %v10957, %v11176
    %v11369 = vadd.f32 %v10958, %v11177
    %v11370 = vadd.f32 %v10959, %v11178
    %v11371 = vadd.f32 %v10960, %v11179
    %v11372 = vadd.f32 %v10961, %v11180
    %v11373 = vadd.f32 %v10962, %v11181
    %v11374 = vadd.f32 %v10963, %v11182
    %v11375 = vadd.f32 %v10964, %v11183
    %v11376 = vlaneseq
    %v11377 = vshrl.u32 %v11376, 7
    %v11378 = vsub.s32 3, %v11377
    %v11379 = vrot.slane %v10330, %v11378
    %v11380 = vlaneseq
    %v11381 = vshrl.u32 %v11380, 7
    %v11382 = vsub.s32 7, %v11381
    %v11383 = vrot.slane %v10330, %v11382
    %v11384 = vlaneseq
    %v11385 = vshrl.u32 %v11384, 7
    %v11386 = vsub.s32 3, %v11385
    %v11387 = vrot.slane %v10331, %v11386
    %v11391 = vlaneseq
    %v11392 = vshrl.u32 %v11391, 7
    %v11393 = vsub.s32 3, %v11392
    %v11394 = vrot.slane %v11379, %v11393
    %v11395 = vlaneseq
    %v11396 = vshrl.u32 %v11395, 7
    %v11397 = vsub.s32 3, %v11396
    %v11398 = vrot.slane %v11383, %v11397
    %v11399 = vlaneseq
    %v11400 = vshrl.u32 %v11399, 7
    %v11401 = vsub.s32 3, %v11400
    %v11402 = vrot.slane %v11387, %v11401
    %v11403 = vmul.f32 %v1979, %v11394
    %v11404 = vmul.f32 %v1979, %v11398
    %v11405 = vmul.f32 %v1979, %v11402
    %v11406 = vmul.f32 %v1983, %v11394
    %v11407 = vmul.f32 %v1983, %v11398
    %v11408 = vmul.f32 %v1983, %v11402
    %v11409 = vmul.f32 %v1987, %v11394
    %v11410 = vmul.f32 %v1987, %v11398
    %v11411 = vmul.f32 %v1987, %v11402
    %v11412 = vmul.f32 %v1991, %v11394
    %v11413 = vmul.f32 %v1991, %v11398
    %v11414 = vmul.f32 %v1991, %v11402
    %v11415 = vmul.f32 %v1995, %v11394
    %v11416 = vmul.f32 %v1995, %v11398
    %v11417 = vmul.f32 %v1995, %v11402
    %v11418 = vmul.f32 %v1999, %v11394
    %v11419 = vmul.f32 %v1999, %v11398
    %v11420 = vmul.f32 %v1999, %v11402
    %v11421 = vmul.f32 %v2003, %v11394
    %v11422 = vmul.f32 %v2003, %v11398
    %v11423 = vmul.f32 %v2003, %v11402
    %v11424 = vmul.f32 %v2007, %v11394
    %v11425 = vmul.f32 %v2007, %v11398
    %v11426 = vmul.f32 %v2007, %v11402
    %v11427 = vmul.f32 %v2011, %v11394
    %v11428 = vmul.f32 %v2011, %v11398
    %v11429 = vmul.f32 %v2011, %v11402
    %v11430 = vmul.f32 %v2015, %v11394
    %v11431 = vmul.f32 %v2015, %v11398
    %v11432 = vmul.f32 %v2015, %v11402
    %v11433 = vmul.f32 %v2019, %v11394
    %v11434 = vmul.f32 %v2019, %v11398
    %v11435 = vmul.f32 %v2019, %v11402
    %v11436 = vmul.f32 %v2023, %v11394
    %v11437 = vmul.f32 %v2023, %v11398
    %v11438 = vmul.f32 %v2023, %v11402
    %v11439 = vmul.f32 %v2027, %v11394
    %v11440 = vmul.f32 %v2027, %v11398
    %v11441 = vmul.f32 %v2027, %v11402
    %v11442 = vmul.f32 %v2031, %v11394
    %v11443 = vmul.f32 %v2031, %v11398
    %v11444 = vmul.f32 %v2031, %v11402
    %v11445 = vmul.f32 %v2035, %v11394
    %v11446 = vmul.f32 %v2035, %v11398
    %v11447 = vmul.f32 %v2035, %v11402
    %v11448 = vmul.f32 %v2039, %v11394
    %v11449 = vmul.f32 %v2039, %v11398
    %v11450 = vmul.f32 %v2039, %v11402
    %v11451 = vmul.f32 %v2043, %v11394
    %v11452 = vmul.f32 %v2043, %v11398
    %v11453 = vmul.f32 %v2043, %v11402
    %v11454 = vmul.f32 %v2047, %v11394
    %v11455 = vmul.f32 %v2047, %v11398
    %v11456 = vmul.f32 %v2047, %v11402
    %v11457 = vmul.f32 %v2051, %v11394
    %v11458 = vmul.f32 %v2051, %v11398
    %v11459 = vmul.f32 %v2051, %v11402
    %v11460 = vmul.f32 %v2055, %v11394
    %v11461 = vmul.f32 %v2055, %v11398
    %v11462 = vmul.f32 %v2055, %v11402
    %v11463 = vmul.f32 %v2059, %v11394
    %v11464 = vmul.f32 %v2059, %v11398
    %v11465 = vmul.f32 %v2059, %v11402
    %v11466 = vmul.f32 %v2063, %v11394
    %v11467 = vmul.f32 %v2063, %v11398
    %v11468 = vmul.f32 %v2063, %v11402
    %v11469 = vmul.f32 %v2067, %v11394
    %v11470 = vmul.f32 %v2067, %v11398
    %v11471 = vmul.f32 %v2067, %v11402
    %v11472 = vmul.f32 %v2071, %v11394
    %v11473 = vmul.f32 %v2071, %v11398
    %v11474 = vmul.f32 %v2071, %v11402
    %v11475 = vmul.f32 %v2075, %v11394
    %v11476 = vmul.f32 %v2075, %v11398
    %v11477 = vmul.f32 %v2075, %v11402
    %v11478 = vmul.f32 %v2079, %v11394
    %v11479 = vmul.f32 %v2079, %v11398
    %v11480 = vmul.f32 %v2079, %v11402
    %v11481 = vmul.f32 %v2083, %v11394
    %v11482 = vmul.f32 %v2083, %v11398
    %v11483 = vmul.f32 %v2083, %v11402
    %v11484 = vmul.f32 %v2087, %v11394
    %v11485 = vmul.f32 %v2087, %v11398
    %v11486 = vmul.f32 %v2087, %v11402
    %v11487 = vmul.f32 %v2091, %v11394
    %v11488 = vmul.f32 %v2091, %v11398
    %v11489 = vmul.f32 %v2091, %v11402
    %v11490 = vmul.f32 %v2095, %v11394
    %v11491 = vmul.f32 %v2095, %v11398
    %v11492 = vmul.f32 %v2095, %v11402
    %v11493 = vmul.f32 %v2099, %v11394
    %v11494 = vmul.f32 %v2099, %v11398
    %v11495 = vmul.f32 %v2099, %v11402
    %v11496 = vmul.f32 %v2103, %v11394
    %v11497 = vmul.f32 %v2103, %v11398
    %v11498 = vmul.f32 %v2103, %v11402
    %v11499 = vmul.f32 %v2107, %v11394
    %v11500 = vmul.f32 %v2107, %v11398
    %v11501 = vmul.f32 %v2107, %v11402
    %v11502 = vmul.f32 %v2111, %v11394
    %v11503 = vmul.f32 %v2111, %v11398
    %v11504 = vmul.f32 %v2111, %v11402
    %v11505 = vmul.f32 %v2115, %v11394
    %v11506 = vmul.f32 %v2115, %v11398
    %v11507 = vmul.f32 %v2115, %v11402
    %v11508 = vmul.f32 %v2119, %v11394
    %v11509 = vmul.f32 %v2119, %v11398
    %v11510 = vmul.f32 %v2119, %v11402
    %v11511 = vmul.f32 %v2123, %v11394
    %v11512 = vmul.f32 %v2123, %v11398
    %v11513 = vmul.f32 %v2123, %v11402
    %v11514 = vmul.f32 %v2127, %v11394
    %v11515 = vmul.f32 %v2127, %v11398
    %v11516 = vmul.f32 %v2127, %v11402
    %v11517 = vmul.f32 %v2131, %v11394
    %v11518 = vmul.f32 %v2131, %v11398
    %v11519 = vmul.f32 %v2131, %v11402
    %v11520 = vmul.f32 %v2135, %v11394
    %v11521 = vmul.f32 %v2135, %v11398
    %v11522 = vmul.f32 %v2135, %v11402
    %v11523 = vmul.f32 %v2139, %v11394
    %v11524 = vmul.f32 %v2139, %v11398
    %v11525 = vmul.f32 %v2139, %v11402
    %v11526 = vmul.f32 %v2143, %v11394
    %v11527 = vmul.f32 %v2143, %v11398
    %v11528 = vmul.f32 %v2143, %v11402
    %v11529 = vmul.f32 %v2147, %v11394
    %v11530 = vmul.f32 %v2147, %v11398
    %v11531 = vmul.f32 %v2147, %v11402
    %v11532 = vmul.f32 %v2151, %v11394
    %v11533 = vmul.f32 %v2151, %v11398
    %v11534 = vmul.f32 %v2151, %v11402
    %v11535 = vmul.f32 %v2155, %v11394
    %v11536 = vmul.f32 %v2155, %v11398
    %v11537 = vmul.f32 %v2155, %v11402
    %v11538 = vmul.f32 %v2159, %v11394
    %v11539 = vmul.f32 %v2159, %v11398
    %v11540 = vmul.f32 %v2159, %v11402
    %v11541 = vmul.f32 %v2163, %v11394
    %v11542 = vmul.f32 %v2163, %v11398
    %v11543 = vmul.f32 %v2163, %v11402
    %v11544 = vmul.f32 %v2167, %v11394
    %v11545 = vmul.f32 %v2167, %v11398
    %v11546 = vmul.f32 %v2167, %v11402
    %v11547 = vmul.f32 %v2171, %v11394
    %v11548 = vmul.f32 %v2171, %v11398
    %v11549 = vmul.f32 %v2171, %v11402
    %v11550 = vmul.f32 %v2175, %v11394
    %v11551 = vmul.f32 %v2175, %v11398
    %v11552 = vmul.f32 %v2175, %v11402
    %v11553 = vmul.f32 %v2179, %v11394
    %v11554 = vmul.f32 %v2179, %v11398
    %v11555 = vmul.f32 %v2179, %v11402
    %v11556 = vmul.f32 %v2183, %v11394
    %v11557 = vmul.f32 %v2183, %v11398
    %v11558 = vmul.f32 %v2183, %v11402
    %v11559 = vmul.f32 %v2187, %v11394
    %v11560 = vmul.f32 %v2187, %v11398
    %v11561 = vmul.f32 %v2187, %v11402
    %v11562 = vmul.f32 %v2191, %v11394
    %v11563 = vmul.f32 %v2191, %v11398
    %v11564 = vmul.f32 %v2191, %v11402
    %v11565 = vmul.f32 %v2195, %v11394
    %v11566 = vmul.f32 %v2195, %v11398
    %v11567 = vmul.f32 %v2195, %v11402
    %v11568 = vmul.f32 %v2199, %v11394
    %v11569 = vmul.f32 %v2199, %v11398
    %v11570 = vmul.f32 %v2199, %v11402
    %v11571 = vmul.f32 %v2203, %v11394
    %v11572 = vmul.f32 %v2203, %v11398
    %v11573 = vmul.f32 %v2203, %v11402
    %v11574 = vmul.f32 %v2207, %v11394
    %v11575 = vmul.f32 %v2207, %v11398
    %v11576 = vmul.f32 %v2207, %v11402
    %v11577 = vmul.f32 %v2211, %v11394
    %v11578 = vmul.f32 %v2211, %v11398
    %v11579 = vmul.f32 %v2211, %v11402
    %v11580 = vmul.f32 %v2215, %v11394
    %v11581 = vmul.f32 %v2215, %v11398
    %v11582 = vmul.f32 %v2215, %v11402
    %v11583 = vmul.f32 %v2219, %v11394
    %v11584 = vmul.f32 %v2219, %v11398
    %v11585 = vmul.f32 %v2219, %v11402
    %v11586 = vmul.f32 %v2223, %v11394
    %v11587 = vmul.f32 %v2223, %v11398
    %v11588 = vmul.f32 %v2223, %v11402
    %v11589 = vmul.f32 %v2227, %v11394
    %v11590 = vmul.f32 %v2227, %v11398
    %v11591 = vmul.f32 %v2227, %v11402
    %v11592 = vmul.f32 %v2231, %v11394
    %v11593 = vmul.f32 %v2231, %v11398
    %v11594 = vmul.f32 %v2231, %v11402
    %v11595 = vadd.f32 %v11184, %v11403
    %v11596 = vadd.f32 %v11185, %v11404
    %v11597 = vadd.f32 %v11186, %v11405
    %v11598 = vadd.f32 %v11187, %v11406
    %v11599 = vadd.f32 %v11188, %v11407
    %v11600 = vadd.f32 %v11189, %v11408
    %v11601 = vadd.f32 %v11190, %v11409
    %v11602 = vadd.f32 %v11191, %v11410
    %v11603 = vadd.f32 %v11192, %v11411
    %v11604 = vadd.f32 %v11193, %v11412
    %v11605 = vadd.f32 %v11194, %v11413
    %v11606 = vadd.f32 %v11195, %v11414
    %v11607 = vadd.f32 %v11196, %v11415
    %v11608 = vadd.f32 %v11197, %v11416
    %v11609 = vadd.f32 %v11198, %v11417
    %v11610 = vadd.f32 %v11199, %v11418
    %v11611 = vadd.f32 %v11200, %v11419
    %v11612 = vadd.f32 %v11201, %v11420
    %v11613 = vadd.f32 %v11202, %v11421
    %v11614 = vadd.f32 %v11203, %v11422
    %v11615 = vadd.f32 %v11204, %v11423
    %v11616 = vadd.f32 %v11205, %v11424
    %v11617 = vadd.f32 %v11206, %v11425
    %v11618 = vadd.f32 %v11207, %v11426
    %v11619 = vadd.f32 %v11208, %v11427
    %v11620 = vadd.f32 %v11209, %v11428
    %v11621 = vadd.f32 %v11210, %v11429
    %v11622 = vadd.f32 %v11211, %v11430
    %v11623 = vadd.f32 %v11212, %v11431
    %v11624 = vadd.f32 %v11213, %v11432
    %v11625 = vadd.f32 %v11214, %v11433
    %v11626 = vadd.f32 %v11215, %v11434
    %v11627 = vadd.f32 %v11216, %v11435
    %v11628 = vadd.f32 %v11217, %v11436
    %v11629 = vadd.f32 %v11218, %v11437
    %v11630 = vadd.f32 %v11219, %v11438
    %v11631 = vadd.f32 %v11220, %v11439
    %v11632 = vadd.f32 %v11221, %v11440
    %v11633 = vadd.f32 %v11222, %v11441
    %v11634 = vadd.f32 %v11223, %v11442
    %v11635 = vadd.f32 %v11224, %v11443
    %v11636 = vadd.f32 %v11225, %v11444
    %v11637 = vadd.f32 %v11226, %v11445
    %v11638 = vadd.f32 %v11227, %v11446
    %v11639 = vadd.f32 %v11228, %v11447
    %v11640 = vadd.f32 %v11229, %v11448
    %v11641 = vadd.f32 %v11230, %v11449
    %v11642 = vadd.f32 %v11231, %v11450
    %v11643 = vadd.f32 %v11232, %v11451
    %v11644 = vadd.f32 %v11233, %v11452
    %v11645 = vadd.f32 %v11234, %v11453
    %v11646 = vadd.f32 %v11235, %v11454
    %v11647 = vadd.f32 %v11236, %v11455
    %v11648 = vadd.f32 %v11237, %v11456
    %v11649 = vadd.f32 %v11238, %v11457
    %v11650 = vadd.f32 %v11239, %v11458
    %v11651 = vadd.f32 %v11240, %v11459
    %v11652 = vadd.f32 %v11241, %v11460
    %v11653 = vadd.f32 %v11242, %v11461
    %v11654 = vadd.f32 %v11243, %v11462
    %v11655 = vadd.f32 %v11244, %v11463
    %v11656 = vadd.f32 %v11245, %v11464
    %v11657 = vadd.f32 %v11246, %v11465
    %v11658 = vadd.f32 %v11247, %v11466
    %v11659 = vadd.f32 %v11248, %v11467
    %v11660 = vadd.f32 %v11249, %v11468
    %v11661 = vadd.f32 %v11250, %v11469
    %v11662 = vadd.f32 %v11251, %v11470
    %v11663 = vadd.f32 %v11252, %v11471
    %v11664 = vadd.f32 %v11253, %v11472
    %v11665 = vadd.f32 %v11254, %v11473
    %v11666 = vadd.f32 %v11255, %v11474
    %v11667 = vadd.f32 %v11256, %v11475
    %v11668 = vadd.f32 %v11257, %v11476
    %v11669 = vadd.f32 %v11258, %v11477
    %v11670 = vadd.f32 %v11259, %v11478
    %v11671 = vadd.f32 %v11260, %v11479
    %v11672 = vadd.f32 %v11261, %v11480
    %v11673 = vadd.f32 %v11262, %v11481
    %v11674 = vadd.f32 %v11263, %v11482
    %v11675 = vadd.f32 %v11264, %v11483
    %v11676 = vadd.f32 %v11265, %v11484
    %v11677 = vadd.f32 %v11266, %v11485
    %v11678 = vadd.f32 %v11267, %v11486
    %v11679 = vadd.f32 %v11268, %v11487
    %v11680 = vadd.f32 %v11269, %v11488
    %v11681 = vadd.f32 %v11270, %v11489
    %v11682 = vadd.f32 %v11271, %v11490
    %v11683 = vadd.f32 %v11272, %v11491
    %v11684 = vadd.f32 %v11273, %v11492
    %v11685 = vadd.f32 %v11274, %v11493
    %v11686 = vadd.f32 %v11275, %v11494
    %v11687 = vadd.f32 %v11276, %v11495
    %v11688 = vadd.f32 %v11277, %v11496
    %v11689 = vadd.f32 %v11278, %v11497
    %v11690 = vadd.f32 %v11279, %v11498
    %v11691 = vadd.f32 %v11280, %v11499
    %v11692 = vadd.f32 %v11281, %v11500
    %v11693 = vadd.f32 %v11282, %v11501
    %v11694 = vadd.f32 %v11283, %v11502
    %v11695 = vadd.f32 %v11284, %v11503
    %v11696 = vadd.f32 %v11285, %v11504
    %v11697 = vadd.f32 %v11286, %v11505
    %v11698 = vadd.f32 %v11287, %v11506
    %v11699 = vadd.f32 %v11288, %v11507
    %v11700 = vadd.f32 %v11289, %v11508
    %v11701 = vadd.f32 %v11290, %v11509
    %v11702 = vadd.f32 %v11291, %v11510
    %v11703 = vadd.f32 %v11292, %v11511
    %v11704 = vadd.f32 %v11293, %v11512
    %v11705 = vadd.f32 %v11294, %v11513
    %v11706 = vadd.f32 %v11295, %v11514
    %v11707 = vadd.f32 %v11296, %v11515
    %v11708 = vadd.f32 %v11297, %v11516
    %v11709 = vadd.f32 %v11298, %v11517
    %v11710 = vadd.f32 %v11299, %v11518
    %v11711 = vadd.f32 %v11300, %v11519
    %v11712 = vadd.f32 %v11301, %v11520
    %v11713 = vadd.f32 %v11302, %v11521
    %v11714 = vadd.f32 %v11303, %v11522
    %v11715 = vadd.f32 %v11304, %v11523
    %v11716 = vadd.f32 %v11305, %v11524
    %v11717 = vadd.f32 %v11306, %v11525
    %v11718 = vadd.f32 %v11307, %v11526
    %v11719 = vadd.f32 %v11308, %v11527
    %v11720 = vadd.f32 %v11309, %v11528
    %v11721 = vadd.f32 %v11310, %v11529
    %v11722 = vadd.f32 %v11311, %v11530
    %v11723 = vadd.f32 %v11312, %v11531
    %v11724 = vadd.f32 %v11313, %v11532
    %v11725 = vadd.f32 %v11314, %v11533
    %v11726 = vadd.f32 %v11315, %v11534
    %v11727 = vadd.f32 %v11316, %v11535
    %v11728 = vadd.f32 %v11317, %v11536
    %v11729 = vadd.f32 %v11318, %v11537
    %v11730 = vadd.f32 %v11319, %v11538
    %v11731 = vadd.f32 %v11320, %v11539
    %v11732 = vadd.f32 %v11321, %v11540
    %v11733 = vadd.f32 %v11322, %v11541
    %v11734 = vadd.f32 %v11323, %v11542
    %v11735 = vadd.f32 %v11324, %v11543
    %v11736 = vadd.f32 %v11325, %v11544
    %v11737 = vadd.f32 %v11326, %v11545
    %v11738 = vadd.f32 %v11327, %v11546
    %v11739 = vadd.f32 %v11328, %v11547
    %v11740 = vadd.f32 %v11329, %v11548
    %v11741 = vadd.f32 %v11330, %v11549
    %v11742 = vadd.f32 %v11331, %v11550
    %v11743 = vadd.f32 %v11332, %v11551
    %v11744 = vadd.f32 %v11333, %v11552
    %v11745 = vadd.f32 %v11334, %v11553
    %v11746 = vadd.f32 %v11335, %v11554
    %v11747 = vadd.f32 %v11336, %v11555
    %v11748 = vadd.f32 %v11337, %v11556
    %v11749 = vadd.f32 %v11338, %v11557
    %v11750 = vadd.f32 %v11339, %v11558
    %v11751 = vadd.f32 %v11340, %v11559
    %v11752 = vadd.f32 %v11341, %v11560
    %v11753 = vadd.f32 %v11342, %v11561
    %v11754 = vadd.f32 %v11343, %v11562
    %v11755 = vadd.f32 %v11344, %v11563
    %v11756 = vadd.f32 %v11345, %v11564
    %v11757 = vadd.f32 %v11346, %v11565
    %v11758 = vadd.f32 %v11347, %v11566
    %v11759 = vadd.f32 %v11348, %v11567
    %v11760 = vadd.f32 %v11349, %v11568
    %v11761 = vadd.f32 %v11350, %v11569
    %v11762 = vadd.f32 %v11351, %v11570
    %v11763 = vadd.f32 %v11352, %v11571
    %v11764 = vadd.f32 %v11353, %v11572
    %v11765 = vadd.f32 %v11354, %v11573
    %v11766 = vadd.f32 %v11355, %v11574
    %v11767 = vadd.f32 %v11356, %v11575
    %v11768 = vadd.f32 %v11357, %v11576
    %v11769 = vadd.f32 %v11358, %v11577
    %v11770 = vadd.f32 %v11359, %v11578
    %v11771 = vadd.f32 %v11360, %v11579
    %v11772 = vadd.f32 %v11361, %v11580
    %v11773 = vadd.f32 %v11362, %v11581
    %v11774 = vadd.f32 %v11363, %v11582
    %v11775 = vadd.f32 %v11364, %v11583
    %v11776 = vadd.f32 %v11365, %v11584
    %v11777 = vadd.f32 %v11366, %v11585
    %v11778 = vadd.f32 %v11367, %v11586
    %v11779 = vadd.f32 %v11368, %v11587
    %v11780 = vadd.f32 %v11369, %v11588
    %v11781 = vadd.f32 %v11370, %v11589
    %v11782 = vadd.f32 %v11371, %v11590
    %v11783 = vadd.f32 %v11372, %v11591
    %v11784 = vadd.f32 %v11373, %v11592
    %v11785 = vadd.f32 %v11374, %v11593
    %v11786 = vadd.f32 %v11375, %v11594
    %v11788 = vlaneseq
    %v11789 = vshrl.u32 %v11788, 7
    %v11790 = vsub.s32 0, %v11789
    %v11791 = vrot.slane %v10332, %v11790
    %v11792 = vlaneseq
    %v11793 = vshrl.u32 %v11792, 7
    %v11794 = vsub.s32 1, %v11793
    %v11795 = vrot.slane %v10332, %v11794
    %v11796 = vlaneseq
    %v11797 = vshrl.u32 %v11796, 7
    %v11798 = vsub.s32 2, %v11797
    %v11799 = vrot.slane %v10332, %v11798
    %v11803 = vadd.f32 %v11595, %v11791
    %v11804 = vadd.f32 %v11596, %v11795
    %v11805 = vadd.f32 %v11597, %v11799
    %v11806 = vadd.f32 %v11598, %v11791
    %v11807 = vadd.f32 %v11599, %v11795
    %v11808 = vadd.f32 %v11600, %v11799
    %v11809 = vadd.f32 %v11601, %v11791
    %v11810 = vadd.f32 %v11602, %v11795
    %v11811 = vadd.f32 %v11603, %v11799
    %v11812 = vadd.f32 %v11604, %v11791
    %v11813 = vadd.f32 %v11605, %v11795
    %v11814 = vadd.f32 %v11606, %v11799
    %v11815 = vadd.f32 %v11607, %v11791
    %v11816 = vadd.f32 %v11608, %v11795
    %v11817 = vadd.f32 %v11609, %v11799
    %v11818 = vadd.f32 %v11610, %v11791
    %v11819 = vadd.f32 %v11611, %v11795
    %v11820 = vadd.f32 %v11612, %v11799
    %v11821 = vadd.f32 %v11613, %v11791
    %v11822 = vadd.f32 %v11614, %v11795
    %v11823 = vadd.f32 %v11615, %v11799
    %v11824 = vadd.f32 %v11616, %v11791
    %v11825 = vadd.f32 %v11617, %v11795
    %v11826 = vadd.f32 %v11618, %v11799
    %v11827 = vadd.f32 %v11619, %v11791
    %v11828 = vadd.f32 %v11620, %v11795
    %v11829 = vadd.f32 %v11621, %v11799
    %v11830 = vadd.f32 %v11622, %v11791
    %v11831 = vadd.f32 %v11623, %v11795
    %v11832 = vadd.f32 %v11624, %v11799
    %v11833 = vadd.f32 %v11625, %v11791
    %v11834 = vadd.f32 %v11626, %v11795
    %v11835 = vadd.f32 %v11627, %v11799
    %v11836 = vadd.f32 %v11628, %v11791
    %v11837 = vadd.f32 %v11629, %v11795
    %v11838 = vadd.f32 %v11630, %v11799
    %v11839 = vadd.f32 %v11631, %v11791
    %v11840 = vadd.f32 %v11632, %v11795
    %v11841 = vadd.f32 %v11633, %v11799
    %v11842 = vadd.f32 %v11634, %v11791
    %v11843 = vadd.f32 %v11635, %v11795
    %v11844 = vadd.f32 %v11636, %v11799
    %v11845 = vadd.f32 %v11637, %v11791
    %v11846 = vadd.f32 %v11638, %v11795
    %v11847 = vadd.f32 %v11639, %v11799
    %v11848 = vadd.f32 %v11640, %v11791
    %v11849 = vadd.f32 %v11641, %v11795
    %v11850 = vadd.f32 %v11642, %v11799
    %v11851 = vadd.f32 %v11643, %v11791
    %v11852 = vadd.f32 %v11644, %v11795
    %v11853 = vadd.f32 %v11645, %v11799
    %v11854 = vadd.f32 %v11646, %v11791
    %v11855 = vadd.f32 %v11647, %v11795
    %v11856 = vadd.f32 %v11648, %v11799
    %v11857 = vadd.f32 %v11649, %v11791
    %v11858 = vadd.f32 %v11650, %v11795
    %v11859 = vadd.f32 %v11651, %v11799
    %v11860 = vadd.f32 %v11652, %v11791
    %v11861 = vadd.f32 %v11653, %v11795
    %v11862 = vadd.f32 %v11654, %v11799
    %v11863 = vadd.f32 %v11655, %v11791
    %v11864 = vadd.f32 %v11656, %v11795
    %v11865 = vadd.f32 %v11657, %v11799
    %v11866 = vadd.f32 %v11658, %v11791
    %v11867 = vadd.f32 %v11659, %v11795
    %v11868 = vadd.f32 %v11660, %v11799
    %v11869 = vadd.f32 %v11661, %v11791
    %v11870 = vadd.f32 %v11662, %v11795
    %v11871 = vadd.f32 %v11663, %v11799
    %v11872 = vadd.f32 %v11664, %v11791
    %v11873 = vadd.f32 %v11665, %v11795
    %v11874 = vadd.f32 %v11666, %v11799
    %v11875 = vadd.f32 %v11667, %v11791
    %v11876 = vadd.f32 %v11668, %v11795
    %v11877 = vadd.f32 %v11669, %v11799
    %v11878 = vadd.f32 %v11670, %v11791
    %v11879 = vadd.f32 %v11671, %v11795
    %v11880 = vadd.f32 %v11672, %v11799
    %v11881 = vadd.f32 %v11673, %v11791
    %v11882 = vadd.f32 %v11674, %v11795
    %v11883 = vadd.f32 %v11675, %v11799
    %v11884 = vadd.f32 %v11676, %v11791
    %v11885 = vadd.f32 %v11677, %v11795
    %v11886 = vadd.f32 %v11678, %v11799
    %v11887 = vadd.f32 %v11679, %v11791
    %v11888 = vadd.f32 %v11680, %v11795
    %v11889 = vadd.f32 %v11681, %v11799
    %v11890 = vadd.f32 %v11682, %v11791
    %v11891 = vadd.f32 %v11683, %v11795
    %v11892 = vadd.f32 %v11684, %v11799
    %v11893 = vadd.f32 %v11685, %v11791
    %v11894 = vadd.f32 %v11686, %v11795
    %v11895 = vadd.f32 %v11687, %v11799
    %v11896 = vadd.f32 %v11688, %v11791
    %v11897 = vadd.f32 %v11689, %v11795
    %v11898 = vadd.f32 %v11690, %v11799
    %v11899 = vadd.f32 %v11691, %v11791
    %v11900 = vadd.f32 %v11692, %v11795
    %v11901 = vadd.f32 %v11693, %v11799
    %v11902 = vadd.f32 %v11694, %v11791
    %v11903 = vadd.f32 %v11695, %v11795
    %v11904 = vadd.f32 %v11696, %v11799
    %v11905 = vadd.f32 %v11697, %v11791
    %v11906 = vadd.f32 %v11698, %v11795
    %v11907 = vadd.f32 %v11699, %v11799
    %v11908 = vadd.f32 %v11700, %v11791
    %v11909 = vadd.f32 %v11701, %v11795
    %v11910 = vadd.f32 %v11702, %v11799
    %v11911 = vadd.f32 %v11703, %v11791
    %v11912 = vadd.f32 %v11704, %v11795
    %v11913 = vadd.f32 %v11705, %v11799
    %v11914 = vadd.f32 %v11706, %v11791
    %v11915 = vadd.f32 %v11707, %v11795
    %v11916 = vadd.f32 %v11708, %v11799
    %v11917 = vadd.f32 %v11709, %v11791
    %v11918 = vadd.f32 %v11710, %v11795
    %v11919 = vadd.f32 %v11711, %v11799
    %v11920 = vadd.f32 %v11712, %v11791
    %v11921 = vadd.f32 %v11713, %v11795
    %v11922 = vadd.f32 %v11714, %v11799
    %v11923 = vadd.f32 %v11715, %v11791
    %v11924 = vadd.f32 %v11716, %v11795
    %v11925 = vadd.f32 %v11717, %v11799
    %v11926 = vadd.f32 %v11718, %v11791
    %v11927 = vadd.f32 %v11719, %v11795
    %v11928 = vadd.f32 %v11720, %v11799
    %v11929 = vadd.f32 %v11721, %v11791
    %v11930 = vadd.f32 %v11722, %v11795
    %v11931 = vadd.f32 %v11723, %v11799
    %v11932 = vadd.f32 %v11724, %v11791
    %v11933 = vadd.f32 %v11725, %v11795
    %v11934 = vadd.f32 %v11726, %v11799
    %v11935 = vadd.f32 %v11727, %v11791
    %v11936 = vadd.f32 %v11728, %v11795
    %v11937 = vadd.f32 %v11729, %v11799
    %v11938 = vadd.f32 %v11730, %v11791
    %v11939 = vadd.f32 %v11731, %v11795
    %v11940 = vadd.f32 %v11732, %v11799
    %v11941 = vadd.f32 %v11733, %v11791
    %v11942 = vadd.f32 %v11734, %v11795
    %v11943 = vadd.f32 %v11735, %v11799
    %v11944 = vadd.f32 %v11736, %v11791
    %v11945 = vadd.f32 %v11737, %v11795
    %v11946 = vadd.f32 %v11738, %v11799
    %v11947 = vadd.f32 %v11739, %v11791
    %v11948 = vadd.f32 %v11740, %v11795
    %v11949 = vadd.f32 %v11741, %v11799
    %v11950 = vadd.f32 %v11742, %v11791
    %v11951 = vadd.f32 %v11743, %v11795
    %v11952 = vadd.f32 %v11744, %v11799
    %v11953 = vadd.f32 %v11745, %v11791
    %v11954 = vadd.f32 %v11746, %v11795
    %v11955 = vadd.f32 %v11747, %v11799
    %v11956 = vadd.f32 %v11748, %v11791
    %v11957 = vadd.f32 %v11749, %v11795
    %v11958 = vadd.f32 %v11750, %v11799
    %v11959 = vadd.f32 %v11751, %v11791
    %v11960 = vadd.f32 %v11752, %v11795
    %v11961 = vadd.f32 %v11753, %v11799
    %v11962 = vadd.f32 %v11754, %v11791
    %v11963 = vadd.f32 %v11755, %v11795
    %v11964 = vadd.f32 %v11756, %v11799
    %v11965 = vadd.f32 %v11757, %v11791
    %v11966 = vadd.f32 %v11758, %v11795
    %v11967 = vadd.f32 %v11759, %v11799
    %v11968 = vadd.f32 %v11760, %v11791
    %v11969 = vadd.f32 %v11761, %v11795
    %v11970 = vadd.f32 %v11762, %v11799
    %v11971 = vadd.f32 %v11763, %v11791
    %v11972 = vadd.f32 %v11764, %v11795
    %v11973 = vadd.f32 %v11765, %v11799
    %v11974 = vadd.f32 %v11766, %v11791
    %v11975 = vadd.f32 %v11767, %v11795
    %v11976 = vadd.f32 %v11768, %v11799
    %v11977 = vadd.f32 %v11769, %v11791
    %v11978 = vadd.f32 %v11770, %v11795
    %v11979 = vadd.f32 %v11771, %v11799
    %v11980 = vadd.f32 %v11772, %v11791
    %v11981 = vadd.f32 %v11773, %v11795
    %v11982 = vadd.f32 %v11774, %v11799
    %v11983 = vadd.f32 %v11775, %v11791
    %v11984 = vadd.f32 %v11776, %v11795
    %v11985 = vadd.f32 %v11777, %v11799
    %v11986 = vadd.f32 %v11778, %v11791
    %v11987 = vadd.f32 %v11779, %v11795
    %v11988 = vadd.f32 %v11780, %v11799
    %v11989 = vadd.f32 %v11781, %v11791
    %v11990 = vadd.f32 %v11782, %v11795
    %v11991 = vadd.f32 %v11783, %v11799
    %v11992 = vadd.f32 %v11784, %v11791
    %v11993 = vadd.f32 %v11785, %v11795
    %v11994 = vadd.f32 %v11786, %v11799
    %v11995 = vmax.f32 %v11803, 0.0
    %v11996 = vmax.f32 %v11804, 0.0
    %v11997 = vmax.f32 %v11805, 0.0
    %v11998 = vmax.f32 %v11806, 0.0
    %v11999 = vmax.f32 %v11807, 0.0
    %v12000 = vmax.f32 %v11808, 0.0
    %v12001 = vmax.f32 %v11809, 0.0
    %v12002 = vmax.f32 %v11810, 0.0
    %v12003 = vmax.f32 %v11811, 0.0
    %v12004 = vmax.f32 %v11812, 0.0
    %v12005 = vmax.f32 %v11813, 0.0
    %v12006 = vmax.f32 %v11814, 0.0
    %v12007 = vmax.f32 %v11815, 0.0
    %v12008 = vmax.f32 %v11816, 0.0
    %v12009 = vmax.f32 %v11817, 0.0
    %v12010 = vmax.f32 %v11818, 0.0
    %v12011 = vmax.f32 %v11819, 0.0
    %v12012 = vmax.f32 %v11820, 0.0
    %v12013 = vmax.f32 %v11821, 0.0
    %v12014 = vmax.f32 %v11822, 0.0
    %v12015 = vmax.f32 %v11823, 0.0
    %v12016 = vmax.f32 %v11824, 0.0
    %v12017 = vmax.f32 %v11825, 0.0
    %v12018 = vmax.f32 %v11826, 0.0
    %v12019 = vmax.f32 %v11827, 0.0
    %v12020 = vmax.f32 %v11828, 0.0
    %v12021 = vmax.f32 %v11829, 0.0
    %v12022 = vmax.f32 %v11830, 0.0
    %v12023 = vmax.f32 %v11831, 0.0
    %v12024 = vmax.f32 %v11832, 0.0
    %v12025 = vmax.f32 %v11833, 0.0
    %v12026 = vmax.f32 %v11834, 0.0
    %v12027 = vmax.f32 %v11835, 0.0
    %v12028 = vmax.f32 %v11836, 0.0
    %v12029 = vmax.f32 %v11837, 0.0
    %v12030 = vmax.f32 %v11838, 0.0
    %v12031 = vmax.f32 %v11839, 0.0
    %v12032 = vmax.f32 %v11840, 0.0
    %v12033 = vmax.f32 %v11841, 0.0
    %v12034 = vmax.f32 %v11842, 0.0
    %v12035 = vmax.f32 %v11843, 0.0
    %v12036 = vmax.f32 %v11844, 0.0
    %v12037 = vmax.f32 %v11845, 0.0
    %v12038 = vmax.f32 %v11846, 0.0
    %v12039 = vmax.f32 %v11847, 0.0
    %v12040 = vmax.f32 %v11848, 0.0
    %v12041 = vmax.f32 %v11849, 0.0
    %v12042 = vmax.f32 %v11850, 0.0
    %v12043 = vmax.f32 %v11851, 0.0
    %v12044 = vmax.f32 %v11852, 0.0
    %v12045 = vmax.f32 %v11853, 0.0
    %v12046 = vmax.f32 %v11854, 0.0
    %v12047 = vmax.f32 %v11855, 0.0
    %v12048 = vmax.f32 %v11856, 0.0
    %v12049 = vmax.f32 %v11857, 0.0
    %v12050 = vmax.f32 %v11858, 0.0
    %v12051 = vmax.f32 %v11859, 0.0
    %v12052 = vmax.f32 %v11860, 0.0
    %v12053 = vmax.f32 %v11861, 0.0
    %v12054 = vmax.f32 %v11862, 0.0
    %v12055 = vmax.f32 %v11863, 0.0
    %v12056 = vmax.f32 %v11864, 0.0
    %v12057 = vmax.f32 %v11865, 0.0
    %v12058 = vmax.f32 %v11866, 0.0
    %v12059 = vmax.f32 %v11867, 0.0
    %v12060 = vmax.f32 %v11868, 0.0
    %v12061 = vmax.f32 %v11869, 0.0
    %v12062 = vmax.f32 %v11870, 0.0
    %v12063 = vmax.f32 %v11871, 0.0
    %v12064 = vmax.f32 %v11872, 0.0
    %v12065 = vmax.f32 %v11873, 0.0
    %v12066 = vmax.f32 %v11874, 0.0
    %v12067 = vmax.f32 %v11875, 0.0
    %v12068 = vmax.f32 %v11876, 0.0
    %v12069 = vmax.f32 %v11877, 0.0
    %v12070 = vmax.f32 %v11878, 0.0
    %v12071 = vmax.f32 %v11879, 0.0
    %v12072 = vmax.f32 %v11880, 0.0
    %v12073 = vmax.f32 %v11881, 0.0
    %v12074 = vmax.f32 %v11882, 0.0
    %v12075 = vmax.f32 %v11883, 0.0
    %v12076 = vmax.f32 %v11884, 0.0
    %v12077 = vmax.f32 %v11885, 0.0
    %v12078 = vmax.f32 %v11886, 0.0
    %v12079 = vmax.f32 %v11887, 0.0
    %v12080 = vmax.f32 %v11888, 0.0
    %v12081 = vmax.f32 %v11889, 0.0
    %v12082 = vmax.f32 %v11890, 0.0
    %v12083 = vmax.f32 %v11891, 0.0
    %v12084 = vmax.f32 %v11892, 0.0
    %v12085 = vmax.f32 %v11893, 0.0
    %v12086 = vmax.f32 %v11894, 0.0
    %v12087 = vmax.f32 %v11895, 0.0
    %v12088 = vmax.f32 %v11896, 0.0
    %v12089 = vmax.f32 %v11897, 0.0
    %v12090 = vmax.f32 %v11898, 0.0
    %v12091 = vmax.f32 %v11899, 0.0
    %v12092 = vmax.f32 %v11900, 0.0
    %v12093 = vmax.f32 %v11901, 0.0
    %v12094 = vmax.f32 %v11902, 0.0
    %v12095 = vmax.f32 %v11903, 0.0
    %v12096 = vmax.f32 %v11904, 0.0
    %v12097 = vmax.f32 %v11905, 0.0
    %v12098 = vmax.f32 %v11906, 0.0
    %v12099 = vmax.f32 %v11907, 0.0
    %v12100 = vmax.f32 %v11908, 0.0
    %v12101 = vmax.f32 %v11909, 0.0
    %v12102 = vmax.f32 %v11910, 0.0
    %v12103 = vmax.f32 %v11911, 0.0
    %v12104 = vmax.f32 %v11912, 0.0
    %v12105 = vmax.f32 %v11913, 0.0
    %v12106 = vmax.f32 %v11914, 0.0
    %v12107 = vmax.f32 %v11915, 0.0
    %v12108 = vmax.f32 %v11916, 0.0
    %v12109 = vmax.f32 %v11917, 0.0
    %v12110 = vmax.f32 %v11918, 0.0
    %v12111 = vmax.f32 %v11919, 0.0
    %v12112 = vmax.f32 %v11920, 0.0
    %v12113 = vmax.f32 %v11921, 0.0
    %v12114 = vmax.f32 %v11922, 0.0
    %v12115 = vmax.f32 %v11923, 0.0
    %v12116 = vmax.f32 %v11924, 0.0
    %v12117 = vmax.f32 %v11925, 0.0
    %v12118 = vmax.f32 %v11926, 0.0
    %v12119 = vmax.f32 %v11927, 0.0
    %v12120 = vmax.f32 %v11928, 0.0
    %v12121 = vmax.f32 %v11929, 0.0
    %v12122 = vmax.f32 %v11930, 0.0
    %v12123 = vmax.f32 %v11931, 0.0
    %v12124 = vmax.f32 %v11932, 0.0
    %v12125 = vmax.f32 %v11933, 0.0
    %v12126 = vmax.f32 %v11934, 0.0
    %v12127 = vmax.f32 %v11935, 0.0
    %v12128 = vmax.f32 %v11936, 0.0
    %v12129 = vmax.f32 %v11937, 0.0
    %v12130 = vmax.f32 %v11938, 0.0
    %v12131 = vmax.f32 %v11939, 0.0
    %v12132 = vmax.f32 %v11940, 0.0
    %v12133 = vmax.f32 %v11941, 0.0
    %v12134 = vmax.f32 %v11942, 0.0
    %v12135 = vmax.f32 %v11943, 0.0
    %v12136 = vmax.f32 %v11944, 0.0
    %v12137 = vmax.f32 %v11945, 0.0
    %v12138 = vmax.f32 %v11946, 0.0
    %v12139 = vmax.f32 %v11947, 0.0
    %v12140 = vmax.f32 %v11948, 0.0
    %v12141 = vmax.f32 %v11949, 0.0
    %v12142 = vmax.f32 %v11950, 0.0
    %v12143 = vmax.f32 %v11951, 0.0
    %v12144 = vmax.f32 %v11952, 0.0
    %v12145 = vmax.f32 %v11953, 0.0
    %v12146 = vmax.f32 %v11954, 0.0
    %v12147 = vmax.f32 %v11955, 0.0
    %v12148 = vmax.f32 %v11956, 0.0
    %v12149 = vmax.f32 %v11957, 0.0
    %v12150 = vmax.f32 %v11958, 0.0
    %v12151 = vmax.f32 %v11959, 0.0
    %v12152 = vmax.f32 %v11960, 0.0
    %v12153 = vmax.f32 %v11961, 0.0
    %v12154 = vmax.f32 %v11962, 0.0
    %v12155 = vmax.f32 %v11963, 0.0
    %v12156 = vmax.f32 %v11964, 0.0
    %v12157 = vmax.f32 %v11965, 0.0
    %v12158 = vmax.f32 %v11966, 0.0
    %v12159 = vmax.f32 %v11967, 0.0
    %v12160 = vmax.f32 %v11968, 0.0
    %v12161 = vmax.f32 %v11969, 0.0
    %v12162 = vmax.f32 %v11970, 0.0
    %v12163 = vmax.f32 %v11971, 0.0
    %v12164 = vmax.f32 %v11972, 0.0
    %v12165 = vmax.f32 %v11973, 0.0
    %v12166 = vmax.f32 %v11974, 0.0
    %v12167 = vmax.f32 %v11975, 0.0
    %v12168 = vmax.f32 %v11976, 0.0
    %v12169 = vmax.f32 %v11977, 0.0
    %v12170 = vmax.f32 %v11978, 0.0
    %v12171 = vmax.f32 %v11979, 0.0
    %v12172 = vmax.f32 %v11980, 0.0
    %v12173 = vmax.f32 %v11981, 0.0
    %v12174 = vmax.f32 %v11982, 0.0
    %v12175 = vmax.f32 %v11983, 0.0
    %v12176 = vmax.f32 %v11984, 0.0
    %v12177 = vmax.f32 %v11985, 0.0
    %v12178 = vmax.f32 %v11986, 0.0
    %v12179 = vmax.f32 %v11987, 0.0
    %v12180 = vmax.f32 %v11988, 0.0
    %v12181 = vmax.f32 %v11989, 0.0
    %v12182 = vmax.f32 %v11990, 0.0
    %v12183 = vmax.f32 %v11991, 0.0
    %v12184 = vmax.f32 %v11992, 0.0
    %v12185 = vmax.f32 %v11993, 0.0
    %v12186 = vmax.f32 %v11994, 0.0
    %v12187 = vadd.f32 %v11995, %v11998
    %v12188 = vadd.f32 %v12187, %v12001
    %v12189 = vadd.f32 %v12188, %v12004
    %v12190 = vadd.f32 %v12189, %v12007
    %v12191 = vadd.f32 %v12190, %v12010
    %v12192 = vadd.f32 %v12191, %v12013
    %v12193 = vadd.f32 %v12192, %v12016
    %v12194 = vadd.f32 %v12193, %v12019
    %v12195 = vadd.f32 %v12194, %v12022
    %v12196 = vadd.f32 %v12195, %v12025
    %v12197 = vadd.f32 %v12196, %v12028
    %v12198 = vadd.f32 %v12197, %v12031
    %v12199 = vadd.f32 %v12198, %v12034
    %v12200 = vadd.f32 %v12199, %v12037
    %v12201 = vadd.f32 %v12200, %v12040
    %v12202 = vadd.f32 %v12201, %v12043
    %v12203 = vadd.f32 %v12202, %v12046
    %v12204 = vadd.f32 %v12203, %v12049
    %v12205 = vadd.f32 %v12204, %v12052
    %v12206 = vadd.f32 %v12205, %v12055
    %v12207 = vadd.f32 %v12206, %v12058
    %v12208 = vadd.f32 %v12207, %v12061
    %v12209 = vadd.f32 %v12208, %v12064
    %v12210 = vadd.f32 %v12209, %v12067
    %v12211 = vadd.f32 %v12210, %v12070
    %v12212 = vadd.f32 %v12211, %v12073
    %v12213 = vadd.f32 %v12212, %v12076
    %v12214 = vadd.f32 %v12213, %v12079
    %v12215 = vadd.f32 %v12214, %v12082
    %v12216 = vadd.f32 %v12215, %v12085
    %v12217 = vadd.f32 %v12216, %v12088
    %v12218 = vrot.slane %v12217, 4
    %v12219 = vadd.f32 %v12217, %v12218
    %v12220 = vrot.slane %v12219, 2
    %v12221 = vadd.f32 %v12219, %v12220
    %v12222 = vrot.slane %v12221, 1
    %v12223 = vadd.f32 %v12221, %v12222
    %v12224 = vadd.f32 %v11996, %v11999
    %v12225 = vadd.f32 %v12224, %v12002
    %v12226 = vadd.f32 %v12225, %v12005
    %v12227 = vadd.f32 %v12226, %v12008
    %v12228 = vadd.f32 %v12227, %v12011
    %v12229 = vadd.f32 %v12228, %v12014
    %v12230 = vadd.f32 %v12229, %v12017
    %v12231 = vadd.f32 %v12230, %v12020
    %v12232 = vadd.f32 %v12231, %v12023
    %v12233 = vadd.f32 %v12232, %v12026
    %v12234 = vadd.f32 %v12233, %v12029
    %v12235 = vadd.f32 %v12234, %v12032
    %v12236 = vadd.f32 %v12235, %v12035
    %v12237 = vadd.f32 %v12236, %v12038
    %v12238 = vadd.f32 %v12237, %v12041
    %v12239 = vadd.f32 %v12238, %v12044
    %v12240 = vadd.f32 %v12239, %v12047
    %v12241 = vadd.f32 %v12240, %v12050
    %v12242 = vadd.f32 %v12241, %v12053
    %v12243 = vadd.f32 %v12242, %v12056
    %v12244 = vadd.f32 %v12243, %v12059
    %v12245 = vadd.f32 %v12244, %v12062
    %v12246 = vadd.f32 %v12245, %v12065
    %v12247 = vadd.f32 %v12246, %v12068
    %v12248 = vadd.f32 %v12247, %v12071
    %v12249 = vadd.f32 %v12248, %v12074
    %v12250 = vadd.f32 %v12249, %v12077
    %v12251 = vadd.f32 %v12250, %v12080
    %v12252 = vadd.f32 %v12251, %v12083
    %v12253 = vadd.f32 %v12252, %v12086
    %v12254 = vadd.f32 %v12253, %v12089
    %v12255 = vrot.slane %v12254, 4
    %v12256 = vadd.f32 %v12254, %v12255
    %v12257 = vrot.slane %v12256, 2
    %v12258 = vadd.f32 %v12256, %v12257
    %v12259 = vrot.slane %v12258, 1
    %v12260 = vadd.f32 %v12258, %v12259
    %v12261 = vadd.f32 %v11997, %v12000
    %v12262 = vadd.f32 %v12261, %v12003
    %v12263 = vadd.f32 %v12262, %v12006
    %v12264 = vadd.f32 %v12263, %v12009
    %v12265 = vadd.f32 %v12264, %v12012
    %v12266 = vadd.f32 %v12265, %v12015
    %v12267 = vadd.f32 %v12266, %v12018
    %v12268 = vadd.f32 %v12267, %v12021
    %v12269 = vadd.f32 %v12268, %v12024
    %v12270 = vadd.f32 %v12269, %v12027
    %v12271 = vadd.f32 %v12270, %v12030
    %v12272 = vadd.f32 %v12271, %v12033
    %v12273 = vadd.f32 %v12272, %v12036
    %v12274 = vadd.f32 %v12273, %v12039
    %v12275 = vadd.f32 %v12274, %v12042
    %v12276 = vadd.f32 %v12275, %v12045
    %v12277 = vadd.f32 %v12276, %v12048
    %v12278 = vadd.f32 %v12277, %v12051
    %v12279 = vadd.f32 %v12278, %v12054
    %v12280 = vadd.f32 %v12279, %v12057
    %v12281 = vadd.f32 %v12280, %v12060
    %v12282 = vadd.f32 %v12281, %v12063
    %v12283 = vadd.f32 %v12282, %v12066
    %v12284 = vadd.f32 %v12283, %v12069
    %v12285 = vadd.f32 %v12284, %v12072
    %v12286 = vadd.f32 %v12285, %v12075
    %v12287 = vadd.f32 %v12286, %v12078
    %v12288 = vadd.f32 %v12287, %v12081
    %v12289 = vadd.f32 %v12288, %v12084
    %v12290 = vadd.f32 %v12289, %v12087
    %v12291 = vadd.f32 %v12290, %v12090
    %v12292 = vrot.slane %v12291, 4
    %v12293 = vadd.f32 %v12291, %v12292
    %v12294 = vrot.slane %v12293, 2
    %v12295 = vadd.f32 %v12293, %v12294
    %v12296 = vrot.slane %v12295, 1
    %v12297 = vadd.f32 %v12295, %v12296
    %v12298 = vadd.f32 %v12091, %v12094
    %v12299 = vadd.f32 %v12298, %v12097
    %v12300 = vadd.f32 %v12299, %v12100
    %v12301 = vadd.f32 %v12300, %v12103
    %v12302 = vadd.f32 %v12301, %v12106
    %v12303 = vadd.f32 %v12302, %v12109
    %v12304 = vadd.f32 %v12303, %v12112
    %v12305 = vadd.f32 %v12304, %v12115
    %v12306 = vadd.f32 %v12305, %v12118
    %v12307 = vadd.f32 %v12306, %v12121
    %v12308 = vadd.f32 %v12307, %v12124
    %v12309 = vadd.f32 %v12308, %v12127
    %v12310 = vadd.f32 %v12309, %v12130
    %v12311 = vadd.f32 %v12310, %v12133
    %v12312 = vadd.f32 %v12311, %v12136
    %v12313 = vadd.f32 %v12312, %v12139
    %v12314 = vadd.f32 %v12313, %v12142
    %v12315 = vadd.f32 %v12314, %v12145
    %v12316 = vadd.f32 %v12315, %v12148
    %v12317 = vadd.f32 %v12316, %v12151
    %v12318 = vadd.f32 %v12317, %v12154
    %v12319 = vadd.f32 %v12318, %v12157
    %v12320 = vadd.f32 %v12319, %v12160
    %v12321 = vadd.f32 %v12320, %v12163
    %v12322 = vadd.f32 %v12321, %v12166
    %v12323 = vadd.f32 %v12322, %v12169
    %v12324 = vadd.f32 %v12323, %v12172
    %v12325 = vadd.f32 %v12324, %v12175
    %v12326 = vadd.f32 %v12325, %v12178
    %v12327 = vadd.f32 %v12326, %v12181
    %v12328 = vadd.f32 %v12327, %v12184
    %v12329 = vrot.slane %v12328, 4
    %v12330 = vadd.f32 %v12328, %v12329
    %v12331 = vrot.slane %v12330, 2
    %v12332 = vadd.f32 %v12330, %v12331
    %v12333 = vrot.slane %v12332, 1
    %v12334 = vadd.f32 %v12332, %v12333
    %v12335 = vadd.f32 %v12092, %v12095
    %v12336 = vadd.f32 %v12335, %v12098
    %v12337 = vadd.f32 %v12336, %v12101
    %v12338 = vadd.f32 %v12337, %v12104
    %v12339 = vadd.f32 %v12338, %v12107
    %v12340 = vadd.f32 %v12339, %v12110
    %v12341 = vadd.f32 %v12340, %v12113
    %v12342 = vadd.f32 %v12341, %v12116
    %v12343 = vadd.f32 %v12342, %v12119
    %v12344 = vadd.f32 %v12343, %v12122
    %v12345 = vadd.f32 %v12344, %v12125
    %v12346 = vadd.f32 %v12345, %v12128
    %v12347 = vadd.f32 %v12346, %v12131
    %v12348 = vadd.f32 %v12347, %v12134
    %v12349 = vadd.f32 %v12348, %v12137
    %v12350 = vadd.f32 %v12349, %v12140
    %v12351 = vadd.f32 %v12350, %v12143
    %v12352 = vadd.f32 %v12351, %v12146
    %v12353 = vadd.f32 %v12352, %v12149
    %v12354 = vadd.f32 %v12353, %v12152
    %v12355 = vadd.f32 %v12354, %v12155
    %v12356 = vadd.f32 %v12355, %v12158
    %v12357 = vadd.f32 %v12356, %v12161
    %v12358 = vadd.f32 %v12357, %v12164
    %v12359 = vadd.f32 %v12358, %v12167
    %v12360 = vadd.f32 %v12359, %v12170
    %v12361 = vadd.f32 %v12360, %v12173
    %v12362 = vadd.f32 %v12361, %v12176
    %v12363 = vadd.f32 %v12362, %v12179
    %v12364 = vadd.f32 %v12363, %v12182
    %v12365 = vadd.f32 %v12364, %v12185
    %v12366 = vrot.slane %v12365, 4
    %v12367 = vadd.f32 %v12365, %v12366
    %v12368 = vrot.slane %v12367, 2
    %v12369 = vadd.f32 %v12367, %v12368
    %v12370 = vrot.slane %v12369, 1
    %v12371 = vadd.f32 %v12369, %v12370
    %v12372 = vadd.f32 %v12093, %v12096
    %v12373 = vadd.f32 %v12372, %v12099
    %v12374 = vadd.f32 %v12373, %v12102
    %v12375 = vadd.f32 %v12374, %v12105
    %v12376 = vadd.f32 %v12375, %v12108
    %v12377 = vadd.f32 %v12376, %v12111
    %v12378 = vadd.f32 %v12377, %v12114
    %v12379 = vadd.f32 %v12378, %v12117
    %v12380 = vadd.f32 %v12379, %v12120
    %v12381 = vadd.f32 %v12380, %v12123
    %v12382 = vadd.f32 %v12381, %v12126
    %v12383 = vadd.f32 %v12382, %v12129
    %v12384 = vadd.f32 %v12383, %v12132
    %v12385 = vadd.f32 %v12384, %v12135
    %v12386 = vadd.f32 %v12385, %v12138
    %v12387 = vadd.f32 %v12386, %v12141
    %v12388 = vadd.f32 %v12387, %v12144
    %v12389 = vadd.f32 %v12388, %v12147
    %v12390 = vadd.f32 %v12389, %v12150
    %v12391 = vadd.f32 %v12390, %v12153
    %v12392 = vadd.f32 %v12391, %v12156
    %v12393 = vadd.f32 %v12392, %v12159
    %v12394 = vadd.f32 %v12393, %v12162
    %v12395 = vadd.f32 %v12394, %v12165
    %v12396 = vadd.f32 %v12395, %v12168
    %v12397 = vadd.f32 %v12396, %v12171
    %v12398 = vadd.f32 %v12397, %v12174
    %v12399 = vadd.f32 %v12398, %v12177
    %v12400 = vadd.f32 %v12399, %v12180
    %v12401 = vadd.f32 %v12400, %v12183
    %v12402 = vadd.f32 %v12401, %v12186
    %v12403 = vrot.slane %v12402, 4
    %v12404 = vadd.f32 %v12402, %v12403
    %v12405 = vrot.slane %v12404, 2
    %v12406 = vadd.f32 %v12404, %v12405
    %v12407 = vrot.slane %v12406, 1
    %v12408 = vadd.f32 %v12406, %v12407
    %v12409 = vmul.f32 %v12223, 0.00390625
    %v12410 = vmul.f32 %v12260, 0.00390625
    %v12411 = vmul.f32 %v12297, 0.00390625
    %v12412 = vmul.f32 %v12334, 0.00390625
    %v12413 = vmul.f32 %v12371, 0.00390625
    %v12414 = vmul.f32 %v12408, 0.00390625
    %v12415 = vld [vmem:[#allocation2 + $0x600] sm:$0xff]
    %v12416 = vld [vmem:[#allocation2 + $0x608] sm:$0xff]
    %v12417 = vld [vmem:[#allocation2 + $0x610] sm:$0xff]
    %v12418 = vld [vmem:[#allocation2 + $0x618] sm:$0xff]
    %v12419 = vld [vmem:[#allocation2 + $0x620] sm:$0xff]
    %v12420 = vld [vmem:[#allocation2 + $0x628] sm:$0xff]
    %v12421 = vld [vmem:[#allocation2 + $0x630] sm:$0xff]
    %v12422 = vld [vmem:[#allocation2 + $0x638] sm:$0xff]
    %v12423 = vld [vmem:[#allocation2 + $0x640] sm:$0xff]
    %v12424 = vld [vmem:[#allocation2 + $0x648] sm:$0xff]
    %v12425 = vld [vmem:[#allocation2 + $0x650] sm:$0xff]
    %v12426 = vld [vmem:[#allocation2 + $0x658] sm:$0xff]
    %v12427 = vld [vmem:[#allocation2 + $0x660] sm:$0xff]
    %v12428 = vld [vmem:[#allocation2 + $0x668] sm:$0xff]
    %v12429 = vld [vmem:[#allocation2 + $0x670] sm:$0xff]
    %v12430 = vld [vmem:[#allocation2 + $0x678] sm:$0xff]
    %v12431 = vld [vmem:[#allocation2 + $0x680] sm:$0xff]
    %v12432 = vld [vmem:[#allocation2 + $0x688] sm:$0xff]
    %v12433 = vld [vmem:[#allocation2 + $0x690] sm:$0xff]
    %v12434 = vld [vmem:[#allocation2 + $0x698] sm:$0xff]
    %v12435 = vld [vmem:[#allocation2 + $0x6a0] sm:$0xff]
    %v12436 = vld [vmem:[#allocation2 + $0x6a8] sm:$0xff]
    %v12437 = vld [vmem:[#allocation2 + $0x6b0] sm:$0xff]
    %v12438 = vld [vmem:[#allocation2 + $0x6b8] sm:$0xff]
    %v12439 = vld [vmem:[#allocation2 + $0x6c0] sm:$0xff]
    %v12440 = vld [vmem:[#allocation2 + $0x6c8] sm:$0xff]
    %v12441 = vld [vmem:[#allocation2 + $0x6d0] sm:$0xff]
    %v12442 = vld [vmem:[#allocation2 + $0x6d8] sm:$0xff]
    %v12443 = vld [vmem:[#allocation2 + $0x6e0] sm:$0xff]
    %v12444 = vld [vmem:[#allocation2 + $0x6e8] sm:$0xff]
    %v12445 = vld [vmem:[#allocation2 + $0x6f0] sm:$0xff]
    %v12446 = vld [vmem:[#allocation2 + $0x6f8] sm:$0xff]
    %v12447 = vld [vmem:[#allocation2 + $0x700] sm:$0xff]
    %v12448 = vld [vmem:[#allocation2 + $0x708] sm:$0xff]
    %v12449 = vld [vmem:[#allocation2 + $0x710] sm:$0xff]
    %v12450 = vld [vmem:[#allocation2 + $0x718] sm:$0xff]
    %v12451 = vld [vmem:[#allocation2 + $0x720] sm:$0xff]
    %v12452 = vld [vmem:[#allocation2 + $0x728] sm:$0xff]
    %v12453 = vld [vmem:[#allocation2 + $0x730] sm:$0xff]
    %v12454 = vld [vmem:[#allocation2 + $0x738] sm:$0xff]
    %v12455 = vld [vmem:[#allocation2 + $0x740] sm:$0xff]
    %v12456 = vld [vmem:[#allocation2 + $0x748] sm:$0xff]
    %v12457 = vld [vmem:[#allocation2 + $0x750] sm:$0xff]
    %v12458 = vld [vmem:[#allocation2 + $0x758] sm:$0xff]
    %v12459 = vld [vmem:[#allocation2 + $0x760] sm:$0xff]
    %v12460 = vld [vmem:[#allocation2 + $0x768] sm:$0xff]
    %v12461 = vld [vmem:[#allocation2 + $0x770] sm:$0xff]
    %v12462 = vld [vmem:[#allocation2 + $0x778] sm:$0xff]
    %v12469 = vsel %vm5459, %v12412, %v12409
    %v12470 = vsel %vm5459, %v12413, %v12410
    %v12471 = vsel %vm5459, %v12414, %v12411
    %12475 = vmatprep.subr.mxu0 0.0
    %12476 = vmatpush1.msra.mxu0 %v12415
    %12477 = vmatprep.subr.mxu0 0.0
    %12478 = vmatpush1.msra.mxu0 %v12416
    %12479 = vmatprep.subr.mxu0 0.0
    %12480 = vmatpush1.msra.mxu0 %v12417
    %12481 = vmatprep.subr.mxu0 0.0
    %12482 = vmatpush1.msra.mxu0 %v12418
    %12483 = vmatprep.subr.mxu0 0.0
    %12484 = vmatpush1.msra.mxu0 %v12419
    %12485 = vmatprep.subr.mxu0 0.0
    %12486 = vmatpush1.msra.mxu0 %v12420
    %12487 = vmatprep.subr.mxu0 0.0
    %12488 = vmatpush1.msra.mxu0 %v12421
    %12489 = vmatprep.subr.mxu0 0.0
    %12490 = vmatpush1.msra.mxu0 %v12422
    %12491 = vmatprep.subr.mxu0 0.0
    %12492 = vmatpush1.msra.mxu0 %v12423
    %12493 = vmatprep.subr.mxu0 0.0
    %12494 = vmatpush1.msra.mxu0 %v12424
    %12495 = vmatprep.subr.mxu0 0.0
    %12496 = vmatpush1.msra.mxu0 %v12425
    %12497 = vmatprep.subr.mxu0 0.0
    %12498 = vmatpush1.msra.mxu0 %v12426
    %12499 = vmatprep.subr.mxu0 0.0
    %12500 = vmatpush1.msra.mxu0 %v12427
    %12501 = vmatprep.subr.mxu0 0.0
    %12502 = vmatpush1.msra.mxu0 %v12428
    %12503 = vmatprep.subr.mxu0 0.0
    %12504 = vmatpush1.msra.mxu0 %v12429
    %12505 = vmatprep.subr.mxu0 0.0
    %12506 = vmatpush1.msra.mxu0 %v12430
    %12507 = vmatprep.subr.mxu0 0.0
    %12508 = vmatpush1.msra.mxu0 %v12431
    %12509 = vmatprep.subr.mxu0 0.0
    %12510 = vmatpush1.msra.mxu0 %v12432
    %12511 = vmatprep.subr.mxu0 0.0
    %12512 = vmatpush1.msra.mxu0 %v12433
    %12513 = vmatprep.subr.mxu0 0.0
    %12514 = vmatpush1.msra.mxu0 %v12434
    %12515 = vmatprep.subr.mxu0 0.0
    %12516 = vmatpush1.msra.mxu0 %v12435
    %12517 = vmatprep.subr.mxu0 0.0
    %12518 = vmatpush1.msra.mxu0 %v12436
    %12519 = vmatprep.subr.mxu0 0.0
    %12520 = vmatpush1.msra.mxu0 %v12437
    %12521 = vmatprep.subr.mxu0 0.0
    %12522 = vmatpush1.msra.mxu0 %v12438
    %12523 = vmatprep.subr.mxu0 0.0
    %12524 = vmatpush1.msra.mxu0 %v12439
    %12525 = vmatprep.subr.mxu0 0.0
    %12526 = vmatpush1.msra.mxu0 %v12440
    %12527 = vmatprep.subr.mxu0 0.0
    %12528 = vmatpush1.msra.mxu0 %v12441
    %12529 = vmatprep.subr.mxu0 0.0
    %12530 = vmatpush1.msra.mxu0 %v12442
    %12531 = vmatprep.subr.mxu0 0.0
    %12532 = vmatpush1.msra.mxu0 %v12443
    %12533 = vmatprep.subr.mxu0 0.0
    %12534 = vmatpush1.msra.mxu0 %v12444
    %12535 = vmatprep.subr.mxu0 0.0
    %12536 = vmatpush1.msra.mxu0 %v12445
    %12537 = vmatprep.subr.mxu0 0.0
    %12538 = vmatpush1.msra.mxu0 %v12446
    %12539 = vmatprep.mubr.f32.mxu0 %v12470
    %12540 = vmatmul.mubr.f32.gmra.mrb[0].mxu0 %v12469
    %v12541 = vpop.f32.mrb[0].mxu0
    %v12542 = vadd.f32 0.0, %v12541
    %v12543 = vpop.f32.mrb[0].mxu0
    %12544 = vdwg.mxu0
    %12545 = vmatprep.subr.mxu0 0.0
    %12546 = vmatpush1.msra.mxu0 %v12447
    %12547 = vmatprep.subr.mxu0 0.0
    %12548 = vmatpush1.msra.mxu0 %v12448
    %12549 = vmatprep.subr.mxu0 0.0
    %12550 = vmatpush1.msra.mxu0 %v12449
    %12551 = vmatprep.subr.mxu0 0.0
    %12552 = vmatpush1.msra.mxu0 %v12450
    %12553 = vmatprep.subr.mxu0 0.0
    %12554 = vmatpush1.msra.mxu0 %v12451
    %12555 = vmatprep.subr.mxu0 0.0
    %12556 = vmatpush1.msra.mxu0 %v12452
    %12557 = vmatprep.subr.mxu0 0.0
    %12558 = vmatpush1.msra.mxu0 %v12453
    %12559 = vmatprep.subr.mxu0 0.0
    %12560 = vmatpush1.msra.mxu0 %v12454
    %12561 = vmatprep.subr.mxu0 0.0
    %12562 = vmatpush1.msra.mxu0 %v12455
    %12563 = vmatprep.subr.mxu0 0.0
    %12564 = vmatpush1.msra.mxu0 %v12456
    %12565 = vmatprep.subr.mxu0 0.0
    %12566 = vmatpush1.msra.mxu0 %v12457
    %12567 = vmatprep.subr.mxu0 0.0
    %12568 = vmatpush1.msra.mxu0 %v12458
    %12569 = vmatprep.subr.mxu0 0.0
    %12570 = vmatpush1.msra.mxu0 %v12459
    %12571 = vmatprep.subr.mxu0 0.0
    %12572 = vmatpush1.msra.mxu0 %v12460
    %12573 = vmatprep.subr.mxu0 0.0
    %12574 = vmatpush1.msra.mxu0 %v12461
    %12575 = vmatprep.subr.mxu0 0.0
    %12576 = vmatpush1.msra.mxu0 %v12462
    %12577 = vmatprep.subr.mxu0 0.0
    %12578 = vmatpush1.msra.mxu0 0.0
    %12579 = vmatprep.subr.mxu0 0.0
    %12580 = vmatpush1.msra.mxu0 0.0
    %12581 = vmatprep.subr.mxu0 0.0
    %12582 = vmatpush1.msra.mxu0 0.0
    %12583 = vmatprep.subr.mxu0 0.0
    %12584 = vmatpush1.msra.mxu0 0.0
    %12585 = vmatprep.subr.mxu0 0.0
    %12586 = vmatpush1.msra.mxu0 0.0
    %12587 = vmatprep.subr.mxu0 0.0
    %12588 = vmatpush1.msra.mxu0 0.0
    %12589 = vmatprep.subr.mxu0 0.0
    %12590 = vmatpush1.msra.mxu0 0.0
    %12591 = vmatprep.subr.mxu0 0.0
    %12592 = vmatpush1.msra.mxu0 0.0
    %12593 = vmatprep.subr.mxu0 0.0
    %12594 = vmatpush1.msra.mxu0 0.0
    %12595 = vmatprep.subr.mxu0 0.0
    %12596 = vmatpush1.msra.mxu0 0.0
    %12597 = vmatprep.subr.mxu0 0.0
    %12598 = vmatpush1.msra.mxu0 0.0
    %12599 = vmatprep.subr.mxu0 0.0
    %12600 = vmatpush1.msra.mxu0 0.0
    %12601 = vmatprep.subr.mxu0 0.0
    %12602 = vmatpush1.msra.mxu0 0.0
    %12603 = vmatprep.subr.mxu0 0.0
    %12604 = vmatpush1.msra.mxu0 0.0
    %12605 = vmatprep.subr.mxu0 0.0
    %12606 = vmatpush1.msra.mxu0 0.0
    %12607 = vmatprep.subr.mxu0 0.0
    %12608 = vmatpush1.msra.mxu0 0.0
    %12609 = vmatprep.mubr.f32.mxu0 0.0
    %12610 = vmatmul.mubr.f32.gmra.mrb[0].mxu0 %v12471
    %v12611 = vpop.f32.mrb[0].mxu0
    %v12612 = vadd.f32 %v12542, %v12611
    %v12613 = vpop.f32.mrb[0].mxu0
    %12614 = vdwg.mxu0
    %v12615 = vadd.f32 %v10329, %v12612
    %v12616 = vld [vmem:[%s4] sm:$0x1]
    %v12618 = vlaneseq
    %v12619 = vshrl.u32 %v12618, 7
    %v12620 = vsub.s32 0, %v12619
    %v12621 = vrot.slane %v12616, %v12620
    %v12623 = vadd.f32 %v12615, %v12621
    %12624 = vst [vmem:[#allocation5] sm:$0x3] %v12623
    // Predicated region
    $region26: #{densenet_gradcam_forward.1} parent=1 // pred_check
      _
    $region27: #{densenet_gradcam_forward.1} parent=1 // pred_check_branch
      %12626 = sbr.rel (0) target = $region29
    $region28: #{densenet_gradcam_forward.1} parent=1 // pred_region
      %s12628 = ssub.s32 32, 32
      %12629 = vsyncadd [#allocation4], %s12628
      %s12631 = sshll.u32 [#allocation5], 4
      %s12632 = int_to_ptr.vmem [resolvable:$true] %s12631
      %12634 = dma.vmem_to_hbm [thread:$0]  %s12632, 32, %s5, [#allocation4]
    $region29: #{densenet_gradcam_forward.1} parent=1 // pred_fallthru
      _
    // Predicated region
    $region30: #{densenet_gradcam_forward.1} parent=1 // pred_check
      _
    $region31: #{densenet_gradcam_forward.1} parent=1 // pred_check_branch
      %12636 = sbr.rel (0) target = $region33
    $region32: #{densenet_gradcam_forward.1} parent=1 // pred_region
      %12637 = dma.done [#allocation4], 32
    $region33: #{densenet_gradcam_forward.1} parent=1 // pred_fallthru
      _
    %12638 = vsyncpa [#allocation3], 1
    %12639 = vsyncpa [#allocation4], 1

</llo_original>
